<compile_context>
chip_gen: v7x
topology: tpu7x:2x2x1
jax: 0.10.0
libtpu: 0.0.40
codegen_flags: <defaults>
</compile_context>

<pallas_src>
import functools
import math

import jax
import jax.numpy as jnp
from jax.experimental import pallas as pl
from jax.experimental.pallas import tpu as pltpu


# ----------------------------------------------------------------------------- helpers

def _ln(x, gamma, beta, eps):
    """LayerNorm over the last dim (f32 in-register)."""
    mu = jnp.mean(x, axis=-1, keepdims=True)
    var = jnp.mean(jnp.square(x - mu), axis=-1, keepdims=True)
    return (x - mu) * jax.lax.rsqrt(var + eps) * gamma + beta


def _pick_row_tile(M):
    """Largest multiple-of-8 row tile <= 256 that divides M and leaves >= 2 tiles."""
    for cand in (256, 128, 64, 32, 16, 8):
        if M % cand == 0 and M // cand >= 2:
            return cand
    return M


# ----------------------------------------------------------------------------- kernels

def _mha_kernel(qin_ref, kin_ref, vin_ref, res_ref,
                wq_ref, bq_ref, wk_ref, bk_ref, wv_ref, bv_ref,
                wo_ref, bo_ref, g_ref, beta_ref, o_ref,
                *, nhead, causal, epilogue, eps):
    """Fused multi-head attention for one batch element.

    qin: (1, Tq, Dq_in)   kin/vin: (1, Tk, Dk_in / Dv_in)   res: (1, Tq, Do)
    Weights: wq (Dq_in, d) [scale pre-folded], wk (Dk_in, d), wv (Dv_in, d),
             wo (d, Do); biases f32; LN gamma/beta (1, Do).
    Writes LN(res)+attn  or  LN(res+attn)  depending on `epilogue`.
    """
    qin = qin_ref[0].astype(jnp.bfloat16)
    kin = kin_ref[0].astype(jnp.bfloat16)
    vin = vin_ref[0].astype(jnp.bfloat16)

    # Projections (bf16 x bf16 -> f32 accumulate).  1/sqrt(dk) already folded into wq/bq.
    q = jnp.dot(qin, wq_ref[...], preferred_element_type=jnp.float32) + bq_ref[...]
    k = jnp.dot(kin, wk_ref[...], preferred_element_type=jnp.float32) + bk_ref[...]
    v = jnp.dot(vin, wv_ref[...], preferred_element_type=jnp.float32) + bv_ref[...]

    Tq = q.shape[0]
    Tk = k.shape[0]
    d = q.shape[1]
    dk = d // nhead
    Do = wo_ref.shape[1]

    qb = q.astype(jnp.bfloat16)
    kb = k.astype(jnp.bfloat16)
    vb = v.astype(jnp.bfloat16)

    if causal:
        row = jax.lax.broadcasted_iota(jnp.int32, (Tq, Tk), 0)
        col = jax.lax.broadcasted_iota(jnp.int32, (Tq, Tk), 1)
        neg = jnp.where(col <= row, 0.0, -1e30).astype(jnp.float32)

    # Per-head attention; head outputs are folded straight into the output
    # projection (acc += (p @ v_h) @ wo[h]) so no head-concat / transpose is needed.
    acc = jnp.zeros((Tq, Do), jnp.float32)
    for h in range(nhead):
        lo, hi = h * dk, (h + 1) * dk
        qh = qb[:, lo:hi]
        kh = kb[:, lo:hi]
        vh = vb[:, lo:hi]
        # scores without any transpose: contract the dk axis of both operands.
        s = jax.lax.dot_general(qh, kh, (((1,), (1,)), ((), ())),
                                preferred_element_type=jnp.float32)  # (Tq, Tk)
        if causal:
            s = s + neg
        m = jnp.max(s, axis=-1, keepdims=True)
        p = jnp.exp(s - m)
        denom = jnp.sum(p, axis=-1, keepdims=True)
        p = p * pl.reciprocal(denom, approx=True)
        oh = jnp.dot(p.astype(jnp.bfloat16), vh,
                     preferred_element_type=jnp.float32)            # (Tq, dk)
        woh = wo_ref[lo:hi, :]                                      # (dk, Do) bf16
        acc = acc + jnp.dot(oh.astype(jnp.bfloat16), woh,
                            preferred_element_type=jnp.float32)
    attn_out = acc + bo_ref[...]                                    # f32 (Tq, Do)

    res = res_ref[0]
    if epilogue == "ln_then_add":       # tgt = norm(tgt); tgt = tgt + tgt2
        y = _ln(res, g_ref[...], beta_ref[...], eps) + attn_out
    else:                               # "add_then_ln": tgt = norm(tgt + tgt2)
        y = _ln(res + attn_out, g_ref[...], beta_ref[...], eps)
    o_ref[0] = y.astype(o_ref.dtype)


def _ffn_kernel(x_ref, w1_ref, b1_ref, w2_ref, b2_ref, g_ref, beta_ref, o_ref, *, eps):
    """Fused linear1 -> ReLU -> linear2 -> +residual -> LayerNorm over a row tile."""
    x = x_ref[...]                                                   # f32 (tm, Dc)
    xb = x.astype(jnp.bfloat16)
    h = jnp.dot(xb, w1_ref[...], preferred_element_type=jnp.float32) + b1_ref[...]
    h = jnp.maximum(h, 0.0)
    y = jnp.dot(h.astype(jnp.bfloat16), w2_ref[...],
                preferred_element_type=jnp.float32) + b2_ref[...]
    y = x + y                                                        # residual
    o_ref[...] = _ln(y, g_ref[...], beta_ref[...], eps).astype(o_ref.dtype)


# ----------------------------------------------------------------------------- wrappers

def fused_mha(p, ln, Q, Kin, Vin, residual, nhead, *, causal=False,
              epilogue="add_then_ln", eps=1e-5):
    """Fused MHA + residual + LayerNorm.  Q: (B,Tq,Dq), Kin/Vin: (B,Tk,*),
    residual: (B,Tq,Do).  Returns (B,Tq,Do)."""
    B, Tq, Dq = Q.shape
    Tk, Dk = Kin.shape[1], Kin.shape[2]
    Dv = Vin.shape[2]
    d = p["wq"].shape[1]
    Do = p["wo"].shape[1]
    dk = d // nhead
    scale = 1.0 / math.sqrt(dk)

    # Fold the 1/sqrt(dk) scale into the Q projection; cast weights to bf16 once.
    wq = (p["wq"] * scale).astype(jnp.bfloat16)
    bq = (p["bq"] * scale).reshape(1, d).astype(jnp.float32)
    wk = p["wk"].astype(jnp.bfloat16)
    bk = p["bk"].reshape(1, d).astype(jnp.float32)
    wv = p["wv"].astype(jnp.bfloat16)
    bv = p["bv"].reshape(1, d).astype(jnp.float32)
    wo = p["wo"].astype(jnp.bfloat16)
    bo = p["bo"].reshape(1, Do).astype(jnp.float32)
    gamma = ln["gamma"].reshape(1, Do).astype(jnp.float32)
    beta = ln["beta"].reshape(1, Do).astype(jnp.float32)

    kern = functools.partial(_mha_kernel, nhead=nhead, causal=causal,
                             epilogue=epilogue, eps=eps)
    const = lambda b: (0, 0)
    return pl.pallas_call(
        kern,
        out_shape=jax.ShapeDtypeStruct((B, Tq, Do), jnp.float32),
        grid=(B,),
        in_specs=[
            pl.BlockSpec((1, Tq, Dq), lambda b: (b, 0, 0)),
            pl.BlockSpec((1, Tk, Dk), lambda b: (b, 0, 0)),
            pl.BlockSpec((1, Tk, Dv), lambda b: (b, 0, 0)),
            pl.BlockSpec((1, Tq, Do), lambda b: (b, 0, 0)),
            pl.BlockSpec((Dq, d), const),
            pl.BlockSpec((1, d), const),
            pl.BlockSpec((Dk, d), const),
            pl.BlockSpec((1, d), const),
            pl.BlockSpec((Dv, d), const),
            pl.BlockSpec((1, d), const),
            pl.BlockSpec((d, Do), const),
            pl.BlockSpec((1, Do), const),
            pl.BlockSpec((1, Do), const),
            pl.BlockSpec((1, Do), const),
        ],
        out_specs=pl.BlockSpec((1, Tq, Do), lambda b: (b, 0, 0)),
        compiler_params=pltpu.CompilerParams(dimension_semantics=("parallel",)),
    )(Q, Kin, Vin, residual, wq, bq, wk, bk, wv, bv, wo, bo, gamma, beta)


def fused_ffn_ln(x, p, ln, eps=1e-5):
    """LN(x + linear2(relu(linear1(x)))), fused, tiled over rows."""
    B, T, Dc = x.shape
    F = p["w1"].shape[1]
    M = B * T
    tm = _pick_row_tile(M)
    x2d = x.reshape(M, Dc)

    w1 = p["w1"].astype(jnp.bfloat16)
    b1 = p["b1"].reshape(1, F).astype(jnp.float32)
    w2 = p["w2"].astype(jnp.bfloat16)
    b2 = p["b2"].reshape(1, Dc).astype(jnp.float32)
    gamma = ln["gamma"].reshape(1, Dc).astype(jnp.float32)
    beta = ln["beta"].reshape(1, Dc).astype(jnp.float32)

    const = lambda i: (0, 0)
    out = pl.pallas_call(
        functools.partial(_ffn_kernel, eps=eps),
        out_shape=jax.ShapeDtypeStruct((M, Dc), jnp.float32),
        grid=(M // tm,),
        in_specs=[
            pl.BlockSpec((tm, Dc), lambda i: (i, 0)),
            pl.BlockSpec((Dc, F), const),
            pl.BlockSpec((1, F), const),
            pl.BlockSpec((F, Dc), const),
            pl.BlockSpec((1, Dc), const),
            pl.BlockSpec((1, Dc), const),
            pl.BlockSpec((1, Dc), const),
        ],
        out_specs=pl.BlockSpec((tm, Dc), lambda i: (i, 0)),
        compiler_params=pltpu.CompilerParams(dimension_semantics=("parallel",)),
    )(x2d, w1, b1, w2, b2, gamma, beta)
    return out.reshape(B, T, Dc)


# ----------------------------------------------------------------------------- positional encodings

def sinusoid_pe(T, D):
    pos = jnp.arange(T, dtype=jnp.float32)[:, None]
    i = jnp.arange(D, dtype=jnp.float32)[None, :]
    angle = pos / jnp.power(10000.0, (2.0 * jnp.floor(i / 2.0)) / D)
    return jnp.where((jnp.arange(D) % 2) == 0, jnp.sin(angle), jnp.cos(angle))


def add_pe(x):
    """Models the `query_pos` / `pos` / `goal_pos` callables as additive sinusoidal PE."""
    B, T, D = x.shape
    return x + sinusoid_pe(T, D)[None]


# ----------------------------------------------------------------------------- decoder layer

def transformer_decoder_layer_forward(params, tgt, memory, goal, detected_objects, nhead):
    """forward_post with normalize_before=False, add_pos=False, dropout=eval (identity)."""
    # add_pos=False branch: q = k = query_pos(tgt) computed ONCE from the original tgt.
    q = add_pe(tgt)
    k = q

    # tgt2 = self_attn(q, k, tgt, causal); tgt = norm1(tgt); tgt = tgt + tgt2
    # (intentionally matches the reference's LN-then-add ordering for this block)
    tgt = fused_mha(params["self_attn"], params["norm1"], q, k, tgt, tgt, nhead,
                    causal=True, epilogue="ln_then_add")

    # tgt2 = multihead_attn(q, pos(memory), memory); tgt = norm2(tgt + tgt2)
    tgt = fused_mha(params["multihead_attn"], params["norm2"], q, add_pe(memory),
                    memory, tgt, nhead, epilogue="add_then_ln")

    # goal attention: tgt2 = goal_attn(query_pos(tgt), goal_pos(goal), goal); tgt = norm4(tgt + tgt2)
    if goal is not None:
        tgt = fused_mha(params["goal_attention"], params["norm4"], add_pe(tgt),
                        add_pe(goal), goal, tgt, nhead, epilogue="add_then_ln")

    # detected-object attention: tgt2 = det_attn(q, obj, obj); tgt = norm5(tgt + tgt2)
    if detected_objects is not None:
        tgt = fused_mha(params["detected_attention"], params["norm5"], q,
                        detected_objects, detected_objects, tgt, nhead,
                        epilogue="add_then_ln")

    # tgt2 = linear2(relu(linear1(tgt))); tgt = norm3(tgt + tgt2)
    tgt = fused_ffn_ln(tgt, params["ffn"], params["norm3"])
    return tgt


# ----------------------------------------------------------------------------- param init

def init_mha_params(key, d_q, d_k, d_v, d_model):
    ks = jax.random.split(key, 4)
    s = 0.05
    return {
        "wq": s * jax.random.normal(ks[0], (d_q, d_model), jnp.float32),
        "bq": jnp.zeros((d_model,), jnp.float32),
        "wk": s * jax.random.normal(ks[1], (d_k, d_model), jnp.float32),
        "bk": jnp.zeros((d_model,), jnp.float32),
        "wv": s * jax.random.normal(ks[2], (d_v, d_model), jnp.float32),
        "bv": jnp.zeros((d_model,), jnp.float32),
        "wo": s * jax.random.normal(ks[3], (d_model, d_q), jnp.float32),
        "bo": jnp.zeros((d_q,), jnp.float32),
    }


def init_ln_params(D):
    return {"gamma": jnp.ones((D,), jnp.float32), "beta": jnp.zeros((D,), jnp.float32)}


def init_decoder_params(key, d_model, nhead, d_model_C, d_goal, dim_feedforward):
    ks = jax.random.split(key, 8)
    s = 0.05
    return {
        "self_attn":          init_mha_params(ks[0], d_model_C, d_model_C, d_model_C, d_model),
        "multihead_attn":     init_mha_params(ks[1], d_model_C, d_model,   d_model,   d_model),
        "detected_attention": init_mha_params(ks[2], d_model_C, 256,       256,       d_model),
        "goal_attention":     init_mha_params(ks[3], d_model_C, d_goal,    d_goal,    d_model),
        "ffn": {
            "w1": s * jax.random.normal(ks[4], (d_model_C, dim_feedforward), jnp.float32),
            "b1": jnp.zeros((dim_feedforward,), jnp.float32),
            "w2": s * jax.random.normal(ks[5], (dim_feedforward, d_model_C), jnp.float32),
            "b2": jnp.zeros((d_model_C,), jnp.float32),
        },
        "norm1": init_ln_params(d_model_C),
        "norm2": init_ln_params(d_model_C),
        "norm3": init_ln_params(d_model_C),
        "norm4": init_ln_params(d_model_C),
        "norm5": init_ln_params(d_model_C),
    }


# ----------------------------------------------------------------------------- main

if __name__ == "__main__":
    d_model = 32
    d_model_C = 32
    nhead = 4
    d_goal = 16
    dim_feedforward = 64

    B, Tq, Tm, Tg, Tobj = 2, 8, 12, 6, 5

    key = jax.random.PRNGKey(0)
    k_params, k_tgt, k_mem, k_goal, k_obj = jax.random.split(key, 5)

    params = init_decoder_params(k_params, d_model, nhead, d_model_C, d_goal, dim_feedforward)

    tgt = jax.random.normal(k_tgt, (B, Tq, d_model_C), jnp.float32)
    memory = jax.random.normal(k_mem, (B, Tm, d_model), jnp.float32)
    goal = jax.random.normal(k_goal, (B, Tg, d_goal), jnp.float32)
    detected_objects = jax.random.normal(k_obj, (B, Tobj, 256), jnp.float32)

    fwd = jax.jit(functools.partial(transformer_decoder_layer_forward, nhead=nhead))
    out = fwd(params, tgt, memory, goal, detected_objects)
    out = jax.block_until_ready(out)

    assert out.shape == (B, Tq, d_model_C), out.shape
    assert jnp.all(jnp.isfinite(out)), "non-finite output"
    print("KERNEL_OK")
</pallas_src>

<mosaic_0001>
module attributes {stable_mosaic.version = 11 : i64} {
  func.func @_mha_kernel(%arg0: i32, %arg1: memref<1x8x32xf32, #tpu.memory_space<vmem>>, %arg2: memref<1x12x32xf32, #tpu.memory_space<vmem>>, %arg3: memref<1x12x32xf32, #tpu.memory_space<vmem>>, %arg4: memref<1x8x32xf32, #tpu.memory_space<vmem>>, %arg5: memref<32x32xbf16, #tpu.memory_space<vmem>>, %arg6: memref<1x32xf32, #tpu.memory_space<vmem>>, %arg7: memref<32x32xbf16, #tpu.memory_space<vmem>>, %arg8: memref<1x32xf32, #tpu.memory_space<vmem>>, %arg9: memref<32x32xbf16, #tpu.memory_space<vmem>>, %arg10: memref<1x32xf32, #tpu.memory_space<vmem>>, %arg11: memref<32x32xbf16, #tpu.memory_space<vmem>>, %arg12: memref<1x32xf32, #tpu.memory_space<vmem>>, %arg13: memref<1x32xf32, #tpu.memory_space<vmem>>, %arg14: memref<1x32xf32, #tpu.memory_space<vmem>>, %arg15: memref<1x8x32xf32, #tpu.memory_space<vmem>>) attributes {dimension_semantics = [#tpu.dimension_semantics<parallel>], iteration_bounds = array<i64: 2>, scalar_prefetch = 0 : i64, scratch_operands = 0 : i64, tpu.core_type = #tpu.core_type<tc>, window_params = [{transform_indices = @transform_0, window_bounds = array<i64: 1, 8, 32>}, {transform_indices = @transform_1, window_bounds = array<i64: 1, 12, 32>}, {transform_indices = @transform_2, window_bounds = array<i64: 1, 12, 32>}, {transform_indices = @transform_3, window_bounds = array<i64: 1, 8, 32>}, {pipeline_mode = #tpu.pipeline_mode<synchronous>, transform_indices = @transform_4, window_bounds = array<i64: 32, 32>}, {pipeline_mode = #tpu.pipeline_mode<synchronous>, transform_indices = @transform_5, window_bounds = array<i64: 1, 32>}, {pipeline_mode = #tpu.pipeline_mode<synchronous>, transform_indices = @transform_6, window_bounds = array<i64: 32, 32>}, {pipeline_mode = #tpu.pipeline_mode<synchronous>, transform_indices = @transform_7, window_bounds = array<i64: 1, 32>}, {pipeline_mode = #tpu.pipeline_mode<synchronous>, transform_indices = @transform_8, window_bounds = array<i64: 32, 32>}, {pipeline_mode = #tpu.pipeline_mode<synchronous>, transform_indices = @transform_9, window_bounds = array<i64: 1, 32>}, {pipeline_mode = #tpu.pipeline_mode<synchronous>, transform_indices = @transform_10, window_bounds = array<i64: 32, 32>}, {pipeline_mode = #tpu.pipeline_mode<synchronous>, transform_indices = @transform_11, window_bounds = array<i64: 1, 32>}, {pipeline_mode = #tpu.pipeline_mode<synchronous>, transform_indices = @transform_12, window_bounds = array<i64: 1, 32>}, {pipeline_mode = #tpu.pipeline_mode<synchronous>, transform_indices = @transform_13, window_bounds = array<i64: 1, 32>}, {transform_indices = @transform_14, window_bounds = array<i64: 1, 8, 32>}]} {
    %c0 = arith.constant 0 : index
    %c0_0 = arith.constant 0 : index
    %c0_1 = arith.constant 0 : index
    %0 = vector.load %arg1[%c0, %c0_0, %c0_1] : memref<1x8x32xf32, #tpu.memory_space<vmem>>, vector<1x8x32xf32>
    %1 = vector.shape_cast %0 : vector<1x8x32xf32> to vector<8x32xf32>
    %2 = arith.truncf %1 : vector<8x32xf32> to vector<8x32xbf16>
    %c0_2 = arith.constant 0 : index
    %c0_3 = arith.constant 0 : index
    %c0_4 = arith.constant 0 : index
    %3 = vector.load %arg2[%c0_2, %c0_3, %c0_4] : memref<1x12x32xf32, #tpu.memory_space<vmem>>, vector<1x12x32xf32>
    %4 = vector.shape_cast %3 : vector<1x12x32xf32> to vector<12x32xf32>
    %5 = arith.truncf %4 : vector<12x32xf32> to vector<12x32xbf16>
    %c0_5 = arith.constant 0 : index
    %c0_6 = arith.constant 0 : index
    %c0_7 = arith.constant 0 : index
    %6 = vector.load %arg3[%c0_5, %c0_6, %c0_7] : memref<1x12x32xf32, #tpu.memory_space<vmem>>, vector<1x12x32xf32>
    %7 = vector.shape_cast %6 : vector<1x12x32xf32> to vector<12x32xf32>
    %8 = arith.truncf %7 : vector<12x32xf32> to vector<12x32xbf16>
    %c0_8 = arith.constant 0 : index
    %c0_9 = arith.constant 0 : index
    %9 = vector.load %arg5[%c0_8, %c0_9] : memref<32x32xbf16, #tpu.memory_space<vmem>>, vector<32x32xbf16>
    %cst = arith.constant dense<0.000000e+00> : vector<8x32xf32>
    %10 = tpu.matmul %2, %9, %cst {dimension_numbers = #tpu.dot_dimension_numbers<[1], [0], [0], [1], [0, 0, 1, 1], [], []>} : vector<8x32xbf16>, vector<32x32xbf16>, vector<8x32xf32> -> vector<8x32xf32>
    %c0_10 = arith.constant 0 : index
    %c0_11 = arith.constant 0 : index
    %11 = vector.load %arg6[%c0_10, %c0_11] : memref<1x32xf32, #tpu.memory_space<vmem>>, vector<1x32xf32>
    %12 = vector.broadcast %11 : vector<1x32xf32> to vector<8x32xf32>
    %13 = arith.addf %10, %12 : vector<8x32xf32>
    %c0_12 = arith.constant 0 : index
    %c0_13 = arith.constant 0 : index
    %14 = vector.load %arg7[%c0_12, %c0_13] : memref<32x32xbf16, #tpu.memory_space<vmem>>, vector<32x32xbf16>
    %cst_14 = arith.constant dense<0.000000e+00> : vector<12x32xf32>
    %15 = tpu.matmul %5, %14, %cst_14 {dimension_numbers = #tpu.dot_dimension_numbers<[1], [0], [0], [1], [0, 0, 1, 1], [], []>} : vector<12x32xbf16>, vector<32x32xbf16>, vector<12x32xf32> -> vector<12x32xf32>
    %c0_15 = arith.constant 0 : index
    %c0_16 = arith.constant 0 : index
    %16 = vector.load %arg8[%c0_15, %c0_16] : memref<1x32xf32, #tpu.memory_space<vmem>>, vector<1x32xf32>
    %17 = vector.broadcast %16 : vector<1x32xf32> to vector<12x32xf32>
    %18 = arith.addf %15, %17 : vector<12x32xf32>
    %c0_17 = arith.constant 0 : index
    %c0_18 = arith.constant 0 : index
    %19 = vector.load %arg9[%c0_17, %c0_18] : memref<32x32xbf16, #tpu.memory_space<vmem>>, vector<32x32xbf16>
    %cst_19 = arith.constant dense<0.000000e+00> : vector<12x32xf32>
    %20 = tpu.matmul %8, %19, %cst_19 {dimension_numbers = #tpu.dot_dimension_numbers<[1], [0], [0], [1], [0, 0, 1, 1], [], []>} : vector<12x32xbf16>, vector<32x32xbf16>, vector<12x32xf32> -> vector<12x32xf32>
    %c0_20 = arith.constant 0 : index
    %c0_21 = arith.constant 0 : index
    %21 = vector.load %arg10[%c0_20, %c0_21] : memref<1x32xf32, #tpu.memory_space<vmem>>, vector<1x32xf32>
    %22 = vector.broadcast %21 : vector<1x32xf32> to vector<12x32xf32>
    %23 = arith.addf %20, %22 : vector<12x32xf32>
    %24 = arith.truncf %13 : vector<8x32xf32> to vector<8x32xbf16>
    %25 = arith.truncf %18 : vector<12x32xf32> to vector<12x32xbf16>
    %26 = arith.truncf %23 : vector<12x32xf32> to vector<12x32xbf16>
    %cst_22 = arith.constant 0.000000e+00 : f32
    %27 = vector.broadcast %cst_22 : f32 to vector<8x32xf32>
    %28 = vector.extract_strided_slice %24 {offsets = [0, 0], sizes = [8, 8], strides = [1, 1]} : vector<8x32xbf16> to vector<8x8xbf16>
    %29 = vector.extract_strided_slice %25 {offsets = [0, 0], sizes = [12, 8], strides = [1, 1]} : vector<12x32xbf16> to vector<12x8xbf16>
    %30 = vector.extract_strided_slice %26 {offsets = [0, 0], sizes = [12, 8], strides = [1, 1]} : vector<12x32xbf16> to vector<12x8xbf16>
    %cst_23 = arith.constant dense<0.000000e+00> : vector<8x12xf32>
    %31 = tpu.matmul %28, %29, %cst_23 {dimension_numbers = #tpu.dot_dimension_numbers<[1], [1], [0], [0], [0, 0, 1, 0], [], []>} : vector<8x8xbf16>, vector<12x8xbf16>, vector<8x12xf32> -> vector<8x12xf32>
    %cst_24 = arith.constant dense<0xFF800000> : vector<8xf32>
    %32 = vector.multi_reduction <maximumf>, %31, %cst_24 [1] : vector<8x12xf32> to vector<8xf32>
    %33 = vector.shape_cast %32 : vector<8xf32> to vector<8x1xf32>
    %34 = vector.broadcast %33 : vector<8x1xf32> to vector<8x12xf32>
    %35 = arith.subf %31, %34 : vector<8x12xf32>
    %36 = math.exp %35 : vector<8x12xf32>
    %cst_25 = arith.constant dense<0.000000e+00> : vector<8xf32>
    %37 = vector.multi_reduction <add>, %36, %cst_25 [1] : vector<8x12xf32> to vector<8xf32>
    %38 = vector.shape_cast %37 : vector<8xf32> to vector<8x1xf32>
    %39 = tpu.reciprocal %38 {approx = true} : vector<8x1xf32> -> vector<8x1xf32>
    %40 = vector.broadcast %39 : vector<8x1xf32> to vector<8x12xf32>
    %41 = arith.mulf %36, %40 : vector<8x12xf32>
    %42 = arith.truncf %41 : vector<8x12xf32> to vector<8x12xbf16>
    %cst_26 = arith.constant dense<0.000000e+00> : vector<8x8xf32>
    %43 = tpu.matmul %42, %30, %cst_26 {dimension_numbers = #tpu.dot_dimension_numbers<[1], [0], [0], [1], [0, 0, 1, 1], [], []>} : vector<8x12xbf16>, vector<12x8xbf16>, vector<8x8xf32> -> vector<8x8xf32>
    %c0_27 = arith.constant 0 : index
    %c0_28 = arith.constant 0 : index
    %44 = vector.load %arg11[%c0_27, %c0_28] : memref<32x32xbf16, #tpu.memory_space<vmem>>, vector<8x32xbf16>
    %45 = arith.truncf %43 : vector<8x8xf32> to vector<8x8xbf16>
    %cst_29 = arith.constant dense<0.000000e+00> : vector<8x32xf32>
    %46 = tpu.matmul %45, %44, %cst_29 {dimension_numbers = #tpu.dot_dimension_numbers<[1], [0], [0], [1], [0, 0, 1, 1], [], []>} : vector<8x8xbf16>, vector<8x32xbf16>, vector<8x32xf32> -> vector<8x32xf32>
    %47 = arith.addf %27, %46 : vector<8x32xf32>
    %48 = vector.extract_strided_slice %24 {offsets = [0, 8], sizes = [8, 8], strides = [1, 1]} : vector<8x32xbf16> to vector<8x8xbf16>
    %49 = vector.extract_strided_slice %25 {offsets = [0, 8], sizes = [12, 8], strides = [1, 1]} : vector<12x32xbf16> to vector<12x8xbf16>
    %50 = vector.extract_strided_slice %26 {offsets = [0, 8], sizes = [12, 8], strides = [1, 1]} : vector<12x32xbf16> to vector<12x8xbf16>
    %cst_30 = arith.constant dense<0.000000e+00> : vector<8x12xf32>
    %51 = tpu.matmul %48, %49, %cst_30 {dimension_numbers = #tpu.dot_dimension_numbers<[1], [1], [0], [0], [0, 0, 1, 0], [], []>} : vector<8x8xbf16>, vector<12x8xbf16>, vector<8x12xf32> -> vector<8x12xf32>
    %cst_31 = arith.constant dense<0xFF800000> : vector<8xf32>
    %52 = vector.multi_reduction <maximumf>, %51, %cst_31 [1] : vector<8x12xf32> to vector<8xf32>
    %53 = vector.shape_cast %52 : vector<8xf32> to vector<8x1xf32>
    %54 = vector.broadcast %53 : vector<8x1xf32> to vector<8x12xf32>
    %55 = arith.subf %51, %54 : vector<8x12xf32>
    %56 = math.exp %55 : vector<8x12xf32>
    %cst_32 = arith.constant dense<0.000000e+00> : vector<8xf32>
    %57 = vector.multi_reduction <add>, %56, %cst_32 [1] : vector<8x12xf32> to vector<8xf32>
    %58 = vector.shape_cast %57 : vector<8xf32> to vector<8x1xf32>
    %59 = tpu.reciprocal %58 {approx = true} : vector<8x1xf32> -> vector<8x1xf32>
    %60 = vector.broadcast %59 : vector<8x1xf32> to vector<8x12xf32>
    %61 = arith.mulf %56, %60 : vector<8x12xf32>
    %62 = arith.truncf %61 : vector<8x12xf32> to vector<8x12xbf16>
    %cst_33 = arith.constant dense<0.000000e+00> : vector<8x8xf32>
    %63 = tpu.matmul %62, %50, %cst_33 {dimension_numbers = #tpu.dot_dimension_numbers<[1], [0], [0], [1], [0, 0, 1, 1], [], []>} : vector<8x12xbf16>, vector<12x8xbf16>, vector<8x8xf32> -> vector<8x8xf32>
    %c8 = arith.constant 8 : index
    %c0_34 = arith.constant 0 : index
    %64 = vector.load %arg11[%c8, %c0_34] : memref<32x32xbf16, #tpu.memory_space<vmem>>, vector<8x32xbf16>
    %65 = arith.truncf %63 : vector<8x8xf32> to vector<8x8xbf16>
    %cst_35 = arith.constant dense<0.000000e+00> : vector<8x32xf32>
    %66 = tpu.matmul %65, %64, %cst_35 {dimension_numbers = #tpu.dot_dimension_numbers<[1], [0], [0], [1], [0, 0, 1, 1], [], []>} : vector<8x8xbf16>, vector<8x32xbf16>, vector<8x32xf32> -> vector<8x32xf32>
    %67 = arith.addf %47, %66 : vector<8x32xf32>
    %68 = vector.extract_strided_slice %24 {offsets = [0, 16], sizes = [8, 8], strides = [1, 1]} : vector<8x32xbf16> to vector<8x8xbf16>
    %69 = vector.extract_strided_slice %25 {offsets = [0, 16], sizes = [12, 8], strides = [1, 1]} : vector<12x32xbf16> to vector<12x8xbf16>
    %70 = vector.extract_strided_slice %26 {offsets = [0, 16], sizes = [12, 8], strides = [1, 1]} : vector<12x32xbf16> to vector<12x8xbf16>
    %cst_36 = arith.constant dense<0.000000e+00> : vector<8x12xf32>
    %71 = tpu.matmul %68, %69, %cst_36 {dimension_numbers = #tpu.dot_dimension_numbers<[1], [1], [0], [0], [0, 0, 1, 0], [], []>} : vector<8x8xbf16>, vector<12x8xbf16>, vector<8x12xf32> -> vector<8x12xf32>
    %cst_37 = arith.constant dense<0xFF800000> : vector<8xf32>
    %72 = vector.multi_reduction <maximumf>, %71, %cst_37 [1] : vector<8x12xf32> to vector<8xf32>
    %73 = vector.shape_cast %72 : vector<8xf32> to vector<8x1xf32>
    %74 = vector.broadcast %73 : vector<8x1xf32> to vector<8x12xf32>
    %75 = arith.subf %71, %74 : vector<8x12xf32>
    %76 = math.exp %75 : vector<8x12xf32>
    %cst_38 = arith.constant dense<0.000000e+00> : vector<8xf32>
    %77 = vector.multi_reduction <add>, %76, %cst_38 [1] : vector<8x12xf32> to vector<8xf32>
    %78 = vector.shape_cast %77 : vector<8xf32> to vector<8x1xf32>
    %79 = tpu.reciprocal %78 {approx = true} : vector<8x1xf32> -> vector<8x1xf32>
    %80 = vector.broadcast %79 : vector<8x1xf32> to vector<8x12xf32>
    %81 = arith.mulf %76, %80 : vector<8x12xf32>
    %82 = arith.truncf %81 : vector<8x12xf32> to vector<8x12xbf16>
    %cst_39 = arith.constant dense<0.000000e+00> : vector<8x8xf32>
    %83 = tpu.matmul %82, %70, %cst_39 {dimension_numbers = #tpu.dot_dimension_numbers<[1], [0], [0], [1], [0, 0, 1, 1], [], []>} : vector<8x12xbf16>, vector<12x8xbf16>, vector<8x8xf32> -> vector<8x8xf32>
    %c16 = arith.constant 16 : index
    %c0_40 = arith.constant 0 : index
    %84 = vector.load %arg11[%c16, %c0_40] : memref<32x32xbf16, #tpu.memory_space<vmem>>, vector<8x32xbf16>
    %85 = arith.truncf %83 : vector<8x8xf32> to vector<8x8xbf16>
    %cst_41 = arith.constant dense<0.000000e+00> : vector<8x32xf32>
    %86 = tpu.matmul %85, %84, %cst_41 {dimension_numbers = #tpu.dot_dimension_numbers<[1], [0], [0], [1], [0, 0, 1, 1], [], []>} : vector<8x8xbf16>, vector<8x32xbf16>, vector<8x32xf32> -> vector<8x32xf32>
    %87 = arith.addf %67, %86 : vector<8x32xf32>
    %88 = vector.extract_strided_slice %24 {offsets = [0, 24], sizes = [8, 8], strides = [1, 1]} : vector<8x32xbf16> to vector<8x8xbf16>
    %89 = vector.extract_strided_slice %25 {offsets = [0, 24], sizes = [12, 8], strides = [1, 1]} : vector<12x32xbf16> to vector<12x8xbf16>
    %90 = vector.extract_strided_slice %26 {offsets = [0, 24], sizes = [12, 8], strides = [1, 1]} : vector<12x32xbf16> to vector<12x8xbf16>
    %cst_42 = arith.constant dense<0.000000e+00> : vector<8x12xf32>
    %91 = tpu.matmul %88, %89, %cst_42 {dimension_numbers = #tpu.dot_dimension_numbers<[1], [1], [0], [0], [0, 0, 1, 0], [], []>} : vector<8x8xbf16>, vector<12x8xbf16>, vector<8x12xf32> -> vector<8x12xf32>
    %cst_43 = arith.constant dense<0xFF800000> : vector<8xf32>
    %92 = vector.multi_reduction <maximumf>, %91, %cst_43 [1] : vector<8x12xf32> to vector<8xf32>
    %93 = vector.shape_cast %92 : vector<8xf32> to vector<8x1xf32>
    %94 = vector.broadcast %93 : vector<8x1xf32> to vector<8x12xf32>
    %95 = arith.subf %91, %94 : vector<8x12xf32>
    %96 = math.exp %95 : vector<8x12xf32>
    %cst_44 = arith.constant dense<0.000000e+00> : vector<8xf32>
    %97 = vector.multi_reduction <add>, %96, %cst_44 [1] : vector<8x12xf32> to vector<8xf32>
    %98 = vector.shape_cast %97 : vector<8xf32> to vector<8x1xf32>
    %99 = tpu.reciprocal %98 {approx = true} : vector<8x1xf32> -> vector<8x1xf32>
    %100 = vector.broadcast %99 : vector<8x1xf32> to vector<8x12xf32>
    %101 = arith.mulf %96, %100 : vector<8x12xf32>
    %102 = arith.truncf %101 : vector<8x12xf32> to vector<8x12xbf16>
    %cst_45 = arith.constant dense<0.000000e+00> : vector<8x8xf32>
    %103 = tpu.matmul %102, %90, %cst_45 {dimension_numbers = #tpu.dot_dimension_numbers<[1], [0], [0], [1], [0, 0, 1, 1], [], []>} : vector<8x12xbf16>, vector<12x8xbf16>, vector<8x8xf32> -> vector<8x8xf32>
    %c24 = arith.constant 24 : index
    %c0_46 = arith.constant 0 : index
    %104 = vector.load %arg11[%c24, %c0_46] : memref<32x32xbf16, #tpu.memory_space<vmem>>, vector<8x32xbf16>
    %105 = arith.truncf %103 : vector<8x8xf32> to vector<8x8xbf16>
    %cst_47 = arith.constant dense<0.000000e+00> : vector<8x32xf32>
    %106 = tpu.matmul %105, %104, %cst_47 {dimension_numbers = #tpu.dot_dimension_numbers<[1], [0], [0], [1], [0, 0, 1, 1], [], []>} : vector<8x8xbf16>, vector<8x32xbf16>, vector<8x32xf32> -> vector<8x32xf32>
    %107 = arith.addf %87, %106 : vector<8x32xf32>
    %c0_48 = arith.constant 0 : index
    %c0_49 = arith.constant 0 : index
    %108 = vector.load %arg12[%c0_48, %c0_49] : memref<1x32xf32, #tpu.memory_space<vmem>>, vector<1x32xf32>
    %109 = vector.broadcast %108 : vector<1x32xf32> to vector<8x32xf32>
    %110 = arith.addf %107, %109 : vector<8x32xf32>
    %c0_50 = arith.constant 0 : index
    %c0_51 = arith.constant 0 : index
    %c0_52 = arith.constant 0 : index
    %111 = vector.load %arg4[%c0_50, %c0_51, %c0_52] : memref<1x8x32xf32, #tpu.memory_space<vmem>>, vector<1x8x32xf32>
    %112 = vector.shape_cast %111 : vector<1x8x32xf32> to vector<8x32xf32>
    %113 = arith.addf %112, %110 : vector<8x32xf32>
    %c0_53 = arith.constant 0 : index
    %c0_54 = arith.constant 0 : index
    %114 = vector.load %arg13[%c0_53, %c0_54] : memref<1x32xf32, #tpu.memory_space<vmem>>, vector<1x32xf32>
    %c0_55 = arith.constant 0 : index
    %c0_56 = arith.constant 0 : index
    %115 = vector.load %arg14[%c0_55, %c0_56] : memref<1x32xf32, #tpu.memory_space<vmem>>, vector<1x32xf32>
    %cst_57 = arith.constant dense<0.000000e+00> : vector<8xf32>
    %116 = vector.multi_reduction <add>, %113, %cst_57 [1] : vector<8x32xf32> to vector<8xf32>
    %117 = vector.shape_cast %116 : vector<8xf32> to vector<8x1xf32>
    %cst_58 = arith.constant 3.200000e+01 : f32
    %118 = vector.broadcast %cst_58 : f32 to vector<8x1xf32>
    %119 = arith.divf %117, %118 : vector<8x1xf32>
    %120 = vector.broadcast %119 : vector<8x1xf32> to vector<8x32xf32>
    %121 = arith.subf %113, %120 : vector<8x32xf32>
    %122 = arith.mulf %121, %121 : vector<8x32xf32>
    %cst_59 = arith.constant dense<0.000000e+00> : vector<8xf32>
    %123 = vector.multi_reduction <add>, %122, %cst_59 [1] : vector<8x32xf32> to vector<8xf32>
    %124 = vector.shape_cast %123 : vector<8xf32> to vector<8x1xf32>
    %cst_60 = arith.constant 3.200000e+01 : f32
    %125 = vector.broadcast %cst_60 : f32 to vector<8x1xf32>
    %126 = arith.divf %124, %125 : vector<8x1xf32>
    %127 = vector.broadcast %119 : vector<8x1xf32> to vector<8x32xf32>
    %128 = arith.subf %113, %127 : vector<8x32xf32>
    %cst_61 = arith.constant 9.99999974E-6 : f32
    %129 = vector.broadcast %cst_61 : f32 to vector<8x1xf32>
    %130 = arith.addf %126, %129 : vector<8x1xf32>
    %131 = math.rsqrt %130 : vector<8x1xf32>
    %132 = vector.broadcast %131 : vector<8x1xf32> to vector<8x32xf32>
    %133 = arith.mulf %128, %132 : vector<8x32xf32>
    %134 = vector.broadcast %114 : vector<1x32xf32> to vector<8x32xf32>
    %135 = arith.mulf %133, %134 : vector<8x32xf32>
    %136 = vector.broadcast %115 : vector<1x32xf32> to vector<8x32xf32>
    %137 = arith.addf %135, %136 : vector<8x32xf32>
    %c0_62 = arith.constant 0 : index
    %c0_63 = arith.constant 0 : index
    %c0_64 = arith.constant 0 : index
    %138 = vector.load %arg15[%c0_62, %c0_63, %c0_64] : memref<1x8x32xf32, #tpu.memory_space<vmem>>, vector<1x8x32xf32>
    %139 = vector.shape_cast %138 : vector<1x8x32xf32> to vector<8x32xf32>
    %140 = vector.shape_cast %137 : vector<8x32xf32> to vector<1x8x32xf32>
    tpu.vector_store %arg15[%c0_62, %c0_63, %c0_64], %140 {strides = array<i32>} : memref<1x8x32xf32, #tpu.memory_space<vmem>>, vector<1x8x32xf32>,
    return
  }
  func.func @transform_0(%arg0: i32) -> (i32, i32, i32) {
    %c0_i32 = arith.constant 0 : i32
    %c0_i32_0 = arith.constant 0 : i32
    %c0_i32_1 = arith.constant 0 : i32
    return %arg0, %c0_i32, %c0_i32_0 : i32, i32, i32
  }
  func.func @transform_1(%arg0: i32) -> (i32, i32, i32) {
    %c0_i32 = arith.constant 0 : i32
    %c0_i32_0 = arith.constant 0 : i32
    %c0_i32_1 = arith.constant 0 : i32
    return %arg0, %c0_i32, %c0_i32_0 : i32, i32, i32
  }
  func.func @transform_2(%arg0: i32) -> (i32, i32, i32) {
    %c0_i32 = arith.constant 0 : i32
    %c0_i32_0 = arith.constant 0 : i32
    %c0_i32_1 = arith.constant 0 : i32
    return %arg0, %c0_i32, %c0_i32_0 : i32, i32, i32
  }
  func.func @transform_3(%arg0: i32) -> (i32, i32, i32) {
    %c0_i32 = arith.constant 0 : i32
    %c0_i32_0 = arith.constant 0 : i32
    %c0_i32_1 = arith.constant 0 : i32
    return %arg0, %c0_i32, %c0_i32_0 : i32, i32, i32
  }
  func.func @transform_4(%arg0: i32) -> (i32, i32) {
    %c0_i32 = arith.constant 0 : i32
    %c0_i32_0 = arith.constant 0 : i32
    %c0_i32_1 = arith.constant 0 : i32
    return %c0_i32, %c0_i32_0 : i32, i32
  }
  func.func @transform_5(%arg0: i32) -> (i32, i32) {
    %c0_i32 = arith.constant 0 : i32
    %c0_i32_0 = arith.constant 0 : i32
    %c0_i32_1 = arith.constant 0 : i32
    return %c0_i32, %c0_i32_0 : i32, i32
  }
  func.func @transform_6(%arg0: i32) -> (i32, i32) {
    %c0_i32 = arith.constant 0 : i32
    %c0_i32_0 = arith.constant 0 : i32
    %c0_i32_1 = arith.constant 0 : i32
    return %c0_i32, %c0_i32_0 : i32, i32
  }
  func.func @transform_7(%arg0: i32) -> (i32, i32) {
    %c0_i32 = arith.constant 0 : i32
    %c0_i32_0 = arith.constant 0 : i32
    %c0_i32_1 = arith.constant 0 : i32
    return %c0_i32, %c0_i32_0 : i32, i32
  }
  func.func @transform_8(%arg0: i32) -> (i32, i32) {
    %c0_i32 = arith.constant 0 : i32
    %c0_i32_0 = arith.constant 0 : i32
    %c0_i32_1 = arith.constant 0 : i32
    return %c0_i32, %c0_i32_0 : i32, i32
  }
  func.func @transform_9(%arg0: i32) -> (i32, i32) {
    %c0_i32 = arith.constant 0 : i32
    %c0_i32_0 = arith.constant 0 : i32
    %c0_i32_1 = arith.constant 0 : i32
    return %c0_i32, %c0_i32_0 : i32, i32
  }
  func.func @transform_10(%arg0: i32) -> (i32, i32) {
    %c0_i32 = arith.constant 0 : i32
    %c0_i32_0 = arith.constant 0 : i32
    %c0_i32_1 = arith.constant 0 : i32
    return %c0_i32, %c0_i32_0 : i32, i32
  }
  func.func @transform_11(%arg0: i32) -> (i32, i32) {
    %c0_i32 = arith.constant 0 : i32
    %c0_i32_0 = arith.constant 0 : i32
    %c0_i32_1 = arith.constant 0 : i32
    return %c0_i32, %c0_i32_0 : i32, i32
  }
  func.func @transform_12(%arg0: i32) -> (i32, i32) {
    %c0_i32 = arith.constant 0 : i32
    %c0_i32_0 = arith.constant 0 : i32
    %c0_i32_1 = arith.constant 0 : i32
    return %c0_i32, %c0_i32_0 : i32, i32
  }
  func.func @transform_13(%arg0: i32) -> (i32, i32) {
    %c0_i32 = arith.constant 0 : i32
    %c0_i32_0 = arith.constant 0 : i32
    %c0_i32_1 = arith.constant 0 : i32
    return %c0_i32, %c0_i32_0 : i32, i32
  }
  func.func @transform_14(%arg0: i32) -> (i32, i32, i32) {
    %c0_i32 = arith.constant 0 : i32
    %c0_i32_0 = arith.constant 0 : i32
    %c0_i32_1 = arith.constant 0 : i32
    return %arg0, %c0_i32, %c0_i32_0 : i32, i32, i32
  }
}

module attributes {stable_mosaic.version = 11 : i64} {
  func.func @_mha_kernel(%arg0: i32, %arg1: memref<1x8x32xf32, #tpu.memory_space<vmem>>, %arg2: memref<1x8x32xf32, #tpu.memory_space<vmem>>, %arg3: memref<1x8x32xf32, #tpu.memory_space<vmem>>, %arg4: memref<1x8x32xf32, #tpu.memory_space<vmem>>, %arg5: memref<32x32xbf16, #tpu.memory_space<vmem>>, %arg6: memref<1x32xf32, #tpu.memory_space<vmem>>, %arg7: memref<32x32xbf16, #tpu.memory_space<vmem>>, %arg8: memref<1x32xf32, #tpu.memory_space<vmem>>, %arg9: memref<32x32xbf16, #tpu.memory_space<vmem>>, %arg10: memref<1x32xf32, #tpu.memory_space<vmem>>, %arg11: memref<32x32xbf16, #tpu.memory_space<vmem>>, %arg12: memref<1x32xf32, #tpu.memory_space<vmem>>, %arg13: memref<1x32xf32, #tpu.memory_space<vmem>>, %arg14: memref<1x32xf32, #tpu.memory_space<vmem>>, %arg15: memref<1x8x32xf32, #tpu.memory_space<vmem>>) attributes {dimension_semantics = [#tpu.dimension_semantics<parallel>], iteration_bounds = array<i64: 2>, scalar_prefetch = 0 : i64, scratch_operands = 0 : i64, tpu.core_type = #tpu.core_type<tc>, window_params = [{transform_indices = @transform_0, window_bounds = array<i64: 1, 8, 32>}, {transform_indices = @transform_1, window_bounds = array<i64: 1, 8, 32>}, {transform_indices = @transform_2, window_bounds = array<i64: 1, 8, 32>}, {transform_indices = @transform_3, window_bounds = array<i64: 1, 8, 32>}, {pipeline_mode = #tpu.pipeline_mode<synchronous>, transform_indices = @transform_4, window_bounds = array<i64: 32, 32>}, {pipeline_mode = #tpu.pipeline_mode<synchronous>, transform_indices = @transform_5, window_bounds = array<i64: 1, 32>}, {pipeline_mode = #tpu.pipeline_mode<synchronous>, transform_indices = @transform_6, window_bounds = array<i64: 32, 32>}, {pipeline_mode = #tpu.pipeline_mode<synchronous>, transform_indices = @transform_7, window_bounds = array<i64: 1, 32>}, {pipeline_mode = #tpu.pipeline_mode<synchronous>, transform_indices = @transform_8, window_bounds = array<i64: 32, 32>}, {pipeline_mode = #tpu.pipeline_mode<synchronous>, transform_indices = @transform_9, window_bounds = array<i64: 1, 32>}, {pipeline_mode = #tpu.pipeline_mode<synchronous>, transform_indices = @transform_10, window_bounds = array<i64: 32, 32>}, {pipeline_mode = #tpu.pipeline_mode<synchronous>, transform_indices = @transform_11, window_bounds = array<i64: 1, 32>}, {pipeline_mode = #tpu.pipeline_mode<synchronous>, transform_indices = @transform_12, window_bounds = array<i64: 1, 32>}, {pipeline_mode = #tpu.pipeline_mode<synchronous>, transform_indices = @transform_13, window_bounds = array<i64: 1, 32>}, {transform_indices = @transform_14, window_bounds = array<i64: 1, 8, 32>}]} {
    %c0 = arith.constant 0 : index
    %c0_0 = arith.constant 0 : index
    %c0_1 = arith.constant 0 : index
    %0 = vector.load %arg1[%c0, %c0_0, %c0_1] : memref<1x8x32xf32, #tpu.memory_space<vmem>>, vector<1x8x32xf32>
    %1 = vector.shape_cast %0 : vector<1x8x32xf32> to vector<8x32xf32>
    %2 = arith.truncf %1 : vector<8x32xf32> to vector<8x32xbf16>
    %c0_2 = arith.constant 0 : index
    %c0_3 = arith.constant 0 : index
    %c0_4 = arith.constant 0 : index
    %3 = vector.load %arg2[%c0_2, %c0_3, %c0_4] : memref<1x8x32xf32, #tpu.memory_space<vmem>>, vector<1x8x32xf32>
    %4 = vector.shape_cast %3 : vector<1x8x32xf32> to vector<8x32xf32>
    %5 = arith.truncf %4 : vector<8x32xf32> to vector<8x32xbf16>
    %c0_5 = arith.constant 0 : index
    %c0_6 = arith.constant 0 : index
    %c0_7 = arith.constant 0 : index
    %6 = vector.load %arg3[%c0_5, %c0_6, %c0_7] : memref<1x8x32xf32, #tpu.memory_space<vmem>>, vector<1x8x32xf32>
    %7 = vector.shape_cast %6 : vector<1x8x32xf32> to vector<8x32xf32>
    %8 = arith.truncf %7 : vector<8x32xf32> to vector<8x32xbf16>
    %c0_8 = arith.constant 0 : index
    %c0_9 = arith.constant 0 : index
    %9 = vector.load %arg5[%c0_8, %c0_9] : memref<32x32xbf16, #tpu.memory_space<vmem>>, vector<32x32xbf16>
    %cst = arith.constant dense<0.000000e+00> : vector<8x32xf32>
    %10 = tpu.matmul %2, %9, %cst {dimension_numbers = #tpu.dot_dimension_numbers<[1], [0], [0], [1], [0, 0, 1, 1], [], []>} : vector<8x32xbf16>, vector<32x32xbf16>, vector<8x32xf32> -> vector<8x32xf32>
    %c0_10 = arith.constant 0 : index
    %c0_11 = arith.constant 0 : index
    %11 = vector.load %arg6[%c0_10, %c0_11] : memref<1x32xf32, #tpu.memory_space<vmem>>, vector<1x32xf32>
    %12 = vector.broadcast %11 : vector<1x32xf32> to vector<8x32xf32>
    %13 = arith.addf %10, %12 : vector<8x32xf32>
    %c0_12 = arith.constant 0 : index
    %c0_13 = arith.constant 0 : index
    %14 = vector.load %arg7[%c0_12, %c0_13] : memref<32x32xbf16, #tpu.memory_space<vmem>>, vector<32x32xbf16>
    %cst_14 = arith.constant dense<0.000000e+00> : vector<8x32xf32>
    %15 = tpu.matmul %5, %14, %cst_14 {dimension_numbers = #tpu.dot_dimension_numbers<[1], [0], [0], [1], [0, 0, 1, 1], [], []>} : vector<8x32xbf16>, vector<32x32xbf16>, vector<8x32xf32> -> vector<8x32xf32>
    %c0_15 = arith.constant 0 : index
    %c0_16 = arith.constant 0 : index
    %16 = vector.load %arg8[%c0_15, %c0_16] : memref<1x32xf32, #tpu.memory_space<vmem>>, vector<1x32xf32>
    %17 = vector.broadcast %16 : vector<1x32xf32> to vector<8x32xf32>
    %18 = arith.addf %15, %17 : vector<8x32xf32>
    %c0_17 = arith.constant 0 : index
    %c0_18 = arith.constant 0 : index
    %19 = vector.load %arg9[%c0_17, %c0_18] : memref<32x32xbf16, #tpu.memory_space<vmem>>, vector<32x32xbf16>
    %cst_19 = arith.constant dense<0.000000e+00> : vector<8x32xf32>
    %20 = tpu.matmul %8, %19, %cst_19 {dimension_numbers = #tpu.dot_dimension_numbers<[1], [0], [0], [1], [0, 0, 1, 1], [], []>} : vector<8x32xbf16>, vector<32x32xbf16>, vector<8x32xf32> -> vector<8x32xf32>
    %c0_20 = arith.constant 0 : index
    %c0_21 = arith.constant 0 : index
    %21 = vector.load %arg10[%c0_20, %c0_21] : memref<1x32xf32, #tpu.memory_space<vmem>>, vector<1x32xf32>
    %22 = vector.broadcast %21 : vector<1x32xf32> to vector<8x32xf32>
    %23 = arith.addf %20, %22 : vector<8x32xf32>
    %24 = arith.truncf %13 : vector<8x32xf32> to vector<8x32xbf16>
    %25 = arith.truncf %18 : vector<8x32xf32> to vector<8x32xbf16>
    %26 = arith.truncf %23 : vector<8x32xf32> to vector<8x32xbf16>
    %27 = tpu.iota {dimensions = array<i32: 0>} : vector<8x8xi32>
    %28 = tpu.iota {dimensions = array<i32: 1>} : vector<8x8xi32>
    %29 = arith.cmpi sle, %28, %27 : vector<8x8xi32>
    %cst_22 = arith.constant 0.000000e+00 : f32
    %cst_23 = arith.constant -1.000000e+30 : f32
    %30 = vector.broadcast %cst_22 : f32 to vector<8x8xf32>
    %31 = vector.broadcast %cst_23 : f32 to vector<8x8xf32>
    %32 = arith.select %29, %30, %31 : vector<8x8xi1>, vector<8x8xf32>
    %cst_24 = arith.constant 0.000000e+00 : f32
    %33 = vector.broadcast %cst_24 : f32 to vector<8x32xf32>
    %34 = vector.extract_strided_slice %24 {offsets = [0, 0], sizes = [8, 8], strides = [1, 1]} : vector<8x32xbf16> to vector<8x8xbf16>
    %35 = vector.extract_strided_slice %25 {offsets = [0, 0], sizes = [8, 8], strides = [1, 1]} : vector<8x32xbf16> to vector<8x8xbf16>
    %36 = vector.extract_strided_slice %26 {offsets = [0, 0], sizes = [8, 8], strides = [1, 1]} : vector<8x32xbf16> to vector<8x8xbf16>
    %cst_25 = arith.constant dense<0.000000e+00> : vector<8x8xf32>
    %37 = tpu.matmul %34, %35, %cst_25 {dimension_numbers = #tpu.dot_dimension_numbers<[1], [1], [0], [0], [0, 0, 1, 0], [], []>} : vector<8x8xbf16>, vector<8x8xbf16>, vector<8x8xf32> -> vector<8x8xf32>
    %38 = arith.addf %37, %32 : vector<8x8xf32>
    %cst_26 = arith.constant dense<0xFF800000> : vector<8xf32>
    %39 = vector.multi_reduction <maximumf>, %38, %cst_26 [1] : vector<8x8xf32> to vector<8xf32>
    %40 = vector.shape_cast %39 : vector<8xf32> to vector<8x1xf32>
    %41 = vector.broadcast %40 : vector<8x1xf32> to vector<8x8xf32>
    %42 = arith.subf %38, %41 : vector<8x8xf32>
    %43 = math.exp %42 : vector<8x8xf32>
    %cst_27 = arith.constant dense<0.000000e+00> : vector<8xf32>
    %44 = vector.multi_reduction <add>, %43, %cst_27 [1] : vector<8x8xf32> to vector<8xf32>
    %45 = vector.shape_cast %44 : vector<8xf32> to vector<8x1xf32>
    %46 = tpu.reciprocal %45 {approx = true} : vector<8x1xf32> -> vector<8x1xf32>
    %47 = vector.broadcast %46 : vector<8x1xf32> to vector<8x8xf32>
    %48 = arith.mulf %43, %47 : vector<8x8xf32>
    %49 = arith.truncf %48 : vector<8x8xf32> to vector<8x8xbf16>
    %cst_28 = arith.constant dense<0.000000e+00> : vector<8x8xf32>
    %50 = tpu.matmul %49, %36, %cst_28 {dimension_numbers = #tpu.dot_dimension_numbers<[1], [0], [0], [1], [0, 0, 1, 1], [], []>} : vector<8x8xbf16>, vector<8x8xbf16>, vector<8x8xf32> -> vector<8x8xf32>
    %c0_29 = arith.constant 0 : index
    %c0_30 = arith.constant 0 : index
    %51 = vector.load %arg11[%c0_29, %c0_30] : memref<32x32xbf16, #tpu.memory_space<vmem>>, vector<8x32xbf16>
    %52 = arith.truncf %50 : vector<8x8xf32> to vector<8x8xbf16>
    %cst_31 = arith.constant dense<0.000000e+00> : vector<8x32xf32>
    %53 = tpu.matmul %52, %51, %cst_31 {dimension_numbers = #tpu.dot_dimension_numbers<[1], [0], [0], [1], [0, 0, 1, 1], [], []>} : vector<8x8xbf16>, vector<8x32xbf16>, vector<8x32xf32> -> vector<8x32xf32>
    %54 = arith.addf %33, %53 : vector<8x32xf32>
    %55 = vector.extract_strided_slice %24 {offsets = [0, 8], sizes = [8, 8], strides = [1, 1]} : vector<8x32xbf16> to vector<8x8xbf16>
    %56 = vector.extract_strided_slice %25 {offsets = [0, 8], sizes = [8, 8], strides = [1, 1]} : vector<8x32xbf16> to vector<8x8xbf16>
    %57 = vector.extract_strided_slice %26 {offsets = [0, 8], sizes = [8, 8], strides = [1, 1]} : vector<8x32xbf16> to vector<8x8xbf16>
    %cst_32 = arith.constant dense<0.000000e+00> : vector<8x8xf32>
    %58 = tpu.matmul %55, %56, %cst_32 {dimension_numbers = #tpu.dot_dimension_numbers<[1], [1], [0], [0], [0, 0, 1, 0], [], []>} : vector<8x8xbf16>, vector<8x8xbf16>, vector<8x8xf32> -> vector<8x8xf32>
    %59 = arith.addf %58, %32 : vector<8x8xf32>
    %cst_33 = arith.constant dense<0xFF800000> : vector<8xf32>
    %60 = vector.multi_reduction <maximumf>, %59, %cst_33 [1] : vector<8x8xf32> to vector<8xf32>
    %61 = vector.shape_cast %60 : vector<8xf32> to vector<8x1xf32>
    %62 = vector.broadcast %61 : vector<8x1xf32> to vector<8x8xf32>
    %63 = arith.subf %59, %62 : vector<8x8xf32>
    %64 = math.exp %63 : vector<8x8xf32>
    %cst_34 = arith.constant dense<0.000000e+00> : vector<8xf32>
    %65 = vector.multi_reduction <add>, %64, %cst_34 [1] : vector<8x8xf32> to vector<8xf32>
    %66 = vector.shape_cast %65 : vector<8xf32> to vector<8x1xf32>
    %67 = tpu.reciprocal %66 {approx = true} : vector<8x1xf32> -> vector<8x1xf32>
    %68 = vector.broadcast %67 : vector<8x1xf32> to vector<8x8xf32>
    %69 = arith.mulf %64, %68 : vector<8x8xf32>
    %70 = arith.truncf %69 : vector<8x8xf32> to vector<8x8xbf16>
    %cst_35 = arith.constant dense<0.000000e+00> : vector<8x8xf32>
    %71 = tpu.matmul %70, %57, %cst_35 {dimension_numbers = #tpu.dot_dimension_numbers<[1], [0], [0], [1], [0, 0, 1, 1], [], []>} : vector<8x8xbf16>, vector<8x8xbf16>, vector<8x8xf32> -> vector<8x8xf32>
    %c8 = arith.constant 8 : index
    %c0_36 = arith.constant 0 : index
    %72 = vector.load %arg11[%c8, %c0_36] : memref<32x32xbf16, #tpu.memory_space<vmem>>, vector<8x32xbf16>
    %73 = arith.truncf %71 : vector<8x8xf32> to vector<8x8xbf16>
    %cst_37 = arith.constant dense<0.000000e+00> : vector<8x32xf32>
    %74 = tpu.matmul %73, %72, %cst_37 {dimension_numbers = #tpu.dot_dimension_numbers<[1], [0], [0], [1], [0, 0, 1, 1], [], []>} : vector<8x8xbf16>, vector<8x32xbf16>, vector<8x32xf32> -> vector<8x32xf32>
    %75 = arith.addf %54, %74 : vector<8x32xf32>
    %76 = vector.extract_strided_slice %24 {offsets = [0, 16], sizes = [8, 8], strides = [1, 1]} : vector<8x32xbf16> to vector<8x8xbf16>
    %77 = vector.extract_strided_slice %25 {offsets = [0, 16], sizes = [8, 8], strides = [1, 1]} : vector<8x32xbf16> to vector<8x8xbf16>
    %78 = vector.extract_strided_slice %26 {offsets = [0, 16], sizes = [8, 8], strides = [1, 1]} : vector<8x32xbf16> to vector<8x8xbf16>
    %cst_38 = arith.constant dense<0.000000e+00> : vector<8x8xf32>
    %79 = tpu.matmul %76, %77, %cst_38 {dimension_numbers = #tpu.dot_dimension_numbers<[1], [1], [0], [0], [0, 0, 1, 0], [], []>} : vector<8x8xbf16>, vector<8x8xbf16>, vector<8x8xf32> -> vector<8x8xf32>
    %80 = arith.addf %79, %32 : vector<8x8xf32>
    %cst_39 = arith.constant dense<0xFF800000> : vector<8xf32>
    %81 = vector.multi_reduction <maximumf>, %80, %cst_39 [1] : vector<8x8xf32> to vector<8xf32>
    %82 = vector.shape_cast %81 : vector<8xf32> to vector<8x1xf32>
    %83 = vector.broadcast %82 : vector<8x1xf32> to vector<8x8xf32>
    %84 = arith.subf %80, %83 : vector<8x8xf32>
    %85 = math.exp %84 : vector<8x8xf32>
    %cst_40 = arith.constant dense<0.000000e+00> : vector<8xf32>
    %86 = vector.multi_reduction <add>, %85, %cst_40 [1] : vector<8x8xf32> to vector<8xf32>
    %87 = vector.shape_cast %86 : vector<8xf32> to vector<8x1xf32>
    %88 = tpu.reciprocal %87 {approx = true} : vector<8x1xf32> -> vector<8x1xf32>
    %89 = vector.broadcast %88 : vector<8x1xf32> to vector<8x8xf32>
    %90 = arith.mulf %85, %89 : vector<8x8xf32>
    %91 = arith.truncf %90 : vector<8x8xf32> to vector<8x8xbf16>
    %cst_41 = arith.constant dense<0.000000e+00> : vector<8x8xf32>
    %92 = tpu.matmul %91, %78, %cst_41 {dimension_numbers = #tpu.dot_dimension_numbers<[1], [0], [0], [1], [0, 0, 1, 1], [], []>} : vector<8x8xbf16>, vector<8x8xbf16>, vector<8x8xf32> -> vector<8x8xf32>
    %c16 = arith.constant 16 : index
    %c0_42 = arith.constant 0 : index
    %93 = vector.load %arg11[%c16, %c0_42] : memref<32x32xbf16, #tpu.memory_space<vmem>>, vector<8x32xbf16>
    %94 = arith.truncf %92 : vector<8x8xf32> to vector<8x8xbf16>
    %cst_43 = arith.constant dense<0.000000e+00> : vector<8x32xf32>
    %95 = tpu.matmul %94, %93, %cst_43 {dimension_numbers = #tpu.dot_dimension_numbers<[1], [0], [0], [1], [0, 0, 1, 1], [], []>} : vector<8x8xbf16>, vector<8x32xbf16>, vector<8x32xf32> -> vector<8x32xf32>
    %96 = arith.addf %75, %95 : vector<8x32xf32>
    %97 = vector.extract_strided_slice %24 {offsets = [0, 24], sizes = [8, 8], strides = [1, 1]} : vector<8x32xbf16> to vector<8x8xbf16>
    %98 = vector.extract_strided_slice %25 {offsets = [0, 24], sizes = [8, 8], strides = [1, 1]} : vector<8x32xbf16> to vector<8x8xbf16>
    %99 = vector.extract_strided_slice %26 {offsets = [0, 24], sizes = [8, 8], strides = [1, 1]} : vector<8x32xbf16> to vector<8x8xbf16>
    %cst_44 = arith.constant dense<0.000000e+00> : vector<8x8xf32>
    %100 = tpu.matmul %97, %98, %cst_44 {dimension_numbers = #tpu.dot_dimension_numbers<[1], [1], [0], [0], [0, 0, 1, 0], [], []>} : vector<8x8xbf16>, vector<8x8xbf16>, vector<8x8xf32> -> vector<8x8xf32>
    %101 = arith.addf %100, %32 : vector<8x8xf32>
    %cst_45 = arith.constant dense<0xFF800000> : vector<8xf32>
    %102 = vector.multi_reduction <maximumf>, %101, %cst_45 [1] : vector<8x8xf32> to vector<8xf32>
    %103 = vector.shape_cast %102 : vector<8xf32> to vector<8x1xf32>
    %104 = vector.broadcast %103 : vector<8x1xf32> to vector<8x8xf32>
    %105 = arith.subf %101, %104 : vector<8x8xf32>
    %106 = math.exp %105 : vector<8x8xf32>
    %cst_46 = arith.constant dense<0.000000e+00> : vector<8xf32>
    %107 = vector.multi_reduction <add>, %106, %cst_46 [1] : vector<8x8xf32> to vector<8xf32>
    %108 = vector.shape_cast %107 : vector<8xf32> to vector<8x1xf32>
    %109 = tpu.reciprocal %108 {approx = true} : vector<8x1xf32> -> vector<8x1xf32>
    %110 = vector.broadcast %109 : vector<8x1xf32> to vector<8x8xf32>
    %111 = arith.mulf %106, %110 : vector<8x8xf32>
    %112 = arith.truncf %111 : vector<8x8xf32> to vector<8x8xbf16>
    %cst_47 = arith.constant dense<0.000000e+00> : vector<8x8xf32>
    %113 = tpu.matmul %112, %99, %cst_47 {dimension_numbers = #tpu.dot_dimension_numbers<[1], [0], [0], [1], [0, 0, 1, 1], [], []>} : vector<8x8xbf16>, vector<8x8xbf16>, vector<8x8xf32> -> vector<8x8xf32>
    %c24 = arith.constant 24 : index
    %c0_48 = arith.constant 0 : index
    %114 = vector.load %arg11[%c24, %c0_48] : memref<32x32xbf16, #tpu.memory_space<vmem>>, vector<8x32xbf16>
    %115 = arith.truncf %113 : vector<8x8xf32> to vector<8x8xbf16>
    %cst_49 = arith.constant dense<0.000000e+00> : vector<8x32xf32>
    %116 = tpu.matmul %115, %114, %cst_49 {dimension_numbers = #tpu.dot_dimension_numbers<[1], [0], [0], [1], [0, 0, 1, 1], [], []>} : vector<8x8xbf16>, vector<8x32xbf16>, vector<8x32xf32> -> vector<8x32xf32>
    %117 = arith.addf %96, %116 : vector<8x32xf32>
    %c0_50 = arith.constant 0 : index
    %c0_51 = arith.constant 0 : index
    %118 = vector.load %arg12[%c0_50, %c0_51] : memref<1x32xf32, #tpu.memory_space<vmem>>, vector<1x32xf32>
    %119 = vector.broadcast %118 : vector<1x32xf32> to vector<8x32xf32>
    %120 = arith.addf %117, %119 : vector<8x32xf32>
    %c0_52 = arith.constant 0 : index
    %c0_53 = arith.constant 0 : index
    %c0_54 = arith.constant 0 : index
    %121 = vector.load %arg4[%c0_52, %c0_53, %c0_54] : memref<1x8x32xf32, #tpu.memory_space<vmem>>, vector<1x8x32xf32>
    %122 = vector.shape_cast %121 : vector<1x8x32xf32> to vector<8x32xf32>
    %c0_55 = arith.constant 0 : index
    %c0_56 = arith.constant 0 : index
    %123 = vector.load %arg13[%c0_55, %c0_56] : memref<1x32xf32, #tpu.memory_space<vmem>>, vector<1x32xf32>
    %c0_57 = arith.constant 0 : index
    %c0_58 = arith.constant 0 : index
    %124 = vector.load %arg14[%c0_57, %c0_58] : memref<1x32xf32, #tpu.memory_space<vmem>>, vector<1x32xf32>
    %cst_59 = arith.constant dense<0.000000e+00> : vector<8xf32>
    %125 = vector.multi_reduction <add>, %122, %cst_59 [1] : vector<8x32xf32> to vector<8xf32>
    %126 = vector.shape_cast %125 : vector<8xf32> to vector<8x1xf32>
    %cst_60 = arith.constant 3.200000e+01 : f32
    %127 = vector.broadcast %cst_60 : f32 to vector<8x1xf32>
    %128 = arith.divf %126, %127 : vector<8x1xf32>
    %129 = vector.broadcast %128 : vector<8x1xf32> to vector<8x32xf32>
    %130 = arith.subf %122, %129 : vector<8x32xf32>
    %131 = arith.mulf %130, %130 : vector<8x32xf32>
    %cst_61 = arith.constant dense<0.000000e+00> : vector<8xf32>
    %132 = vector.multi_reduction <add>, %131, %cst_61 [1] : vector<8x32xf32> to vector<8xf32>
    %133 = vector.shape_cast %132 : vector<8xf32> to vector<8x1xf32>
    %cst_62 = arith.constant 3.200000e+01 : f32
    %134 = vector.broadcast %cst_62 : f32 to vector<8x1xf32>
    %135 = arith.divf %133, %134 : vector<8x1xf32>
    %136 = vector.broadcast %128 : vector<8x1xf32> to vector<8x32xf32>
    %137 = arith.subf %122, %136 : vector<8x32xf32>
    %cst_63 = arith.constant 9.99999974E-6 : f32
    %138 = vector.broadcast %cst_63 : f32 to vector<8x1xf32>
    %139 = arith.addf %135, %138 : vector<8x1xf32>
    %140 = math.rsqrt %139 : vector<8x1xf32>
    %141 = vector.broadcast %140 : vector<8x1xf32> to vector<8x32xf32>
    %142 = arith.mulf %137, %141 : vector<8x32xf32>
    %143 = vector.broadcast %123 : vector<1x32xf32> to vector<8x32xf32>
    %144 = arith.mulf %142, %143 : vector<8x32xf32>
    %145 = vector.broadcast %124 : vector<1x32xf32> to vector<8x32xf32>
    %146 = arith.addf %144, %145 : vector<8x32xf32>
    %147 = arith.addf %146, %120 : vector<8x32xf32>
    %c0_64 = arith.constant 0 : index
    %c0_65 = arith.constant 0 : index
    %c0_66 = arith.constant 0 : index
    %148 = vector.load %arg15[%c0_64, %c0_65, %c0_66] : memref<1x8x32xf32, #tpu.memory_space<vmem>>, vector<1x8x32xf32>
    %149 = vector.shape_cast %148 : vector<1x8x32xf32> to vector<8x32xf32>
    %150 = vector.shape_cast %147 : vector<8x32xf32> to vector<1x8x32xf32>
    tpu.vector_store %arg15[%c0_64, %c0_65, %c0_66], %150 {strides = array<i32>} : memref<1x8x32xf32, #tpu.memory_space<vmem>>, vector<1x8x32xf32>,
    return
  }
  func.func @transform_0(%arg0: i32) -> (i32, i32, i32) {
    %c0_i32 = arith.constant 0 : i32
    %c0_i32_0 = arith.constant 0 : i32
    %c0_i32_1 = arith.constant 0 : i32
    return %arg0, %c0_i32, %c0_i32_0 : i32, i32, i32
  }
  func.func @transform_1(%arg0: i32) -> (i32, i32, i32) {
    %c0_i32 = arith.constant 0 : i32
    %c0_i32_0 = arith.constant 0 : i32
    %c0_i32_1 = arith.constant 0 : i32
    return %arg0, %c0_i32, %c0_i32_0 : i32, i32, i32
  }
  func.func @transform_2(%arg0: i32) -> (i32, i32, i32) {
    %c0_i32 = arith.constant 0 : i32
    %c0_i32_0 = arith.constant 0 : i32
    %c0_i32_1 = arith.constant 0 : i32
    return %arg0, %c0_i32, %c0_i32_0 : i32, i32, i32
  }
  func.func @transform_3(%arg0: i32) -> (i32, i32, i32) {
    %c0_i32 = arith.constant 0 : i32
    %c0_i32_0 = arith.constant 0 : i32
    %c0_i32_1 = arith.constant 0 : i32
    return %arg0, %c0_i32, %c0_i32_0 : i32, i32, i32
  }
  func.func @transform_4(%arg0: i32) -> (i32, i32) {
    %c0_i32 = arith.constant 0 : i32
    %c0_i32_0 = arith.constant 0 : i32
    %c0_i32_1 = arith.constant 0 : i32
    return %c0_i32, %c0_i32_0 : i32, i32
  }
  func.func @transform_5(%arg0: i32) -> (i32, i32) {
    %c0_i32 = arith.constant 0 : i32
    %c0_i32_0 = arith.constant 0 : i32
    %c0_i32_1 = arith.constant 0 : i32
    return %c0_i32, %c0_i32_0 : i32, i32
  }
  func.func @transform_6(%arg0: i32) -> (i32, i32) {
    %c0_i32 = arith.constant 0 : i32
    %c0_i32_0 = arith.constant 0 : i32
    %c0_i32_1 = arith.constant 0 : i32
    return %c0_i32, %c0_i32_0 : i32, i32
  }
  func.func @transform_7(%arg0: i32) -> (i32, i32) {
    %c0_i32 = arith.constant 0 : i32
    %c0_i32_0 = arith.constant 0 : i32
    %c0_i32_1 = arith.constant 0 : i32
    return %c0_i32, %c0_i32_0 : i32, i32
  }
  func.func @transform_8(%arg0: i32) -> (i32, i32) {
    %c0_i32 = arith.constant 0 : i32
    %c0_i32_0 = arith.constant 0 : i32
    %c0_i32_1 = arith.constant 0 : i32
    return %c0_i32, %c0_i32_0 : i32, i32
  }
  func.func @transform_9(%arg0: i32) -> (i32, i32) {
    %c0_i32 = arith.constant 0 : i32
    %c0_i32_0 = arith.constant 0 : i32
    %c0_i32_1 = arith.constant 0 : i32
    return %c0_i32, %c0_i32_0 : i32, i32
  }
  func.func @transform_10(%arg0: i32) -> (i32, i32) {
    %c0_i32 = arith.constant 0 : i32
    %c0_i32_0 = arith.constant 0 : i32
    %c0_i32_1 = arith.constant 0 : i32
    return %c0_i32, %c0_i32_0 : i32, i32
  }
  func.func @transform_11(%arg0: i32) -> (i32, i32) {
    %c0_i32 = arith.constant 0 : i32
    %c0_i32_0 = arith.constant 0 : i32
    %c0_i32_1 = arith.constant 0 : i32
    return %c0_i32, %c0_i32_0 : i32, i32
  }
  func.func @transform_12(%arg0: i32) -> (i32, i32) {
    %c0_i32 = arith.constant 0 : i32
    %c0_i32_0 = arith.constant 0 : i32
    %c0_i32_1 = arith.constant 0 : i32
    return %c0_i32, %c0_i32_0 : i32, i32
  }
  func.func @transform_13(%arg0: i32) -> (i32, i32) {
    %c0_i32 = arith.constant 0 : i32
    %c0_i32_0 = arith.constant 0 : i32
    %c0_i32_1 = arith.constant 0 : i32
    return %c0_i32, %c0_i32_0 : i32, i32
  }
  func.func @transform_14(%arg0: i32) -> (i32, i32, i32) {
    %c0_i32 = arith.constant 0 : i32
    %c0_i32_0 = arith.constant 0 : i32
    %c0_i32_1 = arith.constant 0 : i32
    return %arg0, %c0_i32, %c0_i32_0 : i32, i32, i32
  }
}

module attributes {stable_mosaic.version = 11 : i64} {
  func.func @_mha_kernel(%arg0: i32, %arg1: memref<1x8x32xf32, #tpu.memory_space<vmem>>, %arg2: memref<1x6x16xf32, #tpu.memory_space<vmem>>, %arg3: memref<1x6x16xf32, #tpu.memory_space<vmem>>, %arg4: memref<1x8x32xf32, #tpu.memory_space<vmem>>, %arg5: memref<32x32xbf16, #tpu.memory_space<vmem>>, %arg6: memref<1x32xf32, #tpu.memory_space<vmem>>, %arg7: memref<16x32xbf16, #tpu.memory_space<vmem>>, %arg8: memref<1x32xf32, #tpu.memory_space<vmem>>, %arg9: memref<16x32xbf16, #tpu.memory_space<vmem>>, %arg10: memref<1x32xf32, #tpu.memory_space<vmem>>, %arg11: memref<32x32xbf16, #tpu.memory_space<vmem>>, %arg12: memref<1x32xf32, #tpu.memory_space<vmem>>, %arg13: memref<1x32xf32, #tpu.memory_space<vmem>>, %arg14: memref<1x32xf32, #tpu.memory_space<vmem>>, %arg15: memref<1x8x32xf32, #tpu.memory_space<vmem>>) attributes {dimension_semantics = [#tpu.dimension_semantics<parallel>], iteration_bounds = array<i64: 2>, scalar_prefetch = 0 : i64, scratch_operands = 0 : i64, tpu.core_type = #tpu.core_type<tc>, window_params = [{transform_indices = @transform_0, window_bounds = array<i64: 1, 8, 32>}, {transform_indices = @transform_1, window_bounds = array<i64: 1, 6, 16>}, {transform_indices = @transform_2, window_bounds = array<i64: 1, 6, 16>}, {transform_indices = @transform_3, window_bounds = array<i64: 1, 8, 32>}, {pipeline_mode = #tpu.pipeline_mode<synchronous>, transform_indices = @transform_4, window_bounds = array<i64: 32, 32>}, {pipeline_mode = #tpu.pipeline_mode<synchronous>, transform_indices = @transform_5, window_bounds = array<i64: 1, 32>}, {pipeline_mode = #tpu.pipeline_mode<synchronous>, transform_indices = @transform_6, window_bounds = array<i64: 16, 32>}, {pipeline_mode = #tpu.pipeline_mode<synchronous>, transform_indices = @transform_7, window_bounds = array<i64: 1, 32>}, {pipeline_mode = #tpu.pipeline_mode<synchronous>, transform_indices = @transform_8, window_bounds = array<i64: 16, 32>}, {pipeline_mode = #tpu.pipeline_mode<synchronous>, transform_indices = @transform_9, window_bounds = array<i64: 1, 32>}, {pipeline_mode = #tpu.pipeline_mode<synchronous>, transform_indices = @transform_10, window_bounds = array<i64: 32, 32>}, {pipeline_mode = #tpu.pipeline_mode<synchronous>, transform_indices = @transform_11, window_bounds = array<i64: 1, 32>}, {pipeline_mode = #tpu.pipeline_mode<synchronous>, transform_indices = @transform_12, window_bounds = array<i64: 1, 32>}, {pipeline_mode = #tpu.pipeline_mode<synchronous>, transform_indices = @transform_13, window_bounds = array<i64: 1, 32>}, {transform_indices = @transform_14, window_bounds = array<i64: 1, 8, 32>}]} {
    %c0 = arith.constant 0 : index
    %c0_0 = arith.constant 0 : index
    %c0_1 = arith.constant 0 : index
    %0 = vector.load %arg1[%c0, %c0_0, %c0_1] : memref<1x8x32xf32, #tpu.memory_space<vmem>>, vector<1x8x32xf32>
    %1 = vector.shape_cast %0 : vector<1x8x32xf32> to vector<8x32xf32>
    %2 = arith.truncf %1 : vector<8x32xf32> to vector<8x32xbf16>
    %c0_2 = arith.constant 0 : index
    %c0_3 = arith.constant 0 : index
    %c0_4 = arith.constant 0 : index
    %3 = vector.load %arg2[%c0_2, %c0_3, %c0_4] : memref<1x6x16xf32, #tpu.memory_space<vmem>>, vector<1x6x16xf32>
    %4 = vector.shape_cast %3 : vector<1x6x16xf32> to vector<6x16xf32>
    %5 = arith.truncf %4 : vector<6x16xf32> to vector<6x16xbf16>
    %c0_5 = arith.constant 0 : index
    %c0_6 = arith.constant 0 : index
    %c0_7 = arith.constant 0 : index
    %6 = vector.load %arg3[%c0_5, %c0_6, %c0_7] : memref<1x6x16xf32, #tpu.memory_space<vmem>>, vector<1x6x16xf32>
    %7 = vector.shape_cast %6 : vector<1x6x16xf32> to vector<6x16xf32>
    %8 = arith.truncf %7 : vector<6x16xf32> to vector<6x16xbf16>
    %c0_8 = arith.constant 0 : index
    %c0_9 = arith.constant 0 : index
    %9 = vector.load %arg5[%c0_8, %c0_9] : memref<32x32xbf16, #tpu.memory_space<vmem>>, vector<32x32xbf16>
    %cst = arith.constant dense<0.000000e+00> : vector<8x32xf32>
    %10 = tpu.matmul %2, %9, %cst {dimension_numbers = #tpu.dot_dimension_numbers<[1], [0], [0], [1], [0, 0, 1, 1], [], []>} : vector<8x32xbf16>, vector<32x32xbf16>, vector<8x32xf32> -> vector<8x32xf32>
    %c0_10 = arith.constant 0 : index
    %c0_11 = arith.constant 0 : index
    %11 = vector.load %arg6[%c0_10, %c0_11] : memref<1x32xf32, #tpu.memory_space<vmem>>, vector<1x32xf32>
    %12 = vector.broadcast %11 : vector<1x32xf32> to vector<8x32xf32>
    %13 = arith.addf %10, %12 : vector<8x32xf32>
    %c0_12 = arith.constant 0 : index
    %c0_13 = arith.constant 0 : index
    %14 = vector.load %arg7[%c0_12, %c0_13] : memref<16x32xbf16, #tpu.memory_space<vmem>>, vector<16x32xbf16>
    %cst_14 = arith.constant dense<0.000000e+00> : vector<6x32xf32>
    %15 = tpu.matmul %5, %14, %cst_14 {dimension_numbers = #tpu.dot_dimension_numbers<[1], [0], [0], [1], [0, 0, 1, 1], [], []>} : vector<6x16xbf16>, vector<16x32xbf16>, vector<6x32xf32> -> vector<6x32xf32>
    %c0_15 = arith.constant 0 : index
    %c0_16 = arith.constant 0 : index
    %16 = vector.load %arg8[%c0_15, %c0_16] : memref<1x32xf32, #tpu.memory_space<vmem>>, vector<1x32xf32>
    %17 = vector.broadcast %16 : vector<1x32xf32> to vector<6x32xf32>
    %18 = arith.addf %15, %17 : vector<6x32xf32>
    %c0_17 = arith.constant 0 : index
    %c0_18 = arith.constant 0 : index
    %19 = vector.load %arg9[%c0_17, %c0_18] : memref<16x32xbf16, #tpu.memory_space<vmem>>, vector<16x32xbf16>
    %cst_19 = arith.constant dense<0.000000e+00> : vector<6x32xf32>
    %20 = tpu.matmul %8, %19, %cst_19 {dimension_numbers = #tpu.dot_dimension_numbers<[1], [0], [0], [1], [0, 0, 1, 1], [], []>} : vector<6x16xbf16>, vector<16x32xbf16>, vector<6x32xf32> -> vector<6x32xf32>
    %c0_20 = arith.constant 0 : index
    %c0_21 = arith.constant 0 : index
    %21 = vector.load %arg10[%c0_20, %c0_21] : memref<1x32xf32, #tpu.memory_space<vmem>>, vector<1x32xf32>
    %22 = vector.broadcast %21 : vector<1x32xf32> to vector<6x32xf32>
    %23 = arith.addf %20, %22 : vector<6x32xf32>
    %24 = arith.truncf %13 : vector<8x32xf32> to vector<8x32xbf16>
    %25 = arith.truncf %18 : vector<6x32xf32> to vector<6x32xbf16>
    %26 = arith.truncf %23 : vector<6x32xf32> to vector<6x32xbf16>
    %cst_22 = arith.constant 0.000000e+00 : f32
    %27 = vector.broadcast %cst_22 : f32 to vector<8x32xf32>
    %28 = vector.extract_strided_slice %24 {offsets = [0, 0], sizes = [8, 8], strides = [1, 1]} : vector<8x32xbf16> to vector<8x8xbf16>
    %29 = vector.extract_strided_slice %25 {offsets = [0, 0], sizes = [6, 8], strides = [1, 1]} : vector<6x32xbf16> to vector<6x8xbf16>
    %30 = vector.extract_strided_slice %26 {offsets = [0, 0], sizes = [6, 8], strides = [1, 1]} : vector<6x32xbf16> to vector<6x8xbf16>
    %cst_23 = arith.constant dense<0.000000e+00> : vector<8x6xf32>
    %31 = tpu.matmul %28, %29, %cst_23 {dimension_numbers = #tpu.dot_dimension_numbers<[1], [1], [0], [0], [0, 0, 1, 0], [], []>} : vector<8x8xbf16>, vector<6x8xbf16>, vector<8x6xf32> -> vector<8x6xf32>
    %cst_24 = arith.constant dense<0xFF800000> : vector<8xf32>
    %32 = vector.multi_reduction <maximumf>, %31, %cst_24 [1] : vector<8x6xf32> to vector<8xf32>
    %33 = vector.shape_cast %32 : vector<8xf32> to vector<8x1xf32>
    %34 = vector.broadcast %33 : vector<8x1xf32> to vector<8x6xf32>
    %35 = arith.subf %31, %34 : vector<8x6xf32>
    %36 = math.exp %35 : vector<8x6xf32>
    %cst_25 = arith.constant dense<0.000000e+00> : vector<8xf32>
    %37 = vector.multi_reduction <add>, %36, %cst_25 [1] : vector<8x6xf32> to vector<8xf32>
    %38 = vector.shape_cast %37 : vector<8xf32> to vector<8x1xf32>
    %39 = tpu.reciprocal %38 {approx = true} : vector<8x1xf32> -> vector<8x1xf32>
    %40 = vector.broadcast %39 : vector<8x1xf32> to vector<8x6xf32>
    %41 = arith.mulf %36, %40 : vector<8x6xf32>
    %42 = arith.truncf %41 : vector<8x6xf32> to vector<8x6xbf16>
    %cst_26 = arith.constant dense<0.000000e+00> : vector<8x8xf32>
    %43 = tpu.matmul %42, %30, %cst_26 {dimension_numbers = #tpu.dot_dimension_numbers<[1], [0], [0], [1], [0, 0, 1, 1], [], []>} : vector<8x6xbf16>, vector<6x8xbf16>, vector<8x8xf32> -> vector<8x8xf32>
    %c0_27 = arith.constant 0 : index
    %c0_28 = arith.constant 0 : index
    %44 = vector.load %arg11[%c0_27, %c0_28] : memref<32x32xbf16, #tpu.memory_space<vmem>>, vector<8x32xbf16>
    %45 = arith.truncf %43 : vector<8x8xf32> to vector<8x8xbf16>
    %cst_29 = arith.constant dense<0.000000e+00> : vector<8x32xf32>
    %46 = tpu.matmul %45, %44, %cst_29 {dimension_numbers = #tpu.dot_dimension_numbers<[1], [0], [0], [1], [0, 0, 1, 1], [], []>} : vector<8x8xbf16>, vector<8x32xbf16>, vector<8x32xf32> -> vector<8x32xf32>
    %47 = arith.addf %27, %46 : vector<8x32xf32>
    %48 = vector.extract_strided_slice %24 {offsets = [0, 8], sizes = [8, 8], strides = [1, 1]} : vector<8x32xbf16> to vector<8x8xbf16>
    %49 = vector.extract_strided_slice %25 {offsets = [0, 8], sizes = [6, 8], strides = [1, 1]} : vector<6x32xbf16> to vector<6x8xbf16>
    %50 = vector.extract_strided_slice %26 {offsets = [0, 8], sizes = [6, 8], strides = [1, 1]} : vector<6x32xbf16> to vector<6x8xbf16>
    %cst_30 = arith.constant dense<0.000000e+00> : vector<8x6xf32>
    %51 = tpu.matmul %48, %49, %cst_30 {dimension_numbers = #tpu.dot_dimension_numbers<[1], [1], [0], [0], [0, 0, 1, 0], [], []>} : vector<8x8xbf16>, vector<6x8xbf16>, vector<8x6xf32> -> vector<8x6xf32>
    %cst_31 = arith.constant dense<0xFF800000> : vector<8xf32>
    %52 = vector.multi_reduction <maximumf>, %51, %cst_31 [1] : vector<8x6xf32> to vector<8xf32>
    %53 = vector.shape_cast %52 : vector<8xf32> to vector<8x1xf32>
    %54 = vector.broadcast %53 : vector<8x1xf32> to vector<8x6xf32>
    %55 = arith.subf %51, %54 : vector<8x6xf32>
    %56 = math.exp %55 : vector<8x6xf32>
    %cst_32 = arith.constant dense<0.000000e+00> : vector<8xf32>
    %57 = vector.multi_reduction <add>, %56, %cst_32 [1] : vector<8x6xf32> to vector<8xf32>
    %58 = vector.shape_cast %57 : vector<8xf32> to vector<8x1xf32>
    %59 = tpu.reciprocal %58 {approx = true} : vector<8x1xf32> -> vector<8x1xf32>
    %60 = vector.broadcast %59 : vector<8x1xf32> to vector<8x6xf32>
    %61 = arith.mulf %56, %60 : vector<8x6xf32>
    %62 = arith.truncf %61 : vector<8x6xf32> to vector<8x6xbf16>
    %cst_33 = arith.constant dense<0.000000e+00> : vector<8x8xf32>
    %63 = tpu.matmul %62, %50, %cst_33 {dimension_numbers = #tpu.dot_dimension_numbers<[1], [0], [0], [1], [0, 0, 1, 1], [], []>} : vector<8x6xbf16>, vector<6x8xbf16>, vector<8x8xf32> -> vector<8x8xf32>
    %c8 = arith.constant 8 : index
    %c0_34 = arith.constant 0 : index
    %64 = vector.load %arg11[%c8, %c0_34] : memref<32x32xbf16, #tpu.memory_space<vmem>>, vector<8x32xbf16>
    %65 = arith.truncf %63 : vector<8x8xf32> to vector<8x8xbf16>
    %cst_35 = arith.constant dense<0.000000e+00> : vector<8x32xf32>
    %66 = tpu.matmul %65, %64, %cst_35 {dimension_numbers = #tpu.dot_dimension_numbers<[1], [0], [0], [1], [0, 0, 1, 1], [], []>} : vector<8x8xbf16>, vector<8x32xbf16>, vector<8x32xf32> -> vector<8x32xf32>
    %67 = arith.addf %47, %66 : vector<8x32xf32>
    %68 = vector.extract_strided_slice %24 {offsets = [0, 16], sizes = [8, 8], strides = [1, 1]} : vector<8x32xbf16> to vector<8x8xbf16>
    %69 = vector.extract_strided_slice %25 {offsets = [0, 16], sizes = [6, 8], strides = [1, 1]} : vector<6x32xbf16> to vector<6x8xbf16>
    %70 = vector.extract_strided_slice %26 {offsets = [0, 16], sizes = [6, 8], strides = [1, 1]} : vector<6x32xbf16> to vector<6x8xbf16>
    %cst_36 = arith.constant dense<0.000000e+00> : vector<8x6xf32>
    %71 = tpu.matmul %68, %69, %cst_36 {dimension_numbers = #tpu.dot_dimension_numbers<[1], [1], [0], [0], [0, 0, 1, 0], [], []>} : vector<8x8xbf16>, vector<6x8xbf16>, vector<8x6xf32> -> vector<8x6xf32>
    %cst_37 = arith.constant dense<0xFF800000> : vector<8xf32>
    %72 = vector.multi_reduction <maximumf>, %71, %cst_37 [1] : vector<8x6xf32> to vector<8xf32>
    %73 = vector.shape_cast %72 : vector<8xf32> to vector<8x1xf32>
    %74 = vector.broadcast %73 : vector<8x1xf32> to vector<8x6xf32>
    %75 = arith.subf %71, %74 : vector<8x6xf32>
    %76 = math.exp %75 : vector<8x6xf32>
    %cst_38 = arith.constant dense<0.000000e+00> : vector<8xf32>
    %77 = vector.multi_reduction <add>, %76, %cst_38 [1] : vector<8x6xf32> to vector<8xf32>
    %78 = vector.shape_cast %77 : vector<8xf32> to vector<8x1xf32>
    %79 = tpu.reciprocal %78 {approx = true} : vector<8x1xf32> -> vector<8x1xf32>
    %80 = vector.broadcast %79 : vector<8x1xf32> to vector<8x6xf32>
    %81 = arith.mulf %76, %80 : vector<8x6xf32>
    %82 = arith.truncf %81 : vector<8x6xf32> to vector<8x6xbf16>
    %cst_39 = arith.constant dense<0.000000e+00> : vector<8x8xf32>
    %83 = tpu.matmul %82, %70, %cst_39 {dimension_numbers = #tpu.dot_dimension_numbers<[1], [0], [0], [1], [0, 0, 1, 1], [], []>} : vector<8x6xbf16>, vector<6x8xbf16>, vector<8x8xf32> -> vector<8x8xf32>
    %c16 = arith.constant 16 : index
    %c0_40 = arith.constant 0 : index
    %84 = vector.load %arg11[%c16, %c0_40] : memref<32x32xbf16, #tpu.memory_space<vmem>>, vector<8x32xbf16>
    %85 = arith.truncf %83 : vector<8x8xf32> to vector<8x8xbf16>
    %cst_41 = arith.constant dense<0.000000e+00> : vector<8x32xf32>
    %86 = tpu.matmul %85, %84, %cst_41 {dimension_numbers = #tpu.dot_dimension_numbers<[1], [0], [0], [1], [0, 0, 1, 1], [], []>} : vector<8x8xbf16>, vector<8x32xbf16>, vector<8x32xf32> -> vector<8x32xf32>
    %87 = arith.addf %67, %86 : vector<8x32xf32>
    %88 = vector.extract_strided_slice %24 {offsets = [0, 24], sizes = [8, 8], strides = [1, 1]} : vector<8x32xbf16> to vector<8x8xbf16>
    %89 = vector.extract_strided_slice %25 {offsets = [0, 24], sizes = [6, 8], strides = [1, 1]} : vector<6x32xbf16> to vector<6x8xbf16>
    %90 = vector.extract_strided_slice %26 {offsets = [0, 24], sizes = [6, 8], strides = [1, 1]} : vector<6x32xbf16> to vector<6x8xbf16>
    %cst_42 = arith.constant dense<0.000000e+00> : vector<8x6xf32>
    %91 = tpu.matmul %88, %89, %cst_42 {dimension_numbers = #tpu.dot_dimension_numbers<[1], [1], [0], [0], [0, 0, 1, 0], [], []>} : vector<8x8xbf16>, vector<6x8xbf16>, vector<8x6xf32> -> vector<8x6xf32>
    %cst_43 = arith.constant dense<0xFF800000> : vector<8xf32>
    %92 = vector.multi_reduction <maximumf>, %91, %cst_43 [1] : vector<8x6xf32> to vector<8xf32>
    %93 = vector.shape_cast %92 : vector<8xf32> to vector<8x1xf32>
    %94 = vector.broadcast %93 : vector<8x1xf32> to vector<8x6xf32>
    %95 = arith.subf %91, %94 : vector<8x6xf32>
    %96 = math.exp %95 : vector<8x6xf32>
    %cst_44 = arith.constant dense<0.000000e+00> : vector<8xf32>
    %97 = vector.multi_reduction <add>, %96, %cst_44 [1] : vector<8x6xf32> to vector<8xf32>
    %98 = vector.shape_cast %97 : vector<8xf32> to vector<8x1xf32>
    %99 = tpu.reciprocal %98 {approx = true} : vector<8x1xf32> -> vector<8x1xf32>
    %100 = vector.broadcast %99 : vector<8x1xf32> to vector<8x6xf32>
    %101 = arith.mulf %96, %100 : vector<8x6xf32>
    %102 = arith.truncf %101 : vector<8x6xf32> to vector<8x6xbf16>
    %cst_45 = arith.constant dense<0.000000e+00> : vector<8x8xf32>
    %103 = tpu.matmul %102, %90, %cst_45 {dimension_numbers = #tpu.dot_dimension_numbers<[1], [0], [0], [1], [0, 0, 1, 1], [], []>} : vector<8x6xbf16>, vector<6x8xbf16>, vector<8x8xf32> -> vector<8x8xf32>
    %c24 = arith.constant 24 : index
    %c0_46 = arith.constant 0 : index
    %104 = vector.load %arg11[%c24, %c0_46] : memref<32x32xbf16, #tpu.memory_space<vmem>>, vector<8x32xbf16>
    %105 = arith.truncf %103 : vector<8x8xf32> to vector<8x8xbf16>
    %cst_47 = arith.constant dense<0.000000e+00> : vector<8x32xf32>
    %106 = tpu.matmul %105, %104, %cst_47 {dimension_numbers = #tpu.dot_dimension_numbers<[1], [0], [0], [1], [0, 0, 1, 1], [], []>} : vector<8x8xbf16>, vector<8x32xbf16>, vector<8x32xf32> -> vector<8x32xf32>
    %107 = arith.addf %87, %106 : vector<8x32xf32>
    %c0_48 = arith.constant 0 : index
    %c0_49 = arith.constant 0 : index
    %108 = vector.load %arg12[%c0_48, %c0_49] : memref<1x32xf32, #tpu.memory_space<vmem>>, vector<1x32xf32>
    %109 = vector.broadcast %108 : vector<1x32xf32> to vector<8x32xf32>
    %110 = arith.addf %107, %109 : vector<8x32xf32>
    %c0_50 = arith.constant 0 : index
    %c0_51 = arith.constant 0 : index
    %c0_52 = arith.constant 0 : index
    %111 = vector.load %arg4[%c0_50, %c0_51, %c0_52] : memref<1x8x32xf32, #tpu.memory_space<vmem>>, vector<1x8x32xf32>
    %112 = vector.shape_cast %111 : vector<1x8x32xf32> to vector<8x32xf32>
    %113 = arith.addf %112, %110 : vector<8x32xf32>
    %c0_53 = arith.constant 0 : index
    %c0_54 = arith.constant 0 : index
    %114 = vector.load %arg13[%c0_53, %c0_54] : memref<1x32xf32, #tpu.memory_space<vmem>>, vector<1x32xf32>
    %c0_55 = arith.constant 0 : index
    %c0_56 = arith.constant 0 : index
    %115 = vector.load %arg14[%c0_55, %c0_56] : memref<1x32xf32, #tpu.memory_space<vmem>>, vector<1x32xf32>
    %cst_57 = arith.constant dense<0.000000e+00> : vector<8xf32>
    %116 = vector.multi_reduction <add>, %113, %cst_57 [1] : vector<8x32xf32> to vector<8xf32>
    %117 = vector.shape_cast %116 : vector<8xf32> to vector<8x1xf32>
    %cst_58 = arith.constant 3.200000e+01 : f32
    %118 = vector.broadcast %cst_58 : f32 to vector<8x1xf32>
    %119 = arith.divf %117, %118 : vector<8x1xf32>
    %120 = vector.broadcast %119 : vector<8x1xf32> to vector<8x32xf32>
    %121 = arith.subf %113, %120 : vector<8x32xf32>
    %122 = arith.mulf %121, %121 : vector<8x32xf32>
    %cst_59 = arith.constant dense<0.000000e+00> : vector<8xf32>
    %123 = vector.multi_reduction <add>, %122, %cst_59 [1] : vector<8x32xf32> to vector<8xf32>
    %124 = vector.shape_cast %123 : vector<8xf32> to vector<8x1xf32>
    %cst_60 = arith.constant 3.200000e+01 : f32
    %125 = vector.broadcast %cst_60 : f32 to vector<8x1xf32>
    %126 = arith.divf %124, %125 : vector<8x1xf32>
    %127 = vector.broadcast %119 : vector<8x1xf32> to vector<8x32xf32>
    %128 = arith.subf %113, %127 : vector<8x32xf32>
    %cst_61 = arith.constant 9.99999974E-6 : f32
    %129 = vector.broadcast %cst_61 : f32 to vector<8x1xf32>
    %130 = arith.addf %126, %129 : vector<8x1xf32>
    %131 = math.rsqrt %130 : vector<8x1xf32>
    %132 = vector.broadcast %131 : vector<8x1xf32> to vector<8x32xf32>
    %133 = arith.mulf %128, %132 : vector<8x32xf32>
    %134 = vector.broadcast %114 : vector<1x32xf32> to vector<8x32xf32>
    %135 = arith.mulf %133, %134 : vector<8x32xf32>
    %136 = vector.broadcast %115 : vector<1x32xf32> to vector<8x32xf32>
    %137 = arith.addf %135, %136 : vector<8x32xf32>
    %c0_62 = arith.constant 0 : index
    %c0_63 = arith.constant 0 : index
    %c0_64 = arith.constant 0 : index
    %138 = vector.load %arg15[%c0_62, %c0_63, %c0_64] : memref<1x8x32xf32, #tpu.memory_space<vmem>>, vector<1x8x32xf32>
    %139 = vector.shape_cast %138 : vector<1x8x32xf32> to vector<8x32xf32>
    %140 = vector.shape_cast %137 : vector<8x32xf32> to vector<1x8x32xf32>
    tpu.vector_store %arg15[%c0_62, %c0_63, %c0_64], %140 {strides = array<i32>} : memref<1x8x32xf32, #tpu.memory_space<vmem>>, vector<1x8x32xf32>,
    return
  }
  func.func @transform_0(%arg0: i32) -> (i32, i32, i32) {
    %c0_i32 = arith.constant 0 : i32
    %c0_i32_0 = arith.constant 0 : i32
    %c0_i32_1 = arith.constant 0 : i32
    return %arg0, %c0_i32, %c0_i32_0 : i32, i32, i32
  }
  func.func @transform_1(%arg0: i32) -> (i32, i32, i32) {
    %c0_i32 = arith.constant 0 : i32
    %c0_i32_0 = arith.constant 0 : i32
    %c0_i32_1 = arith.constant 0 : i32
    return %arg0, %c0_i32, %c0_i32_0 : i32, i32, i32
  }
  func.func @transform_2(%arg0: i32) -> (i32, i32, i32) {
    %c0_i32 = arith.constant 0 : i32
    %c0_i32_0 = arith.constant 0 : i32
    %c0_i32_1 = arith.constant 0 : i32
    return %arg0, %c0_i32, %c0_i32_0 : i32, i32, i32
  }
  func.func @transform_3(%arg0: i32) -> (i32, i32, i32) {
    %c0_i32 = arith.constant 0 : i32
    %c0_i32_0 = arith.constant 0 : i32
    %c0_i32_1 = arith.constant 0 : i32
    return %arg0, %c0_i32, %c0_i32_0 : i32, i32, i32
  }
  func.func @transform_4(%arg0: i32) -> (i32, i32) {
    %c0_i32 = arith.constant 0 : i32
    %c0_i32_0 = arith.constant 0 : i32
    %c0_i32_1 = arith.constant 0 : i32
    return %c0_i32, %c0_i32_0 : i32, i32
  }
  func.func @transform_5(%arg0: i32) -> (i32, i32) {
    %c0_i32 = arith.constant 0 : i32
    %c0_i32_0 = arith.constant 0 : i32
    %c0_i32_1 = arith.constant 0 : i32
    return %c0_i32, %c0_i32_0 : i32, i32
  }
  func.func @transform_6(%arg0: i32) -> (i32, i32) {
    %c0_i32 = arith.constant 0 : i32
    %c0_i32_0 = arith.constant 0 : i32
    %c0_i32_1 = arith.constant 0 : i32
    return %c0_i32, %c0_i32_0 : i32, i32
  }
  func.func @transform_7(%arg0: i32) -> (i32, i32) {
    %c0_i32 = arith.constant 0 : i32
    %c0_i32_0 = arith.constant 0 : i32
    %c0_i32_1 = arith.constant 0 : i32
    return %c0_i32, %c0_i32_0 : i32, i32
  }
  func.func @transform_8(%arg0: i32) -> (i32, i32) {
    %c0_i32 = arith.constant 0 : i32
    %c0_i32_0 = arith.constant 0 : i32
    %c0_i32_1 = arith.constant 0 : i32
    return %c0_i32, %c0_i32_0 : i32, i32
  }
  func.func @transform_9(%arg0: i32) -> (i32, i32) {
    %c0_i32 = arith.constant 0 : i32
    %c0_i32_0 = arith.constant 0 : i32
    %c0_i32_1 = arith.constant 0 : i32
    return %c0_i32, %c0_i32_0 : i32, i32
  }
  func.func @transform_10(%arg0: i32) -> (i32, i32) {
    %c0_i32 = arith.constant 0 : i32
    %c0_i32_0 = arith.constant 0 : i32
    %c0_i32_1 = arith.constant 0 : i32
    return %c0_i32, %c0_i32_0 : i32, i32
  }
  func.func @transform_11(%arg0: i32) -> (i32, i32) {
    %c0_i32 = arith.constant 0 : i32
    %c0_i32_0 = arith.constant 0 : i32
    %c0_i32_1 = arith.constant 0 : i32
    return %c0_i32, %c0_i32_0 : i32, i32
  }
  func.func @transform_12(%arg0: i32) -> (i32, i32) {
    %c0_i32 = arith.constant 0 : i32
    %c0_i32_0 = arith.constant 0 : i32
    %c0_i32_1 = arith.constant 0 : i32
    return %c0_i32, %c0_i32_0 : i32, i32
  }
  func.func @transform_13(%arg0: i32) -> (i32, i32) {
    %c0_i32 = arith.constant 0 : i32
    %c0_i32_0 = arith.constant 0 : i32
    %c0_i32_1 = arith.constant 0 : i32
    return %c0_i32, %c0_i32_0 : i32, i32
  }
  func.func @transform_14(%arg0: i32) -> (i32, i32, i32) {
    %c0_i32 = arith.constant 0 : i32
    %c0_i32_0 = arith.constant 0 : i32
    %c0_i32_1 = arith.constant 0 : i32
    return %arg0, %c0_i32, %c0_i32_0 : i32, i32, i32
  }
}

module attributes {stable_mosaic.version = 11 : i64} {
  func.func @_mha_kernel(%arg0: i32, %arg1: memref<1x8x32xf32, #tpu.memory_space<vmem>>, %arg2: memref<1x5x256xf32, #tpu.memory_space<vmem>>, %arg3: memref<1x5x256xf32, #tpu.memory_space<vmem>>, %arg4: memref<1x8x32xf32, #tpu.memory_space<vmem>>, %arg5: memref<32x32xbf16, #tpu.memory_space<vmem>>, %arg6: memref<1x32xf32, #tpu.memory_space<vmem>>, %arg7: memref<256x32xbf16, #tpu.memory_space<vmem>>, %arg8: memref<1x32xf32, #tpu.memory_space<vmem>>, %arg9: memref<256x32xbf16, #tpu.memory_space<vmem>>, %arg10: memref<1x32xf32, #tpu.memory_space<vmem>>, %arg11: memref<32x32xbf16, #tpu.memory_space<vmem>>, %arg12: memref<1x32xf32, #tpu.memory_space<vmem>>, %arg13: memref<1x32xf32, #tpu.memory_space<vmem>>, %arg14: memref<1x32xf32, #tpu.memory_space<vmem>>, %arg15: memref<1x8x32xf32, #tpu.memory_space<vmem>>) attributes {dimension_semantics = [#tpu.dimension_semantics<parallel>], iteration_bounds = array<i64: 2>, scalar_prefetch = 0 : i64, scratch_operands = 0 : i64, tpu.core_type = #tpu.core_type<tc>, window_params = [{transform_indices = @transform_0, window_bounds = array<i64: 1, 8, 32>}, {transform_indices = @transform_1, window_bounds = array<i64: 1, 5, 256>}, {transform_indices = @transform_2, window_bounds = array<i64: 1, 5, 256>}, {transform_indices = @transform_3, window_bounds = array<i64: 1, 8, 32>}, {pipeline_mode = #tpu.pipeline_mode<synchronous>, transform_indices = @transform_4, window_bounds = array<i64: 32, 32>}, {pipeline_mode = #tpu.pipeline_mode<synchronous>, transform_indices = @transform_5, window_bounds = array<i64: 1, 32>}, {pipeline_mode = #tpu.pipeline_mode<synchronous>, transform_indices = @transform_6, window_bounds = array<i64: 256, 32>}, {pipeline_mode = #tpu.pipeline_mode<synchronous>, transform_indices = @transform_7, window_bounds = array<i64: 1, 32>}, {pipeline_mode = #tpu.pipeline_mode<synchronous>, transform_indices = @transform_8, window_bounds = array<i64: 256, 32>}, {pipeline_mode = #tpu.pipeline_mode<synchronous>, transform_indices = @transform_9, window_bounds = array<i64: 1, 32>}, {pipeline_mode = #tpu.pipeline_mode<synchronous>, transform_indices = @transform_10, window_bounds = array<i64: 32, 32>}, {pipeline_mode = #tpu.pipeline_mode<synchronous>, transform_indices = @transform_11, window_bounds = array<i64: 1, 32>}, {pipeline_mode = #tpu.pipeline_mode<synchronous>, transform_indices = @transform_12, window_bounds = array<i64: 1, 32>}, {pipeline_mode = #tpu.pipeline_mode<synchronous>, transform_indices = @transform_13, window_bounds = array<i64: 1, 32>}, {transform_indices = @transform_14, window_bounds = array<i64: 1, 8, 32>}]} {
    %c0 = arith.constant 0 : index
    %c0_0 = arith.constant 0 : index
    %c0_1 = arith.constant 0 : index
    %0 = vector.load %arg1[%c0, %c0_0, %c0_1] : memref<1x8x32xf32, #tpu.memory_space<vmem>>, vector<1x8x32xf32>
    %1 = vector.shape_cast %0 : vector<1x8x32xf32> to vector<8x32xf32>
    %2 = arith.truncf %1 : vector<8x32xf32> to vector<8x32xbf16>
    %c0_2 = arith.constant 0 : index
    %c0_3 = arith.constant 0 : index
    %c0_4 = arith.constant 0 : index
    %3 = vector.load %arg2[%c0_2, %c0_3, %c0_4] : memref<1x5x256xf32, #tpu.memory_space<vmem>>, vector<1x5x256xf32>
    %4 = vector.shape_cast %3 : vector<1x5x256xf32> to vector<5x256xf32>
    %5 = arith.truncf %4 : vector<5x256xf32> to vector<5x256xbf16>
    %c0_5 = arith.constant 0 : index
    %c0_6 = arith.constant 0 : index
    %c0_7 = arith.constant 0 : index
    %6 = vector.load %arg3[%c0_5, %c0_6, %c0_7] : memref<1x5x256xf32, #tpu.memory_space<vmem>>, vector<1x5x256xf32>
    %7 = vector.shape_cast %6 : vector<1x5x256xf32> to vector<5x256xf32>
    %8 = arith.truncf %7 : vector<5x256xf32> to vector<5x256xbf16>
    %c0_8 = arith.constant 0 : index
    %c0_9 = arith.constant 0 : index
    %9 = vector.load %arg5[%c0_8, %c0_9] : memref<32x32xbf16, #tpu.memory_space<vmem>>, vector<32x32xbf16>
    %cst = arith.constant dense<0.000000e+00> : vector<8x32xf32>
    %10 = tpu.matmul %2, %9, %cst {dimension_numbers = #tpu.dot_dimension_numbers<[1], [0], [0], [1], [0, 0, 1, 1], [], []>} : vector<8x32xbf16>, vector<32x32xbf16>, vector<8x32xf32> -> vector<8x32xf32>
    %c0_10 = arith.constant 0 : index
    %c0_11 = arith.constant 0 : index
    %11 = vector.load %arg6[%c0_10, %c0_11] : memref<1x32xf32, #tpu.memory_space<vmem>>, vector<1x32xf32>
    %12 = vector.broadcast %11 : vector<1x32xf32> to vector<8x32xf32>
    %13 = arith.addf %10, %12 : vector<8x32xf32>
    %c0_12 = arith.constant 0 : index
    %c0_13 = arith.constant 0 : index
    %14 = vector.load %arg7[%c0_12, %c0_13] : memref<256x32xbf16, #tpu.memory_space<vmem>>, vector<256x32xbf16>
    %cst_14 = arith.constant dense<0.000000e+00> : vector<5x32xf32>
    %15 = tpu.matmul %5, %14, %cst_14 {dimension_numbers = #tpu.dot_dimension_numbers<[1], [0], [0], [1], [0, 0, 1, 1], [], []>} : vector<5x256xbf16>, vector<256x32xbf16>, vector<5x32xf32> -> vector<5x32xf32>
    %c0_15 = arith.constant 0 : index
    %c0_16 = arith.constant 0 : index
    %16 = vector.load %arg8[%c0_15, %c0_16] : memref<1x32xf32, #tpu.memory_space<vmem>>, vector<1x32xf32>
    %17 = vector.broadcast %16 : vector<1x32xf32> to vector<5x32xf32>
    %18 = arith.addf %15, %17 : vector<5x32xf32>
    %c0_17 = arith.constant 0 : index
    %c0_18 = arith.constant 0 : index
    %19 = vector.load %arg9[%c0_17, %c0_18] : memref<256x32xbf16, #tpu.memory_space<vmem>>, vector<256x32xbf16>
    %cst_19 = arith.constant dense<0.000000e+00> : vector<5x32xf32>
    %20 = tpu.matmul %8, %19, %cst_19 {dimension_numbers = #tpu.dot_dimension_numbers<[1], [0], [0], [1], [0, 0, 1, 1], [], []>} : vector<5x256xbf16>, vector<256x32xbf16>, vector<5x32xf32> -> vector<5x32xf32>
    %c0_20 = arith.constant 0 : index
    %c0_21 = arith.constant 0 : index
    %21 = vector.load %arg10[%c0_20, %c0_21] : memref<1x32xf32, #tpu.memory_space<vmem>>, vector<1x32xf32>
    %22 = vector.broadcast %21 : vector<1x32xf32> to vector<5x32xf32>
    %23 = arith.addf %20, %22 : vector<5x32xf32>
    %24 = arith.truncf %13 : vector<8x32xf32> to vector<8x32xbf16>
    %25 = arith.truncf %18 : vector<5x32xf32> to vector<5x32xbf16>
    %26 = arith.truncf %23 : vector<5x32xf32> to vector<5x32xbf16>
    %cst_22 = arith.constant 0.000000e+00 : f32
    %27 = vector.broadcast %cst_22 : f32 to vector<8x32xf32>
    %28 = vector.extract_strided_slice %24 {offsets = [0, 0], sizes = [8, 8], strides = [1, 1]} : vector<8x32xbf16> to vector<8x8xbf16>
    %29 = vector.extract_strided_slice %25 {offsets = [0, 0], sizes = [5, 8], strides = [1, 1]} : vector<5x32xbf16> to vector<5x8xbf16>
    %30 = vector.extract_strided_slice %26 {offsets = [0, 0], sizes = [5, 8], strides = [1, 1]} : vector<5x32xbf16> to vector<5x8xbf16>
    %cst_23 = arith.constant dense<0.000000e+00> : vector<8x5xf32>
    %31 = tpu.matmul %28, %29, %cst_23 {dimension_numbers = #tpu.dot_dimension_numbers<[1], [1], [0], [0], [0, 0, 1, 0], [], []>} : vector<8x8xbf16>, vector<5x8xbf16>, vector<8x5xf32> -> vector<8x5xf32>
    %cst_24 = arith.constant dense<0xFF800000> : vector<8xf32>
    %32 = vector.multi_reduction <maximumf>, %31, %cst_24 [1] : vector<8x5xf32> to vector<8xf32>
    %33 = vector.shape_cast %32 : vector<8xf32> to vector<8x1xf32>
    %34 = vector.broadcast %33 : vector<8x1xf32> to vector<8x5xf32>
    %35 = arith.subf %31, %34 : vector<8x5xf32>
    %36 = math.exp %35 : vector<8x5xf32>
    %cst_25 = arith.constant dense<0.000000e+00> : vector<8xf32>
    %37 = vector.multi_reduction <add>, %36, %cst_25 [1] : vector<8x5xf32> to vector<8xf32>
    %38 = vector.shape_cast %37 : vector<8xf32> to vector<8x1xf32>
    %39 = tpu.reciprocal %38 {approx = true} : vector<8x1xf32> -> vector<8x1xf32>
    %40 = vector.broadcast %39 : vector<8x1xf32> to vector<8x5xf32>
    %41 = arith.mulf %36, %40 : vector<8x5xf32>
    %42 = arith.truncf %41 : vector<8x5xf32> to vector<8x5xbf16>
    %cst_26 = arith.constant dense<0.000000e+00> : vector<8x8xf32>
    %43 = tpu.matmul %42, %30, %cst_26 {dimension_numbers = #tpu.dot_dimension_numbers<[1], [0], [0], [1], [0, 0, 1, 1], [], []>} : vector<8x5xbf16>, vector<5x8xbf16>, vector<8x8xf32> -> vector<8x8xf32>
    %c0_27 = arith.constant 0 : index
    %c0_28 = arith.constant 0 : index
    %44 = vector.load %arg11[%c0_27, %c0_28] : memref<32x32xbf16, #tpu.memory_space<vmem>>, vector<8x32xbf16>
    %45 = arith.truncf %43 : vector<8x8xf32> to vector<8x8xbf16>
    %cst_29 = arith.constant dense<0.000000e+00> : vector<8x32xf32>
    %46 = tpu.matmul %45, %44, %cst_29 {dimension_numbers = #tpu.dot_dimension_numbers<[1], [0], [0], [1], [0, 0, 1, 1], [], []>} : vector<8x8xbf16>, vector<8x32xbf16>, vector<8x32xf32> -> vector<8x32xf32>
    %47 = arith.addf %27, %46 : vector<8x32xf32>
    %48 = vector.extract_strided_slice %24 {offsets = [0, 8], sizes = [8, 8], strides = [1, 1]} : vector<8x32xbf16> to vector<8x8xbf16>
    %49 = vector.extract_strided_slice %25 {offsets = [0, 8], sizes = [5, 8], strides = [1, 1]} : vector<5x32xbf16> to vector<5x8xbf16>
    %50 = vector.extract_strided_slice %26 {offsets = [0, 8], sizes = [5, 8], strides = [1, 1]} : vector<5x32xbf16> to vector<5x8xbf16>
    %cst_30 = arith.constant dense<0.000000e+00> : vector<8x5xf32>
    %51 = tpu.matmul %48, %49, %cst_30 {dimension_numbers = #tpu.dot_dimension_numbers<[1], [1], [0], [0], [0, 0, 1, 0], [], []>} : vector<8x8xbf16>, vector<5x8xbf16>, vector<8x5xf32> -> vector<8x5xf32>
    %cst_31 = arith.constant dense<0xFF800000> : vector<8xf32>
    %52 = vector.multi_reduction <maximumf>, %51, %cst_31 [1] : vector<8x5xf32> to vector<8xf32>
    %53 = vector.shape_cast %52 : vector<8xf32> to vector<8x1xf32>
    %54 = vector.broadcast %53 : vector<8x1xf32> to vector<8x5xf32>
    %55 = arith.subf %51, %54 : vector<8x5xf32>
    %56 = math.exp %55 : vector<8x5xf32>
    %cst_32 = arith.constant dense<0.000000e+00> : vector<8xf32>
    %57 = vector.multi_reduction <add>, %56, %cst_32 [1] : vector<8x5xf32> to vector<8xf32>
    %58 = vector.shape_cast %57 : vector<8xf32> to vector<8x1xf32>
    %59 = tpu.reciprocal %58 {approx = true} : vector<8x1xf32> -> vector<8x1xf32>
    %60 = vector.broadcast %59 : vector<8x1xf32> to vector<8x5xf32>
    %61 = arith.mulf %56, %60 : vector<8x5xf32>
    %62 = arith.truncf %61 : vector<8x5xf32> to vector<8x5xbf16>
    %cst_33 = arith.constant dense<0.000000e+00> : vector<8x8xf32>
    %63 = tpu.matmul %62, %50, %cst_33 {dimension_numbers = #tpu.dot_dimension_numbers<[1], [0], [0], [1], [0, 0, 1, 1], [], []>} : vector<8x5xbf16>, vector<5x8xbf16>, vector<8x8xf32> -> vector<8x8xf32>
    %c8 = arith.constant 8 : index
    %c0_34 = arith.constant 0 : index
    %64 = vector.load %arg11[%c8, %c0_34] : memref<32x32xbf16, #tpu.memory_space<vmem>>, vector<8x32xbf16>
    %65 = arith.truncf %63 : vector<8x8xf32> to vector<8x8xbf16>
    %cst_35 = arith.constant dense<0.000000e+00> : vector<8x32xf32>
    %66 = tpu.matmul %65, %64, %cst_35 {dimension_numbers = #tpu.dot_dimension_numbers<[1], [0], [0], [1], [0, 0, 1, 1], [], []>} : vector<8x8xbf16>, vector<8x32xbf16>, vector<8x32xf32> -> vector<8x32xf32>
    %67 = arith.addf %47, %66 : vector<8x32xf32>
    %68 = vector.extract_strided_slice %24 {offsets = [0, 16], sizes = [8, 8], strides = [1, 1]} : vector<8x32xbf16> to vector<8x8xbf16>
    %69 = vector.extract_strided_slice %25 {offsets = [0, 16], sizes = [5, 8], strides = [1, 1]} : vector<5x32xbf16> to vector<5x8xbf16>
    %70 = vector.extract_strided_slice %26 {offsets = [0, 16], sizes = [5, 8], strides = [1, 1]} : vector<5x32xbf16> to vector<5x8xbf16>
    %cst_36 = arith.constant dense<0.000000e+00> : vector<8x5xf32>
    %71 = tpu.matmul %68, %69, %cst_36 {dimension_numbers = #tpu.dot_dimension_numbers<[1], [1], [0], [0], [0, 0, 1, 0], [], []>} : vector<8x8xbf16>, vector<5x8xbf16>, vector<8x5xf32> -> vector<8x5xf32>
    %cst_37 = arith.constant dense<0xFF800000> : vector<8xf32>
    %72 = vector.multi_reduction <maximumf>, %71, %cst_37 [1] : vector<8x5xf32> to vector<8xf32>
    %73 = vector.shape_cast %72 : vector<8xf32> to vector<8x1xf32>
    %74 = vector.broadcast %73 : vector<8x1xf32> to vector<8x5xf32>
    %75 = arith.subf %71, %74 : vector<8x5xf32>
    %76 = math.exp %75 : vector<8x5xf32>
    %cst_38 = arith.constant dense<0.000000e+00> : vector<8xf32>
    %77 = vector.multi_reduction <add>, %76, %cst_38 [1] : vector<8x5xf32> to vector<8xf32>
    %78 = vector.shape_cast %77 : vector<8xf32> to vector<8x1xf32>
    %79 = tpu.reciprocal %78 {approx = true} : vector<8x1xf32> -> vector<8x1xf32>
    %80 = vector.broadcast %79 : vector<8x1xf32> to vector<8x5xf32>
    %81 = arith.mulf %76, %80 : vector<8x5xf32>
    %82 = arith.truncf %81 : vector<8x5xf32> to vector<8x5xbf16>
    %cst_39 = arith.constant dense<0.000000e+00> : vector<8x8xf32>
    %83 = tpu.matmul %82, %70, %cst_39 {dimension_numbers = #tpu.dot_dimension_numbers<[1], [0], [0], [1], [0, 0, 1, 1], [], []>} : vector<8x5xbf16>, vector<5x8xbf16>, vector<8x8xf32> -> vector<8x8xf32>
    %c16 = arith.constant 16 : index
    %c0_40 = arith.constant 0 : index
    %84 = vector.load %arg11[%c16, %c0_40] : memref<32x32xbf16, #tpu.memory_space<vmem>>, vector<8x32xbf16>
    %85 = arith.truncf %83 : vector<8x8xf32> to vector<8x8xbf16>
    %cst_41 = arith.constant dense<0.000000e+00> : vector<8x32xf32>
    %86 = tpu.matmul %85, %84, %cst_41 {dimension_numbers = #tpu.dot_dimension_numbers<[1], [0], [0], [1], [0, 0, 1, 1], [], []>} : vector<8x8xbf16>, vector<8x32xbf16>, vector<8x32xf32> -> vector<8x32xf32>
    %87 = arith.addf %67, %86 : vector<8x32xf32>
    %88 = vector.extract_strided_slice %24 {offsets = [0, 24], sizes = [8, 8], strides = [1, 1]} : vector<8x32xbf16> to vector<8x8xbf16>
    %89 = vector.extract_strided_slice %25 {offsets = [0, 24], sizes = [5, 8], strides = [1, 1]} : vector<5x32xbf16> to vector<5x8xbf16>
    %90 = vector.extract_strided_slice %26 {offsets = [0, 24], sizes = [5, 8], strides = [1, 1]} : vector<5x32xbf16> to vector<5x8xbf16>
    %cst_42 = arith.constant dense<0.000000e+00> : vector<8x5xf32>
    %91 = tpu.matmul %88, %89, %cst_42 {dimension_numbers = #tpu.dot_dimension_numbers<[1], [1], [0], [0], [0, 0, 1, 0], [], []>} : vector<8x8xbf16>, vector<5x8xbf16>, vector<8x5xf32> -> vector<8x5xf32>
    %cst_43 = arith.constant dense<0xFF800000> : vector<8xf32>
    %92 = vector.multi_reduction <maximumf>, %91, %cst_43 [1] : vector<8x5xf32> to vector<8xf32>
    %93 = vector.shape_cast %92 : vector<8xf32> to vector<8x1xf32>
    %94 = vector.broadcast %93 : vector<8x1xf32> to vector<8x5xf32>
    %95 = arith.subf %91, %94 : vector<8x5xf32>
    %96 = math.exp %95 : vector<8x5xf32>
    %cst_44 = arith.constant dense<0.000000e+00> : vector<8xf32>
    %97 = vector.multi_reduction <add>, %96, %cst_44 [1] : vector<8x5xf32> to vector<8xf32>
    %98 = vector.shape_cast %97 : vector<8xf32> to vector<8x1xf32>
    %99 = tpu.reciprocal %98 {approx = true} : vector<8x1xf32> -> vector<8x1xf32>
    %100 = vector.broadcast %99 : vector<8x1xf32> to vector<8x5xf32>
    %101 = arith.mulf %96, %100 : vector<8x5xf32>
    %102 = arith.truncf %101 : vector<8x5xf32> to vector<8x5xbf16>
    %cst_45 = arith.constant dense<0.000000e+00> : vector<8x8xf32>
    %103 = tpu.matmul %102, %90, %cst_45 {dimension_numbers = #tpu.dot_dimension_numbers<[1], [0], [0], [1], [0, 0, 1, 1], [], []>} : vector<8x5xbf16>, vector<5x8xbf16>, vector<8x8xf32> -> vector<8x8xf32>
    %c24 = arith.constant 24 : index
    %c0_46 = arith.constant 0 : index
    %104 = vector.load %arg11[%c24, %c0_46] : memref<32x32xbf16, #tpu.memory_space<vmem>>, vector<8x32xbf16>
    %105 = arith.truncf %103 : vector<8x8xf32> to vector<8x8xbf16>
    %cst_47 = arith.constant dense<0.000000e+00> : vector<8x32xf32>
    %106 = tpu.matmul %105, %104, %cst_47 {dimension_numbers = #tpu.dot_dimension_numbers<[1], [0], [0], [1], [0, 0, 1, 1], [], []>} : vector<8x8xbf16>, vector<8x32xbf16>, vector<8x32xf32> -> vector<8x32xf32>
    %107 = arith.addf %87, %106 : vector<8x32xf32>
    %c0_48 = arith.constant 0 : index
    %c0_49 = arith.constant 0 : index
    %108 = vector.load %arg12[%c0_48, %c0_49] : memref<1x32xf32, #tpu.memory_space<vmem>>, vector<1x32xf32>
    %109 = vector.broadcast %108 : vector<1x32xf32> to vector<8x32xf32>
    %110 = arith.addf %107, %109 : vector<8x32xf32>
    %c0_50 = arith.constant 0 : index
    %c0_51 = arith.constant 0 : index
    %c0_52 = arith.constant 0 : index
    %111 = vector.load %arg4[%c0_50, %c0_51, %c0_52] : memref<1x8x32xf32, #tpu.memory_space<vmem>>, vector<1x8x32xf32>
    %112 = vector.shape_cast %111 : vector<1x8x32xf32> to vector<8x32xf32>
    %113 = arith.addf %112, %110 : vector<8x32xf32>
    %c0_53 = arith.constant 0 : index
    %c0_54 = arith.constant 0 : index
    %114 = vector.load %arg13[%c0_53, %c0_54] : memref<1x32xf32, #tpu.memory_space<vmem>>, vector<1x32xf32>
    %c0_55 = arith.constant 0 : index
    %c0_56 = arith.constant 0 : index
    %115 = vector.load %arg14[%c0_55, %c0_56] : memref<1x32xf32, #tpu.memory_space<vmem>>, vector<1x32xf32>
    %cst_57 = arith.constant dense<0.000000e+00> : vector<8xf32>
    %116 = vector.multi_reduction <add>, %113, %cst_57 [1] : vector<8x32xf32> to vector<8xf32>
    %117 = vector.shape_cast %116 : vector<8xf32> to vector<8x1xf32>
    %cst_58 = arith.constant 3.200000e+01 : f32
    %118 = vector.broadcast %cst_58 : f32 to vector<8x1xf32>
    %119 = arith.divf %117, %118 : vector<8x1xf32>
    %120 = vector.broadcast %119 : vector<8x1xf32> to vector<8x32xf32>
    %121 = arith.subf %113, %120 : vector<8x32xf32>
    %122 = arith.mulf %121, %121 : vector<8x32xf32>
    %cst_59 = arith.constant dense<0.000000e+00> : vector<8xf32>
    %123 = vector.multi_reduction <add>, %122, %cst_59 [1] : vector<8x32xf32> to vector<8xf32>
    %124 = vector.shape_cast %123 : vector<8xf32> to vector<8x1xf32>
    %cst_60 = arith.constant 3.200000e+01 : f32
    %125 = vector.broadcast %cst_60 : f32 to vector<8x1xf32>
    %126 = arith.divf %124, %125 : vector<8x1xf32>
    %127 = vector.broadcast %119 : vector<8x1xf32> to vector<8x32xf32>
    %128 = arith.subf %113, %127 : vector<8x32xf32>
    %cst_61 = arith.constant 9.99999974E-6 : f32
    %129 = vector.broadcast %cst_61 : f32 to vector<8x1xf32>
    %130 = arith.addf %126, %129 : vector<8x1xf32>
    %131 = math.rsqrt %130 : vector<8x1xf32>
    %132 = vector.broadcast %131 : vector<8x1xf32> to vector<8x32xf32>
    %133 = arith.mulf %128, %132 : vector<8x32xf32>
    %134 = vector.broadcast %114 : vector<1x32xf32> to vector<8x32xf32>
    %135 = arith.mulf %133, %134 : vector<8x32xf32>
    %136 = vector.broadcast %115 : vector<1x32xf32> to vector<8x32xf32>
    %137 = arith.addf %135, %136 : vector<8x32xf32>
    %c0_62 = arith.constant 0 : index
    %c0_63 = arith.constant 0 : index
    %c0_64 = arith.constant 0 : index
    %138 = vector.load %arg15[%c0_62, %c0_63, %c0_64] : memref<1x8x32xf32, #tpu.memory_space<vmem>>, vector<1x8x32xf32>
    %139 = vector.shape_cast %138 : vector<1x8x32xf32> to vector<8x32xf32>
    %140 = vector.shape_cast %137 : vector<8x32xf32> to vector<1x8x32xf32>
    tpu.vector_store %arg15[%c0_62, %c0_63, %c0_64], %140 {strides = array<i32>} : memref<1x8x32xf32, #tpu.memory_space<vmem>>, vector<1x8x32xf32>,
    return
  }
  func.func @transform_0(%arg0: i32) -> (i32, i32, i32) {
    %c0_i32 = arith.constant 0 : i32
    %c0_i32_0 = arith.constant 0 : i32
    %c0_i32_1 = arith.constant 0 : i32
    return %arg0, %c0_i32, %c0_i32_0 : i32, i32, i32
  }
  func.func @transform_1(%arg0: i32) -> (i32, i32, i32) {
    %c0_i32 = arith.constant 0 : i32
    %c0_i32_0 = arith.constant 0 : i32
    %c0_i32_1 = arith.constant 0 : i32
    return %arg0, %c0_i32, %c0_i32_0 : i32, i32, i32
  }
  func.func @transform_2(%arg0: i32) -> (i32, i32, i32) {
    %c0_i32 = arith.constant 0 : i32
    %c0_i32_0 = arith.constant 0 : i32
    %c0_i32_1 = arith.constant 0 : i32
    return %arg0, %c0_i32, %c0_i32_0 : i32, i32, i32
  }
  func.func @transform_3(%arg0: i32) -> (i32, i32, i32) {
    %c0_i32 = arith.constant 0 : i32
    %c0_i32_0 = arith.constant 0 : i32
    %c0_i32_1 = arith.constant 0 : i32
    return %arg0, %c0_i32, %c0_i32_0 : i32, i32, i32
  }
  func.func @transform_4(%arg0: i32) -> (i32, i32) {
    %c0_i32 = arith.constant 0 : i32
    %c0_i32_0 = arith.constant 0 : i32
    %c0_i32_1 = arith.constant 0 : i32
    return %c0_i32, %c0_i32_0 : i32, i32
  }
  func.func @transform_5(%arg0: i32) -> (i32, i32) {
    %c0_i32 = arith.constant 0 : i32
    %c0_i32_0 = arith.constant 0 : i32
    %c0_i32_1 = arith.constant 0 : i32
    return %c0_i32, %c0_i32_0 : i32, i32
  }
  func.func @transform_6(%arg0: i32) -> (i32, i32) {
    %c0_i32 = arith.constant 0 : i32
    %c0_i32_0 = arith.constant 0 : i32
    %c0_i32_1 = arith.constant 0 : i32
    return %c0_i32, %c0_i32_0 : i32, i32
  }
  func.func @transform_7(%arg0: i32) -> (i32, i32) {
    %c0_i32 = arith.constant 0 : i32
    %c0_i32_0 = arith.constant 0 : i32
    %c0_i32_1 = arith.constant 0 : i32
    return %c0_i32, %c0_i32_0 : i32, i32
  }
  func.func @transform_8(%arg0: i32) -> (i32, i32) {
    %c0_i32 = arith.constant 0 : i32
    %c0_i32_0 = arith.constant 0 : i32
    %c0_i32_1 = arith.constant 0 : i32
    return %c0_i32, %c0_i32_0 : i32, i32
  }
  func.func @transform_9(%arg0: i32) -> (i32, i32) {
    %c0_i32 = arith.constant 0 : i32
    %c0_i32_0 = arith.constant 0 : i32
    %c0_i32_1 = arith.constant 0 : i32
    return %c0_i32, %c0_i32_0 : i32, i32
  }
  func.func @transform_10(%arg0: i32) -> (i32, i32) {
    %c0_i32 = arith.constant 0 : i32
    %c0_i32_0 = arith.constant 0 : i32
    %c0_i32_1 = arith.constant 0 : i32
    return %c0_i32, %c0_i32_0 : i32, i32
  }
  func.func @transform_11(%arg0: i32) -> (i32, i32) {
    %c0_i32 = arith.constant 0 : i32
    %c0_i32_0 = arith.constant 0 : i32
    %c0_i32_1 = arith.constant 0 : i32
    return %c0_i32, %c0_i32_0 : i32, i32
  }
  func.func @transform_12(%arg0: i32) -> (i32, i32) {
    %c0_i32 = arith.constant 0 : i32
    %c0_i32_0 = arith.constant 0 : i32
    %c0_i32_1 = arith.constant 0 : i32
    return %c0_i32, %c0_i32_0 : i32, i32
  }
  func.func @transform_13(%arg0: i32) -> (i32, i32) {
    %c0_i32 = arith.constant 0 : i32
    %c0_i32_0 = arith.constant 0 : i32
    %c0_i32_1 = arith.constant 0 : i32
    return %c0_i32, %c0_i32_0 : i32, i32
  }
  func.func @transform_14(%arg0: i32) -> (i32, i32, i32) {
    %c0_i32 = arith.constant 0 : i32
    %c0_i32_0 = arith.constant 0 : i32
    %c0_i32_1 = arith.constant 0 : i32
    return %arg0, %c0_i32, %c0_i32_0 : i32, i32, i32
  }
}

module attributes {stable_mosaic.version = 11 : i64} {
  func.func @_ffn_kernel(%arg0: i32, %arg1: memref<8x32xf32, #tpu.memory_space<vmem>>, %arg2: memref<32x64xbf16, #tpu.memory_space<vmem>>, %arg3: memref<1x64xf32, #tpu.memory_space<vmem>>, %arg4: memref<64x32xbf16, #tpu.memory_space<vmem>>, %arg5: memref<1x32xf32, #tpu.memory_space<vmem>>, %arg6: memref<1x32xf32, #tpu.memory_space<vmem>>, %arg7: memref<1x32xf32, #tpu.memory_space<vmem>>, %arg8: memref<8x32xf32, #tpu.memory_space<vmem>>) attributes {dimension_semantics = [#tpu.dimension_semantics<parallel>], iteration_bounds = array<i64: 2>, scalar_prefetch = 0 : i64, scratch_operands = 0 : i64, tpu.core_type = #tpu.core_type<tc>, window_params = [{transform_indices = @transform_0, window_bounds = array<i64: 8, 32>}, {pipeline_mode = #tpu.pipeline_mode<synchronous>, transform_indices = @transform_1, window_bounds = array<i64: 32, 64>}, {pipeline_mode = #tpu.pipeline_mode<synchronous>, transform_indices = @transform_2, window_bounds = array<i64: 1, 64>}, {pipeline_mode = #tpu.pipeline_mode<synchronous>, transform_indices = @transform_3, window_bounds = array<i64: 64, 32>}, {pipeline_mode = #tpu.pipeline_mode<synchronous>, transform_indices = @transform_4, window_bounds = array<i64: 1, 32>}, {pipeline_mode = #tpu.pipeline_mode<synchronous>, transform_indices = @transform_5, window_bounds = array<i64: 1, 32>}, {pipeline_mode = #tpu.pipeline_mode<synchronous>, transform_indices = @transform_6, window_bounds = array<i64: 1, 32>}, {transform_indices = @transform_7, window_bounds = array<i64: 8, 32>}]} {
    %c0 = arith.constant 0 : index
    %c0_0 = arith.constant 0 : index
    %0 = vector.load %arg1[%c0, %c0_0] : memref<8x32xf32, #tpu.memory_space<vmem>>, vector<8x32xf32>
    %1 = arith.truncf %0 : vector<8x32xf32> to vector<8x32xbf16>
    %c0_1 = arith.constant 0 : index
    %c0_2 = arith.constant 0 : index
    %2 = vector.load %arg2[%c0_1, %c0_2] : memref<32x64xbf16, #tpu.memory_space<vmem>>, vector<32x64xbf16>
    %cst = arith.constant dense<0.000000e+00> : vector<8x64xf32>
    %3 = tpu.matmul %1, %2, %cst {dimension_numbers = #tpu.dot_dimension_numbers<[1], [0], [0], [1], [0, 0, 1, 1], [], []>} : vector<8x32xbf16>, vector<32x64xbf16>, vector<8x64xf32> -> vector<8x64xf32>
    %c0_3 = arith.constant 0 : index
    %c0_4 = arith.constant 0 : index
    %4 = vector.load %arg3[%c0_3, %c0_4] : memref<1x64xf32, #tpu.memory_space<vmem>>, vector<1x64xf32>
    %5 = vector.broadcast %4 : vector<1x64xf32> to vector<8x64xf32>
    %6 = arith.addf %3, %5 : vector<8x64xf32>
    %cst_5 = arith.constant 0.000000e+00 : f32
    %7 = vector.broadcast %cst_5 : f32 to vector<8x64xf32>
    %8 = arith.maximumf %6, %7 : vector<8x64xf32>
    %9 = arith.truncf %8 : vector<8x64xf32> to vector<8x64xbf16>
    %c0_6 = arith.constant 0 : index
    %c0_7 = arith.constant 0 : index
    %10 = vector.load %arg4[%c0_6, %c0_7] : memref<64x32xbf16, #tpu.memory_space<vmem>>, vector<64x32xbf16>
    %cst_8 = arith.constant dense<0.000000e+00> : vector<8x32xf32>
    %11 = tpu.matmul %9, %10, %cst_8 {dimension_numbers = #tpu.dot_dimension_numbers<[1], [0], [0], [1], [0, 0, 1, 1], [], []>} : vector<8x64xbf16>, vector<64x32xbf16>, vector<8x32xf32> -> vector<8x32xf32>
    %c0_9 = arith.constant 0 : index
    %c0_10 = arith.constant 0 : index
    %12 = vector.load %arg5[%c0_9, %c0_10] : memref<1x32xf32, #tpu.memory_space<vmem>>, vector<1x32xf32>
    %13 = vector.broadcast %12 : vector<1x32xf32> to vector<8x32xf32>
    %14 = arith.addf %11, %13 : vector<8x32xf32>
    %15 = arith.addf %0, %14 : vector<8x32xf32>
    %c0_11 = arith.constant 0 : index
    %c0_12 = arith.constant 0 : index
    %16 = vector.load %arg6[%c0_11, %c0_12] : memref<1x32xf32, #tpu.memory_space<vmem>>, vector<1x32xf32>
    %c0_13 = arith.constant 0 : index
    %c0_14 = arith.constant 0 : index
    %17 = vector.load %arg7[%c0_13, %c0_14] : memref<1x32xf32, #tpu.memory_space<vmem>>, vector<1x32xf32>
    %cst_15 = arith.constant dense<0.000000e+00> : vector<8xf32>
    %18 = vector.multi_reduction <add>, %15, %cst_15 [1] : vector<8x32xf32> to vector<8xf32>
    %19 = vector.shape_cast %18 : vector<8xf32> to vector<8x1xf32>
    %cst_16 = arith.constant 3.200000e+01 : f32
    %20 = vector.broadcast %cst_16 : f32 to vector<8x1xf32>
    %21 = arith.divf %19, %20 : vector<8x1xf32>
    %22 = vector.broadcast %21 : vector<8x1xf32> to vector<8x32xf32>
    %23 = arith.subf %15, %22 : vector<8x32xf32>
    %24 = arith.mulf %23, %23 : vector<8x32xf32>
    %cst_17 = arith.constant dense<0.000000e+00> : vector<8xf32>
    %25 = vector.multi_reduction <add>, %24, %cst_17 [1] : vector<8x32xf32> to vector<8xf32>
    %26 = vector.shape_cast %25 : vector<8xf32> to vector<8x1xf32>
    %cst_18 = arith.constant 3.200000e+01 : f32
    %27 = vector.broadcast %cst_18 : f32 to vector<8x1xf32>
    %28 = arith.divf %26, %27 : vector<8x1xf32>
    %29 = vector.broadcast %21 : vector<8x1xf32> to vector<8x32xf32>
    %30 = arith.subf %15, %29 : vector<8x32xf32>
    %cst_19 = arith.constant 9.99999974E-6 : f32
    %31 = vector.broadcast %cst_19 : f32 to vector<8x1xf32>
    %32 = arith.addf %28, %31 : vector<8x1xf32>
    %33 = math.rsqrt %32 : vector<8x1xf32>
    %34 = vector.broadcast %33 : vector<8x1xf32> to vector<8x32xf32>
    %35 = arith.mulf %30, %34 : vector<8x32xf32>
    %36 = vector.broadcast %16 : vector<1x32xf32> to vector<8x32xf32>
    %37 = arith.mulf %35, %36 : vector<8x32xf32>
    %38 = vector.broadcast %17 : vector<1x32xf32> to vector<8x32xf32>
    %39 = arith.addf %37, %38 : vector<8x32xf32>
    %c0_20 = arith.constant 0 : index
    %c0_21 = arith.constant 0 : index
    %40 = vector.load %arg8[%c0_20, %c0_21] : memref<8x32xf32, #tpu.memory_space<vmem>>, vector<8x32xf32>
    tpu.vector_store %arg8[%c0_20, %c0_21], %39 {strides = array<i32>} : memref<8x32xf32, #tpu.memory_space<vmem>>, vector<8x32xf32>,
    return
  }
  func.func @transform_0(%arg0: i32) -> (i32, i32) {
    %c0_i32 = arith.constant 0 : i32
    %c0_i32_0 = arith.constant 0 : i32
    return %arg0, %c0_i32 : i32, i32
  }
  func.func @transform_1(%arg0: i32) -> (i32, i32) {
    %c0_i32 = arith.constant 0 : i32
    %c0_i32_0 = arith.constant 0 : i32
    %c0_i32_1 = arith.constant 0 : i32
    return %c0_i32, %c0_i32_0 : i32, i32
  }
  func.func @transform_2(%arg0: i32) -> (i32, i32) {
    %c0_i32 = arith.constant 0 : i32
    %c0_i32_0 = arith.constant 0 : i32
    %c0_i32_1 = arith.constant 0 : i32
    return %c0_i32, %c0_i32_0 : i32, i32
  }
  func.func @transform_3(%arg0: i32) -> (i32, i32) {
    %c0_i32 = arith.constant 0 : i32
    %c0_i32_0 = arith.constant 0 : i32
    %c0_i32_1 = arith.constant 0 : i32
    return %c0_i32, %c0_i32_0 : i32, i32
  }
  func.func @transform_4(%arg0: i32) -> (i32, i32) {
    %c0_i32 = arith.constant 0 : i32
    %c0_i32_0 = arith.constant 0 : i32
    %c0_i32_1 = arith.constant 0 : i32
    return %c0_i32, %c0_i32_0 : i32, i32
  }
  func.func @transform_5(%arg0: i32) -> (i32, i32) {
    %c0_i32 = arith.constant 0 : i32
    %c0_i32_0 = arith.constant 0 : i32
    %c0_i32_1 = arith.constant 0 : i32
    return %c0_i32, %c0_i32_0 : i32, i32
  }
  func.func @transform_6(%arg0: i32) -> (i32, i32) {
    %c0_i32 = arith.constant 0 : i32
    %c0_i32_0 = arith.constant 0 : i32
    %c0_i32_1 = arith.constant 0 : i32
    return %c0_i32, %c0_i32_0 : i32, i32
  }
  func.func @transform_7(%arg0: i32) -> (i32, i32) {
    %c0_i32 = arith.constant 0 : i32
    %c0_i32_0 = arith.constant 0 : i32
    return %arg0, %c0_i32 : i32, i32
  }
}

</mosaic_0001>

<llo_original>
// kernel: transformer_decoder_layer_forward.6
$region0: #{transformer_decoder_layer_forward.6}
  #allocation0 [shape = 'u32[]', space=smem, size = 0x4, offset = 0x4, fixed_abs, tag = 'smem constant byte address 0x4 - core index']
  #allocation1 [shape = 'u32[144,128]{1,0:T(1,128)}', space=vmem, size = 0x12000, scoped, tag = 'internal scratch']
  %s0 = inlined_call_operand.vmem [shape: f32[2,8,32], index: 0, kind: input, shape index: {}]
  %s1 = inlined_call_operand.vmem [shape: f32[2,12,32], index: 1, kind: input, shape index: {}]
  %s2 = inlined_call_operand.vmem [shape: f32[2,12,32], index: 2, kind: input, shape index: {}]
  %s3 = inlined_call_operand.vmem [shape: f32[2,8,32], index: 3, kind: input, shape index: {}]
  %s4 = inlined_call_operand.vmem [shape: bf16[32,32], index: 4, kind: input, shape index: {}]
  %s5 = inlined_call_operand.vmem [shape: f32[1,32], index: 5, kind: input, shape index: {}]
  %s6 = inlined_call_operand.vmem [shape: bf16[32,32], index: 6, kind: input, shape index: {}]
  %s7 = inlined_call_operand.vmem [shape: f32[1,32], index: 7, kind: input, shape index: {}]
  %s8 = inlined_call_operand.vmem [shape: bf16[32,32], index: 8, kind: input, shape index: {}]
  %s9 = inlined_call_operand.vmem [shape: f32[1,32], index: 9, kind: input, shape index: {}]
  %s10 = inlined_call_operand.vmem [shape: bf16[32,32], index: 10, kind: input, shape index: {}]
  %s11 = inlined_call_operand.vmem [shape: f32[1,32], index: 11, kind: input, shape index: {}]
  %s12 = inlined_call_operand.vmem [shape: f32[1,32], index: 12, kind: input, shape index: {}]
  %s13 = inlined_call_operand.vmem [shape: f32[1,32], index: 13, kind: input, shape index: {}]
  %s14 = inlined_call_operand.vmem [shape: f32[2,8,32], index: 14, kind: output, shape index: {}]
  %s15 = sld [smem:[#allocation0]]
  $region89: #{transformer_decoder_layer_forward.6} parent=0
    _
  %s17 = ssub.s32 1, %s15
  %s18 = scalar_select 0, %s17, %s15
  loop: start=0, step=1, limit=4
  $region2: #{transformer_decoder_layer_forward.6} parent=0 // loop_pre_header
    _
  $region3: #{transformer_decoder_layer_forward.6} parent=0 // loop_header
    %s20 = sphi 0, %s24
    %p21 = scmp.ge.s32.totalorder %s20, 4
    %s30 = sphi 0, %s32
    %s33 = sphi 0, %s30
    %s34 = sphi 0, %s33
    %s50 = sphi 0, %s34
    %s56 = sphi 0, %s58
    %s59 = sphi 0, %s56
    %s60 = sphi 0, %s59
    %s76 = sphi 0, %s60
    %s82 = sphi 0, %s84
    %s85 = sphi 0, %s82
    %s86 = sphi 0, %s85
    %s102 = sphi 0, %s86
    %s108 = sphi 0, %s110
    %s111 = sphi 0, %s108
    %s112 = sphi 0, %s111
    %s128 = sphi 0, %s112
    %s132 = sphi 0, %s132
    %s134 = sphi 0, %s132
    %s135 = sphi 0, %s134
    %s149 = sphi 0, %s135
    %s153 = sphi 0, %s153
    %s155 = sphi 0, %s153
    %s156 = sphi 0, %s155
    %s170 = sphi 0, %s156
    %s174 = sphi 0, %s174
    %s176 = sphi 0, %s174
    %s177 = sphi 0, %s176
    %s191 = sphi 0, %s177
    %s195 = sphi 0, %s195
    %s197 = sphi 0, %s195
    %s198 = sphi 0, %s197
    %s212 = sphi 0, %s198
    %s216 = sphi 0, %s216
    %s218 = sphi 0, %s216
    %s219 = sphi 0, %s218
    %s233 = sphi 0, %s219
    %s237 = sphi 0, %s237
    %s239 = sphi 0, %s237
    %s240 = sphi 0, %s239
    %s254 = sphi 0, %s240
    %s258 = sphi 0, %s258
    %s260 = sphi 0, %s258
    %s261 = sphi 0, %s260
    %s275 = sphi 0, %s261
    %s279 = sphi 0, %s279
    %s281 = sphi 0, %s279
    %s282 = sphi 0, %s281
    %s296 = sphi 0, %s282
    %s300 = sphi 0, %s300
    %s302 = sphi 0, %s300
    %s303 = sphi 0, %s302
    %s317 = sphi 0, %s303
    %s321 = sphi 0, %s321
    %s323 = sphi 0, %s321
    %s324 = sphi 0, %s323
    %s338 = sphi 0, %s324
    %s344 = sphi 0, %s346
    %s347 = sphi 0, %s344
    %s348 = sphi 0, %s347
    %s364 = sphi 0, %s348
  $region4: #{transformer_decoder_layer_forward.6} parent=0 // loop_header_branch
    %23 = sbr.rel (%p21) target = $region8
  $region5: #{transformer_decoder_layer_forward.6} parent=0 // loop_body
    %s25 = ssub.s32 %s20, 1
    %s26 = ssub.s32 %s20, 2
    %s27 = sadd.s32 %s20, 1
    %s28 = ssub.s32 %s20, %s27
    %p29 = scmp.eq.s32.totalorder %s28, 0
    %s31 = sadd.s32 %s30, 1
    %s32 = scalar_select %p29, %s30, %s31
    %p35 = pneg %p29
    %p36 = scmp.eq.s32.totalorder %s20, 1
    %p37 = por %p35, %p36
    %p38 = scmp.ne.s32.totalorder %s30, %s33
    %p39 = scmp.eq.s32.totalorder %s20, 0
    %p40 = por %p38, %p39
    %p41 = scmp.ne.s32.totalorder %s30, %s33
    %p42 = scmp.eq.s32.totalorder %s25, 1
    %p43 = por %p41, %p42
    %p44 = scmp.ne.s32.totalorder %s33, %s34
    %p45 = scmp.eq.s32.totalorder %s25, 0
    %p46 = por %p44, %p45
    %p47 = scmp.ne.s32.totalorder %s33, %s34
    %p48 = scmp.eq.s32.totalorder %s26, 1
    %p49 = por %p47, %p48
    %p51 = scmp.ne.s32.totalorder %s34, %s50
    %p52 = scmp.eq.s32.totalorder %s26, 0
    %p53 = por %p51, %p52
    %s54 = ssub.s32 %s20, %s27
    %p55 = scmp.eq.s32.totalorder %s54, 0
    %s57 = sadd.s32 %s56, 1
    %s58 = scalar_select %p55, %s56, %s57
    %p61 = pneg %p55
    %p62 = scmp.eq.s32.totalorder %s20, 1
    %p63 = por %p61, %p62
    %p64 = scmp.ne.s32.totalorder %s56, %s59
    %p65 = scmp.eq.s32.totalorder %s20, 0
    %p66 = por %p64, %p65
    %p67 = scmp.ne.s32.totalorder %s56, %s59
    %p68 = scmp.eq.s32.totalorder %s25, 1
    %p69 = por %p67, %p68
    %p70 = scmp.ne.s32.totalorder %s59, %s60
    %p71 = scmp.eq.s32.totalorder %s25, 0
    %p72 = por %p70, %p71
    %p73 = scmp.ne.s32.totalorder %s59, %s60
    %p74 = scmp.eq.s32.totalorder %s26, 1
    %p75 = por %p73, %p74
    %p77 = scmp.ne.s32.totalorder %s60, %s76
    %p78 = scmp.eq.s32.totalorder %s26, 0
    %p79 = por %p77, %p78
    %s80 = ssub.s32 %s20, %s27
    %p81 = scmp.eq.s32.totalorder %s80, 0
    %s83 = sadd.s32 %s82, 1
    %s84 = scalar_select %p81, %s82, %s83
    %p87 = pneg %p81
    %p88 = scmp.eq.s32.totalorder %s20, 1
    %p89 = por %p87, %p88
    %p90 = scmp.ne.s32.totalorder %s82, %s85
    %p91 = scmp.eq.s32.totalorder %s20, 0
    %p92 = por %p90, %p91
    %p93 = scmp.ne.s32.totalorder %s82, %s85
    %p94 = scmp.eq.s32.totalorder %s25, 1
    %p95 = por %p93, %p94
    %p96 = scmp.ne.s32.totalorder %s85, %s86
    %p97 = scmp.eq.s32.totalorder %s25, 0
    %p98 = por %p96, %p97
    %p99 = scmp.ne.s32.totalorder %s85, %s86
    %p100 = scmp.eq.s32.totalorder %s26, 1
    %p101 = por %p99, %p100
    %p103 = scmp.ne.s32.totalorder %s86, %s102
    %p104 = scmp.eq.s32.totalorder %s26, 0
    %p105 = por %p103, %p104
    %s106 = ssub.s32 %s20, %s27
    %p107 = scmp.eq.s32.totalorder %s106, 0
    %s109 = sadd.s32 %s108, 1
    %s110 = scalar_select %p107, %s108, %s109
    %p113 = pneg %p107
    %p114 = scmp.eq.s32.totalorder %s20, 1
    %p115 = por %p113, %p114
    %p116 = scmp.ne.s32.totalorder %s108, %s111
    %p117 = scmp.eq.s32.totalorder %s20, 0
    %p118 = por %p116, %p117
    %p119 = scmp.ne.s32.totalorder %s108, %s111
    %p120 = scmp.eq.s32.totalorder %s25, 1
    %p121 = por %p119, %p120
    %p122 = scmp.ne.s32.totalorder %s111, %s112
    %p123 = scmp.eq.s32.totalorder %s25, 0
    %p124 = por %p122, %p123
    %p125 = scmp.ne.s32.totalorder %s111, %s112
    %p126 = scmp.eq.s32.totalorder %s26, 1
    %p127 = por %p125, %p126
    %p129 = scmp.ne.s32.totalorder %s112, %s128
    %p130 = scmp.eq.s32.totalorder %s26, 0
    %p131 = por %p129, %p130
    %s133 = sadd.s32 %s132, 1
    %p136 = scmp.eq.s32.totalorder %s20, 1
    %p137 = scmp.ne.s32.totalorder %s132, %s134
    %p138 = scmp.eq.s32.totalorder %s20, 0
    %p139 = por %p137, %p138
    %p140 = scmp.ne.s32.totalorder %s132, %s134
    %p141 = scmp.eq.s32.totalorder %s25, 1
    %p142 = por %p140, %p141
    %p143 = scmp.ne.s32.totalorder %s134, %s135
    %p144 = scmp.eq.s32.totalorder %s25, 0
    %p145 = por %p143, %p144
    %p146 = scmp.ne.s32.totalorder %s134, %s135
    %p147 = scmp.eq.s32.totalorder %s26, 1
    %p148 = por %p146, %p147
    %p150 = scmp.ne.s32.totalorder %s135, %s149
    %p151 = scmp.eq.s32.totalorder %s26, 0
    %p152 = por %p150, %p151
    %s154 = sadd.s32 %s153, 1
    %p157 = scmp.eq.s32.totalorder %s20, 1
    %p158 = scmp.ne.s32.totalorder %s153, %s155
    %p159 = scmp.eq.s32.totalorder %s20, 0
    %p160 = por %p158, %p159
    %p161 = scmp.ne.s32.totalorder %s153, %s155
    %p162 = scmp.eq.s32.totalorder %s25, 1
    %p163 = por %p161, %p162
    %p164 = scmp.ne.s32.totalorder %s155, %s156
    %p165 = scmp.eq.s32.totalorder %s25, 0
    %p166 = por %p164, %p165
    %p167 = scmp.ne.s32.totalorder %s155, %s156
    %p168 = scmp.eq.s32.totalorder %s26, 1
    %p169 = por %p167, %p168
    %p171 = scmp.ne.s32.totalorder %s156, %s170
    %p172 = scmp.eq.s32.totalorder %s26, 0
    %p173 = por %p171, %p172
    %s175 = sadd.s32 %s174, 1
    %p178 = scmp.eq.s32.totalorder %s20, 1
    %p179 = scmp.ne.s32.totalorder %s174, %s176
    %p180 = scmp.eq.s32.totalorder %s20, 0
    %p181 = por %p179, %p180
    %p182 = scmp.ne.s32.totalorder %s174, %s176
    %p183 = scmp.eq.s32.totalorder %s25, 1
    %p184 = por %p182, %p183
    %p185 = scmp.ne.s32.totalorder %s176, %s177
    %p186 = scmp.eq.s32.totalorder %s25, 0
    %p187 = por %p185, %p186
    %p188 = scmp.ne.s32.totalorder %s176, %s177
    %p189 = scmp.eq.s32.totalorder %s26, 1
    %p190 = por %p188, %p189
    %p192 = scmp.ne.s32.totalorder %s177, %s191
    %p193 = scmp.eq.s32.totalorder %s26, 0
    %p194 = por %p192, %p193
    %s196 = sadd.s32 %s195, 1
    %p199 = scmp.eq.s32.totalorder %s20, 1
    %p200 = scmp.ne.s32.totalorder %s195, %s197
    %p201 = scmp.eq.s32.totalorder %s20, 0
    %p202 = por %p200, %p201
    %p203 = scmp.ne.s32.totalorder %s195, %s197
    %p204 = scmp.eq.s32.totalorder %s25, 1
    %p205 = por %p203, %p204
    %p206 = scmp.ne.s32.totalorder %s197, %s198
    %p207 = scmp.eq.s32.totalorder %s25, 0
    %p208 = por %p206, %p207
    %p209 = scmp.ne.s32.totalorder %s197, %s198
    %p210 = scmp.eq.s32.totalorder %s26, 1
    %p211 = por %p209, %p210
    %p213 = scmp.ne.s32.totalorder %s198, %s212
    %p214 = scmp.eq.s32.totalorder %s26, 0
    %p215 = por %p213, %p214
    %s217 = sadd.s32 %s216, 1
    %p220 = scmp.eq.s32.totalorder %s20, 1
    %p221 = scmp.ne.s32.totalorder %s216, %s218
    %p222 = scmp.eq.s32.totalorder %s20, 0
    %p223 = por %p221, %p222
    %p224 = scmp.ne.s32.totalorder %s216, %s218
    %p225 = scmp.eq.s32.totalorder %s25, 1
    %p226 = por %p224, %p225
    %p227 = scmp.ne.s32.totalorder %s218, %s219
    %p228 = scmp.eq.s32.totalorder %s25, 0
    %p229 = por %p227, %p228
    %p230 = scmp.ne.s32.totalorder %s218, %s219
    %p231 = scmp.eq.s32.totalorder %s26, 1
    %p232 = por %p230, %p231
    %p234 = scmp.ne.s32.totalorder %s219, %s233
    %p235 = scmp.eq.s32.totalorder %s26, 0
    %p236 = por %p234, %p235
    %s238 = sadd.s32 %s237, 1
    %p241 = scmp.eq.s32.totalorder %s20, 1
    %p242 = scmp.ne.s32.totalorder %s237, %s239
    %p243 = scmp.eq.s32.totalorder %s20, 0
    %p244 = por %p242, %p243
    %p245 = scmp.ne.s32.totalorder %s237, %s239
    %p246 = scmp.eq.s32.totalorder %s25, 1
    %p247 = por %p245, %p246
    %p248 = scmp.ne.s32.totalorder %s239, %s240
    %p249 = scmp.eq.s32.totalorder %s25, 0
    %p250 = por %p248, %p249
    %p251 = scmp.ne.s32.totalorder %s239, %s240
    %p252 = scmp.eq.s32.totalorder %s26, 1
    %p253 = por %p251, %p252
    %p255 = scmp.ne.s32.totalorder %s240, %s254
    %p256 = scmp.eq.s32.totalorder %s26, 0
    %p257 = por %p255, %p256
    %s259 = sadd.s32 %s258, 1
    %p262 = scmp.eq.s32.totalorder %s20, 1
    %p263 = scmp.ne.s32.totalorder %s258, %s260
    %p264 = scmp.eq.s32.totalorder %s20, 0
    %p265 = por %p263, %p264
    %p266 = scmp.ne.s32.totalorder %s258, %s260
    %p267 = scmp.eq.s32.totalorder %s25, 1
    %p268 = por %p266, %p267
    %p269 = scmp.ne.s32.totalorder %s260, %s261
    %p270 = scmp.eq.s32.totalorder %s25, 0
    %p271 = por %p269, %p270
    %p272 = scmp.ne.s32.totalorder %s260, %s261
    %p273 = scmp.eq.s32.totalorder %s26, 1
    %p274 = por %p272, %p273
    %p276 = scmp.ne.s32.totalorder %s261, %s275
    %p277 = scmp.eq.s32.totalorder %s26, 0
    %p278 = por %p276, %p277
    %s280 = sadd.s32 %s279, 1
    %p283 = scmp.eq.s32.totalorder %s20, 1
    %p284 = scmp.ne.s32.totalorder %s279, %s281
    %p285 = scmp.eq.s32.totalorder %s20, 0
    %p286 = por %p284, %p285
    %p287 = scmp.ne.s32.totalorder %s279, %s281
    %p288 = scmp.eq.s32.totalorder %s25, 1
    %p289 = por %p287, %p288
    %p290 = scmp.ne.s32.totalorder %s281, %s282
    %p291 = scmp.eq.s32.totalorder %s25, 0
    %p292 = por %p290, %p291
    %p293 = scmp.ne.s32.totalorder %s281, %s282
    %p294 = scmp.eq.s32.totalorder %s26, 1
    %p295 = por %p293, %p294
    %p297 = scmp.ne.s32.totalorder %s282, %s296
    %p298 = scmp.eq.s32.totalorder %s26, 0
    %p299 = por %p297, %p298
    %s301 = sadd.s32 %s300, 1
    %p304 = scmp.eq.s32.totalorder %s20, 1
    %p305 = scmp.ne.s32.totalorder %s300, %s302
    %p306 = scmp.eq.s32.totalorder %s20, 0
    %p307 = por %p305, %p306
    %p308 = scmp.ne.s32.totalorder %s300, %s302
    %p309 = scmp.eq.s32.totalorder %s25, 1
    %p310 = por %p308, %p309
    %p311 = scmp.ne.s32.totalorder %s302, %s303
    %p312 = scmp.eq.s32.totalorder %s25, 0
    %p313 = por %p311, %p312
    %p314 = scmp.ne.s32.totalorder %s302, %s303
    %p315 = scmp.eq.s32.totalorder %s26, 1
    %p316 = por %p314, %p315
    %p318 = scmp.ne.s32.totalorder %s303, %s317
    %p319 = scmp.eq.s32.totalorder %s26, 0
    %p320 = por %p318, %p319
    %s322 = sadd.s32 %s321, 1
    %p325 = scmp.eq.s32.totalorder %s20, 1
    %p326 = scmp.ne.s32.totalorder %s321, %s323
    %p327 = scmp.eq.s32.totalorder %s20, 0
    %p328 = por %p326, %p327
    %p329 = scmp.ne.s32.totalorder %s321, %s323
    %p330 = scmp.eq.s32.totalorder %s25, 1
    %p331 = por %p329, %p330
    %p332 = scmp.ne.s32.totalorder %s323, %s324
    %p333 = scmp.eq.s32.totalorder %s25, 0
    %p334 = por %p332, %p333
    %p335 = scmp.ne.s32.totalorder %s323, %s324
    %p336 = scmp.eq.s32.totalorder %s26, 1
    %p337 = por %p335, %p336
    %p339 = scmp.ne.s32.totalorder %s324, %s338
    %p340 = scmp.eq.s32.totalorder %s26, 0
    %p341 = por %p339, %p340
    %s342 = ssub.s32 %s20, %s27
    %p343 = scmp.eq.s32.totalorder %s342, 0
    %s345 = sadd.s32 %s344, 1
    %s346 = scalar_select %p343, %s344, %s345
    %p349 = pneg %p343
    %p350 = scmp.eq.s32.totalorder %s20, 1
    %p351 = por %p349, %p350
    %p352 = scmp.ne.s32.totalorder %s344, %s347
    %p353 = scmp.eq.s32.totalorder %s20, 0
    %p354 = por %p352, %p353
    %p355 = scmp.ne.s32.totalorder %s344, %s347
    %p356 = scmp.eq.s32.totalorder %s25, 1
    %p357 = por %p355, %p356
    %p358 = scmp.ne.s32.totalorder %s347, %s348
    %p359 = scmp.eq.s32.totalorder %s25, 0
    %p360 = por %p358, %p359
    %p361 = scmp.ne.s32.totalorder %s347, %s348
    %p362 = scmp.eq.s32.totalorder %s26, 1
    %p363 = por %p361, %p362
    %p365 = scmp.ne.s32.totalorder %s348, %s364
    %p366 = scmp.eq.s32.totalorder %s26, 0
    %p367 = por %p365, %p366
    %p368 = scmp.le.s32.totalorder 1, %s20
    %p369 = scmp.lt.s32.totalorder %s20, 3
    %p370 = pnand %p368, %p369
    %p371 = pneg %p370
    // Predicated region
    $region9: #{transformer_decoder_layer_forward.6} parent=5 // pred_check
      _
    $region10: #{transformer_decoder_layer_forward.6} parent=5 // pred_check_branch
      %373 = sbr.rel (%p370) target = $region12
    $region11: #{transformer_decoder_layer_forward.6} parent=5 // pred_region
      %s374 = ssub.s32 %s20, 1
      // Predicated region
      $region13: #{transformer_decoder_layer_forward.6} parent=11 // pred_check
        %p375 = pneg %p145
      $region14: #{transformer_decoder_layer_forward.6} parent=11 // pred_check_branch
        %377 = sbr.rel (%p375) target = $region16
      $region15: #{transformer_decoder_layer_forward.6} parent=11 // pred_region
        _
      $region16: #{transformer_decoder_layer_forward.6} parent=11 // pred_fallthru
        _
      // Predicated region
      $region17: #{transformer_decoder_layer_forward.6} parent=11 // pred_check
        %p378 = pneg %p166
      $region18: #{transformer_decoder_layer_forward.6} parent=11 // pred_check_branch
        %380 = sbr.rel (%p378) target = $region20
      $region19: #{transformer_decoder_layer_forward.6} parent=11 // pred_region
        _
      $region20: #{transformer_decoder_layer_forward.6} parent=11 // pred_fallthru
        _
      // Predicated region
      $region21: #{transformer_decoder_layer_forward.6} parent=11 // pred_check
        %p381 = pneg %p187
      $region22: #{transformer_decoder_layer_forward.6} parent=11 // pred_check_branch
        %383 = sbr.rel (%p381) target = $region24
      $region23: #{transformer_decoder_layer_forward.6} parent=11 // pred_region
        _
      $region24: #{transformer_decoder_layer_forward.6} parent=11 // pred_fallthru
        _
      // Predicated region
      $region25: #{transformer_decoder_layer_forward.6} parent=11 // pred_check
        %p384 = pneg %p208
      $region26: #{transformer_decoder_layer_forward.6} parent=11 // pred_check_branch
        %386 = sbr.rel (%p384) target = $region28
      $region27: #{transformer_decoder_layer_forward.6} parent=11 // pred_region
        _
      $region28: #{transformer_decoder_layer_forward.6} parent=11 // pred_fallthru
        _
      // Predicated region
      $region29: #{transformer_decoder_layer_forward.6} parent=11 // pred_check
        %p387 = pneg %p229
      $region30: #{transformer_decoder_layer_forward.6} parent=11 // pred_check_branch
        %389 = sbr.rel (%p387) target = $region32
      $region31: #{transformer_decoder_layer_forward.6} parent=11 // pred_region
        _
      $region32: #{transformer_decoder_layer_forward.6} parent=11 // pred_fallthru
        _
      // Predicated region
      $region33: #{transformer_decoder_layer_forward.6} parent=11 // pred_check
        %p390 = pneg %p250
      $region34: #{transformer_decoder_layer_forward.6} parent=11 // pred_check_branch
        %392 = sbr.rel (%p390) target = $region36
      $region35: #{transformer_decoder_layer_forward.6} parent=11 // pred_region
        _
      $region36: #{transformer_decoder_layer_forward.6} parent=11 // pred_fallthru
        _
      // Predicated region
      $region37: #{transformer_decoder_layer_forward.6} parent=11 // pred_check
        %p393 = pneg %p271
      $region38: #{transformer_decoder_layer_forward.6} parent=11 // pred_check_branch
        %395 = sbr.rel (%p393) target = $region40
      $region39: #{transformer_decoder_layer_forward.6} parent=11 // pred_region
        _
      $region40: #{transformer_decoder_layer_forward.6} parent=11 // pred_fallthru
        _
      // Predicated region
      $region41: #{transformer_decoder_layer_forward.6} parent=11 // pred_check
        %p396 = pneg %p292
      $region42: #{transformer_decoder_layer_forward.6} parent=11 // pred_check_branch
        %398 = sbr.rel (%p396) target = $region44
      $region43: #{transformer_decoder_layer_forward.6} parent=11 // pred_region
        _
      $region44: #{transformer_decoder_layer_forward.6} parent=11 // pred_fallthru
        _
      // Predicated region
      $region45: #{transformer_decoder_layer_forward.6} parent=11 // pred_check
        %p399 = pneg %p313
      $region46: #{transformer_decoder_layer_forward.6} parent=11 // pred_check_branch
        %401 = sbr.rel (%p399) target = $region48
      $region47: #{transformer_decoder_layer_forward.6} parent=11 // pred_region
        _
      $region48: #{transformer_decoder_layer_forward.6} parent=11 // pred_fallthru
        _
      // Predicated region
      $region49: #{transformer_decoder_layer_forward.6} parent=11 // pred_check
        %p402 = pneg %p334
      $region50: #{transformer_decoder_layer_forward.6} parent=11 // pred_check_branch
        %404 = sbr.rel (%p402) target = $region52
      $region51: #{transformer_decoder_layer_forward.6} parent=11 // pred_region
        _
      $region52: #{transformer_decoder_layer_forward.6} parent=11 // pred_fallthru
        _
    $region12: #{transformer_decoder_layer_forward.6} parent=5 // pred_fallthru
      _
    %p405 = scmp.lt.s32.totalorder %s20, 2
    // Predicated region
    $region53: #{transformer_decoder_layer_forward.6} parent=5 // pred_check
      %p406 = pneg %p405
    $region54: #{transformer_decoder_layer_forward.6} parent=5 // pred_check_branch
      %408 = sbr.rel (%p406) target = $region56
    $region55: #{transformer_decoder_layer_forward.6} parent=5 // pred_region
      // Predicated region
      $region57: #{transformer_decoder_layer_forward.6} parent=55 // pred_check
        %p409 = pneg %p40
      $region58: #{transformer_decoder_layer_forward.6} parent=55 // pred_check_branch
        %411 = sbr.rel (%p409) target = $region60
      $region59: #{transformer_decoder_layer_forward.6} parent=55 // pred_region
        %p412 = scmp.lt.s32.totalorder %s20, 1
        %s413 = scalar_select %p412, %s20, 1
        %s414 = smul.addr %s413, 8
        %s415 = scalar_lea.vmem %s0, %s414
      $region60: #{transformer_decoder_layer_forward.6} parent=55 // pred_fallthru
        _
      // Predicated region
      $region61: #{transformer_decoder_layer_forward.6} parent=55 // pred_check
        %p416 = pneg %p66
      $region62: #{transformer_decoder_layer_forward.6} parent=55 // pred_check_branch
        %418 = sbr.rel (%p416) target = $region64
      $region63: #{transformer_decoder_layer_forward.6} parent=55 // pred_region
        %p419 = scmp.lt.s32.totalorder %s20, 1
        %s420 = scalar_select %p419, %s20, 1
        %s421 = smul.addr %s420, 2
        %s422 = smul.addr %s421, 8
        %s423 = scalar_lea.vmem %s1, %s422
      $region64: #{transformer_decoder_layer_forward.6} parent=55 // pred_fallthru
        _
      // Predicated region
      $region65: #{transformer_decoder_layer_forward.6} parent=55 // pred_check
        %p424 = pneg %p92
      $region66: #{transformer_decoder_layer_forward.6} parent=55 // pred_check_branch
        %426 = sbr.rel (%p424) target = $region68
      $region67: #{transformer_decoder_layer_forward.6} parent=55 // pred_region
        %p427 = scmp.lt.s32.totalorder %s20, 1
        %s428 = scalar_select %p427, %s20, 1
        %s429 = smul.addr %s428, 2
        %s430 = smul.addr %s429, 8
        %s431 = scalar_lea.vmem %s2, %s430
      $region68: #{transformer_decoder_layer_forward.6} parent=55 // pred_fallthru
        _
      // Predicated region
      $region69: #{transformer_decoder_layer_forward.6} parent=55 // pred_check
        %p432 = pneg %p118
      $region70: #{transformer_decoder_layer_forward.6} parent=55 // pred_check_branch
        %434 = sbr.rel (%p432) target = $region72
      $region71: #{transformer_decoder_layer_forward.6} parent=55 // pred_region
        %p435 = scmp.lt.s32.totalorder %s20, 1
        %s436 = scalar_select %p435, %s20, 1
        %s437 = smul.addr %s436, 8
        %s438 = scalar_lea.vmem %s3, %s437
      $region72: #{transformer_decoder_layer_forward.6} parent=55 // pred_fallthru
        _
    $region56: #{transformer_decoder_layer_forward.6} parent=5 // pred_fallthru
      _
    %p439 = scmp.le.s32.totalorder 1, %s20
    %p440 = scmp.lt.s32.totalorder %s20, 3
    %p441 = pnand %p439, %p440
    %p442 = pneg %p441
    // Predicated region
    $region73: #{transformer_decoder_layer_forward.6} parent=5 // pred_check
      _
    $region74: #{transformer_decoder_layer_forward.6} parent=5 // pred_check_branch
      %444 = sbr.rel (%p441) target = $region76
    $region75: #{transformer_decoder_layer_forward.6} parent=5 // pred_region
      %s445 = ssub.s32 %s20, 1
      %p446 = scmp.lt.s32.totalorder %s25, 1
      %s447 = scalar_select %p446, %s25, 1
      %s448 = smul.addr %s447, 8
      %s449 = scalar_lea.vmem %s0, %s448
      %p450 = pneg %p46
      %p451 = pneg %p43
      %p452 = scmp.lt.s32.totalorder %s25, 1
      %s453 = scalar_select %p452, %s25, 1
      %s454 = smul.addr %s453, 2
      %s455 = smul.addr %s454, 8
      %s456 = scalar_lea.vmem %s1, %s455
      %p457 = pneg %p72
      %p458 = pneg %p69
      %p459 = scmp.lt.s32.totalorder %s25, 1
      %s460 = scalar_select %p459, %s25, 1
      %s461 = smul.addr %s460, 2
      %s462 = smul.addr %s461, 8
      %s463 = scalar_lea.vmem %s2, %s462
      %p464 = pneg %p98
      %p465 = pneg %p95
      %p466 = scmp.lt.s32.totalorder %s25, 1
      %s467 = scalar_select %p466, %s25, 1
      %s468 = smul.addr %s467, 8
      %s469 = scalar_lea.vmem %s3, %s468
      %p470 = pneg %p124
      %p471 = pneg %p121
      %p472 = pneg %p145
      %p473 = pneg %p142
      %p474 = pneg %p166
      %p475 = pneg %p163
      %p476 = pneg %p187
      %p477 = pneg %p184
      %p478 = pneg %p208
      %p479 = pneg %p205
      %p480 = pneg %p229
      %p481 = pneg %p226
      %p482 = pneg %p250
      %p483 = pneg %p247
      %p484 = pneg %p271
      %p485 = pneg %p268
      %p486 = pneg %p292
      %p487 = pneg %p289
      %p488 = pneg %p313
      %p489 = pneg %p310
      %p490 = pneg %p334
      %p491 = pneg %p331
      %p492 = pneg %p360
      %p493 = pneg %p357
      %p494 = scmp.lt.s32.totalorder %s25, 1
      %s495 = scalar_select %p494, %s25, 1
      %s496 = smul.addr %s495, 8
      %s497 = scalar_lea.vmem %s14, %s496
      %p498 = scmp.lt.s32.totalorder %s25, 1
      %s499 = scalar_select %p498, %s25, 1
      %s500 = smul.addr %s499, 8
      %s501 = scalar_lea.vmem %s0, %s500
      %p502 = scmp.lt.s32.totalorder %s25, 1
      %s503 = scalar_select %p502, %s25, 1
      %s504 = smul.addr %s503, 2
      %s505 = smul.addr %s504, 8
      %s506 = scalar_lea.vmem %s1, %s505
      %p507 = scmp.lt.s32.totalorder %s25, 1
      %s508 = scalar_select %p507, %s25, 1
      %s509 = smul.addr %s508, 2
      %s510 = smul.addr %s509, 8
      %s511 = scalar_lea.vmem %s2, %s510
      %p512 = scmp.lt.s32.totalorder %s25, 1
      %s513 = scalar_select %p512, %s25, 1
      %s514 = smul.addr %s513, 8
      %s515 = scalar_lea.vmem %s3, %s514
      %p516 = scmp.lt.s32.totalorder %s25, 1
      %s517 = scalar_select %p516, %s25, 1
      %s518 = smul.addr %s517, 8
      %s519 = scalar_lea.vmem %s14, %s518
      %v521 = vld [vmem:[%s501] sm:$0xff]
      %v522 = vpack.c.bf16 %v521, %v521
      %v523 = vld [vmem:[%s506] sm:$0xff]
      %v524 = vld [vmem:[%s506 + $0x8] sm:$0xf]
      %v525 = vpack.c.bf16 %v524, %v523
      %v526 = vld [vmem:[%s511] sm:$0xff]
      %v527 = vld [vmem:[%s511 + $0x8] sm:$0xf]
      %v528 = vpack.c.bf16 %v527, %v526
      %v529 = vld [vmem:[%s4] sm:$0xf]
      %v530 = vld [vmem:[%s4 + $0x4] sm:$0xf]
      %v531 = vld [vmem:[%s4 + $0x8] sm:$0xf]
      %v532 = vld [vmem:[%s4 + $0xc] sm:$0xf]
      %v533 = vld [vmem:[%s5] sm:$0x1]
      %v535 = vlaneseq
      %v536 = vshrl.u32 %v535, 7
      %v537 = vsub.s32 0, %v536
      %v538 = vrot.slane %v533, %v537
      %v544 = vunpack.c.l.b16 %v529
      %v545 = vunpack.c.l.b16 %v530
      %v546 = vunpack.c.l.b16 %v531
      %v547 = vunpack.c.l.b16 %v532
      %v548 = vpack.c.b16 %v545, %v544
      %v549 = vpack.c.b16 %v547, %v546
      %vm552 = vcmask 261120
      %v554 = vsel %vm552, %v522, 0
      %556 = vmatprep.subr.bf16.mxu0 0
      %557 = vmatpush1.bf16.msra.mxu0 %v548
      %558 = vmatprep.subr.bf16.mxu0 0
      %559 = vmatpush1.bf16.msra.mxu0 %v549
      %560 = vmatprep.subr.bf16.mxu0 0
      %561 = vmatpush1.bf16.msra.mxu0 0
      %562 = vmatprep.subr.bf16.mxu0 0
      %563 = vmatpush1.bf16.msra.mxu0 0
      %564 = vmatprep.subr.bf16.mxu0 0
      %565 = vmatpush1.bf16.msra.mxu0 0
      %566 = vmatprep.subr.bf16.mxu0 0
      %567 = vmatpush1.bf16.msra.mxu0 0
      %568 = vmatprep.subr.bf16.mxu0 0
      %569 = vmatpush1.bf16.msra.mxu0 0
      %570 = vmatprep.subr.bf16.mxu0 0
      %571 = vmatpush1.bf16.msra.mxu0 0
      %572 = vmatprep.subr.bf16.mxu0 0
      %573 = vmatpush1.bf16.msra.mxu0 0
      %574 = vmatprep.subr.bf16.mxu0 0
      %575 = vmatpush1.bf16.msra.mxu0 0
      %576 = vmatprep.subr.bf16.mxu0 0
      %577 = vmatpush1.bf16.msra.mxu0 0
      %578 = vmatprep.subr.bf16.mxu0 0
      %579 = vmatpush1.bf16.msra.mxu0 0
      %580 = vmatprep.subr.bf16.mxu0 0
      %581 = vmatpush1.bf16.msra.mxu0 0
      %582 = vmatprep.subr.bf16.mxu0 0
      %583 = vmatpush1.bf16.msra.mxu0 0
      %584 = vmatprep.subr.bf16.mxu0 0
      %585 = vmatpush1.bf16.msra.mxu0 0
      %586 = vmatprep.subr.bf16.mxu0 0
      %587 = vmatpush1.bf16.msra.mxu0 0
      %588 = vmatprep.mubr.bf16.mxu0 0
      %589 = vmatmul.mubr.bf16.gmra.mrb[0].mxu0 %v554
      %v590 = vpop.f32.mrb[0].mxu0
      %v591 = vadd.f32 %v538, %v590
      %v592 = vpop.f32.mrb[0].mxu0
      %v593 = vpop.f32.mrb[0].mxu0
      %v594 = vpop.f32.mrb[0].mxu0
      %595 = vdwg.mxu0
      %v596 = vld [vmem:[%s6] sm:$0xf]
      %v597 = vld [vmem:[%s6 + $0x4] sm:$0xf]
      %v598 = vld [vmem:[%s6 + $0x8] sm:$0xf]
      %v599 = vld [vmem:[%s6 + $0xc] sm:$0xf]
      %v600 = vld [vmem:[%s7] sm:$0x1]
      %v602 = vlaneseq
      %v603 = vshrl.u32 %v602, 7
      %v604 = vsub.s32 0, %v603
      %v605 = vrot.slane %v600, %v604
      %v611 = vunpack.c.l.b16 %v596
      %v612 = vunpack.c.l.b16 %v597
      %v613 = vunpack.c.l.b16 %v598
      %v614 = vunpack.c.l.b16 %v599
      %v615 = vpack.c.b16 %v612, %v611
      %v616 = vpack.c.b16 %v614, %v613
      %v620 = vsel %vm552, %v525, 0
      %622 = vmatprep.subr.bf16.mxu0 0
      %623 = vmatpush1.bf16.msra.mxu0 %v615
      %624 = vmatprep.subr.bf16.mxu0 0
      %625 = vmatpush1.bf16.msra.mxu0 %v616
      %626 = vmatprep.subr.bf16.mxu0 0
      %627 = vmatpush1.bf16.msra.mxu0 0
      %628 = vmatprep.subr.bf16.mxu0 0
      %629 = vmatpush1.bf16.msra.mxu0 0
      %630 = vmatprep.subr.bf16.mxu0 0
      %631 = vmatpush1.bf16.msra.mxu0 0
      %632 = vmatprep.subr.bf16.mxu0 0
      %633 = vmatpush1.bf16.msra.mxu0 0
      %634 = vmatprep.subr.bf16.mxu0 0
      %635 = vmatpush1.bf16.msra.mxu0 0
      %636 = vmatprep.subr.bf16.mxu0 0
      %637 = vmatpush1.bf16.msra.mxu0 0
      %638 = vmatprep.subr.bf16.mxu0 0
      %639 = vmatpush1.bf16.msra.mxu0 0
      %640 = vmatprep.subr.bf16.mxu0 0
      %641 = vmatpush1.bf16.msra.mxu0 0
      %642 = vmatprep.subr.bf16.mxu0 0
      %643 = vmatpush1.bf16.msra.mxu0 0
      %644 = vmatprep.subr.bf16.mxu0 0
      %645 = vmatpush1.bf16.msra.mxu0 0
      %646 = vmatprep.subr.bf16.mxu0 0
      %647 = vmatpush1.bf16.msra.mxu0 0
      %648 = vmatprep.subr.bf16.mxu0 0
      %649 = vmatpush1.bf16.msra.mxu0 0
      %650 = vmatprep.subr.bf16.mxu0 0
      %651 = vmatpush1.bf16.msra.mxu0 0
      %652 = vmatprep.subr.bf16.mxu0 0
      %653 = vmatpush1.bf16.msra.mxu0 0
      %654 = vmatprep.mubr.bf16.mxu0 0
      %655 = vmatmul.mubr.bf16.gmra.mrb[0].mxu0 %v620
      %v656 = vpop.f32.mrb[0].mxu0
      %v657 = vadd.f32 %v605, %v656
      %v658 = vpop.f32.mrb[0].mxu0
      %v659 = vpop.f32.mrb[0].mxu0
      %v660 = vadd.f32 %v605, %v659
      %v661 = vpop.f32.mrb[0].mxu0
      %662 = vdwg.mxu0
      %v663 = vld [vmem:[%s8] sm:$0xf]
      %v664 = vld [vmem:[%s8 + $0x4] sm:$0xf]
      %v665 = vld [vmem:[%s8 + $0x8] sm:$0xf]
      %v666 = vld [vmem:[%s8 + $0xc] sm:$0xf]
      %v667 = vld [vmem:[%s9] sm:$0x1]
      %v669 = vlaneseq
      %v670 = vshrl.u32 %v669, 7
      %v671 = vsub.s32 0, %v670
      %v672 = vrot.slane %v667, %v671
      %v678 = vunpack.c.l.b16 %v663
      %v679 = vunpack.c.l.b16 %v664
      %v680 = vunpack.c.l.b16 %v665
      %v681 = vunpack.c.l.b16 %v666
      %v682 = vpack.c.b16 %v679, %v678
      %v683 = vpack.c.b16 %v681, %v680
      %v687 = vsel %vm552, %v528, 0
      %689 = vmatprep.subr.bf16.mxu0 0
      %690 = vmatpush1.bf16.msra.mxu0 %v682
      %691 = vmatprep.subr.bf16.mxu0 0
      %692 = vmatpush1.bf16.msra.mxu0 %v683
      %693 = vmatprep.subr.bf16.mxu0 0
      %694 = vmatpush1.bf16.msra.mxu0 0
      %695 = vmatprep.subr.bf16.mxu0 0
      %696 = vmatpush1.bf16.msra.mxu0 0
      %697 = vmatprep.subr.bf16.mxu0 0
      %698 = vmatpush1.bf16.msra.mxu0 0
      %699 = vmatprep.subr.bf16.mxu0 0
      %700 = vmatpush1.bf16.msra.mxu0 0
      %701 = vmatprep.subr.bf16.mxu0 0
      %702 = vmatpush1.bf16.msra.mxu0 0
      %703 = vmatprep.subr.bf16.mxu0 0
      %704 = vmatpush1.bf16.msra.mxu0 0
      %705 = vmatprep.subr.bf16.mxu0 0
      %706 = vmatpush1.bf16.msra.mxu0 0
      %707 = vmatprep.subr.bf16.mxu0 0
      %708 = vmatpush1.bf16.msra.mxu0 0
      %709 = vmatprep.subr.bf16.mxu0 0
      %710 = vmatpush1.bf16.msra.mxu0 0
      %711 = vmatprep.subr.bf16.mxu0 0
      %712 = vmatpush1.bf16.msra.mxu0 0
      %713 = vmatprep.subr.bf16.mxu0 0
      %714 = vmatpush1.bf16.msra.mxu0 0
      %715 = vmatprep.subr.bf16.mxu0 0
      %716 = vmatpush1.bf16.msra.mxu0 0
      %717 = vmatprep.subr.bf16.mxu0 0
      %718 = vmatpush1.bf16.msra.mxu0 0
      %719 = vmatprep.subr.bf16.mxu0 0
      %720 = vmatpush1.bf16.msra.mxu0 0
      %721 = vmatprep.mubr.bf16.mxu0 0
      %722 = vmatmul.mubr.bf16.gmra.mrb[0].mxu0 %v687
      %v723 = vpop.f32.mrb[0].mxu0
      %v724 = vadd.f32 %v672, %v723
      %v725 = vpop.f32.mrb[0].mxu0
      %v726 = vpop.f32.mrb[0].mxu0
      %v727 = vadd.f32 %v672, %v726
      %v728 = vpop.f32.mrb[0].mxu0
      %729 = vdwg.mxu0
      %v730 = vpack.c.bf16 %v591, %v591
      %v731 = vpack.c.bf16 %v660, %v657
      %v732 = vpack.c.bf16 %v727, %v724
      %vm733 = vcmask 64512
      %v735 = vsel %vm733, %v730, 0
      %v738 = vsel %vm733, %v731, 0
      %740 = vmatprep.subr.bf16.mxu0 0
      %741 = vmatpush1.bf16.xpose.msra.mxu0 %v738
      %742 = vmatprep.subr.bf16.mxu0 0
      %743 = vmatpush1.bf16.xpose.msra.mxu0 0
      %744 = vmatprep.subr.bf16.mxu0 0
      %745 = vmatpush1.bf16.xpose.msra.mxu0 0
      %746 = vmatprep.subr.bf16.mxu0 0
      %747 = vmatpush1.bf16.xpose.msra.mxu0 0
      %748 = vmatprep.subr.bf16.mxu0 0
      %749 = vmatpush1.bf16.xpose.msra.mxu0 0
      %750 = vmatprep.subr.bf16.mxu0 0
      %751 = vmatpush1.bf16.xpose.msra.mxu0 0
      %752 = vmatprep.subr.bf16.mxu0 0
      %753 = vmatpush1.bf16.xpose.msra.mxu0 0
      %754 = vmatprep.subr.bf16.mxu0 0
      %755 = vmatpush1.bf16.xpose.msra.mxu0 0
      %756 = vmatprep.subr.bf16.mxu0 0
      %757 = vmatpush1.bf16.xpose.msra.mxu0 0
      %758 = vmatprep.subr.bf16.mxu0 0
      %759 = vmatpush1.bf16.xpose.msra.mxu0 0
      %760 = vmatprep.subr.bf16.mxu0 0
      %761 = vmatpush1.bf16.xpose.msra.mxu0 0
      %762 = vmatprep.subr.bf16.mxu0 0
      %763 = vmatpush1.bf16.xpose.msra.mxu0 0
      %764 = vmatprep.subr.bf16.mxu0 0
      %765 = vmatpush1.bf16.xpose.msra.mxu0 0
      %766 = vmatprep.subr.bf16.mxu0 0
      %767 = vmatpush1.bf16.xpose.msra.mxu0 0
      %768 = vmatprep.subr.bf16.mxu0 0
      %769 = vmatpush1.bf16.xpose.msra.mxu0 0
      %770 = vmatprep.subr.bf16.mxu0 0
      %771 = vmatpush1.bf16.xpose.msra.mxu0 0
      %772 = vmatprep.mubr.bf16.mxu0 0
      %773 = vmatmul.mubr.bf16.gmra.mrb[0].mxu0 %v735
      %v774 = vpop.f32.mrb[0].mxu0
      %v775 = vadd.f32 0.0, %v774
      %v776 = vpop.f32.mrb[0].mxu0
      %v777 = vpop.f32.mrb[0].mxu0
      %v778 = vpop.f32.mrb[0].mxu0
      %779 = vdwg.mxu0
      %vm780 = vcmask 97280
      %v781 = vsel %vm780, %v775, -inf
      %782 = vmax.xlane.f32.xlu0 %v781
      %v783 = vpop.xlane.xlu0 %782
      %v784 = vsub.f32 %v775, %v783
      %v785 = vmul.f32 %v784, 1.442695
      %v786 = vpow.pop %v785
      %v787 = vsel %vm780, %v786, 0.0
      %788 = vadd.xlane.f32.xlu0 %v787
      %v789 = vpop.xlane.xlu0 %788
      %v790 = vrcp.pop %v789
      %v791 = vmul.f32 %v786, %v790
      %v792 = vpack.c.bf16 %v791, %v791
      %v794 = vsel %vm780, %v792, 0
      %vm796 = vcmask 1045504
      %v798 = vsel %vm796, %v732, 0
      %800 = vmatprep.subr.bf16.mxu0 0
      %801 = vmatpush1.bf16.msra.mxu0 %v798
      %802 = vmatprep.subr.bf16.mxu0 0
      %803 = vmatpush1.bf16.msra.mxu0 0
      %804 = vmatprep.subr.bf16.mxu0 0
      %805 = vmatpush1.bf16.msra.mxu0 0
      %806 = vmatprep.subr.bf16.mxu0 0
      %807 = vmatpush1.bf16.msra.mxu0 0
      %808 = vmatprep.subr.bf16.mxu0 0
      %809 = vmatpush1.bf16.msra.mxu0 0
      %810 = vmatprep.subr.bf16.mxu0 0
      %811 = vmatpush1.bf16.msra.mxu0 0
      %812 = vmatprep.subr.bf16.mxu0 0
      %813 = vmatpush1.bf16.msra.mxu0 0
      %814 = vmatprep.subr.bf16.mxu0 0
      %815 = vmatpush1.bf16.msra.mxu0 0
      %816 = vmatprep.subr.bf16.mxu0 0
      %817 = vmatpush1.bf16.msra.mxu0 0
      %818 = vmatprep.subr.bf16.mxu0 0
      %819 = vmatpush1.bf16.msra.mxu0 0
      %820 = vmatprep.subr.bf16.mxu0 0
      %821 = vmatpush1.bf16.msra.mxu0 0
      %822 = vmatprep.subr.bf16.mxu0 0
      %823 = vmatpush1.bf16.msra.mxu0 0
      %824 = vmatprep.subr.bf16.mxu0 0
      %825 = vmatpush1.bf16.msra.mxu0 0
      %826 = vmatprep.subr.bf16.mxu0 0
      %827 = vmatpush1.bf16.msra.mxu0 0
      %828 = vmatprep.subr.bf16.mxu0 0
      %829 = vmatpush1.bf16.msra.mxu0 0
      %830 = vmatprep.subr.bf16.mxu0 0
      %831 = vmatpush1.bf16.msra.mxu0 0
      %832 = vmatprep.mubr.bf16.mxu0 0
      %833 = vmatmul.mubr.bf16.gmra.mrb[0].mxu0 %v794
      %v834 = vpop.f32.mrb[0].mxu0
      %v835 = vadd.f32 0.0, %v834
      %v836 = vpop.f32.mrb[0].mxu0
      %v837 = vpop.f32.mrb[0].mxu0
      %v838 = vpop.f32.mrb[0].mxu0
      %839 = vdwg.mxu0
      %v840 = vld [vmem:[%s10] sm:$0xf]
      %v841 = vpack.c.bf16 %v835, %v835
      %843 = vrot.lane.b32.xlu0 %v730, 120
      %v844 = vpop.permute.xlu0 %843
      %846 = vrot.lane.b32.xlu0 %v731, 120
      %v847 = vpop.permute.xlu0 %846
      %v849 = vsel %vm733, %v844, 0
      %v852 = vsel %vm733, %v847, 0
      %854 = vmatprep.subr.bf16.mxu0 0
      %855 = vmatpush1.bf16.xpose.msra.mxu0 %v852
      %856 = vmatprep.subr.bf16.mxu0 0
      %857 = vmatpush1.bf16.xpose.msra.mxu0 0
      %858 = vmatprep.subr.bf16.mxu0 0
      %859 = vmatpush1.bf16.xpose.msra.mxu0 0
      %860 = vmatprep.subr.bf16.mxu0 0
      %861 = vmatpush1.bf16.xpose.msra.mxu0 0
      %862 = vmatprep.subr.bf16.mxu0 0
      %863 = vmatpush1.bf16.xpose.msra.mxu0 0
      %864 = vmatprep.subr.bf16.mxu0 0
      %865 = vmatpush1.bf16.xpose.msra.mxu0 0
      %866 = vmatprep.subr.bf16.mxu0 0
      %867 = vmatpush1.bf16.xpose.msra.mxu0 0
      %868 = vmatprep.subr.bf16.mxu0 0
      %869 = vmatpush1.bf16.xpose.msra.mxu0 0
      %870 = vmatprep.subr.bf16.mxu0 0
      %871 = vmatpush1.bf16.xpose.msra.mxu0 0
      %872 = vmatprep.subr.bf16.mxu0 0
      %873 = vmatpush1.bf16.xpose.msra.mxu0 0
      %874 = vmatprep.subr.bf16.mxu0 0
      %875 = vmatpush1.bf16.xpose.msra.mxu0 0
      %876 = vmatprep.subr.bf16.mxu0 0
      %877 = vmatpush1.bf16.xpose.msra.mxu0 0
      %878 = vmatprep.subr.bf16.mxu0 0
      %879 = vmatpush1.bf16.xpose.msra.mxu0 0
      %880 = vmatprep.subr.bf16.mxu0 0
      %881 = vmatpush1.bf16.xpose.msra.mxu0 0
      %882 = vmatprep.subr.bf16.mxu0 0
      %883 = vmatpush1.bf16.xpose.msra.mxu0 0
      %884 = vmatprep.subr.bf16.mxu0 0
      %885 = vmatpush1.bf16.xpose.msra.mxu0 0
      %886 = vmatprep.mubr.bf16.mxu0 0
      %887 = vmatmul.mubr.bf16.gmra.mrb[0].mxu0 %v849
      %v888 = vpop.f32.mrb[0].mxu0
      %v889 = vadd.f32 0.0, %v888
      %v890 = vpop.f32.mrb[0].mxu0
      %v891 = vpop.f32.mrb[0].mxu0
      %v892 = vpop.f32.mrb[0].mxu0
      %893 = vdwg.mxu0
      %v894 = vsel %vm780, %v889, -inf
      %895 = vmax.xlane.f32.xlu0 %v894
      %v896 = vpop.xlane.xlu0 %895
      %v897 = vsub.f32 %v889, %v896
      %v898 = vmul.f32 %v897, 1.442695
      %v899 = vpow.pop %v898
      %v900 = vsel %vm780, %v899, 0.0
      %901 = vadd.xlane.f32.xlu0 %v900
      %v902 = vpop.xlane.xlu0 %901
      %v903 = vrcp.pop %v902
      %v904 = vmul.f32 %v899, %v903
      %v905 = vpack.c.bf16 %v904, %v904
      %907 = vrot.lane.b32.xlu0 %v732, 120
      %v908 = vpop.permute.xlu0 %907
      %v910 = vsel %vm780, %v905, 0
      %v913 = vsel %vm796, %v908, 0
      %915 = vmatprep.subr.bf16.mxu0 0
      %916 = vmatpush1.bf16.msra.mxu0 %v913
      %917 = vmatprep.subr.bf16.mxu0 0
      %918 = vmatpush1.bf16.msra.mxu0 0
      %919 = vmatprep.subr.bf16.mxu0 0
      %920 = vmatpush1.bf16.msra.mxu0 0
      %921 = vmatprep.subr.bf16.mxu0 0
      %922 = vmatpush1.bf16.msra.mxu0 0
      %923 = vmatprep.subr.bf16.mxu0 0
      %924 = vmatpush1.bf16.msra.mxu0 0
      %925 = vmatprep.subr.bf16.mxu0 0
      %926 = vmatpush1.bf16.msra.mxu0 0
      %927 = vmatprep.subr.bf16.mxu0 0
      %928 = vmatpush1.bf16.msra.mxu0 0
      %929 = vmatprep.subr.bf16.mxu0 0
      %930 = vmatpush1.bf16.msra.mxu0 0
      %931 = vmatprep.subr.bf16.mxu0 0
      %932 = vmatpush1.bf16.msra.mxu0 0
      %933 = vmatprep.subr.bf16.mxu0 0
      %934 = vmatpush1.bf16.msra.mxu0 0
      %935 = vmatprep.subr.bf16.mxu0 0
      %936 = vmatpush1.bf16.msra.mxu0 0
      %937 = vmatprep.subr.bf16.mxu0 0
      %938 = vmatpush1.bf16.msra.mxu0 0
      %939 = vmatprep.subr.bf16.mxu0 0
      %940 = vmatpush1.bf16.msra.mxu0 0
      %941 = vmatprep.subr.bf16.mxu0 0
      %942 = vmatpush1.bf16.msra.mxu0 0
      %943 = vmatprep.subr.bf16.mxu0 0
      %944 = vmatpush1.bf16.msra.mxu0 0
      %945 = vmatprep.subr.bf16.mxu0 0
      %946 = vmatpush1.bf16.msra.mxu0 0
      %947 = vmatprep.mubr.bf16.mxu0 0
      %948 = vmatmul.mubr.bf16.gmra.mrb[0].mxu0 %v910
      %v949 = vpop.f32.mrb[0].mxu0
      %v950 = vadd.f32 0.0, %v949
      %v951 = vpop.f32.mrb[0].mxu0
      %v952 = vpop.f32.mrb[0].mxu0
      %v953 = vpop.f32.mrb[0].mxu0
      %954 = vdwg.mxu0
      %v955 = vld [vmem:[%s10 + $0x4] sm:$0xf]
      %v956 = vpack.c.bf16 %v950, %v950
      %v958 = vsel %vm733, %v956, 0
      %vm960 = vcmask 1043456
      %v962 = vsel %vm960, %v955, 0
      %964 = vmatprep.subr.bf16.mxu0 0
      %965 = vmatpush1.bf16.msra.mxu0 %v962
      %966 = vmatprep.subr.bf16.mxu0 0
      %967 = vmatpush1.bf16.msra.mxu0 0
      %968 = vmatprep.subr.bf16.mxu0 0
      %969 = vmatpush1.bf16.msra.mxu0 0
      %970 = vmatprep.subr.bf16.mxu0 0
      %971 = vmatpush1.bf16.msra.mxu0 0
      %972 = vmatprep.subr.bf16.mxu0 0
      %973 = vmatpush1.bf16.msra.mxu0 0
      %974 = vmatprep.subr.bf16.mxu0 0
      %975 = vmatpush1.bf16.msra.mxu0 0
      %976 = vmatprep.subr.bf16.mxu0 0
      %977 = vmatpush1.bf16.msra.mxu0 0
      %978 = vmatprep.subr.bf16.mxu0 0
      %979 = vmatpush1.bf16.msra.mxu0 0
      %980 = vmatprep.subr.bf16.mxu0 0
      %981 = vmatpush1.bf16.msra.mxu0 0
      %982 = vmatprep.subr.bf16.mxu0 0
      %983 = vmatpush1.bf16.msra.mxu0 0
      %984 = vmatprep.subr.bf16.mxu0 0
      %985 = vmatpush1.bf16.msra.mxu0 0
      %986 = vmatprep.subr.bf16.mxu0 0
      %987 = vmatpush1.bf16.msra.mxu0 0
      %988 = vmatprep.subr.bf16.mxu0 0
      %989 = vmatpush1.bf16.msra.mxu0 0
      %990 = vmatprep.subr.bf16.mxu0 0
      %991 = vmatpush1.bf16.msra.mxu0 0
      %992 = vmatprep.subr.bf16.mxu0 0
      %993 = vmatpush1.bf16.msra.mxu0 0
      %994 = vmatprep.subr.bf16.mxu0 0
      %995 = vmatpush1.bf16.msra.mxu0 0
      %996 = vmatprep.mubr.bf16.mxu0 0
      %997 = vmatmul.mubr.bf16.gmra.mrb[0].mxu0 %v958
      %v998 = vpop.f32.mrb[0].mxu0
      %v999 = vadd.f32 0.0, %v998
      %v1000 = vpop.f32.mrb[0].mxu0
      %v1001 = vpop.f32.mrb[0].mxu0
      %v1002 = vpop.f32.mrb[0].mxu0
      %1003 = vdwg.mxu0
      %v1005 = vsel %vm733, %v841, 0
      %v1008 = vsel %vm960, %v840, 0
      %1010 = vmatprep.subr.bf16.mxu0 0
      %1011 = vmatpush1.bf16.msra.mxu0 %v1008
      %1012 = vmatprep.subr.bf16.mxu0 0
      %1013 = vmatpush1.bf16.msra.mxu0 0
      %1014 = vmatprep.subr.bf16.mxu0 0
      %1015 = vmatpush1.bf16.msra.mxu0 0
      %1016 = vmatprep.subr.bf16.mxu0 0
      %1017 = vmatpush1.bf16.msra.mxu0 0
      %1018 = vmatprep.subr.bf16.mxu0 0
      %1019 = vmatpush1.bf16.msra.mxu0 0
      %1020 = vmatprep.subr.bf16.mxu0 0
      %1021 = vmatpush1.bf16.msra.mxu0 0
      %1022 = vmatprep.subr.bf16.mxu0 0
      %1023 = vmatpush1.bf16.msra.mxu0 0
      %1024 = vmatprep.subr.bf16.mxu0 0
      %1025 = vmatpush1.bf16.msra.mxu0 0
      %1026 = vmatprep.subr.bf16.mxu0 0
      %1027 = vmatpush1.bf16.msra.mxu0 0
      %1028 = vmatprep.subr.bf16.mxu0 0
      %1029 = vmatpush1.bf16.msra.mxu0 0
      %1030 = vmatprep.subr.bf16.mxu0 0
      %1031 = vmatpush1.bf16.msra.mxu0 0
      %1032 = vmatprep.subr.bf16.mxu0 0
      %1033 = vmatpush1.bf16.msra.mxu0 0
      %1034 = vmatprep.subr.bf16.mxu0 0
      %1035 = vmatpush1.bf16.msra.mxu0 0
      %1036 = vmatprep.subr.bf16.mxu0 0
      %1037 = vmatpush1.bf16.msra.mxu0 0
      %1038 = vmatprep.subr.bf16.mxu0 0
      %1039 = vmatpush1.bf16.msra.mxu0 0
      %1040 = vmatprep.subr.bf16.mxu0 0
      %1041 = vmatpush1.bf16.msra.mxu0 0
      %1042 = vmatprep.mubr.bf16.mxu0 0
      %1043 = vmatmul.mubr.bf16.gmra.mrb[0].mxu0 %v1005
      %v1044 = vpop.f32.mrb[0].mxu0
      %v1045 = vadd.f32 %v999, %v1044
      %v1046 = vpop.f32.mrb[0].mxu0
      %v1047 = vpop.f32.mrb[0].mxu0
      %v1048 = vpop.f32.mrb[0].mxu0
      %1049 = vdwg.mxu0
      %1050 = vrot.lane.b32.xlu0 %v730, 112
      %v1051 = vpop.permute.xlu0 %1050
      %1052 = vrot.lane.b32.xlu0 %v731, 112
      %v1053 = vpop.permute.xlu0 %1052
      %v1055 = vsel %vm733, %v1051, 0
      %v1058 = vsel %vm733, %v1053, 0
      %1060 = vmatprep.subr.bf16.mxu0 0
      %1061 = vmatpush1.bf16.xpose.msra.mxu0 %v1058
      %1062 = vmatprep.subr.bf16.mxu0 0
      %1063 = vmatpush1.bf16.xpose.msra.mxu0 0
      %1064 = vmatprep.subr.bf16.mxu0 0
      %1065 = vmatpush1.bf16.xpose.msra.mxu0 0
      %1066 = vmatprep.subr.bf16.mxu0 0
      %1067 = vmatpush1.bf16.xpose.msra.mxu0 0
      %1068 = vmatprep.subr.bf16.mxu0 0
      %1069 = vmatpush1.bf16.xpose.msra.mxu0 0
      %1070 = vmatprep.subr.bf16.mxu0 0
      %1071 = vmatpush1.bf16.xpose.msra.mxu0 0
      %1072 = vmatprep.subr.bf16.mxu0 0
      %1073 = vmatpush1.bf16.xpose.msra.mxu0 0
      %1074 = vmatprep.subr.bf16.mxu0 0
      %1075 = vmatpush1.bf16.xpose.msra.mxu0 0
      %1076 = vmatprep.subr.bf16.mxu0 0
      %1077 = vmatpush1.bf16.xpose.msra.mxu0 0
      %1078 = vmatprep.subr.bf16.mxu0 0
      %1079 = vmatpush1.bf16.xpose.msra.mxu0 0
      %1080 = vmatprep.subr.bf16.mxu0 0
      %1081 = vmatpush1.bf16.xpose.msra.mxu0 0
      %1082 = vmatprep.subr.bf16.mxu0 0
      %1083 = vmatpush1.bf16.xpose.msra.mxu0 0
      %1084 = vmatprep.subr.bf16.mxu0 0
      %1085 = vmatpush1.bf16.xpose.msra.mxu0 0
      %1086 = vmatprep.subr.bf16.mxu0 0
      %1087 = vmatpush1.bf16.xpose.msra.mxu0 0
      %1088 = vmatprep.subr.bf16.mxu0 0
      %1089 = vmatpush1.bf16.xpose.msra.mxu0 0
      %1090 = vmatprep.subr.bf16.mxu0 0
      %1091 = vmatpush1.bf16.xpose.msra.mxu0 0
      %1092 = vmatprep.mubr.bf16.mxu0 0
      %1093 = vmatmul.mubr.bf16.gmra.mrb[0].mxu0 %v1055
      %v1094 = vpop.f32.mrb[0].mxu0
      %v1095 = vadd.f32 0.0, %v1094
      %v1096 = vpop.f32.mrb[0].mxu0
      %v1097 = vpop.f32.mrb[0].mxu0
      %v1098 = vpop.f32.mrb[0].mxu0
      %1099 = vdwg.mxu0
      %v1100 = vsel %vm780, %v1095, -inf
      %1101 = vmax.xlane.f32.xlu0 %v1100
      %v1102 = vpop.xlane.xlu0 %1101
      %v1103 = vsub.f32 %v1095, %v1102
      %v1104 = vmul.f32 %v1103, 1.442695
      %v1105 = vpow.pop %v1104
      %v1106 = vsel %vm780, %v1105, 0.0
      %1107 = vadd.xlane.f32.xlu0 %v1106
      %v1108 = vpop.xlane.xlu0 %1107
      %v1109 = vrcp.pop %v1108
      %v1110 = vmul.f32 %v1105, %v1109
      %v1111 = vpack.c.bf16 %v1110, %v1110
      %1112 = vrot.lane.b32.xlu0 %v732, 112
      %v1113 = vpop.permute.xlu0 %1112
      %v1115 = vsel %vm780, %v1111, 0
      %v1118 = vsel %vm796, %v1113, 0
      %1120 = vmatprep.subr.bf16.mxu0 0
      %1121 = vmatpush1.bf16.msra.mxu0 %v1118
      %1122 = vmatprep.subr.bf16.mxu0 0
      %1123 = vmatpush1.bf16.msra.mxu0 0
      %1124 = vmatprep.subr.bf16.mxu0 0
      %1125 = vmatpush1.bf16.msra.mxu0 0
      %1126 = vmatprep.subr.bf16.mxu0 0
      %1127 = vmatpush1.bf16.msra.mxu0 0
      %1128 = vmatprep.subr.bf16.mxu0 0
      %1129 = vmatpush1.bf16.msra.mxu0 0
      %1130 = vmatprep.subr.bf16.mxu0 0
      %1131 = vmatpush1.bf16.msra.mxu0 0
      %1132 = vmatprep.subr.bf16.mxu0 0
      %1133 = vmatpush1.bf16.msra.mxu0 0
      %1134 = vmatprep.subr.bf16.mxu0 0
      %1135 = vmatpush1.bf16.msra.mxu0 0
      %1136 = vmatprep.subr.bf16.mxu0 0
      %1137 = vmatpush1.bf16.msra.mxu0 0
      %1138 = vmatprep.subr.bf16.mxu0 0
      %1139 = vmatpush1.bf16.msra.mxu0 0
      %1140 = vmatprep.subr.bf16.mxu0 0
      %1141 = vmatpush1.bf16.msra.mxu0 0
      %1142 = vmatprep.subr.bf16.mxu0 0
      %1143 = vmatpush1.bf16.msra.mxu0 0
      %1144 = vmatprep.subr.bf16.mxu0 0
      %1145 = vmatpush1.bf16.msra.mxu0 0
      %1146 = vmatprep.subr.bf16.mxu0 0
      %1147 = vmatpush1.bf16.msra.mxu0 0
      %1148 = vmatprep.subr.bf16.mxu0 0
      %1149 = vmatpush1.bf16.msra.mxu0 0
      %1150 = vmatprep.subr.bf16.mxu0 0
      %1151 = vmatpush1.bf16.msra.mxu0 0
      %1152 = vmatprep.mubr.bf16.mxu0 0
      %1153 = vmatmul.mubr.bf16.gmra.mrb[0].mxu0 %v1115
      %v1154 = vpop.f32.mrb[0].mxu0
      %v1155 = vadd.f32 0.0, %v1154
      %v1156 = vpop.f32.mrb[0].mxu0
      %v1157 = vpop.f32.mrb[0].mxu0
      %v1158 = vpop.f32.mrb[0].mxu0
      %1159 = vdwg.mxu0
      %v1160 = vld [vmem:[%s10 + $0x8] sm:$0xf]
      %v1161 = vpack.c.bf16 %v1155, %v1155
      %v1163 = vsel %vm733, %v1161, 0
      %v1166 = vsel %vm960, %v1160, 0
      %1168 = vmatprep.subr.bf16.mxu0 0
      %1169 = vmatpush1.bf16.msra.mxu0 %v1166
      %1170 = vmatprep.subr.bf16.mxu0 0
      %1171 = vmatpush1.bf16.msra.mxu0 0
      %1172 = vmatprep.subr.bf16.mxu0 0
      %1173 = vmatpush1.bf16.msra.mxu0 0
      %1174 = vmatprep.subr.bf16.mxu0 0
      %1175 = vmatpush1.bf16.msra.mxu0 0
      %1176 = vmatprep.subr.bf16.mxu0 0
      %1177 = vmatpush1.bf16.msra.mxu0 0
      %1178 = vmatprep.subr.bf16.mxu0 0
      %1179 = vmatpush1.bf16.msra.mxu0 0
      %1180 = vmatprep.subr.bf16.mxu0 0
      %1181 = vmatpush1.bf16.msra.mxu0 0
      %1182 = vmatprep.subr.bf16.mxu0 0
      %1183 = vmatpush1.bf16.msra.mxu0 0
      %1184 = vmatprep.subr.bf16.mxu0 0
      %1185 = vmatpush1.bf16.msra.mxu0 0
      %1186 = vmatprep.subr.bf16.mxu0 0
      %1187 = vmatpush1.bf16.msra.mxu0 0
      %1188 = vmatprep.subr.bf16.mxu0 0
      %1189 = vmatpush1.bf16.msra.mxu0 0
      %1190 = vmatprep.subr.bf16.mxu0 0
      %1191 = vmatpush1.bf16.msra.mxu0 0
      %1192 = vmatprep.subr.bf16.mxu0 0
      %1193 = vmatpush1.bf16.msra.mxu0 0
      %1194 = vmatprep.subr.bf16.mxu0 0
      %1195 = vmatpush1.bf16.msra.mxu0 0
      %1196 = vmatprep.subr.bf16.mxu0 0
      %1197 = vmatpush1.bf16.msra.mxu0 0
      %1198 = vmatprep.subr.bf16.mxu0 0
      %1199 = vmatpush1.bf16.msra.mxu0 0
      %1200 = vmatprep.mubr.bf16.mxu0 0
      %1201 = vmatmul.mubr.bf16.gmra.mrb[0].mxu0 %v1163
      %v1202 = vpop.f32.mrb[0].mxu0
      %v1203 = vadd.f32 0.0, %v1202
      %v1204 = vpop.f32.mrb[0].mxu0
      %v1205 = vpop.f32.mrb[0].mxu0
      %v1206 = vpop.f32.mrb[0].mxu0
      %1207 = vdwg.mxu0
      %v1208 = vadd.f32 %v1045, %v1203
      %1209 = vrot.lane.b32.xlu0 %v730, 104
      %v1210 = vpop.permute.xlu0 %1209
      %1211 = vrot.lane.b32.xlu0 %v731, 104
      %v1212 = vpop.permute.xlu0 %1211
      %v1214 = vsel %vm733, %v1210, 0
      %v1217 = vsel %vm733, %v1212, 0
      %1219 = vmatprep.subr.bf16.mxu0 0
      %1220 = vmatpush1.bf16.xpose.msra.mxu0 %v1217
      %1221 = vmatprep.subr.bf16.mxu0 0
      %1222 = vmatpush1.bf16.xpose.msra.mxu0 0
      %1223 = vmatprep.subr.bf16.mxu0 0
      %1224 = vmatpush1.bf16.xpose.msra.mxu0 0
      %1225 = vmatprep.subr.bf16.mxu0 0
      %1226 = vmatpush1.bf16.xpose.msra.mxu0 0
      %1227 = vmatprep.subr.bf16.mxu0 0
      %1228 = vmatpush1.bf16.xpose.msra.mxu0 0
      %1229 = vmatprep.subr.bf16.mxu0 0
      %1230 = vmatpush1.bf16.xpose.msra.mxu0 0
      %1231 = vmatprep.subr.bf16.mxu0 0
      %1232 = vmatpush1.bf16.xpose.msra.mxu0 0
      %1233 = vmatprep.subr.bf16.mxu0 0
      %1234 = vmatpush1.bf16.xpose.msra.mxu0 0
      %1235 = vmatprep.subr.bf16.mxu0 0
      %1236 = vmatpush1.bf16.xpose.msra.mxu0 0
      %1237 = vmatprep.subr.bf16.mxu0 0
      %1238 = vmatpush1.bf16.xpose.msra.mxu0 0
      %1239 = vmatprep.subr.bf16.mxu0 0
      %1240 = vmatpush1.bf16.xpose.msra.mxu0 0
      %1241 = vmatprep.subr.bf16.mxu0 0
      %1242 = vmatpush1.bf16.xpose.msra.mxu0 0
      %1243 = vmatprep.subr.bf16.mxu0 0
      %1244 = vmatpush1.bf16.xpose.msra.mxu0 0
      %1245 = vmatprep.subr.bf16.mxu0 0
      %1246 = vmatpush1.bf16.xpose.msra.mxu0 0
      %1247 = vmatprep.subr.bf16.mxu0 0
      %1248 = vmatpush1.bf16.xpose.msra.mxu0 0
      %1249 = vmatprep.subr.bf16.mxu0 0
      %1250 = vmatpush1.bf16.xpose.msra.mxu0 0
      %1251 = vmatprep.mubr.bf16.mxu0 0
      %1252 = vmatmul.mubr.bf16.gmra.mrb[0].mxu0 %v1214
      %v1253 = vpop.f32.mrb[0].mxu0
      %v1254 = vadd.f32 0.0, %v1253
      %v1255 = vpop.f32.mrb[0].mxu0
      %v1256 = vpop.f32.mrb[0].mxu0
      %v1257 = vpop.f32.mrb[0].mxu0
      %1258 = vdwg.mxu0
      %v1259 = vsel %vm780, %v1254, -inf
      %1260 = vmax.xlane.f32.xlu0 %v1259
      %v1261 = vpop.xlane.xlu0 %1260
      %v1262 = vsub.f32 %v1254, %v1261
      %v1263 = vmul.f32 %v1262, 1.442695
      %v1264 = vpow.pop %v1263
      %v1265 = vsel %vm780, %v1264, 0.0
      %1266 = vadd.xlane.f32.xlu0 %v1265
      %v1267 = vpop.xlane.xlu0 %1266
      %v1268 = vrcp.pop %v1267
      %v1269 = vmul.f32 %v1264, %v1268
      %v1270 = vpack.c.bf16 %v1269, %v1269
      %1271 = vrot.lane.b32.xlu0 %v732, 104
      %v1272 = vpop.permute.xlu0 %1271
      %v1274 = vsel %vm780, %v1270, 0
      %v1277 = vsel %vm796, %v1272, 0
      %1279 = vmatprep.subr.bf16.mxu0 0
      %1280 = vmatpush1.bf16.msra.mxu0 %v1277
      %1281 = vmatprep.subr.bf16.mxu0 0
      %1282 = vmatpush1.bf16.msra.mxu0 0
      %1283 = vmatprep.subr.bf16.mxu0 0
      %1284 = vmatpush1.bf16.msra.mxu0 0
      %1285 = vmatprep.subr.bf16.mxu0 0
      %1286 = vmatpush1.bf16.msra.mxu0 0
      %1287 = vmatprep.subr.bf16.mxu0 0
      %1288 = vmatpush1.bf16.msra.mxu0 0
      %1289 = vmatprep.subr.bf16.mxu0 0
      %1290 = vmatpush1.bf16.msra.mxu0 0
      %1291 = vmatprep.subr.bf16.mxu0 0
      %1292 = vmatpush1.bf16.msra.mxu0 0
      %1293 = vmatprep.subr.bf16.mxu0 0
      %1294 = vmatpush1.bf16.msra.mxu0 0
      %1295 = vmatprep.subr.bf16.mxu0 0
      %1296 = vmatpush1.bf16.msra.mxu0 0
      %1297 = vmatprep.subr.bf16.mxu0 0
      %1298 = vmatpush1.bf16.msra.mxu0 0
      %1299 = vmatprep.subr.bf16.mxu0 0
      %1300 = vmatpush1.bf16.msra.mxu0 0
      %1301 = vmatprep.subr.bf16.mxu0 0
      %1302 = vmatpush1.bf16.msra.mxu0 0
      %1303 = vmatprep.subr.bf16.mxu0 0
      %1304 = vmatpush1.bf16.msra.mxu0 0
      %1305 = vmatprep.subr.bf16.mxu0 0
      %1306 = vmatpush1.bf16.msra.mxu0 0
      %1307 = vmatprep.subr.bf16.mxu0 0
      %1308 = vmatpush1.bf16.msra.mxu0 0
      %1309 = vmatprep.subr.bf16.mxu0 0
      %1310 = vmatpush1.bf16.msra.mxu0 0
      %1311 = vmatprep.mubr.bf16.mxu0 0
      %1312 = vmatmul.mubr.bf16.gmra.mrb[0].mxu0 %v1274
      %v1313 = vpop.f32.mrb[0].mxu0
      %v1314 = vadd.f32 0.0, %v1313
      %v1315 = vpop.f32.mrb[0].mxu0
      %v1316 = vpop.f32.mrb[0].mxu0
      %v1317 = vpop.f32.mrb[0].mxu0
      %1318 = vdwg.mxu0
      %v1319 = vld [vmem:[%s10 + $0xc] sm:$0xf]
      %v1320 = vpack.c.bf16 %v1314, %v1314
      %v1322 = vsel %vm733, %v1320, 0
      %v1325 = vsel %vm960, %v1319, 0
      %1327 = vmatprep.subr.bf16.mxu0 0
      %1328 = vmatpush1.bf16.msra.mxu0 %v1325
      %1329 = vmatprep.subr.bf16.mxu0 0
      %1330 = vmatpush1.bf16.msra.mxu0 0
      %1331 = vmatprep.subr.bf16.mxu0 0
      %1332 = vmatpush1.bf16.msra.mxu0 0
      %1333 = vmatprep.subr.bf16.mxu0 0
      %1334 = vmatpush1.bf16.msra.mxu0 0
      %1335 = vmatprep.subr.bf16.mxu0 0
      %1336 = vmatpush1.bf16.msra.mxu0 0
      %1337 = vmatprep.subr.bf16.mxu0 0
      %1338 = vmatpush1.bf16.msra.mxu0 0
      %1339 = vmatprep.subr.bf16.mxu0 0
      %1340 = vmatpush1.bf16.msra.mxu0 0
      %1341 = vmatprep.subr.bf16.mxu0 0
      %1342 = vmatpush1.bf16.msra.mxu0 0
      %1343 = vmatprep.subr.bf16.mxu0 0
      %1344 = vmatpush1.bf16.msra.mxu0 0
      %1345 = vmatprep.subr.bf16.mxu0 0
      %1346 = vmatpush1.bf16.msra.mxu0 0
      %1347 = vmatprep.subr.bf16.mxu0 0
      %1348 = vmatpush1.bf16.msra.mxu0 0
      %1349 = vmatprep.subr.bf16.mxu0 0
      %1350 = vmatpush1.bf16.msra.mxu0 0
      %1351 = vmatprep.subr.bf16.mxu0 0
      %1352 = vmatpush1.bf16.msra.mxu0 0
      %1353 = vmatprep.subr.bf16.mxu0 0
      %1354 = vmatpush1.bf16.msra.mxu0 0
      %1355 = vmatprep.subr.bf16.mxu0 0
      %1356 = vmatpush1.bf16.msra.mxu0 0
      %1357 = vmatprep.subr.bf16.mxu0 0
      %1358 = vmatpush1.bf16.msra.mxu0 0
      %1359 = vmatprep.mubr.bf16.mxu0 0
      %1360 = vmatmul.mubr.bf16.gmra.mrb[0].mxu0 %v1322
      %v1361 = vpop.f32.mrb[0].mxu0
      %v1362 = vadd.f32 0.0, %v1361
      %v1363 = vpop.f32.mrb[0].mxu0
      %v1364 = vpop.f32.mrb[0].mxu0
      %v1365 = vpop.f32.mrb[0].mxu0
      %1366 = vdwg.mxu0
      %v1367 = vadd.f32 %v1208, %v1362
      %v1368 = vld [vmem:[%s11] sm:$0x1]
      %v1370 = vlaneseq
      %v1371 = vshrl.u32 %v1370, 7
      %v1372 = vsub.s32 0, %v1371
      %v1373 = vrot.slane %v1368, %v1372
      %v1375 = vadd.f32 %v1367, %v1373
      %v1376 = vld [vmem:[%s515] sm:$0xff]
      %v1377 = vadd.f32 %v1376, %v1375
      %v1378 = vld [vmem:[%s12] sm:$0x1]
      %v1379 = vld [vmem:[%s13] sm:$0x1]
      %v1380 = vsel %vm552, %v1377, 0.0
      %1381 = vadd.xlane.f32.xlu0 %v1380
      %v1382 = vpop.xlane.xlu0 %1381
      %v1383 = vrcp.pop 32.0
      %v1384 = vmul.f32 %v1382, %v1383
      %v1385 = vsub.f32 %v1377, %v1384
      %v1386 = vmul.f32 %v1385, %v1385
      %v1387 = vsel %vm552, %v1386, 0.0
      %1388 = vadd.xlane.f32.xlu0 %v1387
      %v1389 = vpop.xlane.xlu0 %1388
      %v1390 = vmul.f32 %v1389, %v1383
      %v1391 = vadd.f32 %v1390, 1e-05
      %v1392 = vrsqrt.pop %v1391
      %v1393 = vmul.f32 %v1385, %v1392
      %v1395 = vlaneseq
      %v1396 = vshrl.u32 %v1395, 7
      %v1397 = vsub.s32 0, %v1396
      %v1398 = vrot.slane %v1378, %v1397
      %v1400 = vmul.f32 %v1393, %v1398
      %v1402 = vlaneseq
      %v1403 = vshrl.u32 %v1402, 7
      %v1404 = vsub.s32 0, %v1403
      %v1405 = vrot.slane %v1379, %v1404
      %v1407 = vadd.f32 %v1400, %v1405
      %1408 = vst.msk [vmem:[%s519] sm:$0xff] %vm552, %v1407
      %p1409 = scmp.lt.s32.totalorder %s25, 1
      %s1410 = scalar_select %p1409, %s25, 1
      %s1411 = smul.addr %s1410, 8
      %s1412 = scalar_lea.vmem %s14, %s1411
      // Predicated region
      $region77: #{transformer_decoder_layer_forward.6} parent=75 // pred_check
        %p1413 = pneg %p357
      $region78: #{transformer_decoder_layer_forward.6} parent=75 // pred_check_branch
        %1415 = sbr.rel (%p1413) target = $region80
      $region79: #{transformer_decoder_layer_forward.6} parent=75 // pred_region
        _
      $region80: #{transformer_decoder_layer_forward.6} parent=75 // pred_fallthru
        _
    $region76: #{transformer_decoder_layer_forward.6} parent=5 // pred_fallthru
      _
    %p1416 = scmp.le.s32.totalorder 2, %s20
    // Predicated region
    $region81: #{transformer_decoder_layer_forward.6} parent=5 // pred_check
      %p1417 = pneg %p1416
    $region82: #{transformer_decoder_layer_forward.6} parent=5 // pred_check_branch
      %1419 = sbr.rel (%p1417) target = $region84
    $region83: #{transformer_decoder_layer_forward.6} parent=5 // pred_region
      %s1420 = ssub.s32 %s20, 2
      // Predicated region
      $region85: #{transformer_decoder_layer_forward.6} parent=83 // pred_check
        %p1421 = pneg %p363
      $region86: #{transformer_decoder_layer_forward.6} parent=83 // pred_check_branch
        %1423 = sbr.rel (%p1421) target = $region88
      $region87: #{transformer_decoder_layer_forward.6} parent=83 // pred_region
        %p1424 = scmp.lt.s32.totalorder %s26, 1
        %s1425 = scalar_select %p1424, %s26, 1
        %s1426 = smul.addr %s1425, 8
        %s1427 = scalar_lea.vmem %s14, %s1426
      $region88: #{transformer_decoder_layer_forward.6} parent=83 // pred_fallthru
        _
    $region84: #{transformer_decoder_layer_forward.6} parent=5 // pred_fallthru
      _
  $region6: #{transformer_decoder_layer_forward.6} parent=0 // loop_footer
    %s24 = sadd.s32 1, %s20
  $region7: #{transformer_decoder_layer_forward.6} parent=0 // loop_footer_branch
    %19 = sbr.rel target = $region3
  $region8: #{transformer_decoder_layer_forward.6} parent=0 // loop_exit
    _

// kernel: transformer_decoder_layer_forward.5
$region0: #{transformer_decoder_layer_forward.5}
  #allocation0 [shape = 'u32[]', space=smem, size = 0x4, offset = 0x4, fixed_abs, tag = 'smem constant byte address 0x4 - core index']
  #allocation1 [shape = 'u32[144,128]{1,0:T(1,128)}', space=vmem, size = 0x12000, scoped, tag = 'internal scratch']
  %s0 = inlined_call_operand.vmem [shape: f32[2,8,32], index: 0, kind: input, shape index: {}, may-alias: {0,1}]
  %s1 = inlined_call_operand.vmem [shape: f32[2,8,32], index: 1, kind: input, shape index: {}, may-alias: {0,1}]
  %s2 = inlined_call_operand.vmem [shape: f32[2,8,32], index: 2, kind: input, shape index: {}, may-alias: {2,3}]
  %s3 = inlined_call_operand.vmem [shape: f32[2,8,32], index: 3, kind: input, shape index: {}, may-alias: {2,3}]
  %s4 = inlined_call_operand.vmem [shape: bf16[32,32], index: 4, kind: input, shape index: {}]
  %s5 = inlined_call_operand.vmem [shape: f32[1,32], index: 5, kind: input, shape index: {}]
  %s6 = inlined_call_operand.vmem [shape: bf16[32,32], index: 6, kind: input, shape index: {}]
  %s7 = inlined_call_operand.vmem [shape: f32[1,32], index: 7, kind: input, shape index: {}]
  %s8 = inlined_call_operand.vmem [shape: bf16[32,32], index: 8, kind: input, shape index: {}]
  %s9 = inlined_call_operand.vmem [shape: f32[1,32], index: 9, kind: input, shape index: {}]
  %s10 = inlined_call_operand.vmem [shape: bf16[32,32], index: 10, kind: input, shape index: {}]
  %s11 = inlined_call_operand.vmem [shape: f32[1,32], index: 11, kind: input, shape index: {}]
  %s12 = inlined_call_operand.vmem [shape: f32[1,32], index: 12, kind: input, shape index: {}]
  %s13 = inlined_call_operand.vmem [shape: f32[1,32], index: 13, kind: input, shape index: {}]
  %s14 = inlined_call_operand.vmem [shape: f32[2,8,32], index: 14, kind: output, shape index: {}]
  %s15 = sld [smem:[#allocation0]]
  $region89: #{transformer_decoder_layer_forward.5} parent=0
    _
  %s17 = ssub.s32 1, %s15
  %s18 = scalar_select 0, %s17, %s15
  loop: start=0, step=1, limit=4
  $region2: #{transformer_decoder_layer_forward.5} parent=0 // loop_pre_header
    _
  $region3: #{transformer_decoder_layer_forward.5} parent=0 // loop_header
    %s20 = sphi 0, %s24
    %p21 = scmp.ge.s32.totalorder %s20, 4
    %s30 = sphi 0, %s32
    %s33 = sphi 0, %s30
    %s34 = sphi 0, %s33
    %s50 = sphi 0, %s34
    %s56 = sphi 0, %s58
    %s59 = sphi 0, %s56
    %s60 = sphi 0, %s59
    %s76 = sphi 0, %s60
    %s82 = sphi 0, %s84
    %s85 = sphi 0, %s82
    %s86 = sphi 0, %s85
    %s102 = sphi 0, %s86
    %s108 = sphi 0, %s110
    %s111 = sphi 0, %s108
    %s112 = sphi 0, %s111
    %s128 = sphi 0, %s112
    %s132 = sphi 0, %s132
    %s134 = sphi 0, %s132
    %s135 = sphi 0, %s134
    %s149 = sphi 0, %s135
    %s153 = sphi 0, %s153
    %s155 = sphi 0, %s153
    %s156 = sphi 0, %s155
    %s170 = sphi 0, %s156
    %s174 = sphi 0, %s174
    %s176 = sphi 0, %s174
    %s177 = sphi 0, %s176
    %s191 = sphi 0, %s177
    %s195 = sphi 0, %s195
    %s197 = sphi 0, %s195
    %s198 = sphi 0, %s197
    %s212 = sphi 0, %s198
    %s216 = sphi 0, %s216
    %s218 = sphi 0, %s216
    %s219 = sphi 0, %s218
    %s233 = sphi 0, %s219
    %s237 = sphi 0, %s237
    %s239 = sphi 0, %s237
    %s240 = sphi 0, %s239
    %s254 = sphi 0, %s240
    %s258 = sphi 0, %s258
    %s260 = sphi 0, %s258
    %s261 = sphi 0, %s260
    %s275 = sphi 0, %s261
    %s279 = sphi 0, %s279
    %s281 = sphi 0, %s279
    %s282 = sphi 0, %s281
    %s296 = sphi 0, %s282
    %s300 = sphi 0, %s300
    %s302 = sphi 0, %s300
    %s303 = sphi 0, %s302
    %s317 = sphi 0, %s303
    %s321 = sphi 0, %s321
    %s323 = sphi 0, %s321
    %s324 = sphi 0, %s323
    %s338 = sphi 0, %s324
    %s344 = sphi 0, %s346
    %s347 = sphi 0, %s344
    %s348 = sphi 0, %s347
    %s364 = sphi 0, %s348
  $region4: #{transformer_decoder_layer_forward.5} parent=0 // loop_header_branch
    %23 = sbr.rel (%p21) target = $region8
  $region5: #{transformer_decoder_layer_forward.5} parent=0 // loop_body
    %s25 = ssub.s32 %s20, 1
    %s26 = ssub.s32 %s20, 2
    %s27 = sadd.s32 %s20, 1
    %s28 = ssub.s32 %s20, %s27
    %p29 = scmp.eq.s32.totalorder %s28, 0
    %s31 = sadd.s32 %s30, 1
    %s32 = scalar_select %p29, %s30, %s31
    %p35 = pneg %p29
    %p36 = scmp.eq.s32.totalorder %s20, 1
    %p37 = por %p35, %p36
    %p38 = scmp.ne.s32.totalorder %s30, %s33
    %p39 = scmp.eq.s32.totalorder %s20, 0
    %p40 = por %p38, %p39
    %p41 = scmp.ne.s32.totalorder %s30, %s33
    %p42 = scmp.eq.s32.totalorder %s25, 1
    %p43 = por %p41, %p42
    %p44 = scmp.ne.s32.totalorder %s33, %s34
    %p45 = scmp.eq.s32.totalorder %s25, 0
    %p46 = por %p44, %p45
    %p47 = scmp.ne.s32.totalorder %s33, %s34
    %p48 = scmp.eq.s32.totalorder %s26, 1
    %p49 = por %p47, %p48
    %p51 = scmp.ne.s32.totalorder %s34, %s50
    %p52 = scmp.eq.s32.totalorder %s26, 0
    %p53 = por %p51, %p52
    %s54 = ssub.s32 %s20, %s27
    %p55 = scmp.eq.s32.totalorder %s54, 0
    %s57 = sadd.s32 %s56, 1
    %s58 = scalar_select %p55, %s56, %s57
    %p61 = pneg %p55
    %p62 = scmp.eq.s32.totalorder %s20, 1
    %p63 = por %p61, %p62
    %p64 = scmp.ne.s32.totalorder %s56, %s59
    %p65 = scmp.eq.s32.totalorder %s20, 0
    %p66 = por %p64, %p65
    %p67 = scmp.ne.s32.totalorder %s56, %s59
    %p68 = scmp.eq.s32.totalorder %s25, 1
    %p69 = por %p67, %p68
    %p70 = scmp.ne.s32.totalorder %s59, %s60
    %p71 = scmp.eq.s32.totalorder %s25, 0
    %p72 = por %p70, %p71
    %p73 = scmp.ne.s32.totalorder %s59, %s60
    %p74 = scmp.eq.s32.totalorder %s26, 1
    %p75 = por %p73, %p74
    %p77 = scmp.ne.s32.totalorder %s60, %s76
    %p78 = scmp.eq.s32.totalorder %s26, 0
    %p79 = por %p77, %p78
    %s80 = ssub.s32 %s20, %s27
    %p81 = scmp.eq.s32.totalorder %s80, 0
    %s83 = sadd.s32 %s82, 1
    %s84 = scalar_select %p81, %s82, %s83
    %p87 = pneg %p81
    %p88 = scmp.eq.s32.totalorder %s20, 1
    %p89 = por %p87, %p88
    %p90 = scmp.ne.s32.totalorder %s82, %s85
    %p91 = scmp.eq.s32.totalorder %s20, 0
    %p92 = por %p90, %p91
    %p93 = scmp.ne.s32.totalorder %s82, %s85
    %p94 = scmp.eq.s32.totalorder %s25, 1
    %p95 = por %p93, %p94
    %p96 = scmp.ne.s32.totalorder %s85, %s86
    %p97 = scmp.eq.s32.totalorder %s25, 0
    %p98 = por %p96, %p97
    %p99 = scmp.ne.s32.totalorder %s85, %s86
    %p100 = scmp.eq.s32.totalorder %s26, 1
    %p101 = por %p99, %p100
    %p103 = scmp.ne.s32.totalorder %s86, %s102
    %p104 = scmp.eq.s32.totalorder %s26, 0
    %p105 = por %p103, %p104
    %s106 = ssub.s32 %s20, %s27
    %p107 = scmp.eq.s32.totalorder %s106, 0
    %s109 = sadd.s32 %s108, 1
    %s110 = scalar_select %p107, %s108, %s109
    %p113 = pneg %p107
    %p114 = scmp.eq.s32.totalorder %s20, 1
    %p115 = por %p113, %p114
    %p116 = scmp.ne.s32.totalorder %s108, %s111
    %p117 = scmp.eq.s32.totalorder %s20, 0
    %p118 = por %p116, %p117
    %p119 = scmp.ne.s32.totalorder %s108, %s111
    %p120 = scmp.eq.s32.totalorder %s25, 1
    %p121 = por %p119, %p120
    %p122 = scmp.ne.s32.totalorder %s111, %s112
    %p123 = scmp.eq.s32.totalorder %s25, 0
    %p124 = por %p122, %p123
    %p125 = scmp.ne.s32.totalorder %s111, %s112
    %p126 = scmp.eq.s32.totalorder %s26, 1
    %p127 = por %p125, %p126
    %p129 = scmp.ne.s32.totalorder %s112, %s128
    %p130 = scmp.eq.s32.totalorder %s26, 0
    %p131 = por %p129, %p130
    %s133 = sadd.s32 %s132, 1
    %p136 = scmp.eq.s32.totalorder %s20, 1
    %p137 = scmp.ne.s32.totalorder %s132, %s134
    %p138 = scmp.eq.s32.totalorder %s20, 0
    %p139 = por %p137, %p138
    %p140 = scmp.ne.s32.totalorder %s132, %s134
    %p141 = scmp.eq.s32.totalorder %s25, 1
    %p142 = por %p140, %p141
    %p143 = scmp.ne.s32.totalorder %s134, %s135
    %p144 = scmp.eq.s32.totalorder %s25, 0
    %p145 = por %p143, %p144
    %p146 = scmp.ne.s32.totalorder %s134, %s135
    %p147 = scmp.eq.s32.totalorder %s26, 1
    %p148 = por %p146, %p147
    %p150 = scmp.ne.s32.totalorder %s135, %s149
    %p151 = scmp.eq.s32.totalorder %s26, 0
    %p152 = por %p150, %p151
    %s154 = sadd.s32 %s153, 1
    %p157 = scmp.eq.s32.totalorder %s20, 1
    %p158 = scmp.ne.s32.totalorder %s153, %s155
    %p159 = scmp.eq.s32.totalorder %s20, 0
    %p160 = por %p158, %p159
    %p161 = scmp.ne.s32.totalorder %s153, %s155
    %p162 = scmp.eq.s32.totalorder %s25, 1
    %p163 = por %p161, %p162
    %p164 = scmp.ne.s32.totalorder %s155, %s156
    %p165 = scmp.eq.s32.totalorder %s25, 0
    %p166 = por %p164, %p165
    %p167 = scmp.ne.s32.totalorder %s155, %s156
    %p168 = scmp.eq.s32.totalorder %s26, 1
    %p169 = por %p167, %p168
    %p171 = scmp.ne.s32.totalorder %s156, %s170
    %p172 = scmp.eq.s32.totalorder %s26, 0
    %p173 = por %p171, %p172
    %s175 = sadd.s32 %s174, 1
    %p178 = scmp.eq.s32.totalorder %s20, 1
    %p179 = scmp.ne.s32.totalorder %s174, %s176
    %p180 = scmp.eq.s32.totalorder %s20, 0
    %p181 = por %p179, %p180
    %p182 = scmp.ne.s32.totalorder %s174, %s176
    %p183 = scmp.eq.s32.totalorder %s25, 1
    %p184 = por %p182, %p183
    %p185 = scmp.ne.s32.totalorder %s176, %s177
    %p186 = scmp.eq.s32.totalorder %s25, 0
    %p187 = por %p185, %p186
    %p188 = scmp.ne.s32.totalorder %s176, %s177
    %p189 = scmp.eq.s32.totalorder %s26, 1
    %p190 = por %p188, %p189
    %p192 = scmp.ne.s32.totalorder %s177, %s191
    %p193 = scmp.eq.s32.totalorder %s26, 0
    %p194 = por %p192, %p193
    %s196 = sadd.s32 %s195, 1
    %p199 = scmp.eq.s32.totalorder %s20, 1
    %p200 = scmp.ne.s32.totalorder %s195, %s197
    %p201 = scmp.eq.s32.totalorder %s20, 0
    %p202 = por %p200, %p201
    %p203 = scmp.ne.s32.totalorder %s195, %s197
    %p204 = scmp.eq.s32.totalorder %s25, 1
    %p205 = por %p203, %p204
    %p206 = scmp.ne.s32.totalorder %s197, %s198
    %p207 = scmp.eq.s32.totalorder %s25, 0
    %p208 = por %p206, %p207
    %p209 = scmp.ne.s32.totalorder %s197, %s198
    %p210 = scmp.eq.s32.totalorder %s26, 1
    %p211 = por %p209, %p210
    %p213 = scmp.ne.s32.totalorder %s198, %s212
    %p214 = scmp.eq.s32.totalorder %s26, 0
    %p215 = por %p213, %p214
    %s217 = sadd.s32 %s216, 1
    %p220 = scmp.eq.s32.totalorder %s20, 1
    %p221 = scmp.ne.s32.totalorder %s216, %s218
    %p222 = scmp.eq.s32.totalorder %s20, 0
    %p223 = por %p221, %p222
    %p224 = scmp.ne.s32.totalorder %s216, %s218
    %p225 = scmp.eq.s32.totalorder %s25, 1
    %p226 = por %p224, %p225
    %p227 = scmp.ne.s32.totalorder %s218, %s219
    %p228 = scmp.eq.s32.totalorder %s25, 0
    %p229 = por %p227, %p228
    %p230 = scmp.ne.s32.totalorder %s218, %s219
    %p231 = scmp.eq.s32.totalorder %s26, 1
    %p232 = por %p230, %p231
    %p234 = scmp.ne.s32.totalorder %s219, %s233
    %p235 = scmp.eq.s32.totalorder %s26, 0
    %p236 = por %p234, %p235
    %s238 = sadd.s32 %s237, 1
    %p241 = scmp.eq.s32.totalorder %s20, 1
    %p242 = scmp.ne.s32.totalorder %s237, %s239
    %p243 = scmp.eq.s32.totalorder %s20, 0
    %p244 = por %p242, %p243
    %p245 = scmp.ne.s32.totalorder %s237, %s239
    %p246 = scmp.eq.s32.totalorder %s25, 1
    %p247 = por %p245, %p246
    %p248 = scmp.ne.s32.totalorder %s239, %s240
    %p249 = scmp.eq.s32.totalorder %s25, 0
    %p250 = por %p248, %p249
    %p251 = scmp.ne.s32.totalorder %s239, %s240
    %p252 = scmp.eq.s32.totalorder %s26, 1
    %p253 = por %p251, %p252
    %p255 = scmp.ne.s32.totalorder %s240, %s254
    %p256 = scmp.eq.s32.totalorder %s26, 0
    %p257 = por %p255, %p256
    %s259 = sadd.s32 %s258, 1
    %p262 = scmp.eq.s32.totalorder %s20, 1
    %p263 = scmp.ne.s32.totalorder %s258, %s260
    %p264 = scmp.eq.s32.totalorder %s20, 0
    %p265 = por %p263, %p264
    %p266 = scmp.ne.s32.totalorder %s258, %s260
    %p267 = scmp.eq.s32.totalorder %s25, 1
    %p268 = por %p266, %p267
    %p269 = scmp.ne.s32.totalorder %s260, %s261
    %p270 = scmp.eq.s32.totalorder %s25, 0
    %p271 = por %p269, %p270
    %p272 = scmp.ne.s32.totalorder %s260, %s261
    %p273 = scmp.eq.s32.totalorder %s26, 1
    %p274 = por %p272, %p273
    %p276 = scmp.ne.s32.totalorder %s261, %s275
    %p277 = scmp.eq.s32.totalorder %s26, 0
    %p278 = por %p276, %p277
    %s280 = sadd.s32 %s279, 1
    %p283 = scmp.eq.s32.totalorder %s20, 1
    %p284 = scmp.ne.s32.totalorder %s279, %s281
    %p285 = scmp.eq.s32.totalorder %s20, 0
    %p286 = por %p284, %p285
    %p287 = scmp.ne.s32.totalorder %s279, %s281
    %p288 = scmp.eq.s32.totalorder %s25, 1
    %p289 = por %p287, %p288
    %p290 = scmp.ne.s32.totalorder %s281, %s282
    %p291 = scmp.eq.s32.totalorder %s25, 0
    %p292 = por %p290, %p291
    %p293 = scmp.ne.s32.totalorder %s281, %s282
    %p294 = scmp.eq.s32.totalorder %s26, 1
    %p295 = por %p293, %p294
    %p297 = scmp.ne.s32.totalorder %s282, %s296
    %p298 = scmp.eq.s32.totalorder %s26, 0
    %p299 = por %p297, %p298
    %s301 = sadd.s32 %s300, 1
    %p304 = scmp.eq.s32.totalorder %s20, 1
    %p305 = scmp.ne.s32.totalorder %s300, %s302
    %p306 = scmp.eq.s32.totalorder %s20, 0
    %p307 = por %p305, %p306
    %p308 = scmp.ne.s32.totalorder %s300, %s302
    %p309 = scmp.eq.s32.totalorder %s25, 1
    %p310 = por %p308, %p309
    %p311 = scmp.ne.s32.totalorder %s302, %s303
    %p312 = scmp.eq.s32.totalorder %s25, 0
    %p313 = por %p311, %p312
    %p314 = scmp.ne.s32.totalorder %s302, %s303
    %p315 = scmp.eq.s32.totalorder %s26, 1
    %p316 = por %p314, %p315
    %p318 = scmp.ne.s32.totalorder %s303, %s317
    %p319 = scmp.eq.s32.totalorder %s26, 0
    %p320 = por %p318, %p319
    %s322 = sadd.s32 %s321, 1
    %p325 = scmp.eq.s32.totalorder %s20, 1
    %p326 = scmp.ne.s32.totalorder %s321, %s323
    %p327 = scmp.eq.s32.totalorder %s20, 0
    %p328 = por %p326, %p327
    %p329 = scmp.ne.s32.totalorder %s321, %s323
    %p330 = scmp.eq.s32.totalorder %s25, 1
    %p331 = por %p329, %p330
    %p332 = scmp.ne.s32.totalorder %s323, %s324
    %p333 = scmp.eq.s32.totalorder %s25, 0
    %p334 = por %p332, %p333
    %p335 = scmp.ne.s32.totalorder %s323, %s324
    %p336 = scmp.eq.s32.totalorder %s26, 1
    %p337 = por %p335, %p336
    %p339 = scmp.ne.s32.totalorder %s324, %s338
    %p340 = scmp.eq.s32.totalorder %s26, 0
    %p341 = por %p339, %p340
    %s342 = ssub.s32 %s20, %s27
    %p343 = scmp.eq.s32.totalorder %s342, 0
    %s345 = sadd.s32 %s344, 1
    %s346 = scalar_select %p343, %s344, %s345
    %p349 = pneg %p343
    %p350 = scmp.eq.s32.totalorder %s20, 1
    %p351 = por %p349, %p350
    %p352 = scmp.ne.s32.totalorder %s344, %s347
    %p353 = scmp.eq.s32.totalorder %s20, 0
    %p354 = por %p352, %p353
    %p355 = scmp.ne.s32.totalorder %s344, %s347
    %p356 = scmp.eq.s32.totalorder %s25, 1
    %p357 = por %p355, %p356
    %p358 = scmp.ne.s32.totalorder %s347, %s348
    %p359 = scmp.eq.s32.totalorder %s25, 0
    %p360 = por %p358, %p359
    %p361 = scmp.ne.s32.totalorder %s347, %s348
    %p362 = scmp.eq.s32.totalorder %s26, 1
    %p363 = por %p361, %p362
    %p365 = scmp.ne.s32.totalorder %s348, %s364
    %p366 = scmp.eq.s32.totalorder %s26, 0
    %p367 = por %p365, %p366
    %p368 = scmp.le.s32.totalorder 1, %s20
    %p369 = scmp.lt.s32.totalorder %s20, 3
    %p370 = pnand %p368, %p369
    %p371 = pneg %p370
    // Predicated region
    $region9: #{transformer_decoder_layer_forward.5} parent=5 // pred_check
      _
    $region10: #{transformer_decoder_layer_forward.5} parent=5 // pred_check_branch
      %373 = sbr.rel (%p370) target = $region12
    $region11: #{transformer_decoder_layer_forward.5} parent=5 // pred_region
      %s374 = ssub.s32 %s20, 1
      // Predicated region
      $region13: #{transformer_decoder_layer_forward.5} parent=11 // pred_check
        %p375 = pneg %p145
      $region14: #{transformer_decoder_layer_forward.5} parent=11 // pred_check_branch
        %377 = sbr.rel (%p375) target = $region16
      $region15: #{transformer_decoder_layer_forward.5} parent=11 // pred_region
        _
      $region16: #{transformer_decoder_layer_forward.5} parent=11 // pred_fallthru
        _
      // Predicated region
      $region17: #{transformer_decoder_layer_forward.5} parent=11 // pred_check
        %p378 = pneg %p166
      $region18: #{transformer_decoder_layer_forward.5} parent=11 // pred_check_branch
        %380 = sbr.rel (%p378) target = $region20
      $region19: #{transformer_decoder_layer_forward.5} parent=11 // pred_region
        _
      $region20: #{transformer_decoder_layer_forward.5} parent=11 // pred_fallthru
        _
      // Predicated region
      $region21: #{transformer_decoder_layer_forward.5} parent=11 // pred_check
        %p381 = pneg %p187
      $region22: #{transformer_decoder_layer_forward.5} parent=11 // pred_check_branch
        %383 = sbr.rel (%p381) target = $region24
      $region23: #{transformer_decoder_layer_forward.5} parent=11 // pred_region
        _
      $region24: #{transformer_decoder_layer_forward.5} parent=11 // pred_fallthru
        _
      // Predicated region
      $region25: #{transformer_decoder_layer_forward.5} parent=11 // pred_check
        %p384 = pneg %p208
      $region26: #{transformer_decoder_layer_forward.5} parent=11 // pred_check_branch
        %386 = sbr.rel (%p384) target = $region28
      $region27: #{transformer_decoder_layer_forward.5} parent=11 // pred_region
        _
      $region28: #{transformer_decoder_layer_forward.5} parent=11 // pred_fallthru
        _
      // Predicated region
      $region29: #{transformer_decoder_layer_forward.5} parent=11 // pred_check
        %p387 = pneg %p229
      $region30: #{transformer_decoder_layer_forward.5} parent=11 // pred_check_branch
        %389 = sbr.rel (%p387) target = $region32
      $region31: #{transformer_decoder_layer_forward.5} parent=11 // pred_region
        _
      $region32: #{transformer_decoder_layer_forward.5} parent=11 // pred_fallthru
        _
      // Predicated region
      $region33: #{transformer_decoder_layer_forward.5} parent=11 // pred_check
        %p390 = pneg %p250
      $region34: #{transformer_decoder_layer_forward.5} parent=11 // pred_check_branch
        %392 = sbr.rel (%p390) target = $region36
      $region35: #{transformer_decoder_layer_forward.5} parent=11 // pred_region
        _
      $region36: #{transformer_decoder_layer_forward.5} parent=11 // pred_fallthru
        _
      // Predicated region
      $region37: #{transformer_decoder_layer_forward.5} parent=11 // pred_check
        %p393 = pneg %p271
      $region38: #{transformer_decoder_layer_forward.5} parent=11 // pred_check_branch
        %395 = sbr.rel (%p393) target = $region40
      $region39: #{transformer_decoder_layer_forward.5} parent=11 // pred_region
        _
      $region40: #{transformer_decoder_layer_forward.5} parent=11 // pred_fallthru
        _
      // Predicated region
      $region41: #{transformer_decoder_layer_forward.5} parent=11 // pred_check
        %p396 = pneg %p292
      $region42: #{transformer_decoder_layer_forward.5} parent=11 // pred_check_branch
        %398 = sbr.rel (%p396) target = $region44
      $region43: #{transformer_decoder_layer_forward.5} parent=11 // pred_region
        _
      $region44: #{transformer_decoder_layer_forward.5} parent=11 // pred_fallthru
        _
      // Predicated region
      $region45: #{transformer_decoder_layer_forward.5} parent=11 // pred_check
        %p399 = pneg %p313
      $region46: #{transformer_decoder_layer_forward.5} parent=11 // pred_check_branch
        %401 = sbr.rel (%p399) target = $region48
      $region47: #{transformer_decoder_layer_forward.5} parent=11 // pred_region
        _
      $region48: #{transformer_decoder_layer_forward.5} parent=11 // pred_fallthru
        _
      // Predicated region
      $region49: #{transformer_decoder_layer_forward.5} parent=11 // pred_check
        %p402 = pneg %p334
      $region50: #{transformer_decoder_layer_forward.5} parent=11 // pred_check_branch
        %404 = sbr.rel (%p402) target = $region52
      $region51: #{transformer_decoder_layer_forward.5} parent=11 // pred_region
        _
      $region52: #{transformer_decoder_layer_forward.5} parent=11 // pred_fallthru
        _
    $region12: #{transformer_decoder_layer_forward.5} parent=5 // pred_fallthru
      _
    %p405 = scmp.lt.s32.totalorder %s20, 2
    // Predicated region
    $region53: #{transformer_decoder_layer_forward.5} parent=5 // pred_check
      %p406 = pneg %p405
    $region54: #{transformer_decoder_layer_forward.5} parent=5 // pred_check_branch
      %408 = sbr.rel (%p406) target = $region56
    $region55: #{transformer_decoder_layer_forward.5} parent=5 // pred_region
      // Predicated region
      $region57: #{transformer_decoder_layer_forward.5} parent=55 // pred_check
        %p409 = pneg %p40
      $region58: #{transformer_decoder_layer_forward.5} parent=55 // pred_check_branch
        %411 = sbr.rel (%p409) target = $region60
      $region59: #{transformer_decoder_layer_forward.5} parent=55 // pred_region
        %p412 = scmp.lt.s32.totalorder %s20, 1
        %s413 = scalar_select %p412, %s20, 1
        %s414 = smul.addr %s413, 8
        %s415 = scalar_lea.vmem %s0, %s414
      $region60: #{transformer_decoder_layer_forward.5} parent=55 // pred_fallthru
        _
      // Predicated region
      $region61: #{transformer_decoder_layer_forward.5} parent=55 // pred_check
        %p416 = pneg %p66
      $region62: #{transformer_decoder_layer_forward.5} parent=55 // pred_check_branch
        %418 = sbr.rel (%p416) target = $region64
      $region63: #{transformer_decoder_layer_forward.5} parent=55 // pred_region
        %p419 = scmp.lt.s32.totalorder %s20, 1
        %s420 = scalar_select %p419, %s20, 1
        %s421 = smul.addr %s420, 8
        %s422 = scalar_lea.vmem %s1, %s421
      $region64: #{transformer_decoder_layer_forward.5} parent=55 // pred_fallthru
        _
      // Predicated region
      $region65: #{transformer_decoder_layer_forward.5} parent=55 // pred_check
        %p423 = pneg %p92
      $region66: #{transformer_decoder_layer_forward.5} parent=55 // pred_check_branch
        %425 = sbr.rel (%p423) target = $region68
      $region67: #{transformer_decoder_layer_forward.5} parent=55 // pred_region
        %p426 = scmp.lt.s32.totalorder %s20, 1
        %s427 = scalar_select %p426, %s20, 1
        %s428 = smul.addr %s427, 8
        %s429 = scalar_lea.vmem %s2, %s428
      $region68: #{transformer_decoder_layer_forward.5} parent=55 // pred_fallthru
        _
      // Predicated region
      $region69: #{transformer_decoder_layer_forward.5} parent=55 // pred_check
        %p430 = pneg %p118
      $region70: #{transformer_decoder_layer_forward.5} parent=55 // pred_check_branch
        %432 = sbr.rel (%p430) target = $region72
      $region71: #{transformer_decoder_layer_forward.5} parent=55 // pred_region
        %p433 = scmp.lt.s32.totalorder %s20, 1
        %s434 = scalar_select %p433, %s20, 1
        %s435 = smul.addr %s434, 8
        %s436 = scalar_lea.vmem %s3, %s435
      $region72: #{transformer_decoder_layer_forward.5} parent=55 // pred_fallthru
        _
    $region56: #{transformer_decoder_layer_forward.5} parent=5 // pred_fallthru
      _
    %p437 = scmp.le.s32.totalorder 1, %s20
    %p438 = scmp.lt.s32.totalorder %s20, 3
    %p439 = pnand %p437, %p438
    %p440 = pneg %p439
    // Predicated region
    $region73: #{transformer_decoder_layer_forward.5} parent=5 // pred_check
      _
    $region74: #{transformer_decoder_layer_forward.5} parent=5 // pred_check_branch
      %442 = sbr.rel (%p439) target = $region76
    $region75: #{transformer_decoder_layer_forward.5} parent=5 // pred_region
      %s443 = ssub.s32 %s20, 1
      %p444 = scmp.lt.s32.totalorder %s25, 1
      %s445 = scalar_select %p444, %s25, 1
      %s446 = smul.addr %s445, 8
      %s447 = scalar_lea.vmem %s0, %s446
      %p448 = pneg %p46
      %p449 = pneg %p43
      %p450 = scmp.lt.s32.totalorder %s25, 1
      %s451 = scalar_select %p450, %s25, 1
      %s452 = smul.addr %s451, 8
      %s453 = scalar_lea.vmem %s1, %s452
      %p454 = pneg %p72
      %p455 = pneg %p69
      %p456 = scmp.lt.s32.totalorder %s25, 1
      %s457 = scalar_select %p456, %s25, 1
      %s458 = smul.addr %s457, 8
      %s459 = scalar_lea.vmem %s2, %s458
      %p460 = pneg %p98
      %p461 = pneg %p95
      %p462 = scmp.lt.s32.totalorder %s25, 1
      %s463 = scalar_select %p462, %s25, 1
      %s464 = smul.addr %s463, 8
      %s465 = scalar_lea.vmem %s3, %s464
      %p466 = pneg %p124
      %p467 = pneg %p121
      %p468 = pneg %p145
      %p469 = pneg %p142
      %p470 = pneg %p166
      %p471 = pneg %p163
      %p472 = pneg %p187
      %p473 = pneg %p184
      %p474 = pneg %p208
      %p475 = pneg %p205
      %p476 = pneg %p229
      %p477 = pneg %p226
      %p478 = pneg %p250
      %p479 = pneg %p247
      %p480 = pneg %p271
      %p481 = pneg %p268
      %p482 = pneg %p292
      %p483 = pneg %p289
      %p484 = pneg %p313
      %p485 = pneg %p310
      %p486 = pneg %p334
      %p487 = pneg %p331
      %p488 = pneg %p360
      %p489 = pneg %p357
      %p490 = scmp.lt.s32.totalorder %s25, 1
      %s491 = scalar_select %p490, %s25, 1
      %s492 = smul.addr %s491, 8
      %s493 = scalar_lea.vmem %s14, %s492
      %p494 = scmp.lt.s32.totalorder %s25, 1
      %s495 = scalar_select %p494, %s25, 1
      %s496 = smul.addr %s495, 8
      %s497 = scalar_lea.vmem %s0, %s496
      %p498 = scmp.lt.s32.totalorder %s25, 1
      %s499 = scalar_select %p498, %s25, 1
      %s500 = smul.addr %s499, 8
      %s501 = scalar_lea.vmem %s1, %s500
      %p502 = scmp.lt.s32.totalorder %s25, 1
      %s503 = scalar_select %p502, %s25, 1
      %s504 = smul.addr %s503, 8
      %s505 = scalar_lea.vmem %s2, %s504
      %p506 = scmp.lt.s32.totalorder %s25, 1
      %s507 = scalar_select %p506, %s25, 1
      %s508 = smul.addr %s507, 8
      %s509 = scalar_lea.vmem %s3, %s508
      %p510 = scmp.lt.s32.totalorder %s25, 1
      %s511 = scalar_select %p510, %s25, 1
      %s512 = smul.addr %s511, 8
      %s513 = scalar_lea.vmem %s14, %s512
      %v515 = vld [vmem:[%s497] sm:$0xff]
      %v516 = vpack.c.bf16 %v515, %v515
      %v517 = vld [vmem:[%s501] sm:$0xff]
      %v518 = vpack.c.bf16 %v517, %v517
      %v519 = vld [vmem:[%s505] sm:$0xff]
      %v520 = vpack.c.bf16 %v519, %v519
      %v521 = vld [vmem:[%s4] sm:$0xf]
      %v522 = vld [vmem:[%s4 + $0x4] sm:$0xf]
      %v523 = vld [vmem:[%s4 + $0x8] sm:$0xf]
      %v524 = vld [vmem:[%s4 + $0xc] sm:$0xf]
      %v525 = vld [vmem:[%s5] sm:$0x1]
      %v527 = vlaneseq
      %v528 = vshrl.u32 %v527, 7
      %v529 = vsub.s32 0, %v528
      %v530 = vrot.slane %v525, %v529
      %v536 = vunpack.c.l.b16 %v521
      %v537 = vunpack.c.l.b16 %v522
      %v538 = vunpack.c.l.b16 %v523
      %v539 = vunpack.c.l.b16 %v524
      %v540 = vpack.c.b16 %v537, %v536
      %v541 = vpack.c.b16 %v539, %v538
      %vm544 = vcmask 261120
      %v546 = vsel %vm544, %v516, 0
      %548 = vmatprep.subr.bf16.mxu0 0
      %549 = vmatpush1.bf16.msra.mxu0 %v540
      %550 = vmatprep.subr.bf16.mxu0 0
      %551 = vmatpush1.bf16.msra.mxu0 %v541
      %552 = vmatprep.subr.bf16.mxu0 0
      %553 = vmatpush1.bf16.msra.mxu0 0
      %554 = vmatprep.subr.bf16.mxu0 0
      %555 = vmatpush1.bf16.msra.mxu0 0
      %556 = vmatprep.subr.bf16.mxu0 0
      %557 = vmatpush1.bf16.msra.mxu0 0
      %558 = vmatprep.subr.bf16.mxu0 0
      %559 = vmatpush1.bf16.msra.mxu0 0
      %560 = vmatprep.subr.bf16.mxu0 0
      %561 = vmatpush1.bf16.msra.mxu0 0
      %562 = vmatprep.subr.bf16.mxu0 0
      %563 = vmatpush1.bf16.msra.mxu0 0
      %564 = vmatprep.subr.bf16.mxu0 0
      %565 = vmatpush1.bf16.msra.mxu0 0
      %566 = vmatprep.subr.bf16.mxu0 0
      %567 = vmatpush1.bf16.msra.mxu0 0
      %568 = vmatprep.subr.bf16.mxu0 0
      %569 = vmatpush1.bf16.msra.mxu0 0
      %570 = vmatprep.subr.bf16.mxu0 0
      %571 = vmatpush1.bf16.msra.mxu0 0
      %572 = vmatprep.subr.bf16.mxu0 0
      %573 = vmatpush1.bf16.msra.mxu0 0
      %574 = vmatprep.subr.bf16.mxu0 0
      %575 = vmatpush1.bf16.msra.mxu0 0
      %576 = vmatprep.subr.bf16.mxu0 0
      %577 = vmatpush1.bf16.msra.mxu0 0
      %578 = vmatprep.subr.bf16.mxu0 0
      %579 = vmatpush1.bf16.msra.mxu0 0
      %580 = vmatprep.mubr.bf16.mxu0 0
      %581 = vmatmul.mubr.bf16.gmra.mrb[0].mxu0 %v546
      %v582 = vpop.f32.mrb[0].mxu0
      %v583 = vadd.f32 %v530, %v582
      %v584 = vpop.f32.mrb[0].mxu0
      %v585 = vpop.f32.mrb[0].mxu0
      %v586 = vpop.f32.mrb[0].mxu0
      %587 = vdwg.mxu0
      %v588 = vld [vmem:[%s6] sm:$0xf]
      %v589 = vld [vmem:[%s6 + $0x4] sm:$0xf]
      %v590 = vld [vmem:[%s6 + $0x8] sm:$0xf]
      %v591 = vld [vmem:[%s6 + $0xc] sm:$0xf]
      %v592 = vld [vmem:[%s7] sm:$0x1]
      %v594 = vlaneseq
      %v595 = vshrl.u32 %v594, 7
      %v596 = vsub.s32 0, %v595
      %v597 = vrot.slane %v592, %v596
      %v603 = vunpack.c.l.b16 %v588
      %v604 = vunpack.c.l.b16 %v589
      %v605 = vunpack.c.l.b16 %v590
      %v606 = vunpack.c.l.b16 %v591
      %v607 = vpack.c.b16 %v604, %v603
      %v608 = vpack.c.b16 %v606, %v605
      %v612 = vsel %vm544, %v518, 0
      %614 = vmatprep.subr.bf16.mxu0 0
      %615 = vmatpush1.bf16.msra.mxu0 %v607
      %616 = vmatprep.subr.bf16.mxu0 0
      %617 = vmatpush1.bf16.msra.mxu0 %v608
      %618 = vmatprep.subr.bf16.mxu0 0
      %619 = vmatpush1.bf16.msra.mxu0 0
      %620 = vmatprep.subr.bf16.mxu0 0
      %621 = vmatpush1.bf16.msra.mxu0 0
      %622 = vmatprep.subr.bf16.mxu0 0
      %623 = vmatpush1.bf16.msra.mxu0 0
      %624 = vmatprep.subr.bf16.mxu0 0
      %625 = vmatpush1.bf16.msra.mxu0 0
      %626 = vmatprep.subr.bf16.mxu0 0
      %627 = vmatpush1.bf16.msra.mxu0 0
      %628 = vmatprep.subr.bf16.mxu0 0
      %629 = vmatpush1.bf16.msra.mxu0 0
      %630 = vmatprep.subr.bf16.mxu0 0
      %631 = vmatpush1.bf16.msra.mxu0 0
      %632 = vmatprep.subr.bf16.mxu0 0
      %633 = vmatpush1.bf16.msra.mxu0 0
      %634 = vmatprep.subr.bf16.mxu0 0
      %635 = vmatpush1.bf16.msra.mxu0 0
      %636 = vmatprep.subr.bf16.mxu0 0
      %637 = vmatpush1.bf16.msra.mxu0 0
      %638 = vmatprep.subr.bf16.mxu0 0
      %639 = vmatpush1.bf16.msra.mxu0 0
      %640 = vmatprep.subr.bf16.mxu0 0
      %641 = vmatpush1.bf16.msra.mxu0 0
      %642 = vmatprep.subr.bf16.mxu0 0
      %643 = vmatpush1.bf16.msra.mxu0 0
      %644 = vmatprep.subr.bf16.mxu0 0
      %645 = vmatpush1.bf16.msra.mxu0 0
      %646 = vmatprep.mubr.bf16.mxu0 0
      %647 = vmatmul.mubr.bf16.gmra.mrb[0].mxu0 %v612
      %v648 = vpop.f32.mrb[0].mxu0
      %v649 = vadd.f32 %v597, %v648
      %v650 = vpop.f32.mrb[0].mxu0
      %v651 = vpop.f32.mrb[0].mxu0
      %v652 = vpop.f32.mrb[0].mxu0
      %653 = vdwg.mxu0
      %v654 = vld [vmem:[%s8] sm:$0xf]
      %v655 = vld [vmem:[%s8 + $0x4] sm:$0xf]
      %v656 = vld [vmem:[%s8 + $0x8] sm:$0xf]
      %v657 = vld [vmem:[%s8 + $0xc] sm:$0xf]
      %v658 = vld [vmem:[%s9] sm:$0x1]
      %v660 = vlaneseq
      %v661 = vshrl.u32 %v660, 7
      %v662 = vsub.s32 0, %v661
      %v663 = vrot.slane %v658, %v662
      %v669 = vunpack.c.l.b16 %v654
      %v670 = vunpack.c.l.b16 %v655
      %v671 = vunpack.c.l.b16 %v656
      %v672 = vunpack.c.l.b16 %v657
      %v673 = vpack.c.b16 %v670, %v669
      %v674 = vpack.c.b16 %v672, %v671
      %v678 = vsel %vm544, %v520, 0
      %680 = vmatprep.subr.bf16.mxu0 0
      %681 = vmatpush1.bf16.msra.mxu0 %v673
      %682 = vmatprep.subr.bf16.mxu0 0
      %683 = vmatpush1.bf16.msra.mxu0 %v674
      %684 = vmatprep.subr.bf16.mxu0 0
      %685 = vmatpush1.bf16.msra.mxu0 0
      %686 = vmatprep.subr.bf16.mxu0 0
      %687 = vmatpush1.bf16.msra.mxu0 0
      %688 = vmatprep.subr.bf16.mxu0 0
      %689 = vmatpush1.bf16.msra.mxu0 0
      %690 = vmatprep.subr.bf16.mxu0 0
      %691 = vmatpush1.bf16.msra.mxu0 0
      %692 = vmatprep.subr.bf16.mxu0 0
      %693 = vmatpush1.bf16.msra.mxu0 0
      %694 = vmatprep.subr.bf16.mxu0 0
      %695 = vmatpush1.bf16.msra.mxu0 0
      %696 = vmatprep.subr.bf16.mxu0 0
      %697 = vmatpush1.bf16.msra.mxu0 0
      %698 = vmatprep.subr.bf16.mxu0 0
      %699 = vmatpush1.bf16.msra.mxu0 0
      %700 = vmatprep.subr.bf16.mxu0 0
      %701 = vmatpush1.bf16.msra.mxu0 0
      %702 = vmatprep.subr.bf16.mxu0 0
      %703 = vmatpush1.bf16.msra.mxu0 0
      %704 = vmatprep.subr.bf16.mxu0 0
      %705 = vmatpush1.bf16.msra.mxu0 0
      %706 = vmatprep.subr.bf16.mxu0 0
      %707 = vmatpush1.bf16.msra.mxu0 0
      %708 = vmatprep.subr.bf16.mxu0 0
      %709 = vmatpush1.bf16.msra.mxu0 0
      %710 = vmatprep.subr.bf16.mxu0 0
      %711 = vmatpush1.bf16.msra.mxu0 0
      %712 = vmatprep.mubr.bf16.mxu0 0
      %713 = vmatmul.mubr.bf16.gmra.mrb[0].mxu0 %v678
      %v714 = vpop.f32.mrb[0].mxu0
      %v715 = vadd.f32 %v663, %v714
      %v716 = vpop.f32.mrb[0].mxu0
      %v717 = vpop.f32.mrb[0].mxu0
      %v718 = vpop.f32.mrb[0].mxu0
      %719 = vdwg.mxu0
      %v720 = vpack.c.bf16 %v583, %v583
      %v721 = vpack.c.bf16 %v649, %v649
      %v722 = vpack.c.bf16 %v715, %v715
      %v723 = vlaneseq
      %v724 = vshrl.u32 %v723, 7
      %v725 = vlaneseq
      %v726 = vand.u32 %v725, 127
      %vm727 = vcmp.le.s32.totalorder %v726, %v724
      %v728 = vsel %vm727, 0.0, -1e+30
      %vm729 = vcmask 64512
      %v731 = vsel %vm729, %v720, 0
      %v734 = vsel %vm729, %v721, 0
      %736 = vmatprep.subr.bf16.mxu0 0
      %737 = vmatpush1.bf16.xpose.msra.mxu0 %v734
      %738 = vmatprep.subr.bf16.mxu0 0
      %739 = vmatpush1.bf16.xpose.msra.mxu0 0
      %740 = vmatprep.subr.bf16.mxu0 0
      %741 = vmatpush1.bf16.xpose.msra.mxu0 0
      %742 = vmatprep.subr.bf16.mxu0 0
      %743 = vmatpush1.bf16.xpose.msra.mxu0 0
      %744 = vmatprep.subr.bf16.mxu0 0
      %745 = vmatpush1.bf16.xpose.msra.mxu0 0
      %746 = vmatprep.subr.bf16.mxu0 0
      %747 = vmatpush1.bf16.xpose.msra.mxu0 0
      %748 = vmatprep.subr.bf16.mxu0 0
      %749 = vmatpush1.bf16.xpose.msra.mxu0 0
      %750 = vmatprep.subr.bf16.mxu0 0
      %751 = vmatpush1.bf16.xpose.msra.mxu0 0
      %752 = vmatprep.subr.bf16.mxu0 0
      %753 = vmatpush1.bf16.xpose.msra.mxu0 0
      %754 = vmatprep.subr.bf16.mxu0 0
      %755 = vmatpush1.bf16.xpose.msra.mxu0 0
      %756 = vmatprep.subr.bf16.mxu0 0
      %757 = vmatpush1.bf16.xpose.msra.mxu0 0
      %758 = vmatprep.subr.bf16.mxu0 0
      %759 = vmatpush1.bf16.xpose.msra.mxu0 0
      %760 = vmatprep.subr.bf16.mxu0 0
      %761 = vmatpush1.bf16.xpose.msra.mxu0 0
      %762 = vmatprep.subr.bf16.mxu0 0
      %763 = vmatpush1.bf16.xpose.msra.mxu0 0
      %764 = vmatprep.subr.bf16.mxu0 0
      %765 = vmatpush1.bf16.xpose.msra.mxu0 0
      %766 = vmatprep.subr.bf16.mxu0 0
      %767 = vmatpush1.bf16.xpose.msra.mxu0 0
      %768 = vmatprep.mubr.bf16.mxu0 0
      %769 = vmatmul.mubr.bf16.gmra.mrb[0].mxu0 %v731
      %v770 = vpop.f32.mrb[0].mxu0
      %v771 = vadd.f32 %v728, %v770
      %v772 = vpop.f32.mrb[0].mxu0
      %v773 = vpop.f32.mrb[0].mxu0
      %v774 = vpop.f32.mrb[0].mxu0
      %775 = vdwg.mxu0
      %v776 = vsel %vm729, %v771, -inf
      %777 = vmax.xlane.f32.xlu0 %v776
      %v778 = vpop.xlane.xlu0 %777
      %v779 = vsub.f32 %v771, %v778
      %v780 = vmul.f32 %v779, 1.442695
      %v781 = vpow.pop %v780
      %v782 = vsel %vm729, %v781, 0.0
      %783 = vadd.xlane.f32.xlu0 %v782
      %v784 = vpop.xlane.xlu0 %783
      %v785 = vrcp.pop %v784
      %v786 = vmul.f32 %v781, %v785
      %v787 = vpack.c.bf16 %v786, %v786
      %v789 = vsel %vm729, %v787, 0
      %vm791 = vcmask 1043456
      %v793 = vsel %vm791, %v722, 0
      %795 = vmatprep.subr.bf16.mxu0 0
      %796 = vmatpush1.bf16.msra.mxu0 %v793
      %797 = vmatprep.subr.bf16.mxu0 0
      %798 = vmatpush1.bf16.msra.mxu0 0
      %799 = vmatprep.subr.bf16.mxu0 0
      %800 = vmatpush1.bf16.msra.mxu0 0
      %801 = vmatprep.subr.bf16.mxu0 0
      %802 = vmatpush1.bf16.msra.mxu0 0
      %803 = vmatprep.subr.bf16.mxu0 0
      %804 = vmatpush1.bf16.msra.mxu0 0
      %805 = vmatprep.subr.bf16.mxu0 0
      %806 = vmatpush1.bf16.msra.mxu0 0
      %807 = vmatprep.subr.bf16.mxu0 0
      %808 = vmatpush1.bf16.msra.mxu0 0
      %809 = vmatprep.subr.bf16.mxu0 0
      %810 = vmatpush1.bf16.msra.mxu0 0
      %811 = vmatprep.subr.bf16.mxu0 0
      %812 = vmatpush1.bf16.msra.mxu0 0
      %813 = vmatprep.subr.bf16.mxu0 0
      %814 = vmatpush1.bf16.msra.mxu0 0
      %815 = vmatprep.subr.bf16.mxu0 0
      %816 = vmatpush1.bf16.msra.mxu0 0
      %817 = vmatprep.subr.bf16.mxu0 0
      %818 = vmatpush1.bf16.msra.mxu0 0
      %819 = vmatprep.subr.bf16.mxu0 0
      %820 = vmatpush1.bf16.msra.mxu0 0
      %821 = vmatprep.subr.bf16.mxu0 0
      %822 = vmatpush1.bf16.msra.mxu0 0
      %823 = vmatprep.subr.bf16.mxu0 0
      %824 = vmatpush1.bf16.msra.mxu0 0
      %825 = vmatprep.subr.bf16.mxu0 0
      %826 = vmatpush1.bf16.msra.mxu0 0
      %827 = vmatprep.mubr.bf16.mxu0 0
      %828 = vmatmul.mubr.bf16.gmra.mrb[0].mxu0 %v789
      %v829 = vpop.f32.mrb[0].mxu0
      %v830 = vadd.f32 0.0, %v829
      %v831 = vpop.f32.mrb[0].mxu0
      %v832 = vpop.f32.mrb[0].mxu0
      %v833 = vpop.f32.mrb[0].mxu0
      %834 = vdwg.mxu0
      %v835 = vld [vmem:[%s10] sm:$0xf]
      %v836 = vpack.c.bf16 %v830, %v830
      %838 = vrot.lane.b32.xlu0 %v720, 120
      %v839 = vpop.permute.xlu0 %838
      %841 = vrot.lane.b32.xlu0 %v721, 120
      %v842 = vpop.permute.xlu0 %841
      %v844 = vsel %vm729, %v839, 0
      %v847 = vsel %vm729, %v842, 0
      %849 = vmatprep.subr.bf16.mxu0 0
      %850 = vmatpush1.bf16.xpose.msra.mxu0 %v847
      %851 = vmatprep.subr.bf16.mxu0 0
      %852 = vmatpush1.bf16.xpose.msra.mxu0 0
      %853 = vmatprep.subr.bf16.mxu0 0
      %854 = vmatpush1.bf16.xpose.msra.mxu0 0
      %855 = vmatprep.subr.bf16.mxu0 0
      %856 = vmatpush1.bf16.xpose.msra.mxu0 0
      %857 = vmatprep.subr.bf16.mxu0 0
      %858 = vmatpush1.bf16.xpose.msra.mxu0 0
      %859 = vmatprep.subr.bf16.mxu0 0
      %860 = vmatpush1.bf16.xpose.msra.mxu0 0
      %861 = vmatprep.subr.bf16.mxu0 0
      %862 = vmatpush1.bf16.xpose.msra.mxu0 0
      %863 = vmatprep.subr.bf16.mxu0 0
      %864 = vmatpush1.bf16.xpose.msra.mxu0 0
      %865 = vmatprep.subr.bf16.mxu0 0
      %866 = vmatpush1.bf16.xpose.msra.mxu0 0
      %867 = vmatprep.subr.bf16.mxu0 0
      %868 = vmatpush1.bf16.xpose.msra.mxu0 0
      %869 = vmatprep.subr.bf16.mxu0 0
      %870 = vmatpush1.bf16.xpose.msra.mxu0 0
      %871 = vmatprep.subr.bf16.mxu0 0
      %872 = vmatpush1.bf16.xpose.msra.mxu0 0
      %873 = vmatprep.subr.bf16.mxu0 0
      %874 = vmatpush1.bf16.xpose.msra.mxu0 0
      %875 = vmatprep.subr.bf16.mxu0 0
      %876 = vmatpush1.bf16.xpose.msra.mxu0 0
      %877 = vmatprep.subr.bf16.mxu0 0
      %878 = vmatpush1.bf16.xpose.msra.mxu0 0
      %879 = vmatprep.subr.bf16.mxu0 0
      %880 = vmatpush1.bf16.xpose.msra.mxu0 0
      %881 = vmatprep.mubr.bf16.mxu0 0
      %882 = vmatmul.mubr.bf16.gmra.mrb[0].mxu0 %v844
      %v883 = vpop.f32.mrb[0].mxu0
      %v884 = vadd.f32 %v728, %v883
      %v885 = vpop.f32.mrb[0].mxu0
      %v886 = vpop.f32.mrb[0].mxu0
      %v887 = vpop.f32.mrb[0].mxu0
      %888 = vdwg.mxu0
      %v889 = vsel %vm729, %v884, -inf
      %890 = vmax.xlane.f32.xlu0 %v889
      %v891 = vpop.xlane.xlu0 %890
      %v892 = vsub.f32 %v884, %v891
      %v893 = vmul.f32 %v892, 1.442695
      %v894 = vpow.pop %v893
      %v895 = vsel %vm729, %v894, 0.0
      %896 = vadd.xlane.f32.xlu0 %v895
      %v897 = vpop.xlane.xlu0 %896
      %v898 = vrcp.pop %v897
      %v899 = vmul.f32 %v894, %v898
      %v900 = vpack.c.bf16 %v899, %v899
      %902 = vrot.lane.b32.xlu0 %v722, 120
      %v903 = vpop.permute.xlu0 %902
      %v905 = vsel %vm729, %v900, 0
      %v908 = vsel %vm791, %v903, 0
      %910 = vmatprep.subr.bf16.mxu0 0
      %911 = vmatpush1.bf16.msra.mxu0 %v908
      %912 = vmatprep.subr.bf16.mxu0 0
      %913 = vmatpush1.bf16.msra.mxu0 0
      %914 = vmatprep.subr.bf16.mxu0 0
      %915 = vmatpush1.bf16.msra.mxu0 0
      %916 = vmatprep.subr.bf16.mxu0 0
      %917 = vmatpush1.bf16.msra.mxu0 0
      %918 = vmatprep.subr.bf16.mxu0 0
      %919 = vmatpush1.bf16.msra.mxu0 0
      %920 = vmatprep.subr.bf16.mxu0 0
      %921 = vmatpush1.bf16.msra.mxu0 0
      %922 = vmatprep.subr.bf16.mxu0 0
      %923 = vmatpush1.bf16.msra.mxu0 0
      %924 = vmatprep.subr.bf16.mxu0 0
      %925 = vmatpush1.bf16.msra.mxu0 0
      %926 = vmatprep.subr.bf16.mxu0 0
      %927 = vmatpush1.bf16.msra.mxu0 0
      %928 = vmatprep.subr.bf16.mxu0 0
      %929 = vmatpush1.bf16.msra.mxu0 0
      %930 = vmatprep.subr.bf16.mxu0 0
      %931 = vmatpush1.bf16.msra.mxu0 0
      %932 = vmatprep.subr.bf16.mxu0 0
      %933 = vmatpush1.bf16.msra.mxu0 0
      %934 = vmatprep.subr.bf16.mxu0 0
      %935 = vmatpush1.bf16.msra.mxu0 0
      %936 = vmatprep.subr.bf16.mxu0 0
      %937 = vmatpush1.bf16.msra.mxu0 0
      %938 = vmatprep.subr.bf16.mxu0 0
      %939 = vmatpush1.bf16.msra.mxu0 0
      %940 = vmatprep.subr.bf16.mxu0 0
      %941 = vmatpush1.bf16.msra.mxu0 0
      %942 = vmatprep.mubr.bf16.mxu0 0
      %943 = vmatmul.mubr.bf16.gmra.mrb[0].mxu0 %v905
      %v944 = vpop.f32.mrb[0].mxu0
      %v945 = vadd.f32 0.0, %v944
      %v946 = vpop.f32.mrb[0].mxu0
      %v947 = vpop.f32.mrb[0].mxu0
      %v948 = vpop.f32.mrb[0].mxu0
      %949 = vdwg.mxu0
      %v950 = vld [vmem:[%s10 + $0x4] sm:$0xf]
      %v951 = vpack.c.bf16 %v945, %v945
      %v953 = vsel %vm729, %v951, 0
      %v956 = vsel %vm791, %v950, 0
      %958 = vmatprep.subr.bf16.mxu0 0
      %959 = vmatpush1.bf16.msra.mxu0 %v956
      %960 = vmatprep.subr.bf16.mxu0 0
      %961 = vmatpush1.bf16.msra.mxu0 0
      %962 = vmatprep.subr.bf16.mxu0 0
      %963 = vmatpush1.bf16.msra.mxu0 0
      %964 = vmatprep.subr.bf16.mxu0 0
      %965 = vmatpush1.bf16.msra.mxu0 0
      %966 = vmatprep.subr.bf16.mxu0 0
      %967 = vmatpush1.bf16.msra.mxu0 0
      %968 = vmatprep.subr.bf16.mxu0 0
      %969 = vmatpush1.bf16.msra.mxu0 0
      %970 = vmatprep.subr.bf16.mxu0 0
      %971 = vmatpush1.bf16.msra.mxu0 0
      %972 = vmatprep.subr.bf16.mxu0 0
      %973 = vmatpush1.bf16.msra.mxu0 0
      %974 = vmatprep.subr.bf16.mxu0 0
      %975 = vmatpush1.bf16.msra.mxu0 0
      %976 = vmatprep.subr.bf16.mxu0 0
      %977 = vmatpush1.bf16.msra.mxu0 0
      %978 = vmatprep.subr.bf16.mxu0 0
      %979 = vmatpush1.bf16.msra.mxu0 0
      %980 = vmatprep.subr.bf16.mxu0 0
      %981 = vmatpush1.bf16.msra.mxu0 0
      %982 = vmatprep.subr.bf16.mxu0 0
      %983 = vmatpush1.bf16.msra.mxu0 0
      %984 = vmatprep.subr.bf16.mxu0 0
      %985 = vmatpush1.bf16.msra.mxu0 0
      %986 = vmatprep.subr.bf16.mxu0 0
      %987 = vmatpush1.bf16.msra.mxu0 0
      %988 = vmatprep.subr.bf16.mxu0 0
      %989 = vmatpush1.bf16.msra.mxu0 0
      %990 = vmatprep.mubr.bf16.mxu0 0
      %991 = vmatmul.mubr.bf16.gmra.mrb[0].mxu0 %v953
      %v992 = vpop.f32.mrb[0].mxu0
      %v993 = vadd.f32 0.0, %v992
      %v994 = vpop.f32.mrb[0].mxu0
      %v995 = vpop.f32.mrb[0].mxu0
      %v996 = vpop.f32.mrb[0].mxu0
      %997 = vdwg.mxu0
      %v999 = vsel %vm729, %v836, 0
      %v1002 = vsel %vm791, %v835, 0
      %1004 = vmatprep.subr.bf16.mxu0 0
      %1005 = vmatpush1.bf16.msra.mxu0 %v1002
      %1006 = vmatprep.subr.bf16.mxu0 0
      %1007 = vmatpush1.bf16.msra.mxu0 0
      %1008 = vmatprep.subr.bf16.mxu0 0
      %1009 = vmatpush1.bf16.msra.mxu0 0
      %1010 = vmatprep.subr.bf16.mxu0 0
      %1011 = vmatpush1.bf16.msra.mxu0 0
      %1012 = vmatprep.subr.bf16.mxu0 0
      %1013 = vmatpush1.bf16.msra.mxu0 0
      %1014 = vmatprep.subr.bf16.mxu0 0
      %1015 = vmatpush1.bf16.msra.mxu0 0
      %1016 = vmatprep.subr.bf16.mxu0 0
      %1017 = vmatpush1.bf16.msra.mxu0 0
      %1018 = vmatprep.subr.bf16.mxu0 0
      %1019 = vmatpush1.bf16.msra.mxu0 0
      %1020 = vmatprep.subr.bf16.mxu0 0
      %1021 = vmatpush1.bf16.msra.mxu0 0
      %1022 = vmatprep.subr.bf16.mxu0 0
      %1023 = vmatpush1.bf16.msra.mxu0 0
      %1024 = vmatprep.subr.bf16.mxu0 0
      %1025 = vmatpush1.bf16.msra.mxu0 0
      %1026 = vmatprep.subr.bf16.mxu0 0
      %1027 = vmatpush1.bf16.msra.mxu0 0
      %1028 = vmatprep.subr.bf16.mxu0 0
      %1029 = vmatpush1.bf16.msra.mxu0 0
      %1030 = vmatprep.subr.bf16.mxu0 0
      %1031 = vmatpush1.bf16.msra.mxu0 0
      %1032 = vmatprep.subr.bf16.mxu0 0
      %1033 = vmatpush1.bf16.msra.mxu0 0
      %1034 = vmatprep.subr.bf16.mxu0 0
      %1035 = vmatpush1.bf16.msra.mxu0 0
      %1036 = vmatprep.mubr.bf16.mxu0 0
      %1037 = vmatmul.mubr.bf16.gmra.mrb[0].mxu0 %v999
      %v1038 = vpop.f32.mrb[0].mxu0
      %v1039 = vadd.f32 %v993, %v1038
      %v1040 = vpop.f32.mrb[0].mxu0
      %v1041 = vpop.f32.mrb[0].mxu0
      %v1042 = vpop.f32.mrb[0].mxu0
      %1043 = vdwg.mxu0
      %1044 = vrot.lane.b32.xlu0 %v720, 112
      %v1045 = vpop.permute.xlu0 %1044
      %1046 = vrot.lane.b32.xlu0 %v721, 112
      %v1047 = vpop.permute.xlu0 %1046
      %v1049 = vsel %vm729, %v1045, 0
      %v1052 = vsel %vm729, %v1047, 0
      %1054 = vmatprep.subr.bf16.mxu0 0
      %1055 = vmatpush1.bf16.xpose.msra.mxu0 %v1052
      %1056 = vmatprep.subr.bf16.mxu0 0
      %1057 = vmatpush1.bf16.xpose.msra.mxu0 0
      %1058 = vmatprep.subr.bf16.mxu0 0
      %1059 = vmatpush1.bf16.xpose.msra.mxu0 0
      %1060 = vmatprep.subr.bf16.mxu0 0
      %1061 = vmatpush1.bf16.xpose.msra.mxu0 0
      %1062 = vmatprep.subr.bf16.mxu0 0
      %1063 = vmatpush1.bf16.xpose.msra.mxu0 0
      %1064 = vmatprep.subr.bf16.mxu0 0
      %1065 = vmatpush1.bf16.xpose.msra.mxu0 0
      %1066 = vmatprep.subr.bf16.mxu0 0
      %1067 = vmatpush1.bf16.xpose.msra.mxu0 0
      %1068 = vmatprep.subr.bf16.mxu0 0
      %1069 = vmatpush1.bf16.xpose.msra.mxu0 0
      %1070 = vmatprep.subr.bf16.mxu0 0
      %1071 = vmatpush1.bf16.xpose.msra.mxu0 0
      %1072 = vmatprep.subr.bf16.mxu0 0
      %1073 = vmatpush1.bf16.xpose.msra.mxu0 0
      %1074 = vmatprep.subr.bf16.mxu0 0
      %1075 = vmatpush1.bf16.xpose.msra.mxu0 0
      %1076 = vmatprep.subr.bf16.mxu0 0
      %1077 = vmatpush1.bf16.xpose.msra.mxu0 0
      %1078 = vmatprep.subr.bf16.mxu0 0
      %1079 = vmatpush1.bf16.xpose.msra.mxu0 0
      %1080 = vmatprep.subr.bf16.mxu0 0
      %1081 = vmatpush1.bf16.xpose.msra.mxu0 0
      %1082 = vmatprep.subr.bf16.mxu0 0
      %1083 = vmatpush1.bf16.xpose.msra.mxu0 0
      %1084 = vmatprep.subr.bf16.mxu0 0
      %1085 = vmatpush1.bf16.xpose.msra.mxu0 0
      %1086 = vmatprep.mubr.bf16.mxu0 0
      %1087 = vmatmul.mubr.bf16.gmra.mrb[0].mxu0 %v1049
      %v1088 = vpop.f32.mrb[0].mxu0
      %v1089 = vadd.f32 %v728, %v1088
      %v1090 = vpop.f32.mrb[0].mxu0
      %v1091 = vpop.f32.mrb[0].mxu0
      %v1092 = vpop.f32.mrb[0].mxu0
      %1093 = vdwg.mxu0
      %v1094 = vsel %vm729, %v1089, -inf
      %1095 = vmax.xlane.f32.xlu0 %v1094
      %v1096 = vpop.xlane.xlu0 %1095
      %v1097 = vsub.f32 %v1089, %v1096
      %v1098 = vmul.f32 %v1097, 1.442695
      %v1099 = vpow.pop %v1098
      %v1100 = vsel %vm729, %v1099, 0.0
      %1101 = vadd.xlane.f32.xlu0 %v1100
      %v1102 = vpop.xlane.xlu0 %1101
      %v1103 = vrcp.pop %v1102
      %v1104 = vmul.f32 %v1099, %v1103
      %v1105 = vpack.c.bf16 %v1104, %v1104
      %1106 = vrot.lane.b32.xlu0 %v722, 112
      %v1107 = vpop.permute.xlu0 %1106
      %v1109 = vsel %vm729, %v1105, 0
      %v1112 = vsel %vm791, %v1107, 0
      %1114 = vmatprep.subr.bf16.mxu0 0
      %1115 = vmatpush1.bf16.msra.mxu0 %v1112
      %1116 = vmatprep.subr.bf16.mxu0 0
      %1117 = vmatpush1.bf16.msra.mxu0 0
      %1118 = vmatprep.subr.bf16.mxu0 0
      %1119 = vmatpush1.bf16.msra.mxu0 0
      %1120 = vmatprep.subr.bf16.mxu0 0
      %1121 = vmatpush1.bf16.msra.mxu0 0
      %1122 = vmatprep.subr.bf16.mxu0 0
      %1123 = vmatpush1.bf16.msra.mxu0 0
      %1124 = vmatprep.subr.bf16.mxu0 0
      %1125 = vmatpush1.bf16.msra.mxu0 0
      %1126 = vmatprep.subr.bf16.mxu0 0
      %1127 = vmatpush1.bf16.msra.mxu0 0
      %1128 = vmatprep.subr.bf16.mxu0 0
      %1129 = vmatpush1.bf16.msra.mxu0 0
      %1130 = vmatprep.subr.bf16.mxu0 0
      %1131 = vmatpush1.bf16.msra.mxu0 0
      %1132 = vmatprep.subr.bf16.mxu0 0
      %1133 = vmatpush1.bf16.msra.mxu0 0
      %1134 = vmatprep.subr.bf16.mxu0 0
      %1135 = vmatpush1.bf16.msra.mxu0 0
      %1136 = vmatprep.subr.bf16.mxu0 0
      %1137 = vmatpush1.bf16.msra.mxu0 0
      %1138 = vmatprep.subr.bf16.mxu0 0
      %1139 = vmatpush1.bf16.msra.mxu0 0
      %1140 = vmatprep.subr.bf16.mxu0 0
      %1141 = vmatpush1.bf16.msra.mxu0 0
      %1142 = vmatprep.subr.bf16.mxu0 0
      %1143 = vmatpush1.bf16.msra.mxu0 0
      %1144 = vmatprep.subr.bf16.mxu0 0
      %1145 = vmatpush1.bf16.msra.mxu0 0
      %1146 = vmatprep.mubr.bf16.mxu0 0
      %1147 = vmatmul.mubr.bf16.gmra.mrb[0].mxu0 %v1109
      %v1148 = vpop.f32.mrb[0].mxu0
      %v1149 = vadd.f32 0.0, %v1148
      %v1150 = vpop.f32.mrb[0].mxu0
      %v1151 = vpop.f32.mrb[0].mxu0
      %v1152 = vpop.f32.mrb[0].mxu0
      %1153 = vdwg.mxu0
      %v1154 = vld [vmem:[%s10 + $0x8] sm:$0xf]
      %v1155 = vpack.c.bf16 %v1149, %v1149
      %v1157 = vsel %vm729, %v1155, 0
      %v1160 = vsel %vm791, %v1154, 0
      %1162 = vmatprep.subr.bf16.mxu0 0
      %1163 = vmatpush1.bf16.msra.mxu0 %v1160
      %1164 = vmatprep.subr.bf16.mxu0 0
      %1165 = vmatpush1.bf16.msra.mxu0 0
      %1166 = vmatprep.subr.bf16.mxu0 0
      %1167 = vmatpush1.bf16.msra.mxu0 0
      %1168 = vmatprep.subr.bf16.mxu0 0
      %1169 = vmatpush1.bf16.msra.mxu0 0
      %1170 = vmatprep.subr.bf16.mxu0 0
      %1171 = vmatpush1.bf16.msra.mxu0 0
      %1172 = vmatprep.subr.bf16.mxu0 0
      %1173 = vmatpush1.bf16.msra.mxu0 0
      %1174 = vmatprep.subr.bf16.mxu0 0
      %1175 = vmatpush1.bf16.msra.mxu0 0
      %1176 = vmatprep.subr.bf16.mxu0 0
      %1177 = vmatpush1.bf16.msra.mxu0 0
      %1178 = vmatprep.subr.bf16.mxu0 0
      %1179 = vmatpush1.bf16.msra.mxu0 0
      %1180 = vmatprep.subr.bf16.mxu0 0
      %1181 = vmatpush1.bf16.msra.mxu0 0
      %1182 = vmatprep.subr.bf16.mxu0 0
      %1183 = vmatpush1.bf16.msra.mxu0 0
      %1184 = vmatprep.subr.bf16.mxu0 0
      %1185 = vmatpush1.bf16.msra.mxu0 0
      %1186 = vmatprep.subr.bf16.mxu0 0
      %1187 = vmatpush1.bf16.msra.mxu0 0
      %1188 = vmatprep.subr.bf16.mxu0 0
      %1189 = vmatpush1.bf16.msra.mxu0 0
      %1190 = vmatprep.subr.bf16.mxu0 0
      %1191 = vmatpush1.bf16.msra.mxu0 0
      %1192 = vmatprep.subr.bf16.mxu0 0
      %1193 = vmatpush1.bf16.msra.mxu0 0
      %1194 = vmatprep.mubr.bf16.mxu0 0
      %1195 = vmatmul.mubr.bf16.gmra.mrb[0].mxu0 %v1157
      %v1196 = vpop.f32.mrb[0].mxu0
      %v1197 = vadd.f32 0.0, %v1196
      %v1198 = vpop.f32.mrb[0].mxu0
      %v1199 = vpop.f32.mrb[0].mxu0
      %v1200 = vpop.f32.mrb[0].mxu0
      %1201 = vdwg.mxu0
      %v1202 = vadd.f32 %v1039, %v1197
      %1203 = vrot.lane.b32.xlu0 %v720, 104
      %v1204 = vpop.permute.xlu0 %1203
      %1205 = vrot.lane.b32.xlu0 %v721, 104
      %v1206 = vpop.permute.xlu0 %1205
      %v1208 = vsel %vm729, %v1204, 0
      %v1211 = vsel %vm729, %v1206, 0
      %1213 = vmatprep.subr.bf16.mxu0 0
      %1214 = vmatpush1.bf16.xpose.msra.mxu0 %v1211
      %1215 = vmatprep.subr.bf16.mxu0 0
      %1216 = vmatpush1.bf16.xpose.msra.mxu0 0
      %1217 = vmatprep.subr.bf16.mxu0 0
      %1218 = vmatpush1.bf16.xpose.msra.mxu0 0
      %1219 = vmatprep.subr.bf16.mxu0 0
      %1220 = vmatpush1.bf16.xpose.msra.mxu0 0
      %1221 = vmatprep.subr.bf16.mxu0 0
      %1222 = vmatpush1.bf16.xpose.msra.mxu0 0
      %1223 = vmatprep.subr.bf16.mxu0 0
      %1224 = vmatpush1.bf16.xpose.msra.mxu0 0
      %1225 = vmatprep.subr.bf16.mxu0 0
      %1226 = vmatpush1.bf16.xpose.msra.mxu0 0
      %1227 = vmatprep.subr.bf16.mxu0 0
      %1228 = vmatpush1.bf16.xpose.msra.mxu0 0
      %1229 = vmatprep.subr.bf16.mxu0 0
      %1230 = vmatpush1.bf16.xpose.msra.mxu0 0
      %1231 = vmatprep.subr.bf16.mxu0 0
      %1232 = vmatpush1.bf16.xpose.msra.mxu0 0
      %1233 = vmatprep.subr.bf16.mxu0 0
      %1234 = vmatpush1.bf16.xpose.msra.mxu0 0
      %1235 = vmatprep.subr.bf16.mxu0 0
      %1236 = vmatpush1.bf16.xpose.msra.mxu0 0
      %1237 = vmatprep.subr.bf16.mxu0 0
      %1238 = vmatpush1.bf16.xpose.msra.mxu0 0
      %1239 = vmatprep.subr.bf16.mxu0 0
      %1240 = vmatpush1.bf16.xpose.msra.mxu0 0
      %1241 = vmatprep.subr.bf16.mxu0 0
      %1242 = vmatpush1.bf16.xpose.msra.mxu0 0
      %1243 = vmatprep.subr.bf16.mxu0 0
      %1244 = vmatpush1.bf16.xpose.msra.mxu0 0
      %1245 = vmatprep.mubr.bf16.mxu0 0
      %1246 = vmatmul.mubr.bf16.gmra.mrb[0].mxu0 %v1208
      %v1247 = vpop.f32.mrb[0].mxu0
      %v1248 = vadd.f32 %v728, %v1247
      %v1249 = vpop.f32.mrb[0].mxu0
      %v1250 = vpop.f32.mrb[0].mxu0
      %v1251 = vpop.f32.mrb[0].mxu0
      %1252 = vdwg.mxu0
      %v1253 = vsel %vm729, %v1248, -inf
      %1254 = vmax.xlane.f32.xlu0 %v1253
      %v1255 = vpop.xlane.xlu0 %1254
      %v1256 = vsub.f32 %v1248, %v1255
      %v1257 = vmul.f32 %v1256, 1.442695
      %v1258 = vpow.pop %v1257
      %v1259 = vsel %vm729, %v1258, 0.0
      %1260 = vadd.xlane.f32.xlu0 %v1259
      %v1261 = vpop.xlane.xlu0 %1260
      %v1262 = vrcp.pop %v1261
      %v1263 = vmul.f32 %v1258, %v1262
      %v1264 = vpack.c.bf16 %v1263, %v1263
      %1265 = vrot.lane.b32.xlu0 %v722, 104
      %v1266 = vpop.permute.xlu0 %1265
      %v1268 = vsel %vm729, %v1264, 0
      %v1271 = vsel %vm791, %v1266, 0
      %1273 = vmatprep.subr.bf16.mxu0 0
      %1274 = vmatpush1.bf16.msra.mxu0 %v1271
      %1275 = vmatprep.subr.bf16.mxu0 0
      %1276 = vmatpush1.bf16.msra.mxu0 0
      %1277 = vmatprep.subr.bf16.mxu0 0
      %1278 = vmatpush1.bf16.msra.mxu0 0
      %1279 = vmatprep.subr.bf16.mxu0 0
      %1280 = vmatpush1.bf16.msra.mxu0 0
      %1281 = vmatprep.subr.bf16.mxu0 0
      %1282 = vmatpush1.bf16.msra.mxu0 0
      %1283 = vmatprep.subr.bf16.mxu0 0
      %1284 = vmatpush1.bf16.msra.mxu0 0
      %1285 = vmatprep.subr.bf16.mxu0 0
      %1286 = vmatpush1.bf16.msra.mxu0 0
      %1287 = vmatprep.subr.bf16.mxu0 0
      %1288 = vmatpush1.bf16.msra.mxu0 0
      %1289 = vmatprep.subr.bf16.mxu0 0
      %1290 = vmatpush1.bf16.msra.mxu0 0
      %1291 = vmatprep.subr.bf16.mxu0 0
      %1292 = vmatpush1.bf16.msra.mxu0 0
      %1293 = vmatprep.subr.bf16.mxu0 0
      %1294 = vmatpush1.bf16.msra.mxu0 0
      %1295 = vmatprep.subr.bf16.mxu0 0
      %1296 = vmatpush1.bf16.msra.mxu0 0
      %1297 = vmatprep.subr.bf16.mxu0 0
      %1298 = vmatpush1.bf16.msra.mxu0 0
      %1299 = vmatprep.subr.bf16.mxu0 0
      %1300 = vmatpush1.bf16.msra.mxu0 0
      %1301 = vmatprep.subr.bf16.mxu0 0
      %1302 = vmatpush1.bf16.msra.mxu0 0
      %1303 = vmatprep.subr.bf16.mxu0 0
      %1304 = vmatpush1.bf16.msra.mxu0 0
      %1305 = vmatprep.mubr.bf16.mxu0 0
      %1306 = vmatmul.mubr.bf16.gmra.mrb[0].mxu0 %v1268
      %v1307 = vpop.f32.mrb[0].mxu0
      %v1308 = vadd.f32 0.0, %v1307
      %v1309 = vpop.f32.mrb[0].mxu0
      %v1310 = vpop.f32.mrb[0].mxu0
      %v1311 = vpop.f32.mrb[0].mxu0
      %1312 = vdwg.mxu0
      %v1313 = vld [vmem:[%s10 + $0xc] sm:$0xf]
      %v1314 = vpack.c.bf16 %v1308, %v1308
      %v1316 = vsel %vm729, %v1314, 0
      %v1319 = vsel %vm791, %v1313, 0
      %1321 = vmatprep.subr.bf16.mxu0 0
      %1322 = vmatpush1.bf16.msra.mxu0 %v1319
      %1323 = vmatprep.subr.bf16.mxu0 0
      %1324 = vmatpush1.bf16.msra.mxu0 0
      %1325 = vmatprep.subr.bf16.mxu0 0
      %1326 = vmatpush1.bf16.msra.mxu0 0
      %1327 = vmatprep.subr.bf16.mxu0 0
      %1328 = vmatpush1.bf16.msra.mxu0 0
      %1329 = vmatprep.subr.bf16.mxu0 0
      %1330 = vmatpush1.bf16.msra.mxu0 0
      %1331 = vmatprep.subr.bf16.mxu0 0
      %1332 = vmatpush1.bf16.msra.mxu0 0
      %1333 = vmatprep.subr.bf16.mxu0 0
      %1334 = vmatpush1.bf16.msra.mxu0 0
      %1335 = vmatprep.subr.bf16.mxu0 0
      %1336 = vmatpush1.bf16.msra.mxu0 0
      %1337 = vmatprep.subr.bf16.mxu0 0
      %1338 = vmatpush1.bf16.msra.mxu0 0
      %1339 = vmatprep.subr.bf16.mxu0 0
      %1340 = vmatpush1.bf16.msra.mxu0 0
      %1341 = vmatprep.subr.bf16.mxu0 0
      %1342 = vmatpush1.bf16.msra.mxu0 0
      %1343 = vmatprep.subr.bf16.mxu0 0
      %1344 = vmatpush1.bf16.msra.mxu0 0
      %1345 = vmatprep.subr.bf16.mxu0 0
      %1346 = vmatpush1.bf16.msra.mxu0 0
      %1347 = vmatprep.subr.bf16.mxu0 0
      %1348 = vmatpush1.bf16.msra.mxu0 0
      %1349 = vmatprep.subr.bf16.mxu0 0
      %1350 = vmatpush1.bf16.msra.mxu0 0
      %1351 = vmatprep.subr.bf16.mxu0 0
      %1352 = vmatpush1.bf16.msra.mxu0 0
      %1353 = vmatprep.mubr.bf16.mxu0 0
      %1354 = vmatmul.mubr.bf16.gmra.mrb[0].mxu0 %v1316
      %v1355 = vpop.f32.mrb[0].mxu0
      %v1356 = vadd.f32 0.0, %v1355
      %v1357 = vpop.f32.mrb[0].mxu0
      %v1358 = vpop.f32.mrb[0].mxu0
      %v1359 = vpop.f32.mrb[0].mxu0
      %1360 = vdwg.mxu0
      %v1361 = vadd.f32 %v1202, %v1356
      %v1362 = vld [vmem:[%s11] sm:$0x1]
      %v1364 = vlaneseq
      %v1365 = vshrl.u32 %v1364, 7
      %v1366 = vsub.s32 0, %v1365
      %v1367 = vrot.slane %v1362, %v1366
      %v1369 = vadd.f32 %v1361, %v1367
      %v1370 = vld [vmem:[%s509] sm:$0xff]
      %v1371 = vld [vmem:[%s12] sm:$0x1]
      %v1372 = vld [vmem:[%s13] sm:$0x1]
      %v1373 = vsel %vm544, %v1370, 0.0
      %1374 = vadd.xlane.f32.xlu0 %v1373
      %v1375 = vpop.xlane.xlu0 %1374
      %v1376 = vrcp.pop 32.0
      %v1377 = vmul.f32 %v1375, %v1376
      %v1378 = vsub.f32 %v1370, %v1377
      %v1379 = vmul.f32 %v1378, %v1378
      %v1380 = vsel %vm544, %v1379, 0.0
      %1381 = vadd.xlane.f32.xlu0 %v1380
      %v1382 = vpop.xlane.xlu0 %1381
      %v1383 = vmul.f32 %v1382, %v1376
      %v1384 = vadd.f32 %v1383, 1e-05
      %v1385 = vrsqrt.pop %v1384
      %v1386 = vmul.f32 %v1378, %v1385
      %v1388 = vlaneseq
      %v1389 = vshrl.u32 %v1388, 7
      %v1390 = vsub.s32 0, %v1389
      %v1391 = vrot.slane %v1371, %v1390
      %v1393 = vmul.f32 %v1386, %v1391
      %v1395 = vlaneseq
      %v1396 = vshrl.u32 %v1395, 7
      %v1397 = vsub.s32 0, %v1396
      %v1398 = vrot.slane %v1372, %v1397
      %v1400 = vadd.f32 %v1393, %v1398
      %v1401 = vadd.f32 %v1400, %v1369
      %1402 = vst.msk [vmem:[%s513] sm:$0xff] %vm544, %v1401
      %p1403 = scmp.lt.s32.totalorder %s25, 1
      %s1404 = scalar_select %p1403, %s25, 1
      %s1405 = smul.addr %s1404, 8
      %s1406 = scalar_lea.vmem %s14, %s1405
      // Predicated region
      $region77: #{transformer_decoder_layer_forward.5} parent=75 // pred_check
        %p1407 = pneg %p357
      $region78: #{transformer_decoder_layer_forward.5} parent=75 // pred_check_branch
        %1409 = sbr.rel (%p1407) target = $region80
      $region79: #{transformer_decoder_layer_forward.5} parent=75 // pred_region
        _
      $region80: #{transformer_decoder_layer_forward.5} parent=75 // pred_fallthru
        _
    $region76: #{transformer_decoder_layer_forward.5} parent=5 // pred_fallthru
      _
    %p1410 = scmp.le.s32.totalorder 2, %s20
    // Predicated region
    $region81: #{transformer_decoder_layer_forward.5} parent=5 // pred_check
      %p1411 = pneg %p1410
    $region82: #{transformer_decoder_layer_forward.5} parent=5 // pred_check_branch
      %1413 = sbr.rel (%p1411) target = $region84
    $region83: #{transformer_decoder_layer_forward.5} parent=5 // pred_region
      %s1414 = ssub.s32 %s20, 2
      // Predicated region
      $region85: #{transformer_decoder_layer_forward.5} parent=83 // pred_check
        %p1415 = pneg %p363
      $region86: #{transformer_decoder_layer_forward.5} parent=83 // pred_check_branch
        %1417 = sbr.rel (%p1415) target = $region88
      $region87: #{transformer_decoder_layer_forward.5} parent=83 // pred_region
        %p1418 = scmp.lt.s32.totalorder %s26, 1
        %s1419 = scalar_select %p1418, %s26, 1
        %s1420 = smul.addr %s1419, 8
        %s1421 = scalar_lea.vmem %s14, %s1420
      $region88: #{transformer_decoder_layer_forward.5} parent=83 // pred_fallthru
        _
    $region84: #{transformer_decoder_layer_forward.5} parent=5 // pred_fallthru
      _
  $region6: #{transformer_decoder_layer_forward.5} parent=0 // loop_footer
    %s24 = sadd.s32 1, %s20
  $region7: #{transformer_decoder_layer_forward.5} parent=0 // loop_footer_branch
    %19 = sbr.rel target = $region3
  $region8: #{transformer_decoder_layer_forward.5} parent=0 // loop_exit
    _

// kernel: transformer_decoder_layer_forward.7
$region0: #{transformer_decoder_layer_forward.7}
  #allocation0 [shape = 'u32[]', space=smem, size = 0x4, offset = 0x4, fixed_abs, tag = 'smem constant byte address 0x4 - core index']
  #allocation1 [shape = 'u32[144,128]{1,0:T(1,128)}', space=vmem, size = 0x12000, scoped, tag = 'internal scratch']
  %s0 = inlined_call_operand.vmem [shape: f32[2,8,32], index: 0, kind: input, shape index: {}]
  %s1 = inlined_call_operand.vmem [shape: f32[2,6,16], index: 1, kind: input, shape index: {}]
  %s2 = inlined_call_operand.vmem [shape: f32[2,6,16], index: 2, kind: input, shape index: {}]
  %s3 = inlined_call_operand.vmem [shape: f32[2,8,32], index: 3, kind: input, shape index: {}]
  %s4 = inlined_call_operand.vmem [shape: bf16[32,32], index: 4, kind: input, shape index: {}]
  %s5 = inlined_call_operand.vmem [shape: f32[1,32], index: 5, kind: input, shape index: {}]
  %s6 = inlined_call_operand.vmem [shape: bf16[16,32], index: 6, kind: input, shape index: {}]
  %s7 = inlined_call_operand.vmem [shape: f32[1,32], index: 7, kind: input, shape index: {}]
  %s8 = inlined_call_operand.vmem [shape: bf16[16,32], index: 8, kind: input, shape index: {}]
  %s9 = inlined_call_operand.vmem [shape: f32[1,32], index: 9, kind: input, shape index: {}]
  %s10 = inlined_call_operand.vmem [shape: bf16[32,32], index: 10, kind: input, shape index: {}]
  %s11 = inlined_call_operand.vmem [shape: f32[1,32], index: 11, kind: input, shape index: {}]
  %s12 = inlined_call_operand.vmem [shape: f32[1,32], index: 12, kind: input, shape index: {}]
  %s13 = inlined_call_operand.vmem [shape: f32[1,32], index: 13, kind: input, shape index: {}]
  %s14 = inlined_call_operand.vmem [shape: f32[2,8,32], index: 14, kind: output, shape index: {}]
  %s15 = sld [smem:[#allocation0]]
  $region89: #{transformer_decoder_layer_forward.7} parent=0
    _
  %s17 = ssub.s32 1, %s15
  %s18 = scalar_select 0, %s17, %s15
  loop: start=0, step=1, limit=4
  $region2: #{transformer_decoder_layer_forward.7} parent=0 // loop_pre_header
    _
  $region3: #{transformer_decoder_layer_forward.7} parent=0 // loop_header
    %s20 = sphi 0, %s24
    %p21 = scmp.ge.s32.totalorder %s20, 4
    %s30 = sphi 0, %s32
    %s33 = sphi 0, %s30
    %s34 = sphi 0, %s33
    %s50 = sphi 0, %s34
    %s56 = sphi 0, %s58
    %s59 = sphi 0, %s56
    %s60 = sphi 0, %s59
    %s76 = sphi 0, %s60
    %s82 = sphi 0, %s84
    %s85 = sphi 0, %s82
    %s86 = sphi 0, %s85
    %s102 = sphi 0, %s86
    %s108 = sphi 0, %s110
    %s111 = sphi 0, %s108
    %s112 = sphi 0, %s111
    %s128 = sphi 0, %s112
    %s132 = sphi 0, %s132
    %s134 = sphi 0, %s132
    %s135 = sphi 0, %s134
    %s149 = sphi 0, %s135
    %s153 = sphi 0, %s153
    %s155 = sphi 0, %s153
    %s156 = sphi 0, %s155
    %s170 = sphi 0, %s156
    %s174 = sphi 0, %s174
    %s176 = sphi 0, %s174
    %s177 = sphi 0, %s176
    %s191 = sphi 0, %s177
    %s195 = sphi 0, %s195
    %s197 = sphi 0, %s195
    %s198 = sphi 0, %s197
    %s212 = sphi 0, %s198
    %s216 = sphi 0, %s216
    %s218 = sphi 0, %s216
    %s219 = sphi 0, %s218
    %s233 = sphi 0, %s219
    %s237 = sphi 0, %s237
    %s239 = sphi 0, %s237
    %s240 = sphi 0, %s239
    %s254 = sphi 0, %s240
    %s258 = sphi 0, %s258
    %s260 = sphi 0, %s258
    %s261 = sphi 0, %s260
    %s275 = sphi 0, %s261
    %s279 = sphi 0, %s279
    %s281 = sphi 0, %s279
    %s282 = sphi 0, %s281
    %s296 = sphi 0, %s282
    %s300 = sphi 0, %s300
    %s302 = sphi 0, %s300
    %s303 = sphi 0, %s302
    %s317 = sphi 0, %s303
    %s321 = sphi 0, %s321
    %s323 = sphi 0, %s321
    %s324 = sphi 0, %s323
    %s338 = sphi 0, %s324
    %s344 = sphi 0, %s346
    %s347 = sphi 0, %s344
    %s348 = sphi 0, %s347
    %s364 = sphi 0, %s348
  $region4: #{transformer_decoder_layer_forward.7} parent=0 // loop_header_branch
    %23 = sbr.rel (%p21) target = $region8
  $region5: #{transformer_decoder_layer_forward.7} parent=0 // loop_body
    %s25 = ssub.s32 %s20, 1
    %s26 = ssub.s32 %s20, 2
    %s27 = sadd.s32 %s20, 1
    %s28 = ssub.s32 %s20, %s27
    %p29 = scmp.eq.s32.totalorder %s28, 0
    %s31 = sadd.s32 %s30, 1
    %s32 = scalar_select %p29, %s30, %s31
    %p35 = pneg %p29
    %p36 = scmp.eq.s32.totalorder %s20, 1
    %p37 = por %p35, %p36
    %p38 = scmp.ne.s32.totalorder %s30, %s33
    %p39 = scmp.eq.s32.totalorder %s20, 0
    %p40 = por %p38, %p39
    %p41 = scmp.ne.s32.totalorder %s30, %s33
    %p42 = scmp.eq.s32.totalorder %s25, 1
    %p43 = por %p41, %p42
    %p44 = scmp.ne.s32.totalorder %s33, %s34
    %p45 = scmp.eq.s32.totalorder %s25, 0
    %p46 = por %p44, %p45
    %p47 = scmp.ne.s32.totalorder %s33, %s34
    %p48 = scmp.eq.s32.totalorder %s26, 1
    %p49 = por %p47, %p48
    %p51 = scmp.ne.s32.totalorder %s34, %s50
    %p52 = scmp.eq.s32.totalorder %s26, 0
    %p53 = por %p51, %p52
    %s54 = ssub.s32 %s20, %s27
    %p55 = scmp.eq.s32.totalorder %s54, 0
    %s57 = sadd.s32 %s56, 1
    %s58 = scalar_select %p55, %s56, %s57
    %p61 = pneg %p55
    %p62 = scmp.eq.s32.totalorder %s20, 1
    %p63 = por %p61, %p62
    %p64 = scmp.ne.s32.totalorder %s56, %s59
    %p65 = scmp.eq.s32.totalorder %s20, 0
    %p66 = por %p64, %p65
    %p67 = scmp.ne.s32.totalorder %s56, %s59
    %p68 = scmp.eq.s32.totalorder %s25, 1
    %p69 = por %p67, %p68
    %p70 = scmp.ne.s32.totalorder %s59, %s60
    %p71 = scmp.eq.s32.totalorder %s25, 0
    %p72 = por %p70, %p71
    %p73 = scmp.ne.s32.totalorder %s59, %s60
    %p74 = scmp.eq.s32.totalorder %s26, 1
    %p75 = por %p73, %p74
    %p77 = scmp.ne.s32.totalorder %s60, %s76
    %p78 = scmp.eq.s32.totalorder %s26, 0
    %p79 = por %p77, %p78
    %s80 = ssub.s32 %s20, %s27
    %p81 = scmp.eq.s32.totalorder %s80, 0
    %s83 = sadd.s32 %s82, 1
    %s84 = scalar_select %p81, %s82, %s83
    %p87 = pneg %p81
    %p88 = scmp.eq.s32.totalorder %s20, 1
    %p89 = por %p87, %p88
    %p90 = scmp.ne.s32.totalorder %s82, %s85
    %p91 = scmp.eq.s32.totalorder %s20, 0
    %p92 = por %p90, %p91
    %p93 = scmp.ne.s32.totalorder %s82, %s85
    %p94 = scmp.eq.s32.totalorder %s25, 1
    %p95 = por %p93, %p94
    %p96 = scmp.ne.s32.totalorder %s85, %s86
    %p97 = scmp.eq.s32.totalorder %s25, 0
    %p98 = por %p96, %p97
    %p99 = scmp.ne.s32.totalorder %s85, %s86
    %p100 = scmp.eq.s32.totalorder %s26, 1
    %p101 = por %p99, %p100
    %p103 = scmp.ne.s32.totalorder %s86, %s102
    %p104 = scmp.eq.s32.totalorder %s26, 0
    %p105 = por %p103, %p104
    %s106 = ssub.s32 %s20, %s27
    %p107 = scmp.eq.s32.totalorder %s106, 0
    %s109 = sadd.s32 %s108, 1
    %s110 = scalar_select %p107, %s108, %s109
    %p113 = pneg %p107
    %p114 = scmp.eq.s32.totalorder %s20, 1
    %p115 = por %p113, %p114
    %p116 = scmp.ne.s32.totalorder %s108, %s111
    %p117 = scmp.eq.s32.totalorder %s20, 0
    %p118 = por %p116, %p117
    %p119 = scmp.ne.s32.totalorder %s108, %s111
    %p120 = scmp.eq.s32.totalorder %s25, 1
    %p121 = por %p119, %p120
    %p122 = scmp.ne.s32.totalorder %s111, %s112
    %p123 = scmp.eq.s32.totalorder %s25, 0
    %p124 = por %p122, %p123
    %p125 = scmp.ne.s32.totalorder %s111, %s112
    %p126 = scmp.eq.s32.totalorder %s26, 1
    %p127 = por %p125, %p126
    %p129 = scmp.ne.s32.totalorder %s112, %s128
    %p130 = scmp.eq.s32.totalorder %s26, 0
    %p131 = por %p129, %p130
    %s133 = sadd.s32 %s132, 1
    %p136 = scmp.eq.s32.totalorder %s20, 1
    %p137 = scmp.ne.s32.totalorder %s132, %s134
    %p138 = scmp.eq.s32.totalorder %s20, 0
    %p139 = por %p137, %p138
    %p140 = scmp.ne.s32.totalorder %s132, %s134
    %p141 = scmp.eq.s32.totalorder %s25, 1
    %p142 = por %p140, %p141
    %p143 = scmp.ne.s32.totalorder %s134, %s135
    %p144 = scmp.eq.s32.totalorder %s25, 0
    %p145 = por %p143, %p144
    %p146 = scmp.ne.s32.totalorder %s134, %s135
    %p147 = scmp.eq.s32.totalorder %s26, 1
    %p148 = por %p146, %p147
    %p150 = scmp.ne.s32.totalorder %s135, %s149
    %p151 = scmp.eq.s32.totalorder %s26, 0
    %p152 = por %p150, %p151
    %s154 = sadd.s32 %s153, 1
    %p157 = scmp.eq.s32.totalorder %s20, 1
    %p158 = scmp.ne.s32.totalorder %s153, %s155
    %p159 = scmp.eq.s32.totalorder %s20, 0
    %p160 = por %p158, %p159
    %p161 = scmp.ne.s32.totalorder %s153, %s155
    %p162 = scmp.eq.s32.totalorder %s25, 1
    %p163 = por %p161, %p162
    %p164 = scmp.ne.s32.totalorder %s155, %s156
    %p165 = scmp.eq.s32.totalorder %s25, 0
    %p166 = por %p164, %p165
    %p167 = scmp.ne.s32.totalorder %s155, %s156
    %p168 = scmp.eq.s32.totalorder %s26, 1
    %p169 = por %p167, %p168
    %p171 = scmp.ne.s32.totalorder %s156, %s170
    %p172 = scmp.eq.s32.totalorder %s26, 0
    %p173 = por %p171, %p172
    %s175 = sadd.s32 %s174, 1
    %p178 = scmp.eq.s32.totalorder %s20, 1
    %p179 = scmp.ne.s32.totalorder %s174, %s176
    %p180 = scmp.eq.s32.totalorder %s20, 0
    %p181 = por %p179, %p180
    %p182 = scmp.ne.s32.totalorder %s174, %s176
    %p183 = scmp.eq.s32.totalorder %s25, 1
    %p184 = por %p182, %p183
    %p185 = scmp.ne.s32.totalorder %s176, %s177
    %p186 = scmp.eq.s32.totalorder %s25, 0
    %p187 = por %p185, %p186
    %p188 = scmp.ne.s32.totalorder %s176, %s177
    %p189 = scmp.eq.s32.totalorder %s26, 1
    %p190 = por %p188, %p189
    %p192 = scmp.ne.s32.totalorder %s177, %s191
    %p193 = scmp.eq.s32.totalorder %s26, 0
    %p194 = por %p192, %p193
    %s196 = sadd.s32 %s195, 1
    %p199 = scmp.eq.s32.totalorder %s20, 1
    %p200 = scmp.ne.s32.totalorder %s195, %s197
    %p201 = scmp.eq.s32.totalorder %s20, 0
    %p202 = por %p200, %p201
    %p203 = scmp.ne.s32.totalorder %s195, %s197
    %p204 = scmp.eq.s32.totalorder %s25, 1
    %p205 = por %p203, %p204
    %p206 = scmp.ne.s32.totalorder %s197, %s198
    %p207 = scmp.eq.s32.totalorder %s25, 0
    %p208 = por %p206, %p207
    %p209 = scmp.ne.s32.totalorder %s197, %s198
    %p210 = scmp.eq.s32.totalorder %s26, 1
    %p211 = por %p209, %p210
    %p213 = scmp.ne.s32.totalorder %s198, %s212
    %p214 = scmp.eq.s32.totalorder %s26, 0
    %p215 = por %p213, %p214
    %s217 = sadd.s32 %s216, 1
    %p220 = scmp.eq.s32.totalorder %s20, 1
    %p221 = scmp.ne.s32.totalorder %s216, %s218
    %p222 = scmp.eq.s32.totalorder %s20, 0
    %p223 = por %p221, %p222
    %p224 = scmp.ne.s32.totalorder %s216, %s218
    %p225 = scmp.eq.s32.totalorder %s25, 1
    %p226 = por %p224, %p225
    %p227 = scmp.ne.s32.totalorder %s218, %s219
    %p228 = scmp.eq.s32.totalorder %s25, 0
    %p229 = por %p227, %p228
    %p230 = scmp.ne.s32.totalorder %s218, %s219
    %p231 = scmp.eq.s32.totalorder %s26, 1
    %p232 = por %p230, %p231
    %p234 = scmp.ne.s32.totalorder %s219, %s233
    %p235 = scmp.eq.s32.totalorder %s26, 0
    %p236 = por %p234, %p235
    %s238 = sadd.s32 %s237, 1
    %p241 = scmp.eq.s32.totalorder %s20, 1
    %p242 = scmp.ne.s32.totalorder %s237, %s239
    %p243 = scmp.eq.s32.totalorder %s20, 0
    %p244 = por %p242, %p243
    %p245 = scmp.ne.s32.totalorder %s237, %s239
    %p246 = scmp.eq.s32.totalorder %s25, 1
    %p247 = por %p245, %p246
    %p248 = scmp.ne.s32.totalorder %s239, %s240
    %p249 = scmp.eq.s32.totalorder %s25, 0
    %p250 = por %p248, %p249
    %p251 = scmp.ne.s32.totalorder %s239, %s240
    %p252 = scmp.eq.s32.totalorder %s26, 1
    %p253 = por %p251, %p252
    %p255 = scmp.ne.s32.totalorder %s240, %s254
    %p256 = scmp.eq.s32.totalorder %s26, 0
    %p257 = por %p255, %p256
    %s259 = sadd.s32 %s258, 1
    %p262 = scmp.eq.s32.totalorder %s20, 1
    %p263 = scmp.ne.s32.totalorder %s258, %s260
    %p264 = scmp.eq.s32.totalorder %s20, 0
    %p265 = por %p263, %p264
    %p266 = scmp.ne.s32.totalorder %s258, %s260
    %p267 = scmp.eq.s32.totalorder %s25, 1
    %p268 = por %p266, %p267
    %p269 = scmp.ne.s32.totalorder %s260, %s261
    %p270 = scmp.eq.s32.totalorder %s25, 0
    %p271 = por %p269, %p270
    %p272 = scmp.ne.s32.totalorder %s260, %s261
    %p273 = scmp.eq.s32.totalorder %s26, 1
    %p274 = por %p272, %p273
    %p276 = scmp.ne.s32.totalorder %s261, %s275
    %p277 = scmp.eq.s32.totalorder %s26, 0
    %p278 = por %p276, %p277
    %s280 = sadd.s32 %s279, 1
    %p283 = scmp.eq.s32.totalorder %s20, 1
    %p284 = scmp.ne.s32.totalorder %s279, %s281
    %p285 = scmp.eq.s32.totalorder %s20, 0
    %p286 = por %p284, %p285
    %p287 = scmp.ne.s32.totalorder %s279, %s281
    %p288 = scmp.eq.s32.totalorder %s25, 1
    %p289 = por %p287, %p288
    %p290 = scmp.ne.s32.totalorder %s281, %s282
    %p291 = scmp.eq.s32.totalorder %s25, 0
    %p292 = por %p290, %p291
    %p293 = scmp.ne.s32.totalorder %s281, %s282
    %p294 = scmp.eq.s32.totalorder %s26, 1
    %p295 = por %p293, %p294
    %p297 = scmp.ne.s32.totalorder %s282, %s296
    %p298 = scmp.eq.s32.totalorder %s26, 0
    %p299 = por %p297, %p298
    %s301 = sadd.s32 %s300, 1
    %p304 = scmp.eq.s32.totalorder %s20, 1
    %p305 = scmp.ne.s32.totalorder %s300, %s302
    %p306 = scmp.eq.s32.totalorder %s20, 0
    %p307 = por %p305, %p306
    %p308 = scmp.ne.s32.totalorder %s300, %s302
    %p309 = scmp.eq.s32.totalorder %s25, 1
    %p310 = por %p308, %p309
    %p311 = scmp.ne.s32.totalorder %s302, %s303
    %p312 = scmp.eq.s32.totalorder %s25, 0
    %p313 = por %p311, %p312
    %p314 = scmp.ne.s32.totalorder %s302, %s303
    %p315 = scmp.eq.s32.totalorder %s26, 1
    %p316 = por %p314, %p315
    %p318 = scmp.ne.s32.totalorder %s303, %s317
    %p319 = scmp.eq.s32.totalorder %s26, 0
    %p320 = por %p318, %p319
    %s322 = sadd.s32 %s321, 1
    %p325 = scmp.eq.s32.totalorder %s20, 1
    %p326 = scmp.ne.s32.totalorder %s321, %s323
    %p327 = scmp.eq.s32.totalorder %s20, 0
    %p328 = por %p326, %p327
    %p329 = scmp.ne.s32.totalorder %s321, %s323
    %p330 = scmp.eq.s32.totalorder %s25, 1
    %p331 = por %p329, %p330
    %p332 = scmp.ne.s32.totalorder %s323, %s324
    %p333 = scmp.eq.s32.totalorder %s25, 0
    %p334 = por %p332, %p333
    %p335 = scmp.ne.s32.totalorder %s323, %s324
    %p336 = scmp.eq.s32.totalorder %s26, 1
    %p337 = por %p335, %p336
    %p339 = scmp.ne.s32.totalorder %s324, %s338
    %p340 = scmp.eq.s32.totalorder %s26, 0
    %p341 = por %p339, %p340
    %s342 = ssub.s32 %s20, %s27
    %p343 = scmp.eq.s32.totalorder %s342, 0
    %s345 = sadd.s32 %s344, 1
    %s346 = scalar_select %p343, %s344, %s345
    %p349 = pneg %p343
    %p350 = scmp.eq.s32.totalorder %s20, 1
    %p351 = por %p349, %p350
    %p352 = scmp.ne.s32.totalorder %s344, %s347
    %p353 = scmp.eq.s32.totalorder %s20, 0
    %p354 = por %p352, %p353
    %p355 = scmp.ne.s32.totalorder %s344, %s347
    %p356 = scmp.eq.s32.totalorder %s25, 1
    %p357 = por %p355, %p356
    %p358 = scmp.ne.s32.totalorder %s347, %s348
    %p359 = scmp.eq.s32.totalorder %s25, 0
    %p360 = por %p358, %p359
    %p361 = scmp.ne.s32.totalorder %s347, %s348
    %p362 = scmp.eq.s32.totalorder %s26, 1
    %p363 = por %p361, %p362
    %p365 = scmp.ne.s32.totalorder %s348, %s364
    %p366 = scmp.eq.s32.totalorder %s26, 0
    %p367 = por %p365, %p366
    %p368 = scmp.le.s32.totalorder 1, %s20
    %p369 = scmp.lt.s32.totalorder %s20, 3
    %p370 = pnand %p368, %p369
    %p371 = pneg %p370
    // Predicated region
    $region9: #{transformer_decoder_layer_forward.7} parent=5 // pred_check
      _
    $region10: #{transformer_decoder_layer_forward.7} parent=5 // pred_check_branch
      %373 = sbr.rel (%p370) target = $region12
    $region11: #{transformer_decoder_layer_forward.7} parent=5 // pred_region
      %s374 = ssub.s32 %s20, 1
      // Predicated region
      $region13: #{transformer_decoder_layer_forward.7} parent=11 // pred_check
        %p375 = pneg %p145
      $region14: #{transformer_decoder_layer_forward.7} parent=11 // pred_check_branch
        %377 = sbr.rel (%p375) target = $region16
      $region15: #{transformer_decoder_layer_forward.7} parent=11 // pred_region
        _
      $region16: #{transformer_decoder_layer_forward.7} parent=11 // pred_fallthru
        _
      // Predicated region
      $region17: #{transformer_decoder_layer_forward.7} parent=11 // pred_check
        %p378 = pneg %p166
      $region18: #{transformer_decoder_layer_forward.7} parent=11 // pred_check_branch
        %380 = sbr.rel (%p378) target = $region20
      $region19: #{transformer_decoder_layer_forward.7} parent=11 // pred_region
        _
      $region20: #{transformer_decoder_layer_forward.7} parent=11 // pred_fallthru
        _
      // Predicated region
      $region21: #{transformer_decoder_layer_forward.7} parent=11 // pred_check
        %p381 = pneg %p187
      $region22: #{transformer_decoder_layer_forward.7} parent=11 // pred_check_branch
        %383 = sbr.rel (%p381) target = $region24
      $region23: #{transformer_decoder_layer_forward.7} parent=11 // pred_region
        _
      $region24: #{transformer_decoder_layer_forward.7} parent=11 // pred_fallthru
        _
      // Predicated region
      $region25: #{transformer_decoder_layer_forward.7} parent=11 // pred_check
        %p384 = pneg %p208
      $region26: #{transformer_decoder_layer_forward.7} parent=11 // pred_check_branch
        %386 = sbr.rel (%p384) target = $region28
      $region27: #{transformer_decoder_layer_forward.7} parent=11 // pred_region
        _
      $region28: #{transformer_decoder_layer_forward.7} parent=11 // pred_fallthru
        _
      // Predicated region
      $region29: #{transformer_decoder_layer_forward.7} parent=11 // pred_check
        %p387 = pneg %p229
      $region30: #{transformer_decoder_layer_forward.7} parent=11 // pred_check_branch
        %389 = sbr.rel (%p387) target = $region32
      $region31: #{transformer_decoder_layer_forward.7} parent=11 // pred_region
        _
      $region32: #{transformer_decoder_layer_forward.7} parent=11 // pred_fallthru
        _
      // Predicated region
      $region33: #{transformer_decoder_layer_forward.7} parent=11 // pred_check
        %p390 = pneg %p250
      $region34: #{transformer_decoder_layer_forward.7} parent=11 // pred_check_branch
        %392 = sbr.rel (%p390) target = $region36
      $region35: #{transformer_decoder_layer_forward.7} parent=11 // pred_region
        _
      $region36: #{transformer_decoder_layer_forward.7} parent=11 // pred_fallthru
        _
      // Predicated region
      $region37: #{transformer_decoder_layer_forward.7} parent=11 // pred_check
        %p393 = pneg %p271
      $region38: #{transformer_decoder_layer_forward.7} parent=11 // pred_check_branch
        %395 = sbr.rel (%p393) target = $region40
      $region39: #{transformer_decoder_layer_forward.7} parent=11 // pred_region
        _
      $region40: #{transformer_decoder_layer_forward.7} parent=11 // pred_fallthru
        _
      // Predicated region
      $region41: #{transformer_decoder_layer_forward.7} parent=11 // pred_check
        %p396 = pneg %p292
      $region42: #{transformer_decoder_layer_forward.7} parent=11 // pred_check_branch
        %398 = sbr.rel (%p396) target = $region44
      $region43: #{transformer_decoder_layer_forward.7} parent=11 // pred_region
        _
      $region44: #{transformer_decoder_layer_forward.7} parent=11 // pred_fallthru
        _
      // Predicated region
      $region45: #{transformer_decoder_layer_forward.7} parent=11 // pred_check
        %p399 = pneg %p313
      $region46: #{transformer_decoder_layer_forward.7} parent=11 // pred_check_branch
        %401 = sbr.rel (%p399) target = $region48
      $region47: #{transformer_decoder_layer_forward.7} parent=11 // pred_region
        _
      $region48: #{transformer_decoder_layer_forward.7} parent=11 // pred_fallthru
        _
      // Predicated region
      $region49: #{transformer_decoder_layer_forward.7} parent=11 // pred_check
        %p402 = pneg %p334
      $region50: #{transformer_decoder_layer_forward.7} parent=11 // pred_check_branch
        %404 = sbr.rel (%p402) target = $region52
      $region51: #{transformer_decoder_layer_forward.7} parent=11 // pred_region
        _
      $region52: #{transformer_decoder_layer_forward.7} parent=11 // pred_fallthru
        _
    $region12: #{transformer_decoder_layer_forward.7} parent=5 // pred_fallthru
      _
    %p405 = scmp.lt.s32.totalorder %s20, 2
    // Predicated region
    $region53: #{transformer_decoder_layer_forward.7} parent=5 // pred_check
      %p406 = pneg %p405
    $region54: #{transformer_decoder_layer_forward.7} parent=5 // pred_check_branch
      %408 = sbr.rel (%p406) target = $region56
    $region55: #{transformer_decoder_layer_forward.7} parent=5 // pred_region
      // Predicated region
      $region57: #{transformer_decoder_layer_forward.7} parent=55 // pred_check
        %p409 = pneg %p40
      $region58: #{transformer_decoder_layer_forward.7} parent=55 // pred_check_branch
        %411 = sbr.rel (%p409) target = $region60
      $region59: #{transformer_decoder_layer_forward.7} parent=55 // pred_region
        %p412 = scmp.lt.s32.totalorder %s20, 1
        %s413 = scalar_select %p412, %s20, 1
        %s414 = smul.addr %s413, 8
        %s415 = scalar_lea.vmem %s0, %s414
      $region60: #{transformer_decoder_layer_forward.7} parent=55 // pred_fallthru
        _
      // Predicated region
      $region61: #{transformer_decoder_layer_forward.7} parent=55 // pred_check
        %p416 = pneg %p66
      $region62: #{transformer_decoder_layer_forward.7} parent=55 // pred_check_branch
        %418 = sbr.rel (%p416) target = $region64
      $region63: #{transformer_decoder_layer_forward.7} parent=55 // pred_region
        %p419 = scmp.lt.s32.totalorder %s20, 1
        %s420 = scalar_select %p419, %s20, 1
        %s421 = smul.addr %s420, 8
        %s422 = scalar_lea.vmem %s1, %s421
      $region64: #{transformer_decoder_layer_forward.7} parent=55 // pred_fallthru
        _
      // Predicated region
      $region65: #{transformer_decoder_layer_forward.7} parent=55 // pred_check
        %p423 = pneg %p92
      $region66: #{transformer_decoder_layer_forward.7} parent=55 // pred_check_branch
        %425 = sbr.rel (%p423) target = $region68
      $region67: #{transformer_decoder_layer_forward.7} parent=55 // pred_region
        %p426 = scmp.lt.s32.totalorder %s20, 1
        %s427 = scalar_select %p426, %s20, 1
        %s428 = smul.addr %s427, 8
        %s429 = scalar_lea.vmem %s2, %s428
      $region68: #{transformer_decoder_layer_forward.7} parent=55 // pred_fallthru
        _
      // Predicated region
      $region69: #{transformer_decoder_layer_forward.7} parent=55 // pred_check
        %p430 = pneg %p118
      $region70: #{transformer_decoder_layer_forward.7} parent=55 // pred_check_branch
        %432 = sbr.rel (%p430) target = $region72
      $region71: #{transformer_decoder_layer_forward.7} parent=55 // pred_region
        %p433 = scmp.lt.s32.totalorder %s20, 1
        %s434 = scalar_select %p433, %s20, 1
        %s435 = smul.addr %s434, 8
        %s436 = scalar_lea.vmem %s3, %s435
      $region72: #{transformer_decoder_layer_forward.7} parent=55 // pred_fallthru
        _
    $region56: #{transformer_decoder_layer_forward.7} parent=5 // pred_fallthru
      _
    %p437 = scmp.le.s32.totalorder 1, %s20
    %p438 = scmp.lt.s32.totalorder %s20, 3
    %p439 = pnand %p437, %p438
    %p440 = pneg %p439
    // Predicated region
    $region73: #{transformer_decoder_layer_forward.7} parent=5 // pred_check
      _
    $region74: #{transformer_decoder_layer_forward.7} parent=5 // pred_check_branch
      %442 = sbr.rel (%p439) target = $region76
    $region75: #{transformer_decoder_layer_forward.7} parent=5 // pred_region
      %s443 = ssub.s32 %s20, 1
      %p444 = scmp.lt.s32.totalorder %s25, 1
      %s445 = scalar_select %p444, %s25, 1
      %s446 = smul.addr %s445, 8
      %s447 = scalar_lea.vmem %s0, %s446
      %p448 = pneg %p46
      %p449 = pneg %p43
      %p450 = scmp.lt.s32.totalorder %s25, 1
      %s451 = scalar_select %p450, %s25, 1
      %s452 = smul.addr %s451, 8
      %s453 = scalar_lea.vmem %s1, %s452
      %p454 = pneg %p72
      %p455 = pneg %p69
      %p456 = scmp.lt.s32.totalorder %s25, 1
      %s457 = scalar_select %p456, %s25, 1
      %s458 = smul.addr %s457, 8
      %s459 = scalar_lea.vmem %s2, %s458
      %p460 = pneg %p98
      %p461 = pneg %p95
      %p462 = scmp.lt.s32.totalorder %s25, 1
      %s463 = scalar_select %p462, %s25, 1
      %s464 = smul.addr %s463, 8
      %s465 = scalar_lea.vmem %s3, %s464
      %p466 = pneg %p124
      %p467 = pneg %p121
      %p468 = pneg %p145
      %p469 = pneg %p142
      %p470 = pneg %p166
      %p471 = pneg %p163
      %p472 = pneg %p187
      %p473 = pneg %p184
      %p474 = pneg %p208
      %p475 = pneg %p205
      %p476 = pneg %p229
      %p477 = pneg %p226
      %p478 = pneg %p250
      %p479 = pneg %p247
      %p480 = pneg %p271
      %p481 = pneg %p268
      %p482 = pneg %p292
      %p483 = pneg %p289
      %p484 = pneg %p313
      %p485 = pneg %p310
      %p486 = pneg %p334
      %p487 = pneg %p331
      %p488 = pneg %p360
      %p489 = pneg %p357
      %p490 = scmp.lt.s32.totalorder %s25, 1
      %s491 = scalar_select %p490, %s25, 1
      %s492 = smul.addr %s491, 8
      %s493 = scalar_lea.vmem %s14, %s492
      %p494 = scmp.lt.s32.totalorder %s25, 1
      %s495 = scalar_select %p494, %s25, 1
      %s496 = smul.addr %s495, 8
      %s497 = scalar_lea.vmem %s0, %s496
      %p498 = scmp.lt.s32.totalorder %s25, 1
      %s499 = scalar_select %p498, %s25, 1
      %s500 = smul.addr %s499, 8
      %s501 = scalar_lea.vmem %s1, %s500
      %p502 = scmp.lt.s32.totalorder %s25, 1
      %s503 = scalar_select %p502, %s25, 1
      %s504 = smul.addr %s503, 8
      %s505 = scalar_lea.vmem %s2, %s504
      %p506 = scmp.lt.s32.totalorder %s25, 1
      %s507 = scalar_select %p506, %s25, 1
      %s508 = smul.addr %s507, 8
      %s509 = scalar_lea.vmem %s3, %s508
      %p510 = scmp.lt.s32.totalorder %s25, 1
      %s511 = scalar_select %p510, %s25, 1
      %s512 = smul.addr %s511, 8
      %s513 = scalar_lea.vmem %s14, %s512
      %v515 = vld [vmem:[%s497] sm:$0xff]
      %v516 = vpack.c.bf16 %v515, %v515
      %v517 = vld [vmem:[%s501] sm:$0x3f]
      %v518 = vpack.c.bf16 %v517, %v517
      %v519 = vld [vmem:[%s505] sm:$0x3f]
      %v520 = vpack.c.bf16 %v519, %v519
      %v521 = vld [vmem:[%s4] sm:$0xf]
      %v522 = vld [vmem:[%s4 + $0x4] sm:$0xf]
      %v523 = vld [vmem:[%s4 + $0x8] sm:$0xf]
      %v524 = vld [vmem:[%s4 + $0xc] sm:$0xf]
      %v525 = vld [vmem:[%s5] sm:$0x1]
      %v527 = vlaneseq
      %v528 = vshrl.u32 %v527, 7
      %v529 = vsub.s32 0, %v528
      %v530 = vrot.slane %v525, %v529
      %v536 = vunpack.c.l.b16 %v521
      %v537 = vunpack.c.l.b16 %v522
      %v538 = vunpack.c.l.b16 %v523
      %v539 = vunpack.c.l.b16 %v524
      %v540 = vpack.c.b16 %v537, %v536
      %v541 = vpack.c.b16 %v539, %v538
      %vm544 = vcmask 261120
      %v546 = vsel %vm544, %v516, 0
      %548 = vmatprep.subr.bf16.mxu0 0
      %549 = vmatpush1.bf16.msra.mxu0 %v540
      %550 = vmatprep.subr.bf16.mxu0 0
      %551 = vmatpush1.bf16.msra.mxu0 %v541
      %552 = vmatprep.subr.bf16.mxu0 0
      %553 = vmatpush1.bf16.msra.mxu0 0
      %554 = vmatprep.subr.bf16.mxu0 0
      %555 = vmatpush1.bf16.msra.mxu0 0
      %556 = vmatprep.subr.bf16.mxu0 0
      %557 = vmatpush1.bf16.msra.mxu0 0
      %558 = vmatprep.subr.bf16.mxu0 0
      %559 = vmatpush1.bf16.msra.mxu0 0
      %560 = vmatprep.subr.bf16.mxu0 0
      %561 = vmatpush1.bf16.msra.mxu0 0
      %562 = vmatprep.subr.bf16.mxu0 0
      %563 = vmatpush1.bf16.msra.mxu0 0
      %564 = vmatprep.subr.bf16.mxu0 0
      %565 = vmatpush1.bf16.msra.mxu0 0
      %566 = vmatprep.subr.bf16.mxu0 0
      %567 = vmatpush1.bf16.msra.mxu0 0
      %568 = vmatprep.subr.bf16.mxu0 0
      %569 = vmatpush1.bf16.msra.mxu0 0
      %570 = vmatprep.subr.bf16.mxu0 0
      %571 = vmatpush1.bf16.msra.mxu0 0
      %572 = vmatprep.subr.bf16.mxu0 0
      %573 = vmatpush1.bf16.msra.mxu0 0
      %574 = vmatprep.subr.bf16.mxu0 0
      %575 = vmatpush1.bf16.msra.mxu0 0
      %576 = vmatprep.subr.bf16.mxu0 0
      %577 = vmatpush1.bf16.msra.mxu0 0
      %578 = vmatprep.subr.bf16.mxu0 0
      %579 = vmatpush1.bf16.msra.mxu0 0
      %580 = vmatprep.mubr.bf16.mxu0 0
      %581 = vmatmul.mubr.bf16.gmra.mrb[0].mxu0 %v546
      %v582 = vpop.f32.mrb[0].mxu0
      %v583 = vadd.f32 %v530, %v582
      %v584 = vpop.f32.mrb[0].mxu0
      %v585 = vpop.f32.mrb[0].mxu0
      %v586 = vpop.f32.mrb[0].mxu0
      %587 = vdwg.mxu0
      %v588 = vld [vmem:[%s6] sm:$0xf]
      %v589 = vld [vmem:[%s6 + $0x4] sm:$0xf]
      %v590 = vld [vmem:[%s7] sm:$0x1]
      %v592 = vlaneseq
      %v593 = vshrl.u32 %v592, 7
      %v594 = vsub.s32 0, %v593
      %v595 = vrot.slane %v590, %v594
      %v599 = vunpack.c.l.b16 %v588
      %v600 = vunpack.c.l.b16 %v589
      %v601 = vpack.c.b16 %v600, %v599
      %vm603 = vcmask 130048
      %v605 = vsel %vm603, %v518, 0
      %607 = vmatprep.subr.bf16.mxu0 0
      %608 = vmatpush1.bf16.msra.mxu0 %v601
      %609 = vmatprep.subr.bf16.mxu0 0
      %610 = vmatpush1.bf16.msra.mxu0 0
      %611 = vmatprep.subr.bf16.mxu0 0
      %612 = vmatpush1.bf16.msra.mxu0 0
      %613 = vmatprep.subr.bf16.mxu0 0
      %614 = vmatpush1.bf16.msra.mxu0 0
      %615 = vmatprep.subr.bf16.mxu0 0
      %616 = vmatpush1.bf16.msra.mxu0 0
      %617 = vmatprep.subr.bf16.mxu0 0
      %618 = vmatpush1.bf16.msra.mxu0 0
      %619 = vmatprep.subr.bf16.mxu0 0
      %620 = vmatpush1.bf16.msra.mxu0 0
      %621 = vmatprep.subr.bf16.mxu0 0
      %622 = vmatpush1.bf16.msra.mxu0 0
      %623 = vmatprep.subr.bf16.mxu0 0
      %624 = vmatpush1.bf16.msra.mxu0 0
      %625 = vmatprep.subr.bf16.mxu0 0
      %626 = vmatpush1.bf16.msra.mxu0 0
      %627 = vmatprep.subr.bf16.mxu0 0
      %628 = vmatpush1.bf16.msra.mxu0 0
      %629 = vmatprep.subr.bf16.mxu0 0
      %630 = vmatpush1.bf16.msra.mxu0 0
      %631 = vmatprep.subr.bf16.mxu0 0
      %632 = vmatpush1.bf16.msra.mxu0 0
      %633 = vmatprep.subr.bf16.mxu0 0
      %634 = vmatpush1.bf16.msra.mxu0 0
      %635 = vmatprep.subr.bf16.mxu0 0
      %636 = vmatpush1.bf16.msra.mxu0 0
      %637 = vmatprep.subr.bf16.mxu0 0
      %638 = vmatpush1.bf16.msra.mxu0 0
      %639 = vmatprep.mubr.bf16.mxu0 0
      %640 = vmatmul.mubr.bf16.gmra.mrb[0].mxu0 %v605
      %v641 = vpop.f32.mrb[0].mxu0
      %v642 = vadd.f32 %v595, %v641
      %v643 = vpop.f32.mrb[0].mxu0
      %v644 = vpop.f32.mrb[0].mxu0
      %v645 = vpop.f32.mrb[0].mxu0
      %646 = vdwg.mxu0
      %v647 = vld [vmem:[%s8] sm:$0xf]
      %v648 = vld [vmem:[%s8 + $0x4] sm:$0xf]
      %v649 = vld [vmem:[%s9] sm:$0x1]
      %v651 = vlaneseq
      %v652 = vshrl.u32 %v651, 7
      %v653 = vsub.s32 0, %v652
      %v654 = vrot.slane %v649, %v653
      %v658 = vunpack.c.l.b16 %v647
      %v659 = vunpack.c.l.b16 %v648
      %v660 = vpack.c.b16 %v659, %v658
      %v663 = vsel %vm603, %v520, 0
      %665 = vmatprep.subr.bf16.mxu0 0
      %666 = vmatpush1.bf16.msra.mxu0 %v660
      %667 = vmatprep.subr.bf16.mxu0 0
      %668 = vmatpush1.bf16.msra.mxu0 0
      %669 = vmatprep.subr.bf16.mxu0 0
      %670 = vmatpush1.bf16.msra.mxu0 0
      %671 = vmatprep.subr.bf16.mxu0 0
      %672 = vmatpush1.bf16.msra.mxu0 0
      %673 = vmatprep.subr.bf16.mxu0 0
      %674 = vmatpush1.bf16.msra.mxu0 0
      %675 = vmatprep.subr.bf16.mxu0 0
      %676 = vmatpush1.bf16.msra.mxu0 0
      %677 = vmatprep.subr.bf16.mxu0 0
      %678 = vmatpush1.bf16.msra.mxu0 0
      %679 = vmatprep.subr.bf16.mxu0 0
      %680 = vmatpush1.bf16.msra.mxu0 0
      %681 = vmatprep.subr.bf16.mxu0 0
      %682 = vmatpush1.bf16.msra.mxu0 0
      %683 = vmatprep.subr.bf16.mxu0 0
      %684 = vmatpush1.bf16.msra.mxu0 0
      %685 = vmatprep.subr.bf16.mxu0 0
      %686 = vmatpush1.bf16.msra.mxu0 0
      %687 = vmatprep.subr.bf16.mxu0 0
      %688 = vmatpush1.bf16.msra.mxu0 0
      %689 = vmatprep.subr.bf16.mxu0 0
      %690 = vmatpush1.bf16.msra.mxu0 0
      %691 = vmatprep.subr.bf16.mxu0 0
      %692 = vmatpush1.bf16.msra.mxu0 0
      %693 = vmatprep.subr.bf16.mxu0 0
      %694 = vmatpush1.bf16.msra.mxu0 0
      %695 = vmatprep.subr.bf16.mxu0 0
      %696 = vmatpush1.bf16.msra.mxu0 0
      %697 = vmatprep.mubr.bf16.mxu0 0
      %698 = vmatmul.mubr.bf16.gmra.mrb[0].mxu0 %v663
      %v699 = vpop.f32.mrb[0].mxu0
      %v700 = vadd.f32 %v654, %v699
      %v701 = vpop.f32.mrb[0].mxu0
      %v702 = vpop.f32.mrb[0].mxu0
      %v703 = vpop.f32.mrb[0].mxu0
      %704 = vdwg.mxu0
      %v705 = vpack.c.bf16 %v583, %v583
      %v706 = vpack.c.bf16 %v642, %v642
      %v707 = vpack.c.bf16 %v700, %v700
      %vm708 = vcmask 64512
      %v710 = vsel %vm708, %v705, 0
      %v713 = vsel %vm708, %v706, 0
      %715 = vmatprep.subr.bf16.mxu0 0
      %716 = vmatpush1.bf16.xpose.msra.mxu0 %v713
      %717 = vmatprep.subr.bf16.mxu0 0
      %718 = vmatpush1.bf16.xpose.msra.mxu0 0
      %719 = vmatprep.subr.bf16.mxu0 0
      %720 = vmatpush1.bf16.xpose.msra.mxu0 0
      %721 = vmatprep.subr.bf16.mxu0 0
      %722 = vmatpush1.bf16.xpose.msra.mxu0 0
      %723 = vmatprep.subr.bf16.mxu0 0
      %724 = vmatpush1.bf16.xpose.msra.mxu0 0
      %725 = vmatprep.subr.bf16.mxu0 0
      %726 = vmatpush1.bf16.xpose.msra.mxu0 0
      %727 = vmatprep.subr.bf16.mxu0 0
      %728 = vmatpush1.bf16.xpose.msra.mxu0 0
      %729 = vmatprep.subr.bf16.mxu0 0
      %730 = vmatpush1.bf16.xpose.msra.mxu0 0
      %731 = vmatprep.subr.bf16.mxu0 0
      %732 = vmatpush1.bf16.xpose.msra.mxu0 0
      %733 = vmatprep.subr.bf16.mxu0 0
      %734 = vmatpush1.bf16.xpose.msra.mxu0 0
      %735 = vmatprep.subr.bf16.mxu0 0
      %736 = vmatpush1.bf16.xpose.msra.mxu0 0
      %737 = vmatprep.subr.bf16.mxu0 0
      %738 = vmatpush1.bf16.xpose.msra.mxu0 0
      %739 = vmatprep.subr.bf16.mxu0 0
      %740 = vmatpush1.bf16.xpose.msra.mxu0 0
      %741 = vmatprep.subr.bf16.mxu0 0
      %742 = vmatpush1.bf16.xpose.msra.mxu0 0
      %743 = vmatprep.subr.bf16.mxu0 0
      %744 = vmatpush1.bf16.xpose.msra.mxu0 0
      %745 = vmatprep.subr.bf16.mxu0 0
      %746 = vmatpush1.bf16.xpose.msra.mxu0 0
      %747 = vmatprep.mubr.bf16.mxu0 0
      %748 = vmatmul.mubr.bf16.gmra.mrb[0].mxu0 %v710
      %v749 = vpop.f32.mrb[0].mxu0
      %v750 = vadd.f32 0.0, %v749
      %v751 = vpop.f32.mrb[0].mxu0
      %v752 = vpop.f32.mrb[0].mxu0
      %v753 = vpop.f32.mrb[0].mxu0
      %754 = vdwg.mxu0
      %vm755 = vcmask 48128
      %v756 = vsel %vm755, %v750, -inf
      %757 = vmax.xlane.f32.xlu0 %v756
      %v758 = vpop.xlane.xlu0 %757
      %v759 = vsub.f32 %v750, %v758
      %v760 = vmul.f32 %v759, 1.442695
      %v761 = vpow.pop %v760
      %v762 = vsel %vm755, %v761, 0.0
      %763 = vadd.xlane.f32.xlu0 %v762
      %v764 = vpop.xlane.xlu0 %763
      %v765 = vrcp.pop %v764
      %v766 = vmul.f32 %v761, %v765
      %v767 = vpack.c.bf16 %v766, %v766
      %v769 = vsel %vm755, %v767, 0
      %vm771 = vcmask 1042432
      %v773 = vsel %vm771, %v707, 0
      %775 = vmatprep.subr.bf16.mxu0 0
      %776 = vmatpush1.bf16.msra.mxu0 %v773
      %777 = vmatprep.subr.bf16.mxu0 0
      %778 = vmatpush1.bf16.msra.mxu0 0
      %779 = vmatprep.subr.bf16.mxu0 0
      %780 = vmatpush1.bf16.msra.mxu0 0
      %781 = vmatprep.subr.bf16.mxu0 0
      %782 = vmatpush1.bf16.msra.mxu0 0
      %783 = vmatprep.subr.bf16.mxu0 0
      %784 = vmatpush1.bf16.msra.mxu0 0
      %785 = vmatprep.subr.bf16.mxu0 0
      %786 = vmatpush1.bf16.msra.mxu0 0
      %787 = vmatprep.subr.bf16.mxu0 0
      %788 = vmatpush1.bf16.msra.mxu0 0
      %789 = vmatprep.subr.bf16.mxu0 0
      %790 = vmatpush1.bf16.msra.mxu0 0
      %791 = vmatprep.subr.bf16.mxu0 0
      %792 = vmatpush1.bf16.msra.mxu0 0
      %793 = vmatprep.subr.bf16.mxu0 0
      %794 = vmatpush1.bf16.msra.mxu0 0
      %795 = vmatprep.subr.bf16.mxu0 0
      %796 = vmatpush1.bf16.msra.mxu0 0
      %797 = vmatprep.subr.bf16.mxu0 0
      %798 = vmatpush1.bf16.msra.mxu0 0
      %799 = vmatprep.subr.bf16.mxu0 0
      %800 = vmatpush1.bf16.msra.mxu0 0
      %801 = vmatprep.subr.bf16.mxu0 0
      %802 = vmatpush1.bf16.msra.mxu0 0
      %803 = vmatprep.subr.bf16.mxu0 0
      %804 = vmatpush1.bf16.msra.mxu0 0
      %805 = vmatprep.subr.bf16.mxu0 0
      %806 = vmatpush1.bf16.msra.mxu0 0
      %807 = vmatprep.mubr.bf16.mxu0 0
      %808 = vmatmul.mubr.bf16.gmra.mrb[0].mxu0 %v769
      %v809 = vpop.f32.mrb[0].mxu0
      %v810 = vadd.f32 0.0, %v809
      %v811 = vpop.f32.mrb[0].mxu0
      %v812 = vpop.f32.mrb[0].mxu0
      %v813 = vpop.f32.mrb[0].mxu0
      %814 = vdwg.mxu0
      %v815 = vld [vmem:[%s10] sm:$0xf]
      %v816 = vpack.c.bf16 %v810, %v810
      %818 = vrot.lane.b32.xlu0 %v705, 120
      %v819 = vpop.permute.xlu0 %818
      %821 = vrot.lane.b32.xlu0 %v706, 120
      %v822 = vpop.permute.xlu0 %821
      %v824 = vsel %vm708, %v819, 0
      %v827 = vsel %vm708, %v822, 0
      %829 = vmatprep.subr.bf16.mxu0 0
      %830 = vmatpush1.bf16.xpose.msra.mxu0 %v827
      %831 = vmatprep.subr.bf16.mxu0 0
      %832 = vmatpush1.bf16.xpose.msra.mxu0 0
      %833 = vmatprep.subr.bf16.mxu0 0
      %834 = vmatpush1.bf16.xpose.msra.mxu0 0
      %835 = vmatprep.subr.bf16.mxu0 0
      %836 = vmatpush1.bf16.xpose.msra.mxu0 0
      %837 = vmatprep.subr.bf16.mxu0 0
      %838 = vmatpush1.bf16.xpose.msra.mxu0 0
      %839 = vmatprep.subr.bf16.mxu0 0
      %840 = vmatpush1.bf16.xpose.msra.mxu0 0
      %841 = vmatprep.subr.bf16.mxu0 0
      %842 = vmatpush1.bf16.xpose.msra.mxu0 0
      %843 = vmatprep.subr.bf16.mxu0 0
      %844 = vmatpush1.bf16.xpose.msra.mxu0 0
      %845 = vmatprep.subr.bf16.mxu0 0
      %846 = vmatpush1.bf16.xpose.msra.mxu0 0
      %847 = vmatprep.subr.bf16.mxu0 0
      %848 = vmatpush1.bf16.xpose.msra.mxu0 0
      %849 = vmatprep.subr.bf16.mxu0 0
      %850 = vmatpush1.bf16.xpose.msra.mxu0 0
      %851 = vmatprep.subr.bf16.mxu0 0
      %852 = vmatpush1.bf16.xpose.msra.mxu0 0
      %853 = vmatprep.subr.bf16.mxu0 0
      %854 = vmatpush1.bf16.xpose.msra.mxu0 0
      %855 = vmatprep.subr.bf16.mxu0 0
      %856 = vmatpush1.bf16.xpose.msra.mxu0 0
      %857 = vmatprep.subr.bf16.mxu0 0
      %858 = vmatpush1.bf16.xpose.msra.mxu0 0
      %859 = vmatprep.subr.bf16.mxu0 0
      %860 = vmatpush1.bf16.xpose.msra.mxu0 0
      %861 = vmatprep.mubr.bf16.mxu0 0
      %862 = vmatmul.mubr.bf16.gmra.mrb[0].mxu0 %v824
      %v863 = vpop.f32.mrb[0].mxu0
      %v864 = vadd.f32 0.0, %v863
      %v865 = vpop.f32.mrb[0].mxu0
      %v866 = vpop.f32.mrb[0].mxu0
      %v867 = vpop.f32.mrb[0].mxu0
      %868 = vdwg.mxu0
      %v869 = vsel %vm755, %v864, -inf
      %870 = vmax.xlane.f32.xlu0 %v869
      %v871 = vpop.xlane.xlu0 %870
      %v872 = vsub.f32 %v864, %v871
      %v873 = vmul.f32 %v872, 1.442695
      %v874 = vpow.pop %v873
      %v875 = vsel %vm755, %v874, 0.0
      %876 = vadd.xlane.f32.xlu0 %v875
      %v877 = vpop.xlane.xlu0 %876
      %v878 = vrcp.pop %v877
      %v879 = vmul.f32 %v874, %v878
      %v880 = vpack.c.bf16 %v879, %v879
      %882 = vrot.lane.b32.xlu0 %v707, 120
      %v883 = vpop.permute.xlu0 %882
      %v885 = vsel %vm755, %v880, 0
      %v888 = vsel %vm771, %v883, 0
      %890 = vmatprep.subr.bf16.mxu0 0
      %891 = vmatpush1.bf16.msra.mxu0 %v888
      %892 = vmatprep.subr.bf16.mxu0 0
      %893 = vmatpush1.bf16.msra.mxu0 0
      %894 = vmatprep.subr.bf16.mxu0 0
      %895 = vmatpush1.bf16.msra.mxu0 0
      %896 = vmatprep.subr.bf16.mxu0 0
      %897 = vmatpush1.bf16.msra.mxu0 0
      %898 = vmatprep.subr.bf16.mxu0 0
      %899 = vmatpush1.bf16.msra.mxu0 0
      %900 = vmatprep.subr.bf16.mxu0 0
      %901 = vmatpush1.bf16.msra.mxu0 0
      %902 = vmatprep.subr.bf16.mxu0 0
      %903 = vmatpush1.bf16.msra.mxu0 0
      %904 = vmatprep.subr.bf16.mxu0 0
      %905 = vmatpush1.bf16.msra.mxu0 0
      %906 = vmatprep.subr.bf16.mxu0 0
      %907 = vmatpush1.bf16.msra.mxu0 0
      %908 = vmatprep.subr.bf16.mxu0 0
      %909 = vmatpush1.bf16.msra.mxu0 0
      %910 = vmatprep.subr.bf16.mxu0 0
      %911 = vmatpush1.bf16.msra.mxu0 0
      %912 = vmatprep.subr.bf16.mxu0 0
      %913 = vmatpush1.bf16.msra.mxu0 0
      %914 = vmatprep.subr.bf16.mxu0 0
      %915 = vmatpush1.bf16.msra.mxu0 0
      %916 = vmatprep.subr.bf16.mxu0 0
      %917 = vmatpush1.bf16.msra.mxu0 0
      %918 = vmatprep.subr.bf16.mxu0 0
      %919 = vmatpush1.bf16.msra.mxu0 0
      %920 = vmatprep.subr.bf16.mxu0 0
      %921 = vmatpush1.bf16.msra.mxu0 0
      %922 = vmatprep.mubr.bf16.mxu0 0
      %923 = vmatmul.mubr.bf16.gmra.mrb[0].mxu0 %v885
      %v924 = vpop.f32.mrb[0].mxu0
      %v925 = vadd.f32 0.0, %v924
      %v926 = vpop.f32.mrb[0].mxu0
      %v927 = vpop.f32.mrb[0].mxu0
      %v928 = vpop.f32.mrb[0].mxu0
      %929 = vdwg.mxu0
      %v930 = vld [vmem:[%s10 + $0x4] sm:$0xf]
      %v931 = vpack.c.bf16 %v925, %v925
      %v933 = vsel %vm708, %v931, 0
      %vm935 = vcmask 1043456
      %v937 = vsel %vm935, %v930, 0
      %939 = vmatprep.subr.bf16.mxu0 0
      %940 = vmatpush1.bf16.msra.mxu0 %v937
      %941 = vmatprep.subr.bf16.mxu0 0
      %942 = vmatpush1.bf16.msra.mxu0 0
      %943 = vmatprep.subr.bf16.mxu0 0
      %944 = vmatpush1.bf16.msra.mxu0 0
      %945 = vmatprep.subr.bf16.mxu0 0
      %946 = vmatpush1.bf16.msra.mxu0 0
      %947 = vmatprep.subr.bf16.mxu0 0
      %948 = vmatpush1.bf16.msra.mxu0 0
      %949 = vmatprep.subr.bf16.mxu0 0
      %950 = vmatpush1.bf16.msra.mxu0 0
      %951 = vmatprep.subr.bf16.mxu0 0
      %952 = vmatpush1.bf16.msra.mxu0 0
      %953 = vmatprep.subr.bf16.mxu0 0
      %954 = vmatpush1.bf16.msra.mxu0 0
      %955 = vmatprep.subr.bf16.mxu0 0
      %956 = vmatpush1.bf16.msra.mxu0 0
      %957 = vmatprep.subr.bf16.mxu0 0
      %958 = vmatpush1.bf16.msra.mxu0 0
      %959 = vmatprep.subr.bf16.mxu0 0
      %960 = vmatpush1.bf16.msra.mxu0 0
      %961 = vmatprep.subr.bf16.mxu0 0
      %962 = vmatpush1.bf16.msra.mxu0 0
      %963 = vmatprep.subr.bf16.mxu0 0
      %964 = vmatpush1.bf16.msra.mxu0 0
      %965 = vmatprep.subr.bf16.mxu0 0
      %966 = vmatpush1.bf16.msra.mxu0 0
      %967 = vmatprep.subr.bf16.mxu0 0
      %968 = vmatpush1.bf16.msra.mxu0 0
      %969 = vmatprep.subr.bf16.mxu0 0
      %970 = vmatpush1.bf16.msra.mxu0 0
      %971 = vmatprep.mubr.bf16.mxu0 0
      %972 = vmatmul.mubr.bf16.gmra.mrb[0].mxu0 %v933
      %v973 = vpop.f32.mrb[0].mxu0
      %v974 = vadd.f32 0.0, %v973
      %v975 = vpop.f32.mrb[0].mxu0
      %v976 = vpop.f32.mrb[0].mxu0
      %v977 = vpop.f32.mrb[0].mxu0
      %978 = vdwg.mxu0
      %v980 = vsel %vm708, %v816, 0
      %v983 = vsel %vm935, %v815, 0
      %985 = vmatprep.subr.bf16.mxu0 0
      %986 = vmatpush1.bf16.msra.mxu0 %v983
      %987 = vmatprep.subr.bf16.mxu0 0
      %988 = vmatpush1.bf16.msra.mxu0 0
      %989 = vmatprep.subr.bf16.mxu0 0
      %990 = vmatpush1.bf16.msra.mxu0 0
      %991 = vmatprep.subr.bf16.mxu0 0
      %992 = vmatpush1.bf16.msra.mxu0 0
      %993 = vmatprep.subr.bf16.mxu0 0
      %994 = vmatpush1.bf16.msra.mxu0 0
      %995 = vmatprep.subr.bf16.mxu0 0
      %996 = vmatpush1.bf16.msra.mxu0 0
      %997 = vmatprep.subr.bf16.mxu0 0
      %998 = vmatpush1.bf16.msra.mxu0 0
      %999 = vmatprep.subr.bf16.mxu0 0
      %1000 = vmatpush1.bf16.msra.mxu0 0
      %1001 = vmatprep.subr.bf16.mxu0 0
      %1002 = vmatpush1.bf16.msra.mxu0 0
      %1003 = vmatprep.subr.bf16.mxu0 0
      %1004 = vmatpush1.bf16.msra.mxu0 0
      %1005 = vmatprep.subr.bf16.mxu0 0
      %1006 = vmatpush1.bf16.msra.mxu0 0
      %1007 = vmatprep.subr.bf16.mxu0 0
      %1008 = vmatpush1.bf16.msra.mxu0 0
      %1009 = vmatprep.subr.bf16.mxu0 0
      %1010 = vmatpush1.bf16.msra.mxu0 0
      %1011 = vmatprep.subr.bf16.mxu0 0
      %1012 = vmatpush1.bf16.msra.mxu0 0
      %1013 = vmatprep.subr.bf16.mxu0 0
      %1014 = vmatpush1.bf16.msra.mxu0 0
      %1015 = vmatprep.subr.bf16.mxu0 0
      %1016 = vmatpush1.bf16.msra.mxu0 0
      %1017 = vmatprep.mubr.bf16.mxu0 0
      %1018 = vmatmul.mubr.bf16.gmra.mrb[0].mxu0 %v980
      %v1019 = vpop.f32.mrb[0].mxu0
      %v1020 = vadd.f32 %v974, %v1019
      %v1021 = vpop.f32.mrb[0].mxu0
      %v1022 = vpop.f32.mrb[0].mxu0
      %v1023 = vpop.f32.mrb[0].mxu0
      %1024 = vdwg.mxu0
      %1025 = vrot.lane.b32.xlu0 %v705, 112
      %v1026 = vpop.permute.xlu0 %1025
      %1027 = vrot.lane.b32.xlu0 %v706, 112
      %v1028 = vpop.permute.xlu0 %1027
      %v1030 = vsel %vm708, %v1026, 0
      %v1033 = vsel %vm708, %v1028, 0
      %1035 = vmatprep.subr.bf16.mxu0 0
      %1036 = vmatpush1.bf16.xpose.msra.mxu0 %v1033
      %1037 = vmatprep.subr.bf16.mxu0 0
      %1038 = vmatpush1.bf16.xpose.msra.mxu0 0
      %1039 = vmatprep.subr.bf16.mxu0 0
      %1040 = vmatpush1.bf16.xpose.msra.mxu0 0
      %1041 = vmatprep.subr.bf16.mxu0 0
      %1042 = vmatpush1.bf16.xpose.msra.mxu0 0
      %1043 = vmatprep.subr.bf16.mxu0 0
      %1044 = vmatpush1.bf16.xpose.msra.mxu0 0
      %1045 = vmatprep.subr.bf16.mxu0 0
      %1046 = vmatpush1.bf16.xpose.msra.mxu0 0
      %1047 = vmatprep.subr.bf16.mxu0 0
      %1048 = vmatpush1.bf16.xpose.msra.mxu0 0
      %1049 = vmatprep.subr.bf16.mxu0 0
      %1050 = vmatpush1.bf16.xpose.msra.mxu0 0
      %1051 = vmatprep.subr.bf16.mxu0 0
      %1052 = vmatpush1.bf16.xpose.msra.mxu0 0
      %1053 = vmatprep.subr.bf16.mxu0 0
      %1054 = vmatpush1.bf16.xpose.msra.mxu0 0
      %1055 = vmatprep.subr.bf16.mxu0 0
      %1056 = vmatpush1.bf16.xpose.msra.mxu0 0
      %1057 = vmatprep.subr.bf16.mxu0 0
      %1058 = vmatpush1.bf16.xpose.msra.mxu0 0
      %1059 = vmatprep.subr.bf16.mxu0 0
      %1060 = vmatpush1.bf16.xpose.msra.mxu0 0
      %1061 = vmatprep.subr.bf16.mxu0 0
      %1062 = vmatpush1.bf16.xpose.msra.mxu0 0
      %1063 = vmatprep.subr.bf16.mxu0 0
      %1064 = vmatpush1.bf16.xpose.msra.mxu0 0
      %1065 = vmatprep.subr.bf16.mxu0 0
      %1066 = vmatpush1.bf16.xpose.msra.mxu0 0
      %1067 = vmatprep.mubr.bf16.mxu0 0
      %1068 = vmatmul.mubr.bf16.gmra.mrb[0].mxu0 %v1030
      %v1069 = vpop.f32.mrb[0].mxu0
      %v1070 = vadd.f32 0.0, %v1069
      %v1071 = vpop.f32.mrb[0].mxu0
      %v1072 = vpop.f32.mrb[0].mxu0
      %v1073 = vpop.f32.mrb[0].mxu0
      %1074 = vdwg.mxu0
      %v1075 = vsel %vm755, %v1070, -inf
      %1076 = vmax.xlane.f32.xlu0 %v1075
      %v1077 = vpop.xlane.xlu0 %1076
      %v1078 = vsub.f32 %v1070, %v1077
      %v1079 = vmul.f32 %v1078, 1.442695
      %v1080 = vpow.pop %v1079
      %v1081 = vsel %vm755, %v1080, 0.0
      %1082 = vadd.xlane.f32.xlu0 %v1081
      %v1083 = vpop.xlane.xlu0 %1082
      %v1084 = vrcp.pop %v1083
      %v1085 = vmul.f32 %v1080, %v1084
      %v1086 = vpack.c.bf16 %v1085, %v1085
      %1087 = vrot.lane.b32.xlu0 %v707, 112
      %v1088 = vpop.permute.xlu0 %1087
      %v1090 = vsel %vm755, %v1086, 0
      %v1093 = vsel %vm771, %v1088, 0
      %1095 = vmatprep.subr.bf16.mxu0 0
      %1096 = vmatpush1.bf16.msra.mxu0 %v1093
      %1097 = vmatprep.subr.bf16.mxu0 0
      %1098 = vmatpush1.bf16.msra.mxu0 0
      %1099 = vmatprep.subr.bf16.mxu0 0
      %1100 = vmatpush1.bf16.msra.mxu0 0
      %1101 = vmatprep.subr.bf16.mxu0 0
      %1102 = vmatpush1.bf16.msra.mxu0 0
      %1103 = vmatprep.subr.bf16.mxu0 0
      %1104 = vmatpush1.bf16.msra.mxu0 0
      %1105 = vmatprep.subr.bf16.mxu0 0
      %1106 = vmatpush1.bf16.msra.mxu0 0
      %1107 = vmatprep.subr.bf16.mxu0 0
      %1108 = vmatpush1.bf16.msra.mxu0 0
      %1109 = vmatprep.subr.bf16.mxu0 0
      %1110 = vmatpush1.bf16.msra.mxu0 0
      %1111 = vmatprep.subr.bf16.mxu0 0
      %1112 = vmatpush1.bf16.msra.mxu0 0
      %1113 = vmatprep.subr.bf16.mxu0 0
      %1114 = vmatpush1.bf16.msra.mxu0 0
      %1115 = vmatprep.subr.bf16.mxu0 0
      %1116 = vmatpush1.bf16.msra.mxu0 0
      %1117 = vmatprep.subr.bf16.mxu0 0
      %1118 = vmatpush1.bf16.msra.mxu0 0
      %1119 = vmatprep.subr.bf16.mxu0 0
      %1120 = vmatpush1.bf16.msra.mxu0 0
      %1121 = vmatprep.subr.bf16.mxu0 0
      %1122 = vmatpush1.bf16.msra.mxu0 0
      %1123 = vmatprep.subr.bf16.mxu0 0
      %1124 = vmatpush1.bf16.msra.mxu0 0
      %1125 = vmatprep.subr.bf16.mxu0 0
      %1126 = vmatpush1.bf16.msra.mxu0 0
      %1127 = vmatprep.mubr.bf16.mxu0 0
      %1128 = vmatmul.mubr.bf16.gmra.mrb[0].mxu0 %v1090
      %v1129 = vpop.f32.mrb[0].mxu0
      %v1130 = vadd.f32 0.0, %v1129
      %v1131 = vpop.f32.mrb[0].mxu0
      %v1132 = vpop.f32.mrb[0].mxu0
      %v1133 = vpop.f32.mrb[0].mxu0
      %1134 = vdwg.mxu0
      %v1135 = vld [vmem:[%s10 + $0x8] sm:$0xf]
      %v1136 = vpack.c.bf16 %v1130, %v1130
      %v1138 = vsel %vm708, %v1136, 0
      %v1141 = vsel %vm935, %v1135, 0
      %1143 = vmatprep.subr.bf16.mxu0 0
      %1144 = vmatpush1.bf16.msra.mxu0 %v1141
      %1145 = vmatprep.subr.bf16.mxu0 0
      %1146 = vmatpush1.bf16.msra.mxu0 0
      %1147 = vmatprep.subr.bf16.mxu0 0
      %1148 = vmatpush1.bf16.msra.mxu0 0
      %1149 = vmatprep.subr.bf16.mxu0 0
      %1150 = vmatpush1.bf16.msra.mxu0 0
      %1151 = vmatprep.subr.bf16.mxu0 0
      %1152 = vmatpush1.bf16.msra.mxu0 0
      %1153 = vmatprep.subr.bf16.mxu0 0
      %1154 = vmatpush1.bf16.msra.mxu0 0
      %1155 = vmatprep.subr.bf16.mxu0 0
      %1156 = vmatpush1.bf16.msra.mxu0 0
      %1157 = vmatprep.subr.bf16.mxu0 0
      %1158 = vmatpush1.bf16.msra.mxu0 0
      %1159 = vmatprep.subr.bf16.mxu0 0
      %1160 = vmatpush1.bf16.msra.mxu0 0
      %1161 = vmatprep.subr.bf16.mxu0 0
      %1162 = vmatpush1.bf16.msra.mxu0 0
      %1163 = vmatprep.subr.bf16.mxu0 0
      %1164 = vmatpush1.bf16.msra.mxu0 0
      %1165 = vmatprep.subr.bf16.mxu0 0
      %1166 = vmatpush1.bf16.msra.mxu0 0
      %1167 = vmatprep.subr.bf16.mxu0 0
      %1168 = vmatpush1.bf16.msra.mxu0 0
      %1169 = vmatprep.subr.bf16.mxu0 0
      %1170 = vmatpush1.bf16.msra.mxu0 0
      %1171 = vmatprep.subr.bf16.mxu0 0
      %1172 = vmatpush1.bf16.msra.mxu0 0
      %1173 = vmatprep.subr.bf16.mxu0 0
      %1174 = vmatpush1.bf16.msra.mxu0 0
      %1175 = vmatprep.mubr.bf16.mxu0 0
      %1176 = vmatmul.mubr.bf16.gmra.mrb[0].mxu0 %v1138
      %v1177 = vpop.f32.mrb[0].mxu0
      %v1178 = vadd.f32 0.0, %v1177
      %v1179 = vpop.f32.mrb[0].mxu0
      %v1180 = vpop.f32.mrb[0].mxu0
      %v1181 = vpop.f32.mrb[0].mxu0
      %1182 = vdwg.mxu0
      %v1183 = vadd.f32 %v1020, %v1178
      %1184 = vrot.lane.b32.xlu0 %v705, 104
      %v1185 = vpop.permute.xlu0 %1184
      %1186 = vrot.lane.b32.xlu0 %v706, 104
      %v1187 = vpop.permute.xlu0 %1186
      %v1189 = vsel %vm708, %v1185, 0
      %v1192 = vsel %vm708, %v1187, 0
      %1194 = vmatprep.subr.bf16.mxu0 0
      %1195 = vmatpush1.bf16.xpose.msra.mxu0 %v1192
      %1196 = vmatprep.subr.bf16.mxu0 0
      %1197 = vmatpush1.bf16.xpose.msra.mxu0 0
      %1198 = vmatprep.subr.bf16.mxu0 0
      %1199 = vmatpush1.bf16.xpose.msra.mxu0 0
      %1200 = vmatprep.subr.bf16.mxu0 0
      %1201 = vmatpush1.bf16.xpose.msra.mxu0 0
      %1202 = vmatprep.subr.bf16.mxu0 0
      %1203 = vmatpush1.bf16.xpose.msra.mxu0 0
      %1204 = vmatprep.subr.bf16.mxu0 0
      %1205 = vmatpush1.bf16.xpose.msra.mxu0 0
      %1206 = vmatprep.subr.bf16.mxu0 0
      %1207 = vmatpush1.bf16.xpose.msra.mxu0 0
      %1208 = vmatprep.subr.bf16.mxu0 0
      %1209 = vmatpush1.bf16.xpose.msra.mxu0 0
      %1210 = vmatprep.subr.bf16.mxu0 0
      %1211 = vmatpush1.bf16.xpose.msra.mxu0 0
      %1212 = vmatprep.subr.bf16.mxu0 0
      %1213 = vmatpush1.bf16.xpose.msra.mxu0 0
      %1214 = vmatprep.subr.bf16.mxu0 0
      %1215 = vmatpush1.bf16.xpose.msra.mxu0 0
      %1216 = vmatprep.subr.bf16.mxu0 0
      %1217 = vmatpush1.bf16.xpose.msra.mxu0 0
      %1218 = vmatprep.subr.bf16.mxu0 0
      %1219 = vmatpush1.bf16.xpose.msra.mxu0 0
      %1220 = vmatprep.subr.bf16.mxu0 0
      %1221 = vmatpush1.bf16.xpose.msra.mxu0 0
      %1222 = vmatprep.subr.bf16.mxu0 0
      %1223 = vmatpush1.bf16.xpose.msra.mxu0 0
      %1224 = vmatprep.subr.bf16.mxu0 0
      %1225 = vmatpush1.bf16.xpose.msra.mxu0 0
      %1226 = vmatprep.mubr.bf16.mxu0 0
      %1227 = vmatmul.mubr.bf16.gmra.mrb[0].mxu0 %v1189
      %v1228 = vpop.f32.mrb[0].mxu0
      %v1229 = vadd.f32 0.0, %v1228
      %v1230 = vpop.f32.mrb[0].mxu0
      %v1231 = vpop.f32.mrb[0].mxu0
      %v1232 = vpop.f32.mrb[0].mxu0
      %1233 = vdwg.mxu0
      %v1234 = vsel %vm755, %v1229, -inf
      %1235 = vmax.xlane.f32.xlu0 %v1234
      %v1236 = vpop.xlane.xlu0 %1235
      %v1237 = vsub.f32 %v1229, %v1236
      %v1238 = vmul.f32 %v1237, 1.442695
      %v1239 = vpow.pop %v1238
      %v1240 = vsel %vm755, %v1239, 0.0
      %1241 = vadd.xlane.f32.xlu0 %v1240
      %v1242 = vpop.xlane.xlu0 %1241
      %v1243 = vrcp.pop %v1242
      %v1244 = vmul.f32 %v1239, %v1243
      %v1245 = vpack.c.bf16 %v1244, %v1244
      %1246 = vrot.lane.b32.xlu0 %v707, 104
      %v1247 = vpop.permute.xlu0 %1246
      %v1249 = vsel %vm755, %v1245, 0
      %v1252 = vsel %vm771, %v1247, 0
      %1254 = vmatprep.subr.bf16.mxu0 0
      %1255 = vmatpush1.bf16.msra.mxu0 %v1252
      %1256 = vmatprep.subr.bf16.mxu0 0
      %1257 = vmatpush1.bf16.msra.mxu0 0
      %1258 = vmatprep.subr.bf16.mxu0 0
      %1259 = vmatpush1.bf16.msra.mxu0 0
      %1260 = vmatprep.subr.bf16.mxu0 0
      %1261 = vmatpush1.bf16.msra.mxu0 0
      %1262 = vmatprep.subr.bf16.mxu0 0
      %1263 = vmatpush1.bf16.msra.mxu0 0
      %1264 = vmatprep.subr.bf16.mxu0 0
      %1265 = vmatpush1.bf16.msra.mxu0 0
      %1266 = vmatprep.subr.bf16.mxu0 0
      %1267 = vmatpush1.bf16.msra.mxu0 0
      %1268 = vmatprep.subr.bf16.mxu0 0
      %1269 = vmatpush1.bf16.msra.mxu0 0
      %1270 = vmatprep.subr.bf16.mxu0 0
      %1271 = vmatpush1.bf16.msra.mxu0 0
      %1272 = vmatprep.subr.bf16.mxu0 0
      %1273 = vmatpush1.bf16.msra.mxu0 0
      %1274 = vmatprep.subr.bf16.mxu0 0
      %1275 = vmatpush1.bf16.msra.mxu0 0
      %1276 = vmatprep.subr.bf16.mxu0 0
      %1277 = vmatpush1.bf16.msra.mxu0 0
      %1278 = vmatprep.subr.bf16.mxu0 0
      %1279 = vmatpush1.bf16.msra.mxu0 0
      %1280 = vmatprep.subr.bf16.mxu0 0
      %1281 = vmatpush1.bf16.msra.mxu0 0
      %1282 = vmatprep.subr.bf16.mxu0 0
      %1283 = vmatpush1.bf16.msra.mxu0 0
      %1284 = vmatprep.subr.bf16.mxu0 0
      %1285 = vmatpush1.bf16.msra.mxu0 0
      %1286 = vmatprep.mubr.bf16.mxu0 0
      %1287 = vmatmul.mubr.bf16.gmra.mrb[0].mxu0 %v1249
      %v1288 = vpop.f32.mrb[0].mxu0
      %v1289 = vadd.f32 0.0, %v1288
      %v1290 = vpop.f32.mrb[0].mxu0
      %v1291 = vpop.f32.mrb[0].mxu0
      %v1292 = vpop.f32.mrb[0].mxu0
      %1293 = vdwg.mxu0
      %v1294 = vld [vmem:[%s10 + $0xc] sm:$0xf]
      %v1295 = vpack.c.bf16 %v1289, %v1289
      %v1297 = vsel %vm708, %v1295, 0
      %v1300 = vsel %vm935, %v1294, 0
      %1302 = vmatprep.subr.bf16.mxu0 0
      %1303 = vmatpush1.bf16.msra.mxu0 %v1300
      %1304 = vmatprep.subr.bf16.mxu0 0
      %1305 = vmatpush1.bf16.msra.mxu0 0
      %1306 = vmatprep.subr.bf16.mxu0 0
      %1307 = vmatpush1.bf16.msra.mxu0 0
      %1308 = vmatprep.subr.bf16.mxu0 0
      %1309 = vmatpush1.bf16.msra.mxu0 0
      %1310 = vmatprep.subr.bf16.mxu0 0
      %1311 = vmatpush1.bf16.msra.mxu0 0
      %1312 = vmatprep.subr.bf16.mxu0 0
      %1313 = vmatpush1.bf16.msra.mxu0 0
      %1314 = vmatprep.subr.bf16.mxu0 0
      %1315 = vmatpush1.bf16.msra.mxu0 0
      %1316 = vmatprep.subr.bf16.mxu0 0
      %1317 = vmatpush1.bf16.msra.mxu0 0
      %1318 = vmatprep.subr.bf16.mxu0 0
      %1319 = vmatpush1.bf16.msra.mxu0 0
      %1320 = vmatprep.subr.bf16.mxu0 0
      %1321 = vmatpush1.bf16.msra.mxu0 0
      %1322 = vmatprep.subr.bf16.mxu0 0
      %1323 = vmatpush1.bf16.msra.mxu0 0
      %1324 = vmatprep.subr.bf16.mxu0 0
      %1325 = vmatpush1.bf16.msra.mxu0 0
      %1326 = vmatprep.subr.bf16.mxu0 0
      %1327 = vmatpush1.bf16.msra.mxu0 0
      %1328 = vmatprep.subr.bf16.mxu0 0
      %1329 = vmatpush1.bf16.msra.mxu0 0
      %1330 = vmatprep.subr.bf16.mxu0 0
      %1331 = vmatpush1.bf16.msra.mxu0 0
      %1332 = vmatprep.subr.bf16.mxu0 0
      %1333 = vmatpush1.bf16.msra.mxu0 0
      %1334 = vmatprep.mubr.bf16.mxu0 0
      %1335 = vmatmul.mubr.bf16.gmra.mrb[0].mxu0 %v1297
      %v1336 = vpop.f32.mrb[0].mxu0
      %v1337 = vadd.f32 0.0, %v1336
      %v1338 = vpop.f32.mrb[0].mxu0
      %v1339 = vpop.f32.mrb[0].mxu0
      %v1340 = vpop.f32.mrb[0].mxu0
      %1341 = vdwg.mxu0
      %v1342 = vadd.f32 %v1183, %v1337
      %v1343 = vld [vmem:[%s11] sm:$0x1]
      %v1345 = vlaneseq
      %v1346 = vshrl.u32 %v1345, 7
      %v1347 = vsub.s32 0, %v1346
      %v1348 = vrot.slane %v1343, %v1347
      %v1350 = vadd.f32 %v1342, %v1348
      %v1351 = vld [vmem:[%s509] sm:$0xff]
      %v1352 = vadd.f32 %v1351, %v1350
      %v1353 = vld [vmem:[%s12] sm:$0x1]
      %v1354 = vld [vmem:[%s13] sm:$0x1]
      %v1355 = vsel %vm544, %v1352, 0.0
      %1356 = vadd.xlane.f32.xlu0 %v1355
      %v1357 = vpop.xlane.xlu0 %1356
      %v1358 = vrcp.pop 32.0
      %v1359 = vmul.f32 %v1357, %v1358
      %v1360 = vsub.f32 %v1352, %v1359
      %v1361 = vmul.f32 %v1360, %v1360
      %v1362 = vsel %vm544, %v1361, 0.0
      %1363 = vadd.xlane.f32.xlu0 %v1362
      %v1364 = vpop.xlane.xlu0 %1363
      %v1365 = vmul.f32 %v1364, %v1358
      %v1366 = vadd.f32 %v1365, 1e-05
      %v1367 = vrsqrt.pop %v1366
      %v1368 = vmul.f32 %v1360, %v1367
      %v1370 = vlaneseq
      %v1371 = vshrl.u32 %v1370, 7
      %v1372 = vsub.s32 0, %v1371
      %v1373 = vrot.slane %v1353, %v1372
      %v1375 = vmul.f32 %v1368, %v1373
      %v1377 = vlaneseq
      %v1378 = vshrl.u32 %v1377, 7
      %v1379 = vsub.s32 0, %v1378
      %v1380 = vrot.slane %v1354, %v1379
      %v1382 = vadd.f32 %v1375, %v1380
      %1383 = vst.msk [vmem:[%s513] sm:$0xff] %vm544, %v1382
      %p1384 = scmp.lt.s32.totalorder %s25, 1
      %s1385 = scalar_select %p1384, %s25, 1
      %s1386 = smul.addr %s1385, 8
      %s1387 = scalar_lea.vmem %s14, %s1386
      // Predicated region
      $region77: #{transformer_decoder_layer_forward.7} parent=75 // pred_check
        %p1388 = pneg %p357
      $region78: #{transformer_decoder_layer_forward.7} parent=75 // pred_check_branch
        %1390 = sbr.rel (%p1388) target = $region80
      $region79: #{transformer_decoder_layer_forward.7} parent=75 // pred_region
        _
      $region80: #{transformer_decoder_layer_forward.7} parent=75 // pred_fallthru
        _
    $region76: #{transformer_decoder_layer_forward.7} parent=5 // pred_fallthru
      _
    %p1391 = scmp.le.s32.totalorder 2, %s20
    // Predicated region
    $region81: #{transformer_decoder_layer_forward.7} parent=5 // pred_check
      %p1392 = pneg %p1391
    $region82: #{transformer_decoder_layer_forward.7} parent=5 // pred_check_branch
      %1394 = sbr.rel (%p1392) target = $region84
    $region83: #{transformer_decoder_layer_forward.7} parent=5 // pred_region
      %s1395 = ssub.s32 %s20, 2
      // Predicated region
      $region85: #{transformer_decoder_layer_forward.7} parent=83 // pred_check
        %p1396 = pneg %p363
      $region86: #{transformer_decoder_layer_forward.7} parent=83 // pred_check_branch
        %1398 = sbr.rel (%p1396) target = $region88
      $region87: #{transformer_decoder_layer_forward.7} parent=83 // pred_region
        %p1399 = scmp.lt.s32.totalorder %s26, 1
        %s1400 = scalar_select %p1399, %s26, 1
        %s1401 = smul.addr %s1400, 8
        %s1402 = scalar_lea.vmem %s14, %s1401
      $region88: #{transformer_decoder_layer_forward.7} parent=83 // pred_fallthru
        _
    $region84: #{transformer_decoder_layer_forward.7} parent=5 // pred_fallthru
      _
  $region6: #{transformer_decoder_layer_forward.7} parent=0 // loop_footer
    %s24 = sadd.s32 1, %s20
  $region7: #{transformer_decoder_layer_forward.7} parent=0 // loop_footer_branch
    %19 = sbr.rel target = $region3
  $region8: #{transformer_decoder_layer_forward.7} parent=0 // loop_exit
    _

// kernel: transformer_decoder_layer_forward.8
$region0: #{transformer_decoder_layer_forward.8}
  #allocation0 [shape = 'u32[]', space=smem, size = 0x4, offset = 0x4, fixed_abs, tag = 'smem constant byte address 0x4 - core index']
  #allocation1 [shape = 'u32[144,128]{1,0:T(1,128)}', space=vmem, size = 0x12000, scoped, tag = 'internal scratch']
  %s0 = inlined_call_operand.vmem [shape: f32[2,8,32], index: 0, kind: input, shape index: {}]
  %s1 = inlined_call_operand.vmem [shape: f32[2,5,256], index: 1, kind: input, shape index: {}, may-alias: {1,2}]
  %s2 = inlined_call_operand.vmem [shape: f32[2,5,256], index: 2, kind: input, shape index: {}, may-alias: {1,2}]
  %s3 = inlined_call_operand.vmem [shape: f32[2,8,32], index: 3, kind: input, shape index: {}]
  %s4 = inlined_call_operand.vmem [shape: bf16[32,32], index: 4, kind: input, shape index: {}]
  %s5 = inlined_call_operand.vmem [shape: f32[1,32], index: 5, kind: input, shape index: {}]
  %s6 = inlined_call_operand.vmem [shape: bf16[256,32], index: 6, kind: input, shape index: {}]
  %s7 = inlined_call_operand.vmem [shape: f32[1,32], index: 7, kind: input, shape index: {}]
  %s8 = inlined_call_operand.vmem [shape: bf16[256,32], index: 8, kind: input, shape index: {}]
  %s9 = inlined_call_operand.vmem [shape: f32[1,32], index: 9, kind: input, shape index: {}]
  %s10 = inlined_call_operand.vmem [shape: bf16[32,32], index: 10, kind: input, shape index: {}]
  %s11 = inlined_call_operand.vmem [shape: f32[1,32], index: 11, kind: input, shape index: {}]
  %s12 = inlined_call_operand.vmem [shape: f32[1,32], index: 12, kind: input, shape index: {}]
  %s13 = inlined_call_operand.vmem [shape: f32[1,32], index: 13, kind: input, shape index: {}]
  %s14 = inlined_call_operand.vmem [shape: f32[2,8,32], index: 14, kind: output, shape index: {}]
  %s15 = sld [smem:[#allocation0]]
  $region89: #{transformer_decoder_layer_forward.8} parent=0
    _
  %s17 = ssub.s32 1, %s15
  %s18 = scalar_select 0, %s17, %s15
  loop: start=0, step=1, limit=4
  $region2: #{transformer_decoder_layer_forward.8} parent=0 // loop_pre_header
    _
  $region3: #{transformer_decoder_layer_forward.8} parent=0 // loop_header
    %s20 = sphi 0, %s24
    %p21 = scmp.ge.s32.totalorder %s20, 4
    %s30 = sphi 0, %s32
    %s33 = sphi 0, %s30
    %s34 = sphi 0, %s33
    %s50 = sphi 0, %s34
    %s56 = sphi 0, %s58
    %s59 = sphi 0, %s56
    %s60 = sphi 0, %s59
    %s76 = sphi 0, %s60
    %s82 = sphi 0, %s84
    %s85 = sphi 0, %s82
    %s86 = sphi 0, %s85
    %s102 = sphi 0, %s86
    %s108 = sphi 0, %s110
    %s111 = sphi 0, %s108
    %s112 = sphi 0, %s111
    %s128 = sphi 0, %s112
    %s132 = sphi 0, %s132
    %s134 = sphi 0, %s132
    %s135 = sphi 0, %s134
    %s149 = sphi 0, %s135
    %s153 = sphi 0, %s153
    %s155 = sphi 0, %s153
    %s156 = sphi 0, %s155
    %s170 = sphi 0, %s156
    %s174 = sphi 0, %s174
    %s176 = sphi 0, %s174
    %s177 = sphi 0, %s176
    %s191 = sphi 0, %s177
    %s195 = sphi 0, %s195
    %s197 = sphi 0, %s195
    %s198 = sphi 0, %s197
    %s212 = sphi 0, %s198
    %s216 = sphi 0, %s216
    %s218 = sphi 0, %s216
    %s219 = sphi 0, %s218
    %s233 = sphi 0, %s219
    %s237 = sphi 0, %s237
    %s239 = sphi 0, %s237
    %s240 = sphi 0, %s239
    %s254 = sphi 0, %s240
    %s258 = sphi 0, %s258
    %s260 = sphi 0, %s258
    %s261 = sphi 0, %s260
    %s275 = sphi 0, %s261
    %s279 = sphi 0, %s279
    %s281 = sphi 0, %s279
    %s282 = sphi 0, %s281
    %s296 = sphi 0, %s282
    %s300 = sphi 0, %s300
    %s302 = sphi 0, %s300
    %s303 = sphi 0, %s302
    %s317 = sphi 0, %s303
    %s321 = sphi 0, %s321
    %s323 = sphi 0, %s321
    %s324 = sphi 0, %s323
    %s338 = sphi 0, %s324
    %s344 = sphi 0, %s346
    %s347 = sphi 0, %s344
    %s348 = sphi 0, %s347
    %s364 = sphi 0, %s348
  $region4: #{transformer_decoder_layer_forward.8} parent=0 // loop_header_branch
    %23 = sbr.rel (%p21) target = $region8
  $region5: #{transformer_decoder_layer_forward.8} parent=0 // loop_body
    %s25 = ssub.s32 %s20, 1
    %s26 = ssub.s32 %s20, 2
    %s27 = sadd.s32 %s20, 1
    %s28 = ssub.s32 %s20, %s27
    %p29 = scmp.eq.s32.totalorder %s28, 0
    %s31 = sadd.s32 %s30, 1
    %s32 = scalar_select %p29, %s30, %s31
    %p35 = pneg %p29
    %p36 = scmp.eq.s32.totalorder %s20, 1
    %p37 = por %p35, %p36
    %p38 = scmp.ne.s32.totalorder %s30, %s33
    %p39 = scmp.eq.s32.totalorder %s20, 0
    %p40 = por %p38, %p39
    %p41 = scmp.ne.s32.totalorder %s30, %s33
    %p42 = scmp.eq.s32.totalorder %s25, 1
    %p43 = por %p41, %p42
    %p44 = scmp.ne.s32.totalorder %s33, %s34
    %p45 = scmp.eq.s32.totalorder %s25, 0
    %p46 = por %p44, %p45
    %p47 = scmp.ne.s32.totalorder %s33, %s34
    %p48 = scmp.eq.s32.totalorder %s26, 1
    %p49 = por %p47, %p48
    %p51 = scmp.ne.s32.totalorder %s34, %s50
    %p52 = scmp.eq.s32.totalorder %s26, 0
    %p53 = por %p51, %p52
    %s54 = ssub.s32 %s20, %s27
    %p55 = scmp.eq.s32.totalorder %s54, 0
    %s57 = sadd.s32 %s56, 1
    %s58 = scalar_select %p55, %s56, %s57
    %p61 = pneg %p55
    %p62 = scmp.eq.s32.totalorder %s20, 1
    %p63 = por %p61, %p62
    %p64 = scmp.ne.s32.totalorder %s56, %s59
    %p65 = scmp.eq.s32.totalorder %s20, 0
    %p66 = por %p64, %p65
    %p67 = scmp.ne.s32.totalorder %s56, %s59
    %p68 = scmp.eq.s32.totalorder %s25, 1
    %p69 = por %p67, %p68
    %p70 = scmp.ne.s32.totalorder %s59, %s60
    %p71 = scmp.eq.s32.totalorder %s25, 0
    %p72 = por %p70, %p71
    %p73 = scmp.ne.s32.totalorder %s59, %s60
    %p74 = scmp.eq.s32.totalorder %s26, 1
    %p75 = por %p73, %p74
    %p77 = scmp.ne.s32.totalorder %s60, %s76
    %p78 = scmp.eq.s32.totalorder %s26, 0
    %p79 = por %p77, %p78
    %s80 = ssub.s32 %s20, %s27
    %p81 = scmp.eq.s32.totalorder %s80, 0
    %s83 = sadd.s32 %s82, 1
    %s84 = scalar_select %p81, %s82, %s83
    %p87 = pneg %p81
    %p88 = scmp.eq.s32.totalorder %s20, 1
    %p89 = por %p87, %p88
    %p90 = scmp.ne.s32.totalorder %s82, %s85
    %p91 = scmp.eq.s32.totalorder %s20, 0
    %p92 = por %p90, %p91
    %p93 = scmp.ne.s32.totalorder %s82, %s85
    %p94 = scmp.eq.s32.totalorder %s25, 1
    %p95 = por %p93, %p94
    %p96 = scmp.ne.s32.totalorder %s85, %s86
    %p97 = scmp.eq.s32.totalorder %s25, 0
    %p98 = por %p96, %p97
    %p99 = scmp.ne.s32.totalorder %s85, %s86
    %p100 = scmp.eq.s32.totalorder %s26, 1
    %p101 = por %p99, %p100
    %p103 = scmp.ne.s32.totalorder %s86, %s102
    %p104 = scmp.eq.s32.totalorder %s26, 0
    %p105 = por %p103, %p104
    %s106 = ssub.s32 %s20, %s27
    %p107 = scmp.eq.s32.totalorder %s106, 0
    %s109 = sadd.s32 %s108, 1
    %s110 = scalar_select %p107, %s108, %s109
    %p113 = pneg %p107
    %p114 = scmp.eq.s32.totalorder %s20, 1
    %p115 = por %p113, %p114
    %p116 = scmp.ne.s32.totalorder %s108, %s111
    %p117 = scmp.eq.s32.totalorder %s20, 0
    %p118 = por %p116, %p117
    %p119 = scmp.ne.s32.totalorder %s108, %s111
    %p120 = scmp.eq.s32.totalorder %s25, 1
    %p121 = por %p119, %p120
    %p122 = scmp.ne.s32.totalorder %s111, %s112
    %p123 = scmp.eq.s32.totalorder %s25, 0
    %p124 = por %p122, %p123
    %p125 = scmp.ne.s32.totalorder %s111, %s112
    %p126 = scmp.eq.s32.totalorder %s26, 1
    %p127 = por %p125, %p126
    %p129 = scmp.ne.s32.totalorder %s112, %s128
    %p130 = scmp.eq.s32.totalorder %s26, 0
    %p131 = por %p129, %p130
    %s133 = sadd.s32 %s132, 1
    %p136 = scmp.eq.s32.totalorder %s20, 1
    %p137 = scmp.ne.s32.totalorder %s132, %s134
    %p138 = scmp.eq.s32.totalorder %s20, 0
    %p139 = por %p137, %p138
    %p140 = scmp.ne.s32.totalorder %s132, %s134
    %p141 = scmp.eq.s32.totalorder %s25, 1
    %p142 = por %p140, %p141
    %p143 = scmp.ne.s32.totalorder %s134, %s135
    %p144 = scmp.eq.s32.totalorder %s25, 0
    %p145 = por %p143, %p144
    %p146 = scmp.ne.s32.totalorder %s134, %s135
    %p147 = scmp.eq.s32.totalorder %s26, 1
    %p148 = por %p146, %p147
    %p150 = scmp.ne.s32.totalorder %s135, %s149
    %p151 = scmp.eq.s32.totalorder %s26, 0
    %p152 = por %p150, %p151
    %s154 = sadd.s32 %s153, 1
    %p157 = scmp.eq.s32.totalorder %s20, 1
    %p158 = scmp.ne.s32.totalorder %s153, %s155
    %p159 = scmp.eq.s32.totalorder %s20, 0
    %p160 = por %p158, %p159
    %p161 = scmp.ne.s32.totalorder %s153, %s155
    %p162 = scmp.eq.s32.totalorder %s25, 1
    %p163 = por %p161, %p162
    %p164 = scmp.ne.s32.totalorder %s155, %s156
    %p165 = scmp.eq.s32.totalorder %s25, 0
    %p166 = por %p164, %p165
    %p167 = scmp.ne.s32.totalorder %s155, %s156
    %p168 = scmp.eq.s32.totalorder %s26, 1
    %p169 = por %p167, %p168
    %p171 = scmp.ne.s32.totalorder %s156, %s170
    %p172 = scmp.eq.s32.totalorder %s26, 0
    %p173 = por %p171, %p172
    %s175 = sadd.s32 %s174, 1
    %p178 = scmp.eq.s32.totalorder %s20, 1
    %p179 = scmp.ne.s32.totalorder %s174, %s176
    %p180 = scmp.eq.s32.totalorder %s20, 0
    %p181 = por %p179, %p180
    %p182 = scmp.ne.s32.totalorder %s174, %s176
    %p183 = scmp.eq.s32.totalorder %s25, 1
    %p184 = por %p182, %p183
    %p185 = scmp.ne.s32.totalorder %s176, %s177
    %p186 = scmp.eq.s32.totalorder %s25, 0
    %p187 = por %p185, %p186
    %p188 = scmp.ne.s32.totalorder %s176, %s177
    %p189 = scmp.eq.s32.totalorder %s26, 1
    %p190 = por %p188, %p189
    %p192 = scmp.ne.s32.totalorder %s177, %s191
    %p193 = scmp.eq.s32.totalorder %s26, 0
    %p194 = por %p192, %p193
    %s196 = sadd.s32 %s195, 1
    %p199 = scmp.eq.s32.totalorder %s20, 1
    %p200 = scmp.ne.s32.totalorder %s195, %s197
    %p201 = scmp.eq.s32.totalorder %s20, 0
    %p202 = por %p200, %p201
    %p203 = scmp.ne.s32.totalorder %s195, %s197
    %p204 = scmp.eq.s32.totalorder %s25, 1
    %p205 = por %p203, %p204
    %p206 = scmp.ne.s32.totalorder %s197, %s198
    %p207 = scmp.eq.s32.totalorder %s25, 0
    %p208 = por %p206, %p207
    %p209 = scmp.ne.s32.totalorder %s197, %s198
    %p210 = scmp.eq.s32.totalorder %s26, 1
    %p211 = por %p209, %p210
    %p213 = scmp.ne.s32.totalorder %s198, %s212
    %p214 = scmp.eq.s32.totalorder %s26, 0
    %p215 = por %p213, %p214
    %s217 = sadd.s32 %s216, 1
    %p220 = scmp.eq.s32.totalorder %s20, 1
    %p221 = scmp.ne.s32.totalorder %s216, %s218
    %p222 = scmp.eq.s32.totalorder %s20, 0
    %p223 = por %p221, %p222
    %p224 = scmp.ne.s32.totalorder %s216, %s218
    %p225 = scmp.eq.s32.totalorder %s25, 1
    %p226 = por %p224, %p225
    %p227 = scmp.ne.s32.totalorder %s218, %s219
    %p228 = scmp.eq.s32.totalorder %s25, 0
    %p229 = por %p227, %p228
    %p230 = scmp.ne.s32.totalorder %s218, %s219
    %p231 = scmp.eq.s32.totalorder %s26, 1
    %p232 = por %p230, %p231
    %p234 = scmp.ne.s32.totalorder %s219, %s233
    %p235 = scmp.eq.s32.totalorder %s26, 0
    %p236 = por %p234, %p235
    %s238 = sadd.s32 %s237, 1
    %p241 = scmp.eq.s32.totalorder %s20, 1
    %p242 = scmp.ne.s32.totalorder %s237, %s239
    %p243 = scmp.eq.s32.totalorder %s20, 0
    %p244 = por %p242, %p243
    %p245 = scmp.ne.s32.totalorder %s237, %s239
    %p246 = scmp.eq.s32.totalorder %s25, 1
    %p247 = por %p245, %p246
    %p248 = scmp.ne.s32.totalorder %s239, %s240
    %p249 = scmp.eq.s32.totalorder %s25, 0
    %p250 = por %p248, %p249
    %p251 = scmp.ne.s32.totalorder %s239, %s240
    %p252 = scmp.eq.s32.totalorder %s26, 1
    %p253 = por %p251, %p252
    %p255 = scmp.ne.s32.totalorder %s240, %s254
    %p256 = scmp.eq.s32.totalorder %s26, 0
    %p257 = por %p255, %p256
    %s259 = sadd.s32 %s258, 1
    %p262 = scmp.eq.s32.totalorder %s20, 1
    %p263 = scmp.ne.s32.totalorder %s258, %s260
    %p264 = scmp.eq.s32.totalorder %s20, 0
    %p265 = por %p263, %p264
    %p266 = scmp.ne.s32.totalorder %s258, %s260
    %p267 = scmp.eq.s32.totalorder %s25, 1
    %p268 = por %p266, %p267
    %p269 = scmp.ne.s32.totalorder %s260, %s261
    %p270 = scmp.eq.s32.totalorder %s25, 0
    %p271 = por %p269, %p270
    %p272 = scmp.ne.s32.totalorder %s260, %s261
    %p273 = scmp.eq.s32.totalorder %s26, 1
    %p274 = por %p272, %p273
    %p276 = scmp.ne.s32.totalorder %s261, %s275
    %p277 = scmp.eq.s32.totalorder %s26, 0
    %p278 = por %p276, %p277
    %s280 = sadd.s32 %s279, 1
    %p283 = scmp.eq.s32.totalorder %s20, 1
    %p284 = scmp.ne.s32.totalorder %s279, %s281
    %p285 = scmp.eq.s32.totalorder %s20, 0
    %p286 = por %p284, %p285
    %p287 = scmp.ne.s32.totalorder %s279, %s281
    %p288 = scmp.eq.s32.totalorder %s25, 1
    %p289 = por %p287, %p288
    %p290 = scmp.ne.s32.totalorder %s281, %s282
    %p291 = scmp.eq.s32.totalorder %s25, 0
    %p292 = por %p290, %p291
    %p293 = scmp.ne.s32.totalorder %s281, %s282
    %p294 = scmp.eq.s32.totalorder %s26, 1
    %p295 = por %p293, %p294
    %p297 = scmp.ne.s32.totalorder %s282, %s296
    %p298 = scmp.eq.s32.totalorder %s26, 0
    %p299 = por %p297, %p298
    %s301 = sadd.s32 %s300, 1
    %p304 = scmp.eq.s32.totalorder %s20, 1
    %p305 = scmp.ne.s32.totalorder %s300, %s302
    %p306 = scmp.eq.s32.totalorder %s20, 0
    %p307 = por %p305, %p306
    %p308 = scmp.ne.s32.totalorder %s300, %s302
    %p309 = scmp.eq.s32.totalorder %s25, 1
    %p310 = por %p308, %p309
    %p311 = scmp.ne.s32.totalorder %s302, %s303
    %p312 = scmp.eq.s32.totalorder %s25, 0
    %p313 = por %p311, %p312
    %p314 = scmp.ne.s32.totalorder %s302, %s303
    %p315 = scmp.eq.s32.totalorder %s26, 1
    %p316 = por %p314, %p315
    %p318 = scmp.ne.s32.totalorder %s303, %s317
    %p319 = scmp.eq.s32.totalorder %s26, 0
    %p320 = por %p318, %p319
    %s322 = sadd.s32 %s321, 1
    %p325 = scmp.eq.s32.totalorder %s20, 1
    %p326 = scmp.ne.s32.totalorder %s321, %s323
    %p327 = scmp.eq.s32.totalorder %s20, 0
    %p328 = por %p326, %p327
    %p329 = scmp.ne.s32.totalorder %s321, %s323
    %p330 = scmp.eq.s32.totalorder %s25, 1
    %p331 = por %p329, %p330
    %p332 = scmp.ne.s32.totalorder %s323, %s324
    %p333 = scmp.eq.s32.totalorder %s25, 0
    %p334 = por %p332, %p333
    %p335 = scmp.ne.s32.totalorder %s323, %s324
    %p336 = scmp.eq.s32.totalorder %s26, 1
    %p337 = por %p335, %p336
    %p339 = scmp.ne.s32.totalorder %s324, %s338
    %p340 = scmp.eq.s32.totalorder %s26, 0
    %p341 = por %p339, %p340
    %s342 = ssub.s32 %s20, %s27
    %p343 = scmp.eq.s32.totalorder %s342, 0
    %s345 = sadd.s32 %s344, 1
    %s346 = scalar_select %p343, %s344, %s345
    %p349 = pneg %p343
    %p350 = scmp.eq.s32.totalorder %s20, 1
    %p351 = por %p349, %p350
    %p352 = scmp.ne.s32.totalorder %s344, %s347
    %p353 = scmp.eq.s32.totalorder %s20, 0
    %p354 = por %p352, %p353
    %p355 = scmp.ne.s32.totalorder %s344, %s347
    %p356 = scmp.eq.s32.totalorder %s25, 1
    %p357 = por %p355, %p356
    %p358 = scmp.ne.s32.totalorder %s347, %s348
    %p359 = scmp.eq.s32.totalorder %s25, 0
    %p360 = por %p358, %p359
    %p361 = scmp.ne.s32.totalorder %s347, %s348
    %p362 = scmp.eq.s32.totalorder %s26, 1
    %p363 = por %p361, %p362
    %p365 = scmp.ne.s32.totalorder %s348, %s364
    %p366 = scmp.eq.s32.totalorder %s26, 0
    %p367 = por %p365, %p366
    %p368 = scmp.le.s32.totalorder 1, %s20
    %p369 = scmp.lt.s32.totalorder %s20, 3
    %p370 = pnand %p368, %p369
    %p371 = pneg %p370
    // Predicated region
    $region9: #{transformer_decoder_layer_forward.8} parent=5 // pred_check
      _
    $region10: #{transformer_decoder_layer_forward.8} parent=5 // pred_check_branch
      %373 = sbr.rel (%p370) target = $region12
    $region11: #{transformer_decoder_layer_forward.8} parent=5 // pred_region
      %s374 = ssub.s32 %s20, 1
      // Predicated region
      $region13: #{transformer_decoder_layer_forward.8} parent=11 // pred_check
        %p375 = pneg %p145
      $region14: #{transformer_decoder_layer_forward.8} parent=11 // pred_check_branch
        %377 = sbr.rel (%p375) target = $region16
      $region15: #{transformer_decoder_layer_forward.8} parent=11 // pred_region
        _
      $region16: #{transformer_decoder_layer_forward.8} parent=11 // pred_fallthru
        _
      // Predicated region
      $region17: #{transformer_decoder_layer_forward.8} parent=11 // pred_check
        %p378 = pneg %p166
      $region18: #{transformer_decoder_layer_forward.8} parent=11 // pred_check_branch
        %380 = sbr.rel (%p378) target = $region20
      $region19: #{transformer_decoder_layer_forward.8} parent=11 // pred_region
        _
      $region20: #{transformer_decoder_layer_forward.8} parent=11 // pred_fallthru
        _
      // Predicated region
      $region21: #{transformer_decoder_layer_forward.8} parent=11 // pred_check
        %p381 = pneg %p187
      $region22: #{transformer_decoder_layer_forward.8} parent=11 // pred_check_branch
        %383 = sbr.rel (%p381) target = $region24
      $region23: #{transformer_decoder_layer_forward.8} parent=11 // pred_region
        _
      $region24: #{transformer_decoder_layer_forward.8} parent=11 // pred_fallthru
        _
      // Predicated region
      $region25: #{transformer_decoder_layer_forward.8} parent=11 // pred_check
        %p384 = pneg %p208
      $region26: #{transformer_decoder_layer_forward.8} parent=11 // pred_check_branch
        %386 = sbr.rel (%p384) target = $region28
      $region27: #{transformer_decoder_layer_forward.8} parent=11 // pred_region
        _
      $region28: #{transformer_decoder_layer_forward.8} parent=11 // pred_fallthru
        _
      // Predicated region
      $region29: #{transformer_decoder_layer_forward.8} parent=11 // pred_check
        %p387 = pneg %p229
      $region30: #{transformer_decoder_layer_forward.8} parent=11 // pred_check_branch
        %389 = sbr.rel (%p387) target = $region32
      $region31: #{transformer_decoder_layer_forward.8} parent=11 // pred_region
        _
      $region32: #{transformer_decoder_layer_forward.8} parent=11 // pred_fallthru
        _
      // Predicated region
      $region33: #{transformer_decoder_layer_forward.8} parent=11 // pred_check
        %p390 = pneg %p250
      $region34: #{transformer_decoder_layer_forward.8} parent=11 // pred_check_branch
        %392 = sbr.rel (%p390) target = $region36
      $region35: #{transformer_decoder_layer_forward.8} parent=11 // pred_region
        _
      $region36: #{transformer_decoder_layer_forward.8} parent=11 // pred_fallthru
        _
      // Predicated region
      $region37: #{transformer_decoder_layer_forward.8} parent=11 // pred_check
        %p393 = pneg %p271
      $region38: #{transformer_decoder_layer_forward.8} parent=11 // pred_check_branch
        %395 = sbr.rel (%p393) target = $region40
      $region39: #{transformer_decoder_layer_forward.8} parent=11 // pred_region
        _
      $region40: #{transformer_decoder_layer_forward.8} parent=11 // pred_fallthru
        _
      // Predicated region
      $region41: #{transformer_decoder_layer_forward.8} parent=11 // pred_check
        %p396 = pneg %p292
      $region42: #{transformer_decoder_layer_forward.8} parent=11 // pred_check_branch
        %398 = sbr.rel (%p396) target = $region44
      $region43: #{transformer_decoder_layer_forward.8} parent=11 // pred_region
        _
      $region44: #{transformer_decoder_layer_forward.8} parent=11 // pred_fallthru
        _
      // Predicated region
      $region45: #{transformer_decoder_layer_forward.8} parent=11 // pred_check
        %p399 = pneg %p313
      $region46: #{transformer_decoder_layer_forward.8} parent=11 // pred_check_branch
        %401 = sbr.rel (%p399) target = $region48
      $region47: #{transformer_decoder_layer_forward.8} parent=11 // pred_region
        _
      $region48: #{transformer_decoder_layer_forward.8} parent=11 // pred_fallthru
        _
      // Predicated region
      $region49: #{transformer_decoder_layer_forward.8} parent=11 // pred_check
        %p402 = pneg %p334
      $region50: #{transformer_decoder_layer_forward.8} parent=11 // pred_check_branch
        %404 = sbr.rel (%p402) target = $region52
      $region51: #{transformer_decoder_layer_forward.8} parent=11 // pred_region
        _
      $region52: #{transformer_decoder_layer_forward.8} parent=11 // pred_fallthru
        _
    $region12: #{transformer_decoder_layer_forward.8} parent=5 // pred_fallthru
      _
    %p405 = scmp.lt.s32.totalorder %s20, 2
    // Predicated region
    $region53: #{transformer_decoder_layer_forward.8} parent=5 // pred_check
      %p406 = pneg %p405
    $region54: #{transformer_decoder_layer_forward.8} parent=5 // pred_check_branch
      %408 = sbr.rel (%p406) target = $region56
    $region55: #{transformer_decoder_layer_forward.8} parent=5 // pred_region
      // Predicated region
      $region57: #{transformer_decoder_layer_forward.8} parent=55 // pred_check
        %p409 = pneg %p40
      $region58: #{transformer_decoder_layer_forward.8} parent=55 // pred_check_branch
        %411 = sbr.rel (%p409) target = $region60
      $region59: #{transformer_decoder_layer_forward.8} parent=55 // pred_region
        %p412 = scmp.lt.s32.totalorder %s20, 1
        %s413 = scalar_select %p412, %s20, 1
        %s414 = smul.addr %s413, 8
        %s415 = scalar_lea.vmem %s0, %s414
      $region60: #{transformer_decoder_layer_forward.8} parent=55 // pred_fallthru
        _
      // Predicated region
      $region61: #{transformer_decoder_layer_forward.8} parent=55 // pred_check
        %p416 = pneg %p66
      $region62: #{transformer_decoder_layer_forward.8} parent=55 // pred_check_branch
        %418 = sbr.rel (%p416) target = $region64
      $region63: #{transformer_decoder_layer_forward.8} parent=55 // pred_region
        %p419 = scmp.lt.s32.totalorder %s20, 1
        %s420 = scalar_select %p419, %s20, 1
        %s421 = smul.addr %s420, 2
        %s422 = smul.addr %s421, 8
        %s423 = scalar_lea.vmem %s1, %s422
      $region64: #{transformer_decoder_layer_forward.8} parent=55 // pred_fallthru
        _
      // Predicated region
      $region65: #{transformer_decoder_layer_forward.8} parent=55 // pred_check
        %p424 = pneg %p92
      $region66: #{transformer_decoder_layer_forward.8} parent=55 // pred_check_branch
        %426 = sbr.rel (%p424) target = $region68
      $region67: #{transformer_decoder_layer_forward.8} parent=55 // pred_region
        %p427 = scmp.lt.s32.totalorder %s20, 1
        %s428 = scalar_select %p427, %s20, 1
        %s429 = smul.addr %s428, 2
        %s430 = smul.addr %s429, 8
        %s431 = scalar_lea.vmem %s2, %s430
      $region68: #{transformer_decoder_layer_forward.8} parent=55 // pred_fallthru
        _
      // Predicated region
      $region69: #{transformer_decoder_layer_forward.8} parent=55 // pred_check
        %p432 = pneg %p118
      $region70: #{transformer_decoder_layer_forward.8} parent=55 // pred_check_branch
        %434 = sbr.rel (%p432) target = $region72
      $region71: #{transformer_decoder_layer_forward.8} parent=55 // pred_region
        %p435 = scmp.lt.s32.totalorder %s20, 1
        %s436 = scalar_select %p435, %s20, 1
        %s437 = smul.addr %s436, 8
        %s438 = scalar_lea.vmem %s3, %s437
      $region72: #{transformer_decoder_layer_forward.8} parent=55 // pred_fallthru
        _
    $region56: #{transformer_decoder_layer_forward.8} parent=5 // pred_fallthru
      _
    %p439 = scmp.le.s32.totalorder 1, %s20
    %p440 = scmp.lt.s32.totalorder %s20, 3
    %p441 = pnand %p439, %p440
    %p442 = pneg %p441
    // Predicated region
    $region73: #{transformer_decoder_layer_forward.8} parent=5 // pred_check
      _
    $region74: #{transformer_decoder_layer_forward.8} parent=5 // pred_check_branch
      %444 = sbr.rel (%p441) target = $region76
    $region75: #{transformer_decoder_layer_forward.8} parent=5 // pred_region
      %s445 = ssub.s32 %s20, 1
      %p446 = scmp.lt.s32.totalorder %s25, 1
      %s447 = scalar_select %p446, %s25, 1
      %s448 = smul.addr %s447, 8
      %s449 = scalar_lea.vmem %s0, %s448
      %p450 = pneg %p46
      %p451 = pneg %p43
      %p452 = scmp.lt.s32.totalorder %s25, 1
      %s453 = scalar_select %p452, %s25, 1
      %s454 = smul.addr %s453, 2
      %s455 = smul.addr %s454, 8
      %s456 = scalar_lea.vmem %s1, %s455
      %p457 = pneg %p72
      %p458 = pneg %p69
      %p459 = scmp.lt.s32.totalorder %s25, 1
      %s460 = scalar_select %p459, %s25, 1
      %s461 = smul.addr %s460, 2
      %s462 = smul.addr %s461, 8
      %s463 = scalar_lea.vmem %s2, %s462
      %p464 = pneg %p98
      %p465 = pneg %p95
      %p466 = scmp.lt.s32.totalorder %s25, 1
      %s467 = scalar_select %p466, %s25, 1
      %s468 = smul.addr %s467, 8
      %s469 = scalar_lea.vmem %s3, %s468
      %p470 = pneg %p124
      %p471 = pneg %p121
      %p472 = pneg %p145
      %p473 = pneg %p142
      %p474 = pneg %p166
      %p475 = pneg %p163
      %p476 = pneg %p187
      %p477 = pneg %p184
      %p478 = pneg %p208
      %p479 = pneg %p205
      %p480 = pneg %p229
      %p481 = pneg %p226
      %p482 = pneg %p250
      %p483 = pneg %p247
      %p484 = pneg %p271
      %p485 = pneg %p268
      %p486 = pneg %p292
      %p487 = pneg %p289
      %p488 = pneg %p313
      %p489 = pneg %p310
      %p490 = pneg %p334
      %p491 = pneg %p331
      %p492 = pneg %p360
      %p493 = pneg %p357
      %p494 = scmp.lt.s32.totalorder %s25, 1
      %s495 = scalar_select %p494, %s25, 1
      %s496 = smul.addr %s495, 8
      %s497 = scalar_lea.vmem %s14, %s496
      %p498 = scmp.lt.s32.totalorder %s25, 1
      %s499 = scalar_select %p498, %s25, 1
      %s500 = smul.addr %s499, 8
      %s501 = scalar_lea.vmem %s0, %s500
      %p502 = scmp.lt.s32.totalorder %s25, 1
      %s503 = scalar_select %p502, %s25, 1
      %s504 = smul.addr %s503, 2
      %s505 = smul.addr %s504, 8
      %s506 = scalar_lea.vmem %s1, %s505
      %p507 = scmp.lt.s32.totalorder %s25, 1
      %s508 = scalar_select %p507, %s25, 1
      %s509 = smul.addr %s508, 2
      %s510 = smul.addr %s509, 8
      %s511 = scalar_lea.vmem %s2, %s510
      %p512 = scmp.lt.s32.totalorder %s25, 1
      %s513 = scalar_select %p512, %s25, 1
      %s514 = smul.addr %s513, 8
      %s515 = scalar_lea.vmem %s3, %s514
      %p516 = scmp.lt.s32.totalorder %s25, 1
      %s517 = scalar_select %p516, %s25, 1
      %s518 = smul.addr %s517, 8
      %s519 = scalar_lea.vmem %s14, %s518
      %v521 = vld [vmem:[%s501] sm:$0xff]
      %v522 = vpack.c.bf16 %v521, %v521
      %v523 = vld [vmem:[%s506] sm:$0x1f]
      %v524 = vld [vmem:[%s506 + $0x8] sm:$0x1f]
      %v525 = vpack.c.bf16 %v523, %v523
      %v526 = vpack.c.bf16 %v524, %v524
      %v527 = vld [vmem:[%s511] sm:$0x1f]
      %v528 = vld [vmem:[%s511 + $0x8] sm:$0x1f]
      %v529 = vpack.c.bf16 %v527, %v527
      %v530 = vpack.c.bf16 %v528, %v528
      %v531 = vld [vmem:[%s4] sm:$0xf]
      %v532 = vld [vmem:[%s4 + $0x4] sm:$0xf]
      %v533 = vld [vmem:[%s4 + $0x8] sm:$0xf]
      %v534 = vld [vmem:[%s4 + $0xc] sm:$0xf]
      %v535 = vld [vmem:[%s5] sm:$0x1]
      %v537 = vlaneseq
      %v538 = vshrl.u32 %v537, 7
      %v539 = vsub.s32 0, %v538
      %v540 = vrot.slane %v535, %v539
      %v546 = vunpack.c.l.b16 %v531
      %v547 = vunpack.c.l.b16 %v532
      %v548 = vunpack.c.l.b16 %v533
      %v549 = vunpack.c.l.b16 %v534
      %v550 = vpack.c.b16 %v547, %v546
      %v551 = vpack.c.b16 %v549, %v548
      %vm554 = vcmask 261120
      %v556 = vsel %vm554, %v522, 0
      %558 = vmatprep.subr.bf16.mxu0 0
      %559 = vmatpush1.bf16.msra.mxu0 %v550
      %560 = vmatprep.subr.bf16.mxu0 0
      %561 = vmatpush1.bf16.msra.mxu0 %v551
      %562 = vmatprep.subr.bf16.mxu0 0
      %563 = vmatpush1.bf16.msra.mxu0 0
      %564 = vmatprep.subr.bf16.mxu0 0
      %565 = vmatpush1.bf16.msra.mxu0 0
      %566 = vmatprep.subr.bf16.mxu0 0
      %567 = vmatpush1.bf16.msra.mxu0 0
      %568 = vmatprep.subr.bf16.mxu0 0
      %569 = vmatpush1.bf16.msra.mxu0 0
      %570 = vmatprep.subr.bf16.mxu0 0
      %571 = vmatpush1.bf16.msra.mxu0 0
      %572 = vmatprep.subr.bf16.mxu0 0
      %573 = vmatpush1.bf16.msra.mxu0 0
      %574 = vmatprep.subr.bf16.mxu0 0
      %575 = vmatpush1.bf16.msra.mxu0 0
      %576 = vmatprep.subr.bf16.mxu0 0
      %577 = vmatpush1.bf16.msra.mxu0 0
      %578 = vmatprep.subr.bf16.mxu0 0
      %579 = vmatpush1.bf16.msra.mxu0 0
      %580 = vmatprep.subr.bf16.mxu0 0
      %581 = vmatpush1.bf16.msra.mxu0 0
      %582 = vmatprep.subr.bf16.mxu0 0
      %583 = vmatpush1.bf16.msra.mxu0 0
      %584 = vmatprep.subr.bf16.mxu0 0
      %585 = vmatpush1.bf16.msra.mxu0 0
      %586 = vmatprep.subr.bf16.mxu0 0
      %587 = vmatpush1.bf16.msra.mxu0 0
      %588 = vmatprep.subr.bf16.mxu0 0
      %589 = vmatpush1.bf16.msra.mxu0 0
      %590 = vmatprep.mubr.bf16.mxu0 0
      %591 = vmatmul.mubr.bf16.gmra.mrb[0].mxu0 %v556
      %v592 = vpop.f32.mrb[0].mxu0
      %v593 = vadd.f32 %v540, %v592
      %v594 = vpop.f32.mrb[0].mxu0
      %v595 = vpop.f32.mrb[0].mxu0
      %v596 = vpop.f32.mrb[0].mxu0
      %597 = vdwg.mxu0
      %v598 = vld [vmem:[%s6] sm:$0xf]
      %v599 = vld [vmem:[%s6 + $0x4] sm:$0xf]
      %v600 = vld [vmem:[%s6 + $0x8] sm:$0xf]
      %v601 = vld [vmem:[%s6 + $0xc] sm:$0xf]
      %v602 = vld [vmem:[%s6 + $0x10] sm:$0xf]
      %v603 = vld [vmem:[%s6 + $0x14] sm:$0xf]
      %v604 = vld [vmem:[%s6 + $0x18] sm:$0xf]
      %v605 = vld [vmem:[%s6 + $0x1c] sm:$0xf]
      %v606 = vld [vmem:[%s6 + $0x20] sm:$0xf]
      %v607 = vld [vmem:[%s6 + $0x24] sm:$0xf]
      %v608 = vld [vmem:[%s6 + $0x28] sm:$0xf]
      %v609 = vld [vmem:[%s6 + $0x2c] sm:$0xf]
      %v610 = vld [vmem:[%s6 + $0x30] sm:$0xf]
      %v611 = vld [vmem:[%s6 + $0x34] sm:$0xf]
      %v612 = vld [vmem:[%s6 + $0x38] sm:$0xf]
      %v613 = vld [vmem:[%s6 + $0x3c] sm:$0xf]
      %v614 = vld [vmem:[%s6 + $0x40] sm:$0xf]
      %v615 = vld [vmem:[%s6 + $0x44] sm:$0xf]
      %v616 = vld [vmem:[%s6 + $0x48] sm:$0xf]
      %v617 = vld [vmem:[%s6 + $0x4c] sm:$0xf]
      %v618 = vld [vmem:[%s6 + $0x50] sm:$0xf]
      %v619 = vld [vmem:[%s6 + $0x54] sm:$0xf]
      %v620 = vld [vmem:[%s6 + $0x58] sm:$0xf]
      %v621 = vld [vmem:[%s6 + $0x5c] sm:$0xf]
      %v622 = vld [vmem:[%s6 + $0x60] sm:$0xf]
      %v623 = vld [vmem:[%s6 + $0x64] sm:$0xf]
      %v624 = vld [vmem:[%s6 + $0x68] sm:$0xf]
      %v625 = vld [vmem:[%s6 + $0x6c] sm:$0xf]
      %v626 = vld [vmem:[%s6 + $0x70] sm:$0xf]
      %v627 = vld [vmem:[%s6 + $0x74] sm:$0xf]
      %v628 = vld [vmem:[%s6 + $0x78] sm:$0xf]
      %v629 = vld [vmem:[%s6 + $0x7c] sm:$0xf]
      %v630 = vld [vmem:[%s7] sm:$0x1]
      %v632 = vlaneseq
      %v633 = vshrl.u32 %v632, 7
      %v634 = vsub.s32 0, %v633
      %v635 = vrot.slane %v630, %v634
      %v669 = vunpack.c.l.b16 %v598
      %v670 = vunpack.c.l.b16 %v599
      %v671 = vunpack.c.l.b16 %v600
      %v672 = vunpack.c.l.b16 %v601
      %v673 = vunpack.c.l.b16 %v602
      %v674 = vunpack.c.l.b16 %v603
      %v675 = vunpack.c.l.b16 %v604
      %v676 = vunpack.c.l.b16 %v605
      %v677 = vunpack.c.l.b16 %v606
      %v678 = vunpack.c.l.b16 %v607
      %v679 = vunpack.c.l.b16 %v608
      %v680 = vunpack.c.l.b16 %v609
      %v681 = vunpack.c.l.b16 %v610
      %v682 = vunpack.c.l.b16 %v611
      %v683 = vunpack.c.l.b16 %v612
      %v684 = vunpack.c.l.b16 %v613
      %v685 = vunpack.c.l.b16 %v614
      %v686 = vunpack.c.l.b16 %v615
      %v687 = vunpack.c.l.b16 %v616
      %v688 = vunpack.c.l.b16 %v617
      %v689 = vunpack.c.l.b16 %v618
      %v690 = vunpack.c.l.b16 %v619
      %v691 = vunpack.c.l.b16 %v620
      %v692 = vunpack.c.l.b16 %v621
      %v693 = vunpack.c.l.b16 %v622
      %v694 = vunpack.c.l.b16 %v623
      %v695 = vunpack.c.l.b16 %v624
      %v696 = vunpack.c.l.b16 %v625
      %v697 = vunpack.c.l.b16 %v626
      %v698 = vunpack.c.l.b16 %v627
      %v699 = vunpack.c.l.b16 %v628
      %v700 = vunpack.c.l.b16 %v629
      %v701 = vpack.c.b16 %v670, %v669
      %v702 = vpack.c.b16 %v672, %v671
      %v703 = vpack.c.b16 %v674, %v673
      %v704 = vpack.c.b16 %v676, %v675
      %v705 = vpack.c.b16 %v678, %v677
      %v706 = vpack.c.b16 %v680, %v679
      %v707 = vpack.c.b16 %v682, %v681
      %v708 = vpack.c.b16 %v684, %v683
      %v709 = vpack.c.b16 %v686, %v685
      %v710 = vpack.c.b16 %v688, %v687
      %v711 = vpack.c.b16 %v690, %v689
      %v712 = vpack.c.b16 %v692, %v691
      %v713 = vpack.c.b16 %v694, %v693
      %v714 = vpack.c.b16 %v696, %v695
      %v715 = vpack.c.b16 %v698, %v697
      %v716 = vpack.c.b16 %v700, %v699
      %733 = vmatprep.subr.bf16.mxu0 0
      %734 = vmatpush1.bf16.msra.mxu0 %v701
      %735 = vmatprep.subr.bf16.mxu0 0
      %736 = vmatpush1.bf16.msra.mxu0 %v702
      %737 = vmatprep.subr.bf16.mxu0 0
      %738 = vmatpush1.bf16.msra.mxu0 %v703
      %739 = vmatprep.subr.bf16.mxu0 0
      %740 = vmatpush1.bf16.msra.mxu0 %v704
      %741 = vmatprep.subr.bf16.mxu0 0
      %742 = vmatpush1.bf16.msra.mxu0 %v705
      %743 = vmatprep.subr.bf16.mxu0 0
      %744 = vmatpush1.bf16.msra.mxu0 %v706
      %745 = vmatprep.subr.bf16.mxu0 0
      %746 = vmatpush1.bf16.msra.mxu0 %v707
      %747 = vmatprep.subr.bf16.mxu0 0
      %748 = vmatpush1.bf16.msra.mxu0 %v708
      %749 = vmatprep.subr.bf16.mxu0 0
      %750 = vmatpush1.bf16.msra.mxu0 %v709
      %751 = vmatprep.subr.bf16.mxu0 0
      %752 = vmatpush1.bf16.msra.mxu0 %v710
      %753 = vmatprep.subr.bf16.mxu0 0
      %754 = vmatpush1.bf16.msra.mxu0 %v711
      %755 = vmatprep.subr.bf16.mxu0 0
      %756 = vmatpush1.bf16.msra.mxu0 %v712
      %757 = vmatprep.subr.bf16.mxu0 0
      %758 = vmatpush1.bf16.msra.mxu0 %v713
      %759 = vmatprep.subr.bf16.mxu0 0
      %760 = vmatpush1.bf16.msra.mxu0 %v714
      %761 = vmatprep.subr.bf16.mxu0 0
      %762 = vmatpush1.bf16.msra.mxu0 %v715
      %763 = vmatprep.subr.bf16.mxu0 0
      %764 = vmatpush1.bf16.msra.mxu0 %v716
      %765 = vmatprep.mubr.bf16.mxu0 %v526
      %766 = vmatmul.mubr.bf16.gmra.mrb[0].mxu0 %v525
      %v767 = vpop.f32.mrb[0].mxu0
      %v768 = vadd.f32 %v635, %v767
      %v769 = vpop.f32.mrb[0].mxu0
      %v770 = vpop.f32.mrb[0].mxu0
      %v771 = vpop.f32.mrb[0].mxu0
      %772 = vdwg.mxu0
      %v773 = vld [vmem:[%s8] sm:$0xf]
      %v774 = vld [vmem:[%s8 + $0x4] sm:$0xf]
      %v775 = vld [vmem:[%s8 + $0x8] sm:$0xf]
      %v776 = vld [vmem:[%s8 + $0xc] sm:$0xf]
      %v777 = vld [vmem:[%s8 + $0x10] sm:$0xf]
      %v778 = vld [vmem:[%s8 + $0x14] sm:$0xf]
      %v779 = vld [vmem:[%s8 + $0x18] sm:$0xf]
      %v780 = vld [vmem:[%s8 + $0x1c] sm:$0xf]
      %v781 = vld [vmem:[%s8 + $0x20] sm:$0xf]
      %v782 = vld [vmem:[%s8 + $0x24] sm:$0xf]
      %v783 = vld [vmem:[%s8 + $0x28] sm:$0xf]
      %v784 = vld [vmem:[%s8 + $0x2c] sm:$0xf]
      %v785 = vld [vmem:[%s8 + $0x30] sm:$0xf]
      %v786 = vld [vmem:[%s8 + $0x34] sm:$0xf]
      %v787 = vld [vmem:[%s8 + $0x38] sm:$0xf]
      %v788 = vld [vmem:[%s8 + $0x3c] sm:$0xf]
      %v789 = vld [vmem:[%s8 + $0x40] sm:$0xf]
      %v790 = vld [vmem:[%s8 + $0x44] sm:$0xf]
      %v791 = vld [vmem:[%s8 + $0x48] sm:$0xf]
      %v792 = vld [vmem:[%s8 + $0x4c] sm:$0xf]
      %v793 = vld [vmem:[%s8 + $0x50] sm:$0xf]
      %v794 = vld [vmem:[%s8 + $0x54] sm:$0xf]
      %v795 = vld [vmem:[%s8 + $0x58] sm:$0xf]
      %v796 = vld [vmem:[%s8 + $0x5c] sm:$0xf]
      %v797 = vld [vmem:[%s8 + $0x60] sm:$0xf]
      %v798 = vld [vmem:[%s8 + $0x64] sm:$0xf]
      %v799 = vld [vmem:[%s8 + $0x68] sm:$0xf]
      %v800 = vld [vmem:[%s8 + $0x6c] sm:$0xf]
      %v801 = vld [vmem:[%s8 + $0x70] sm:$0xf]
      %v802 = vld [vmem:[%s8 + $0x74] sm:$0xf]
      %v803 = vld [vmem:[%s8 + $0x78] sm:$0xf]
      %v804 = vld [vmem:[%s8 + $0x7c] sm:$0xf]
      %v805 = vld [vmem:[%s9] sm:$0x1]
      %v807 = vlaneseq
      %v808 = vshrl.u32 %v807, 7
      %v809 = vsub.s32 0, %v808
      %v810 = vrot.slane %v805, %v809
      %v844 = vunpack.c.l.b16 %v773
      %v845 = vunpack.c.l.b16 %v774
      %v846 = vunpack.c.l.b16 %v775
      %v847 = vunpack.c.l.b16 %v776
      %v848 = vunpack.c.l.b16 %v777
      %v849 = vunpack.c.l.b16 %v778
      %v850 = vunpack.c.l.b16 %v779
      %v851 = vunpack.c.l.b16 %v780
      %v852 = vunpack.c.l.b16 %v781
      %v853 = vunpack.c.l.b16 %v782
      %v854 = vunpack.c.l.b16 %v783
      %v855 = vunpack.c.l.b16 %v784
      %v856 = vunpack.c.l.b16 %v785
      %v857 = vunpack.c.l.b16 %v786
      %v858 = vunpack.c.l.b16 %v787
      %v859 = vunpack.c.l.b16 %v788
      %v860 = vunpack.c.l.b16 %v789
      %v861 = vunpack.c.l.b16 %v790
      %v862 = vunpack.c.l.b16 %v791
      %v863 = vunpack.c.l.b16 %v792
      %v864 = vunpack.c.l.b16 %v793
      %v865 = vunpack.c.l.b16 %v794
      %v866 = vunpack.c.l.b16 %v795
      %v867 = vunpack.c.l.b16 %v796
      %v868 = vunpack.c.l.b16 %v797
      %v869 = vunpack.c.l.b16 %v798
      %v870 = vunpack.c.l.b16 %v799
      %v871 = vunpack.c.l.b16 %v800
      %v872 = vunpack.c.l.b16 %v801
      %v873 = vunpack.c.l.b16 %v802
      %v874 = vunpack.c.l.b16 %v803
      %v875 = vunpack.c.l.b16 %v804
      %v876 = vpack.c.b16 %v845, %v844
      %v877 = vpack.c.b16 %v847, %v846
      %v878 = vpack.c.b16 %v849, %v848
      %v879 = vpack.c.b16 %v851, %v850
      %v880 = vpack.c.b16 %v853, %v852
      %v881 = vpack.c.b16 %v855, %v854
      %v882 = vpack.c.b16 %v857, %v856
      %v883 = vpack.c.b16 %v859, %v858
      %v884 = vpack.c.b16 %v861, %v860
      %v885 = vpack.c.b16 %v863, %v862
      %v886 = vpack.c.b16 %v865, %v864
      %v887 = vpack.c.b16 %v867, %v866
      %v888 = vpack.c.b16 %v869, %v868
      %v889 = vpack.c.b16 %v871, %v870
      %v890 = vpack.c.b16 %v873, %v872
      %v891 = vpack.c.b16 %v875, %v874
      %908 = vmatprep.subr.bf16.mxu0 0
      %909 = vmatpush1.bf16.msra.mxu0 %v876
      %910 = vmatprep.subr.bf16.mxu0 0
      %911 = vmatpush1.bf16.msra.mxu0 %v877
      %912 = vmatprep.subr.bf16.mxu0 0
      %913 = vmatpush1.bf16.msra.mxu0 %v878
      %914 = vmatprep.subr.bf16.mxu0 0
      %915 = vmatpush1.bf16.msra.mxu0 %v879
      %916 = vmatprep.subr.bf16.mxu0 0
      %917 = vmatpush1.bf16.msra.mxu0 %v880
      %918 = vmatprep.subr.bf16.mxu0 0
      %919 = vmatpush1.bf16.msra.mxu0 %v881
      %920 = vmatprep.subr.bf16.mxu0 0
      %921 = vmatpush1.bf16.msra.mxu0 %v882
      %922 = vmatprep.subr.bf16.mxu0 0
      %923 = vmatpush1.bf16.msra.mxu0 %v883
      %924 = vmatprep.subr.bf16.mxu0 0
      %925 = vmatpush1.bf16.msra.mxu0 %v884
      %926 = vmatprep.subr.bf16.mxu0 0
      %927 = vmatpush1.bf16.msra.mxu0 %v885
      %928 = vmatprep.subr.bf16.mxu0 0
      %929 = vmatpush1.bf16.msra.mxu0 %v886
      %930 = vmatprep.subr.bf16.mxu0 0
      %931 = vmatpush1.bf16.msra.mxu0 %v887
      %932 = vmatprep.subr.bf16.mxu0 0
      %933 = vmatpush1.bf16.msra.mxu0 %v888
      %934 = vmatprep.subr.bf16.mxu0 0
      %935 = vmatpush1.bf16.msra.mxu0 %v889
      %936 = vmatprep.subr.bf16.mxu0 0
      %937 = vmatpush1.bf16.msra.mxu0 %v890
      %938 = vmatprep.subr.bf16.mxu0 0
      %939 = vmatpush1.bf16.msra.mxu0 %v891
      %940 = vmatprep.mubr.bf16.mxu0 %v530
      %941 = vmatmul.mubr.bf16.gmra.mrb[0].mxu0 %v529
      %v942 = vpop.f32.mrb[0].mxu0
      %v943 = vadd.f32 %v810, %v942
      %v944 = vpop.f32.mrb[0].mxu0
      %v945 = vpop.f32.mrb[0].mxu0
      %v946 = vpop.f32.mrb[0].mxu0
      %947 = vdwg.mxu0
      %v948 = vpack.c.bf16 %v593, %v593
      %v949 = vpack.c.bf16 %v768, %v768
      %v950 = vpack.c.bf16 %v943, %v943
      %vm951 = vcmask 64512
      %v953 = vsel %vm951, %v948, 0
      %v956 = vsel %vm951, %v949, 0
      %958 = vmatprep.subr.bf16.mxu0 0
      %959 = vmatpush1.bf16.xpose.msra.mxu0 %v956
      %960 = vmatprep.subr.bf16.mxu0 0
      %961 = vmatpush1.bf16.xpose.msra.mxu0 0
      %962 = vmatprep.subr.bf16.mxu0 0
      %963 = vmatpush1.bf16.xpose.msra.mxu0 0
      %964 = vmatprep.subr.bf16.mxu0 0
      %965 = vmatpush1.bf16.xpose.msra.mxu0 0
      %966 = vmatprep.subr.bf16.mxu0 0
      %967 = vmatpush1.bf16.xpose.msra.mxu0 0
      %968 = vmatprep.subr.bf16.mxu0 0
      %969 = vmatpush1.bf16.xpose.msra.mxu0 0
      %970 = vmatprep.subr.bf16.mxu0 0
      %971 = vmatpush1.bf16.xpose.msra.mxu0 0
      %972 = vmatprep.subr.bf16.mxu0 0
      %973 = vmatpush1.bf16.xpose.msra.mxu0 0
      %974 = vmatprep.subr.bf16.mxu0 0
      %975 = vmatpush1.bf16.xpose.msra.mxu0 0
      %976 = vmatprep.subr.bf16.mxu0 0
      %977 = vmatpush1.bf16.xpose.msra.mxu0 0
      %978 = vmatprep.subr.bf16.mxu0 0
      %979 = vmatpush1.bf16.xpose.msra.mxu0 0
      %980 = vmatprep.subr.bf16.mxu0 0
      %981 = vmatpush1.bf16.xpose.msra.mxu0 0
      %982 = vmatprep.subr.bf16.mxu0 0
      %983 = vmatpush1.bf16.xpose.msra.mxu0 0
      %984 = vmatprep.subr.bf16.mxu0 0
      %985 = vmatpush1.bf16.xpose.msra.mxu0 0
      %986 = vmatprep.subr.bf16.mxu0 0
      %987 = vmatpush1.bf16.xpose.msra.mxu0 0
      %988 = vmatprep.subr.bf16.mxu0 0
      %989 = vmatpush1.bf16.xpose.msra.mxu0 0
      %990 = vmatprep.mubr.bf16.mxu0 0
      %991 = vmatmul.mubr.bf16.gmra.mrb[0].mxu0 %v953
      %v992 = vpop.f32.mrb[0].mxu0
      %v993 = vadd.f32 0.0, %v992
      %v994 = vpop.f32.mrb[0].mxu0
      %v995 = vpop.f32.mrb[0].mxu0
      %v996 = vpop.f32.mrb[0].mxu0
      %997 = vdwg.mxu0
      %vm998 = vcmask 39936
      %v999 = vsel %vm998, %v993, -inf
      %1000 = vmax.xlane.f32.xlu0 %v999
      %v1001 = vpop.xlane.xlu0 %1000
      %v1002 = vsub.f32 %v993, %v1001
      %v1003 = vmul.f32 %v1002, 1.442695
      %v1004 = vpow.pop %v1003
      %v1005 = vsel %vm998, %v1004, 0.0
      %1006 = vadd.xlane.f32.xlu0 %v1005
      %v1007 = vpop.xlane.xlu0 %1006
      %v1008 = vrcp.pop %v1007
      %v1009 = vmul.f32 %v1004, %v1008
      %v1010 = vpack.c.bf16 %v1009, %v1009
      %v1012 = vsel %vm998, %v1010, 0
      %vm1014 = vcmask 1041408
      %vm1015 = vcmask 1042432
      %v1016 = vsel %vm1014, 4294967295, 65535
      %v1017 = vsel %vm1015, %v1016, 0
      %v1019 = vand.u32 %v950, %v1017
      %1021 = vmatprep.subr.bf16.mxu0 0
      %1022 = vmatpush1.bf16.msra.mxu0 %v1019
      %1023 = vmatprep.subr.bf16.mxu0 0
      %1024 = vmatpush1.bf16.msra.mxu0 0
      %1025 = vmatprep.subr.bf16.mxu0 0
      %1026 = vmatpush1.bf16.msra.mxu0 0
      %1027 = vmatprep.subr.bf16.mxu0 0
      %1028 = vmatpush1.bf16.msra.mxu0 0
      %1029 = vmatprep.subr.bf16.mxu0 0
      %1030 = vmatpush1.bf16.msra.mxu0 0
      %1031 = vmatprep.subr.bf16.mxu0 0
      %1032 = vmatpush1.bf16.msra.mxu0 0
      %1033 = vmatprep.subr.bf16.mxu0 0
      %1034 = vmatpush1.bf16.msra.mxu0 0
      %1035 = vmatprep.subr.bf16.mxu0 0
      %1036 = vmatpush1.bf16.msra.mxu0 0
      %1037 = vmatprep.subr.bf16.mxu0 0
      %1038 = vmatpush1.bf16.msra.mxu0 0
      %1039 = vmatprep.subr.bf16.mxu0 0
      %1040 = vmatpush1.bf16.msra.mxu0 0
      %1041 = vmatprep.subr.bf16.mxu0 0
      %1042 = vmatpush1.bf16.msra.mxu0 0
      %1043 = vmatprep.subr.bf16.mxu0 0
      %1044 = vmatpush1.bf16.msra.mxu0 0
      %1045 = vmatprep.subr.bf16.mxu0 0
      %1046 = vmatpush1.bf16.msra.mxu0 0
      %1047 = vmatprep.subr.bf16.mxu0 0
      %1048 = vmatpush1.bf16.msra.mxu0 0
      %1049 = vmatprep.subr.bf16.mxu0 0
      %1050 = vmatpush1.bf16.msra.mxu0 0
      %1051 = vmatprep.subr.bf16.mxu0 0
      %1052 = vmatpush1.bf16.msra.mxu0 0
      %1053 = vmatprep.mubr.bf16.mxu0 0
      %1054 = vmatmul.mubr.bf16.gmra.mrb[0].mxu0 %v1012
      %v1055 = vpop.f32.mrb[0].mxu0
      %v1056 = vadd.f32 0.0, %v1055
      %v1057 = vpop.f32.mrb[0].mxu0
      %v1058 = vpop.f32.mrb[0].mxu0
      %v1059 = vpop.f32.mrb[0].mxu0
      %1060 = vdwg.mxu0
      %v1061 = vld [vmem:[%s10] sm:$0xf]
      %v1062 = vpack.c.bf16 %v1056, %v1056
      %1064 = vrot.lane.b32.xlu0 %v948, 120
      %v1065 = vpop.permute.xlu0 %1064
      %1067 = vrot.lane.b32.xlu0 %v949, 120
      %v1068 = vpop.permute.xlu0 %1067
      %v1070 = vsel %vm951, %v1065, 0
      %v1073 = vsel %vm951, %v1068, 0
      %1075 = vmatprep.subr.bf16.mxu0 0
      %1076 = vmatpush1.bf16.xpose.msra.mxu0 %v1073
      %1077 = vmatprep.subr.bf16.mxu0 0
      %1078 = vmatpush1.bf16.xpose.msra.mxu0 0
      %1079 = vmatprep.subr.bf16.mxu0 0
      %1080 = vmatpush1.bf16.xpose.msra.mxu0 0
      %1081 = vmatprep.subr.bf16.mxu0 0
      %1082 = vmatpush1.bf16.xpose.msra.mxu0 0
      %1083 = vmatprep.subr.bf16.mxu0 0
      %1084 = vmatpush1.bf16.xpose.msra.mxu0 0
      %1085 = vmatprep.subr.bf16.mxu0 0
      %1086 = vmatpush1.bf16.xpose.msra.mxu0 0
      %1087 = vmatprep.subr.bf16.mxu0 0
      %1088 = vmatpush1.bf16.xpose.msra.mxu0 0
      %1089 = vmatprep.subr.bf16.mxu0 0
      %1090 = vmatpush1.bf16.xpose.msra.mxu0 0
      %1091 = vmatprep.subr.bf16.mxu0 0
      %1092 = vmatpush1.bf16.xpose.msra.mxu0 0
      %1093 = vmatprep.subr.bf16.mxu0 0
      %1094 = vmatpush1.bf16.xpose.msra.mxu0 0
      %1095 = vmatprep.subr.bf16.mxu0 0
      %1096 = vmatpush1.bf16.xpose.msra.mxu0 0
      %1097 = vmatprep.subr.bf16.mxu0 0
      %1098 = vmatpush1.bf16.xpose.msra.mxu0 0
      %1099 = vmatprep.subr.bf16.mxu0 0
      %1100 = vmatpush1.bf16.xpose.msra.mxu0 0
      %1101 = vmatprep.subr.bf16.mxu0 0
      %1102 = vmatpush1.bf16.xpose.msra.mxu0 0
      %1103 = vmatprep.subr.bf16.mxu0 0
      %1104 = vmatpush1.bf16.xpose.msra.mxu0 0
      %1105 = vmatprep.subr.bf16.mxu0 0
      %1106 = vmatpush1.bf16.xpose.msra.mxu0 0
      %1107 = vmatprep.mubr.bf16.mxu0 0
      %1108 = vmatmul.mubr.bf16.gmra.mrb[0].mxu0 %v1070
      %v1109 = vpop.f32.mrb[0].mxu0
      %v1110 = vadd.f32 0.0, %v1109
      %v1111 = vpop.f32.mrb[0].mxu0
      %v1112 = vpop.f32.mrb[0].mxu0
      %v1113 = vpop.f32.mrb[0].mxu0
      %1114 = vdwg.mxu0
      %v1115 = vsel %vm998, %v1110, -inf
      %1116 = vmax.xlane.f32.xlu0 %v1115
      %v1117 = vpop.xlane.xlu0 %1116
      %v1118 = vsub.f32 %v1110, %v1117
      %v1119 = vmul.f32 %v1118, 1.442695
      %v1120 = vpow.pop %v1119
      %v1121 = vsel %vm998, %v1120, 0.0
      %1122 = vadd.xlane.f32.xlu0 %v1121
      %v1123 = vpop.xlane.xlu0 %1122
      %v1124 = vrcp.pop %v1123
      %v1125 = vmul.f32 %v1120, %v1124
      %v1126 = vpack.c.bf16 %v1125, %v1125
      %1128 = vrot.lane.b32.xlu0 %v950, 120
      %v1129 = vpop.permute.xlu0 %1128
      %v1131 = vsel %vm998, %v1126, 0
      %v1134 = vand.u32 %v1129, %v1017
      %1136 = vmatprep.subr.bf16.mxu0 0
      %1137 = vmatpush1.bf16.msra.mxu0 %v1134
      %1138 = vmatprep.subr.bf16.mxu0 0
      %1139 = vmatpush1.bf16.msra.mxu0 0
      %1140 = vmatprep.subr.bf16.mxu0 0
      %1141 = vmatpush1.bf16.msra.mxu0 0
      %1142 = vmatprep.subr.bf16.mxu0 0
      %1143 = vmatpush1.bf16.msra.mxu0 0
      %1144 = vmatprep.subr.bf16.mxu0 0
      %1145 = vmatpush1.bf16.msra.mxu0 0
      %1146 = vmatprep.subr.bf16.mxu0 0
      %1147 = vmatpush1.bf16.msra.mxu0 0
      %1148 = vmatprep.subr.bf16.mxu0 0
      %1149 = vmatpush1.bf16.msra.mxu0 0
      %1150 = vmatprep.subr.bf16.mxu0 0
      %1151 = vmatpush1.bf16.msra.mxu0 0
      %1152 = vmatprep.subr.bf16.mxu0 0
      %1153 = vmatpush1.bf16.msra.mxu0 0
      %1154 = vmatprep.subr.bf16.mxu0 0
      %1155 = vmatpush1.bf16.msra.mxu0 0
      %1156 = vmatprep.subr.bf16.mxu0 0
      %1157 = vmatpush1.bf16.msra.mxu0 0
      %1158 = vmatprep.subr.bf16.mxu0 0
      %1159 = vmatpush1.bf16.msra.mxu0 0
      %1160 = vmatprep.subr.bf16.mxu0 0
      %1161 = vmatpush1.bf16.msra.mxu0 0
      %1162 = vmatprep.subr.bf16.mxu0 0
      %1163 = vmatpush1.bf16.msra.mxu0 0
      %1164 = vmatprep.subr.bf16.mxu0 0
      %1165 = vmatpush1.bf16.msra.mxu0 0
      %1166 = vmatprep.subr.bf16.mxu0 0
      %1167 = vmatpush1.bf16.msra.mxu0 0
      %1168 = vmatprep.mubr.bf16.mxu0 0
      %1169 = vmatmul.mubr.bf16.gmra.mrb[0].mxu0 %v1131
      %v1170 = vpop.f32.mrb[0].mxu0
      %v1171 = vadd.f32 0.0, %v1170
      %v1172 = vpop.f32.mrb[0].mxu0
      %v1173 = vpop.f32.mrb[0].mxu0
      %v1174 = vpop.f32.mrb[0].mxu0
      %1175 = vdwg.mxu0
      %v1176 = vld [vmem:[%s10 + $0x4] sm:$0xf]
      %v1177 = vpack.c.bf16 %v1171, %v1171
      %v1179 = vsel %vm951, %v1177, 0
      %vm1181 = vcmask 1043456
      %v1183 = vsel %vm1181, %v1176, 0
      %1185 = vmatprep.subr.bf16.mxu0 0
      %1186 = vmatpush1.bf16.msra.mxu0 %v1183
      %1187 = vmatprep.subr.bf16.mxu0 0
      %1188 = vmatpush1.bf16.msra.mxu0 0
      %1189 = vmatprep.subr.bf16.mxu0 0
      %1190 = vmatpush1.bf16.msra.mxu0 0
      %1191 = vmatprep.subr.bf16.mxu0 0
      %1192 = vmatpush1.bf16.msra.mxu0 0
      %1193 = vmatprep.subr.bf16.mxu0 0
      %1194 = vmatpush1.bf16.msra.mxu0 0
      %1195 = vmatprep.subr.bf16.mxu0 0
      %1196 = vmatpush1.bf16.msra.mxu0 0
      %1197 = vmatprep.subr.bf16.mxu0 0
      %1198 = vmatpush1.bf16.msra.mxu0 0
      %1199 = vmatprep.subr.bf16.mxu0 0
      %1200 = vmatpush1.bf16.msra.mxu0 0
      %1201 = vmatprep.subr.bf16.mxu0 0
      %1202 = vmatpush1.bf16.msra.mxu0 0
      %1203 = vmatprep.subr.bf16.mxu0 0
      %1204 = vmatpush1.bf16.msra.mxu0 0
      %1205 = vmatprep.subr.bf16.mxu0 0
      %1206 = vmatpush1.bf16.msra.mxu0 0
      %1207 = vmatprep.subr.bf16.mxu0 0
      %1208 = vmatpush1.bf16.msra.mxu0 0
      %1209 = vmatprep.subr.bf16.mxu0 0
      %1210 = vmatpush1.bf16.msra.mxu0 0
      %1211 = vmatprep.subr.bf16.mxu0 0
      %1212 = vmatpush1.bf16.msra.mxu0 0
      %1213 = vmatprep.subr.bf16.mxu0 0
      %1214 = vmatpush1.bf16.msra.mxu0 0
      %1215 = vmatprep.subr.bf16.mxu0 0
      %1216 = vmatpush1.bf16.msra.mxu0 0
      %1217 = vmatprep.mubr.bf16.mxu0 0
      %1218 = vmatmul.mubr.bf16.gmra.mrb[0].mxu0 %v1179
      %v1219 = vpop.f32.mrb[0].mxu0
      %v1220 = vadd.f32 0.0, %v1219
      %v1221 = vpop.f32.mrb[0].mxu0
      %v1222 = vpop.f32.mrb[0].mxu0
      %v1223 = vpop.f32.mrb[0].mxu0
      %1224 = vdwg.mxu0
      %v1226 = vsel %vm951, %v1062, 0
      %v1229 = vsel %vm1181, %v1061, 0
      %1231 = vmatprep.subr.bf16.mxu0 0
      %1232 = vmatpush1.bf16.msra.mxu0 %v1229
      %1233 = vmatprep.subr.bf16.mxu0 0
      %1234 = vmatpush1.bf16.msra.mxu0 0
      %1235 = vmatprep.subr.bf16.mxu0 0
      %1236 = vmatpush1.bf16.msra.mxu0 0
      %1237 = vmatprep.subr.bf16.mxu0 0
      %1238 = vmatpush1.bf16.msra.mxu0 0
      %1239 = vmatprep.subr.bf16.mxu0 0
      %1240 = vmatpush1.bf16.msra.mxu0 0
      %1241 = vmatprep.subr.bf16.mxu0 0
      %1242 = vmatpush1.bf16.msra.mxu0 0
      %1243 = vmatprep.subr.bf16.mxu0 0
      %1244 = vmatpush1.bf16.msra.mxu0 0
      %1245 = vmatprep.subr.bf16.mxu0 0
      %1246 = vmatpush1.bf16.msra.mxu0 0
      %1247 = vmatprep.subr.bf16.mxu0 0
      %1248 = vmatpush1.bf16.msra.mxu0 0
      %1249 = vmatprep.subr.bf16.mxu0 0
      %1250 = vmatpush1.bf16.msra.mxu0 0
      %1251 = vmatprep.subr.bf16.mxu0 0
      %1252 = vmatpush1.bf16.msra.mxu0 0
      %1253 = vmatprep.subr.bf16.mxu0 0
      %1254 = vmatpush1.bf16.msra.mxu0 0
      %1255 = vmatprep.subr.bf16.mxu0 0
      %1256 = vmatpush1.bf16.msra.mxu0 0
      %1257 = vmatprep.subr.bf16.mxu0 0
      %1258 = vmatpush1.bf16.msra.mxu0 0
      %1259 = vmatprep.subr.bf16.mxu0 0
      %1260 = vmatpush1.bf16.msra.mxu0 0
      %1261 = vmatprep.subr.bf16.mxu0 0
      %1262 = vmatpush1.bf16.msra.mxu0 0
      %1263 = vmatprep.mubr.bf16.mxu0 0
      %1264 = vmatmul.mubr.bf16.gmra.mrb[0].mxu0 %v1226
      %v1265 = vpop.f32.mrb[0].mxu0
      %v1266 = vadd.f32 %v1220, %v1265
      %v1267 = vpop.f32.mrb[0].mxu0
      %v1268 = vpop.f32.mrb[0].mxu0
      %v1269 = vpop.f32.mrb[0].mxu0
      %1270 = vdwg.mxu0
      %1271 = vrot.lane.b32.xlu0 %v948, 112
      %v1272 = vpop.permute.xlu0 %1271
      %1273 = vrot.lane.b32.xlu0 %v949, 112
      %v1274 = vpop.permute.xlu0 %1273
      %v1276 = vsel %vm951, %v1272, 0
      %v1279 = vsel %vm951, %v1274, 0
      %1281 = vmatprep.subr.bf16.mxu0 0
      %1282 = vmatpush1.bf16.xpose.msra.mxu0 %v1279
      %1283 = vmatprep.subr.bf16.mxu0 0
      %1284 = vmatpush1.bf16.xpose.msra.mxu0 0
      %1285 = vmatprep.subr.bf16.mxu0 0
      %1286 = vmatpush1.bf16.xpose.msra.mxu0 0
      %1287 = vmatprep.subr.bf16.mxu0 0
      %1288 = vmatpush1.bf16.xpose.msra.mxu0 0
      %1289 = vmatprep.subr.bf16.mxu0 0
      %1290 = vmatpush1.bf16.xpose.msra.mxu0 0
      %1291 = vmatprep.subr.bf16.mxu0 0
      %1292 = vmatpush1.bf16.xpose.msra.mxu0 0
      %1293 = vmatprep.subr.bf16.mxu0 0
      %1294 = vmatpush1.bf16.xpose.msra.mxu0 0
      %1295 = vmatprep.subr.bf16.mxu0 0
      %1296 = vmatpush1.bf16.xpose.msra.mxu0 0
      %1297 = vmatprep.subr.bf16.mxu0 0
      %1298 = vmatpush1.bf16.xpose.msra.mxu0 0
      %1299 = vmatprep.subr.bf16.mxu0 0
      %1300 = vmatpush1.bf16.xpose.msra.mxu0 0
      %1301 = vmatprep.subr.bf16.mxu0 0
      %1302 = vmatpush1.bf16.xpose.msra.mxu0 0
      %1303 = vmatprep.subr.bf16.mxu0 0
      %1304 = vmatpush1.bf16.xpose.msra.mxu0 0
      %1305 = vmatprep.subr.bf16.mxu0 0
      %1306 = vmatpush1.bf16.xpose.msra.mxu0 0
      %1307 = vmatprep.subr.bf16.mxu0 0
      %1308 = vmatpush1.bf16.xpose.msra.mxu0 0
      %1309 = vmatprep.subr.bf16.mxu0 0
      %1310 = vmatpush1.bf16.xpose.msra.mxu0 0
      %1311 = vmatprep.subr.bf16.mxu0 0
      %1312 = vmatpush1.bf16.xpose.msra.mxu0 0
      %1313 = vmatprep.mubr.bf16.mxu0 0
      %1314 = vmatmul.mubr.bf16.gmra.mrb[0].mxu0 %v1276
      %v1315 = vpop.f32.mrb[0].mxu0
      %v1316 = vadd.f32 0.0, %v1315
      %v1317 = vpop.f32.mrb[0].mxu0
      %v1318 = vpop.f32.mrb[0].mxu0
      %v1319 = vpop.f32.mrb[0].mxu0
      %1320 = vdwg.mxu0
      %v1321 = vsel %vm998, %v1316, -inf
      %1322 = vmax.xlane.f32.xlu0 %v1321
      %v1323 = vpop.xlane.xlu0 %1322
      %v1324 = vsub.f32 %v1316, %v1323
      %v1325 = vmul.f32 %v1324, 1.442695
      %v1326 = vpow.pop %v1325
      %v1327 = vsel %vm998, %v1326, 0.0
      %1328 = vadd.xlane.f32.xlu0 %v1327
      %v1329 = vpop.xlane.xlu0 %1328
      %v1330 = vrcp.pop %v1329
      %v1331 = vmul.f32 %v1326, %v1330
      %v1332 = vpack.c.bf16 %v1331, %v1331
      %1333 = vrot.lane.b32.xlu0 %v950, 112
      %v1334 = vpop.permute.xlu0 %1333
      %v1336 = vsel %vm998, %v1332, 0
      %v1339 = vand.u32 %v1334, %v1017
      %1341 = vmatprep.subr.bf16.mxu0 0
      %1342 = vmatpush1.bf16.msra.mxu0 %v1339
      %1343 = vmatprep.subr.bf16.mxu0 0
      %1344 = vmatpush1.bf16.msra.mxu0 0
      %1345 = vmatprep.subr.bf16.mxu0 0
      %1346 = vmatpush1.bf16.msra.mxu0 0
      %1347 = vmatprep.subr.bf16.mxu0 0
      %1348 = vmatpush1.bf16.msra.mxu0 0
      %1349 = vmatprep.subr.bf16.mxu0 0
      %1350 = vmatpush1.bf16.msra.mxu0 0
      %1351 = vmatprep.subr.bf16.mxu0 0
      %1352 = vmatpush1.bf16.msra.mxu0 0
      %1353 = vmatprep.subr.bf16.mxu0 0
      %1354 = vmatpush1.bf16.msra.mxu0 0
      %1355 = vmatprep.subr.bf16.mxu0 0
      %1356 = vmatpush1.bf16.msra.mxu0 0
      %1357 = vmatprep.subr.bf16.mxu0 0
      %1358 = vmatpush1.bf16.msra.mxu0 0
      %1359 = vmatprep.subr.bf16.mxu0 0
      %1360 = vmatpush1.bf16.msra.mxu0 0
      %1361 = vmatprep.subr.bf16.mxu0 0
      %1362 = vmatpush1.bf16.msra.mxu0 0
      %1363 = vmatprep.subr.bf16.mxu0 0
      %1364 = vmatpush1.bf16.msra.mxu0 0
      %1365 = vmatprep.subr.bf16.mxu0 0
      %1366 = vmatpush1.bf16.msra.mxu0 0
      %1367 = vmatprep.subr.bf16.mxu0 0
      %1368 = vmatpush1.bf16.msra.mxu0 0
      %1369 = vmatprep.subr.bf16.mxu0 0
      %1370 = vmatpush1.bf16.msra.mxu0 0
      %1371 = vmatprep.subr.bf16.mxu0 0
      %1372 = vmatpush1.bf16.msra.mxu0 0
      %1373 = vmatprep.mubr.bf16.mxu0 0
      %1374 = vmatmul.mubr.bf16.gmra.mrb[0].mxu0 %v1336
      %v1375 = vpop.f32.mrb[0].mxu0
      %v1376 = vadd.f32 0.0, %v1375
      %v1377 = vpop.f32.mrb[0].mxu0
      %v1378 = vpop.f32.mrb[0].mxu0
      %v1379 = vpop.f32.mrb[0].mxu0
      %1380 = vdwg.mxu0
      %v1381 = vld [vmem:[%s10 + $0x8] sm:$0xf]
      %v1382 = vpack.c.bf16 %v1376, %v1376
      %v1384 = vsel %vm951, %v1382, 0
      %v1387 = vsel %vm1181, %v1381, 0
      %1389 = vmatprep.subr.bf16.mxu0 0
      %1390 = vmatpush1.bf16.msra.mxu0 %v1387
      %1391 = vmatprep.subr.bf16.mxu0 0
      %1392 = vmatpush1.bf16.msra.mxu0 0
      %1393 = vmatprep.subr.bf16.mxu0 0
      %1394 = vmatpush1.bf16.msra.mxu0 0
      %1395 = vmatprep.subr.bf16.mxu0 0
      %1396 = vmatpush1.bf16.msra.mxu0 0
      %1397 = vmatprep.subr.bf16.mxu0 0
      %1398 = vmatpush1.bf16.msra.mxu0 0
      %1399 = vmatprep.subr.bf16.mxu0 0
      %1400 = vmatpush1.bf16.msra.mxu0 0
      %1401 = vmatprep.subr.bf16.mxu0 0
      %1402 = vmatpush1.bf16.msra.mxu0 0
      %1403 = vmatprep.subr.bf16.mxu0 0
      %1404 = vmatpush1.bf16.msra.mxu0 0
      %1405 = vmatprep.subr.bf16.mxu0 0
      %1406 = vmatpush1.bf16.msra.mxu0 0
      %1407 = vmatprep.subr.bf16.mxu0 0
      %1408 = vmatpush1.bf16.msra.mxu0 0
      %1409 = vmatprep.subr.bf16.mxu0 0
      %1410 = vmatpush1.bf16.msra.mxu0 0
      %1411 = vmatprep.subr.bf16.mxu0 0
      %1412 = vmatpush1.bf16.msra.mxu0 0
      %1413 = vmatprep.subr.bf16.mxu0 0
      %1414 = vmatpush1.bf16.msra.mxu0 0
      %1415 = vmatprep.subr.bf16.mxu0 0
      %1416 = vmatpush1.bf16.msra.mxu0 0
      %1417 = vmatprep.subr.bf16.mxu0 0
      %1418 = vmatpush1.bf16.msra.mxu0 0
      %1419 = vmatprep.subr.bf16.mxu0 0
      %1420 = vmatpush1.bf16.msra.mxu0 0
      %1421 = vmatprep.mubr.bf16.mxu0 0
      %1422 = vmatmul.mubr.bf16.gmra.mrb[0].mxu0 %v1384
      %v1423 = vpop.f32.mrb[0].mxu0
      %v1424 = vadd.f32 0.0, %v1423
      %v1425 = vpop.f32.mrb[0].mxu0
      %v1426 = vpop.f32.mrb[0].mxu0
      %v1427 = vpop.f32.mrb[0].mxu0
      %1428 = vdwg.mxu0
      %v1429 = vadd.f32 %v1266, %v1424
      %1430 = vrot.lane.b32.xlu0 %v948, 104
      %v1431 = vpop.permute.xlu0 %1430
      %1432 = vrot.lane.b32.xlu0 %v949, 104
      %v1433 = vpop.permute.xlu0 %1432
      %v1435 = vsel %vm951, %v1431, 0
      %v1438 = vsel %vm951, %v1433, 0
      %1440 = vmatprep.subr.bf16.mxu0 0
      %1441 = vmatpush1.bf16.xpose.msra.mxu0 %v1438
      %1442 = vmatprep.subr.bf16.mxu0 0
      %1443 = vmatpush1.bf16.xpose.msra.mxu0 0
      %1444 = vmatprep.subr.bf16.mxu0 0
      %1445 = vmatpush1.bf16.xpose.msra.mxu0 0
      %1446 = vmatprep.subr.bf16.mxu0 0
      %1447 = vmatpush1.bf16.xpose.msra.mxu0 0
      %1448 = vmatprep.subr.bf16.mxu0 0
      %1449 = vmatpush1.bf16.xpose.msra.mxu0 0
      %1450 = vmatprep.subr.bf16.mxu0 0
      %1451 = vmatpush1.bf16.xpose.msra.mxu0 0
      %1452 = vmatprep.subr.bf16.mxu0 0
      %1453 = vmatpush1.bf16.xpose.msra.mxu0 0
      %1454 = vmatprep.subr.bf16.mxu0 0
      %1455 = vmatpush1.bf16.xpose.msra.mxu0 0
      %1456 = vmatprep.subr.bf16.mxu0 0
      %1457 = vmatpush1.bf16.xpose.msra.mxu0 0
      %1458 = vmatprep.subr.bf16.mxu0 0
      %1459 = vmatpush1.bf16.xpose.msra.mxu0 0
      %1460 = vmatprep.subr.bf16.mxu0 0
      %1461 = vmatpush1.bf16.xpose.msra.mxu0 0
      %1462 = vmatprep.subr.bf16.mxu0 0
      %1463 = vmatpush1.bf16.xpose.msra.mxu0 0
      %1464 = vmatprep.subr.bf16.mxu0 0
      %1465 = vmatpush1.bf16.xpose.msra.mxu0 0
      %1466 = vmatprep.subr.bf16.mxu0 0
      %1467 = vmatpush1.bf16.xpose.msra.mxu0 0
      %1468 = vmatprep.subr.bf16.mxu0 0
      %1469 = vmatpush1.bf16.xpose.msra.mxu0 0
      %1470 = vmatprep.subr.bf16.mxu0 0
      %1471 = vmatpush1.bf16.xpose.msra.mxu0 0
      %1472 = vmatprep.mubr.bf16.mxu0 0
      %1473 = vmatmul.mubr.bf16.gmra.mrb[0].mxu0 %v1435
      %v1474 = vpop.f32.mrb[0].mxu0
      %v1475 = vadd.f32 0.0, %v1474
      %v1476 = vpop.f32.mrb[0].mxu0
      %v1477 = vpop.f32.mrb[0].mxu0
      %v1478 = vpop.f32.mrb[0].mxu0
      %1479 = vdwg.mxu0
      %v1480 = vsel %vm998, %v1475, -inf
      %1481 = vmax.xlane.f32.xlu0 %v1480
      %v1482 = vpop.xlane.xlu0 %1481
      %v1483 = vsub.f32 %v1475, %v1482
      %v1484 = vmul.f32 %v1483, 1.442695
      %v1485 = vpow.pop %v1484
      %v1486 = vsel %vm998, %v1485, 0.0
      %1487 = vadd.xlane.f32.xlu0 %v1486
      %v1488 = vpop.xlane.xlu0 %1487
      %v1489 = vrcp.pop %v1488
      %v1490 = vmul.f32 %v1485, %v1489
      %v1491 = vpack.c.bf16 %v1490, %v1490
      %1492 = vrot.lane.b32.xlu0 %v950, 104
      %v1493 = vpop.permute.xlu0 %1492
      %v1495 = vsel %vm998, %v1491, 0
      %v1498 = vand.u32 %v1493, %v1017
      %1500 = vmatprep.subr.bf16.mxu0 0
      %1501 = vmatpush1.bf16.msra.mxu0 %v1498
      %1502 = vmatprep.subr.bf16.mxu0 0
      %1503 = vmatpush1.bf16.msra.mxu0 0
      %1504 = vmatprep.subr.bf16.mxu0 0
      %1505 = vmatpush1.bf16.msra.mxu0 0
      %1506 = vmatprep.subr.bf16.mxu0 0
      %1507 = vmatpush1.bf16.msra.mxu0 0
      %1508 = vmatprep.subr.bf16.mxu0 0
      %1509 = vmatpush1.bf16.msra.mxu0 0
      %1510 = vmatprep.subr.bf16.mxu0 0
      %1511 = vmatpush1.bf16.msra.mxu0 0
      %1512 = vmatprep.subr.bf16.mxu0 0
      %1513 = vmatpush1.bf16.msra.mxu0 0
      %1514 = vmatprep.subr.bf16.mxu0 0
      %1515 = vmatpush1.bf16.msra.mxu0 0
      %1516 = vmatprep.subr.bf16.mxu0 0
      %1517 = vmatpush1.bf16.msra.mxu0 0
      %1518 = vmatprep.subr.bf16.mxu0 0
      %1519 = vmatpush1.bf16.msra.mxu0 0
      %1520 = vmatprep.subr.bf16.mxu0 0
      %1521 = vmatpush1.bf16.msra.mxu0 0
      %1522 = vmatprep.subr.bf16.mxu0 0
      %1523 = vmatpush1.bf16.msra.mxu0 0
      %1524 = vmatprep.subr.bf16.mxu0 0
      %1525 = vmatpush1.bf16.msra.mxu0 0
      %1526 = vmatprep.subr.bf16.mxu0 0
      %1527 = vmatpush1.bf16.msra.mxu0 0
      %1528 = vmatprep.subr.bf16.mxu0 0
      %1529 = vmatpush1.bf16.msra.mxu0 0
      %1530 = vmatprep.subr.bf16.mxu0 0
      %1531 = vmatpush1.bf16.msra.mxu0 0
      %1532 = vmatprep.mubr.bf16.mxu0 0
      %1533 = vmatmul.mubr.bf16.gmra.mrb[0].mxu0 %v1495
      %v1534 = vpop.f32.mrb[0].mxu0
      %v1535 = vadd.f32 0.0, %v1534
      %v1536 = vpop.f32.mrb[0].mxu0
      %v1537 = vpop.f32.mrb[0].mxu0
      %v1538 = vpop.f32.mrb[0].mxu0
      %1539 = vdwg.mxu0
      %v1540 = vld [vmem:[%s10 + $0xc] sm:$0xf]
      %v1541 = vpack.c.bf16 %v1535, %v1535
      %v1543 = vsel %vm951, %v1541, 0
      %v1546 = vsel %vm1181, %v1540, 0
      %1548 = vmatprep.subr.bf16.mxu0 0
      %1549 = vmatpush1.bf16.msra.mxu0 %v1546
      %1550 = vmatprep.subr.bf16.mxu0 0
      %1551 = vmatpush1.bf16.msra.mxu0 0
      %1552 = vmatprep.subr.bf16.mxu0 0
      %1553 = vmatpush1.bf16.msra.mxu0 0
      %1554 = vmatprep.subr.bf16.mxu0 0
      %1555 = vmatpush1.bf16.msra.mxu0 0
      %1556 = vmatprep.subr.bf16.mxu0 0
      %1557 = vmatpush1.bf16.msra.mxu0 0
      %1558 = vmatprep.subr.bf16.mxu0 0
      %1559 = vmatpush1.bf16.msra.mxu0 0
      %1560 = vmatprep.subr.bf16.mxu0 0
      %1561 = vmatpush1.bf16.msra.mxu0 0
      %1562 = vmatprep.subr.bf16.mxu0 0
      %1563 = vmatpush1.bf16.msra.mxu0 0
      %1564 = vmatprep.subr.bf16.mxu0 0
      %1565 = vmatpush1.bf16.msra.mxu0 0
      %1566 = vmatprep.subr.bf16.mxu0 0
      %1567 = vmatpush1.bf16.msra.mxu0 0
      %1568 = vmatprep.subr.bf16.mxu0 0
      %1569 = vmatpush1.bf16.msra.mxu0 0
      %1570 = vmatprep.subr.bf16.mxu0 0
      %1571 = vmatpush1.bf16.msra.mxu0 0
      %1572 = vmatprep.subr.bf16.mxu0 0
      %1573 = vmatpush1.bf16.msra.mxu0 0
      %1574 = vmatprep.subr.bf16.mxu0 0
      %1575 = vmatpush1.bf16.msra.mxu0 0
      %1576 = vmatprep.subr.bf16.mxu0 0
      %1577 = vmatpush1.bf16.msra.mxu0 0
      %1578 = vmatprep.subr.bf16.mxu0 0
      %1579 = vmatpush1.bf16.msra.mxu0 0
      %1580 = vmatprep.mubr.bf16.mxu0 0
      %1581 = vmatmul.mubr.bf16.gmra.mrb[0].mxu0 %v1543
      %v1582 = vpop.f32.mrb[0].mxu0
      %v1583 = vadd.f32 0.0, %v1582
      %v1584 = vpop.f32.mrb[0].mxu0
      %v1585 = vpop.f32.mrb[0].mxu0
      %v1586 = vpop.f32.mrb[0].mxu0
      %1587 = vdwg.mxu0
      %v1588 = vadd.f32 %v1429, %v1583
      %v1589 = vld [vmem:[%s11] sm:$0x1]
      %v1591 = vlaneseq
      %v1592 = vshrl.u32 %v1591, 7
      %v1593 = vsub.s32 0, %v1592
      %v1594 = vrot.slane %v1589, %v1593
      %v1596 = vadd.f32 %v1588, %v1594
      %v1597 = vld [vmem:[%s515] sm:$0xff]
      %v1598 = vadd.f32 %v1597, %v1596
      %v1599 = vld [vmem:[%s12] sm:$0x1]
      %v1600 = vld [vmem:[%s13] sm:$0x1]
      %v1601 = vsel %vm554, %v1598, 0.0
      %1602 = vadd.xlane.f32.xlu0 %v1601
      %v1603 = vpop.xlane.xlu0 %1602
      %v1604 = vrcp.pop 32.0
      %v1605 = vmul.f32 %v1603, %v1604
      %v1606 = vsub.f32 %v1598, %v1605
      %v1607 = vmul.f32 %v1606, %v1606
      %v1608 = vsel %vm554, %v1607, 0.0
      %1609 = vadd.xlane.f32.xlu0 %v1608
      %v1610 = vpop.xlane.xlu0 %1609
      %v1611 = vmul.f32 %v1610, %v1604
      %v1612 = vadd.f32 %v1611, 1e-05
      %v1613 = vrsqrt.pop %v1612
      %v1614 = vmul.f32 %v1606, %v1613
      %v1616 = vlaneseq
      %v1617 = vshrl.u32 %v1616, 7
      %v1618 = vsub.s32 0, %v1617
      %v1619 = vrot.slane %v1599, %v1618
      %v1621 = vmul.f32 %v1614, %v1619
      %v1623 = vlaneseq
      %v1624 = vshrl.u32 %v1623, 7
      %v1625 = vsub.s32 0, %v1624
      %v1626 = vrot.slane %v1600, %v1625
      %v1628 = vadd.f32 %v1621, %v1626
      %1629 = vst.msk [vmem:[%s519] sm:$0xff] %vm554, %v1628
      %p1630 = scmp.lt.s32.totalorder %s25, 1
      %s1631 = scalar_select %p1630, %s25, 1
      %s1632 = smul.addr %s1631, 8
      %s1633 = scalar_lea.vmem %s14, %s1632
      // Predicated region
      $region77: #{transformer_decoder_layer_forward.8} parent=75 // pred_check
        %p1634 = pneg %p357
      $region78: #{transformer_decoder_layer_forward.8} parent=75 // pred_check_branch
        %1636 = sbr.rel (%p1634) target = $region80
      $region79: #{transformer_decoder_layer_forward.8} parent=75 // pred_region
        _
      $region80: #{transformer_decoder_layer_forward.8} parent=75 // pred_fallthru
        _
    $region76: #{transformer_decoder_layer_forward.8} parent=5 // pred_fallthru
      _
    %p1637 = scmp.le.s32.totalorder 2, %s20
    // Predicated region
    $region81: #{transformer_decoder_layer_forward.8} parent=5 // pred_check
      %p1638 = pneg %p1637
    $region82: #{transformer_decoder_layer_forward.8} parent=5 // pred_check_branch
      %1640 = sbr.rel (%p1638) target = $region84
    $region83: #{transformer_decoder_layer_forward.8} parent=5 // pred_region
      %s1641 = ssub.s32 %s20, 2
      // Predicated region
      $region85: #{transformer_decoder_layer_forward.8} parent=83 // pred_check
        %p1642 = pneg %p363
      $region86: #{transformer_decoder_layer_forward.8} parent=83 // pred_check_branch
        %1644 = sbr.rel (%p1642) target = $region88
      $region87: #{transformer_decoder_layer_forward.8} parent=83 // pred_region
        %p1645 = scmp.lt.s32.totalorder %s26, 1
        %s1646 = scalar_select %p1645, %s26, 1
        %s1647 = smul.addr %s1646, 8
        %s1648 = scalar_lea.vmem %s14, %s1647
      $region88: #{transformer_decoder_layer_forward.8} parent=83 // pred_fallthru
        _
    $region84: #{transformer_decoder_layer_forward.8} parent=5 // pred_fallthru
      _
  $region6: #{transformer_decoder_layer_forward.8} parent=0 // loop_footer
    %s24 = sadd.s32 1, %s20
  $region7: #{transformer_decoder_layer_forward.8} parent=0 // loop_footer_branch
    %19 = sbr.rel target = $region3
  $region8: #{transformer_decoder_layer_forward.8} parent=0 // loop_exit
    _

// kernel: transformer_decoder_layer_forward.9
$region0: #{transformer_decoder_layer_forward.9}
  #allocation0 [shape = 'u32[]', space=smem, size = 0x4, offset = 0x4, fixed_abs, tag = 'smem constant byte address 0x4 - core index']
  #allocation1 [shape = 'u32[144,128]{1,0:T(1,128)}', space=vmem, size = 0x12000, scoped, tag = 'internal scratch']
  %s0 = inlined_call_operand.vmem [shape: f32[16,32], index: 0, kind: input, shape index: {}]
  %s1 = inlined_call_operand.vmem [shape: bf16[32,64], index: 1, kind: input, shape index: {}]
  %s2 = inlined_call_operand.vmem [shape: f32[1,64], index: 2, kind: input, shape index: {}]
  %s3 = inlined_call_operand.vmem [shape: bf16[64,32], index: 3, kind: input, shape index: {}]
  %s4 = inlined_call_operand.vmem [shape: f32[1,32], index: 4, kind: input, shape index: {}]
  %s5 = inlined_call_operand.vmem [shape: f32[1,32], index: 5, kind: input, shape index: {}]
  %s6 = inlined_call_operand.vmem [shape: f32[1,32], index: 6, kind: input, shape index: {}]
  %s7 = inlined_call_operand.hbm [shape: f32[16,32], index: 7, kind: output, shape index: {}]
  %s8 = sld [smem:[#allocation0]]
  $region61: #{transformer_decoder_layer_forward.9} parent=0
    _
  %s10 = ssub.s32 1, %s8
  %s11 = scalar_select 0, %s10, %s8
  $region1: #{transformer_decoder_layer_forward.9} parent=0
    #allocation2 [shape = 'u8[8192]{0}', space=vmem, size = 0x2000, scoped, tag = 'output window, operand 0']
    #allocation3 [shape = 's32[2]{0}', space=sflag, size = 0x8, scoped, tag = 'scoped memory for transformer_decoder_layer_forward.9']
    %12 = vsyncpa [#allocation3], 0
    %s13 = scalar_lea.sflag [#allocation3], 1
    %14 = vsyncpa %s13, 0
    loop: start=0, step=1, limit=4
    $region2: #{transformer_decoder_layer_forward.9} parent=1 // loop_pre_header
      _
    $region3: #{transformer_decoder_layer_forward.9} parent=1 // loop_header
      %s16 = sphi 0, %s20
      %p17 = scmp.ge.s32.totalorder %s16, 4
      %s26 = sphi 0, %s28
      %s29 = sphi 0, %s26
      %s30 = sphi 0, %s29
      %s46 = sphi 0, %s30
      %s50 = sphi 0, %s50
      %s52 = sphi 0, %s50
      %s53 = sphi 0, %s52
      %s67 = sphi 0, %s53
      %s71 = sphi 0, %s71
      %s73 = sphi 0, %s71
      %s74 = sphi 0, %s73
      %s88 = sphi 0, %s74
      %s92 = sphi 0, %s92
      %s94 = sphi 0, %s92
      %s95 = sphi 0, %s94
      %s109 = sphi 0, %s95
      %s113 = sphi 0, %s113
      %s115 = sphi 0, %s113
      %s116 = sphi 0, %s115
      %s130 = sphi 0, %s116
      %s134 = sphi 0, %s134
      %s136 = sphi 0, %s134
      %s137 = sphi 0, %s136
      %s151 = sphi 0, %s137
      %s155 = sphi 0, %s155
      %s157 = sphi 0, %s155
      %s158 = sphi 0, %s157
      %s172 = sphi 0, %s158
      %s178 = sphi 0, %s180
      %s181 = sphi 0, %s178
      %s182 = sphi 0, %s181
      %s198 = sphi 0, %s182
    $region4: #{transformer_decoder_layer_forward.9} parent=1 // loop_header_branch
      %19 = sbr.rel (%p17) target = $region8
    $region5: #{transformer_decoder_layer_forward.9} parent=1 // loop_body
      %s21 = ssub.s32 %s16, 1
      %s22 = ssub.s32 %s16, 2
      %s23 = sadd.s32 %s16, 1
      %s24 = ssub.s32 %s16, %s23
      %p25 = scmp.eq.s32.totalorder %s24, 0
      %s27 = sadd.s32 %s26, 1
      %s28 = scalar_select %p25, %s26, %s27
      %p31 = pneg %p25
      %p32 = scmp.eq.s32.totalorder %s16, 1
      %p33 = por %p31, %p32
      %p34 = scmp.ne.s32.totalorder %s26, %s29
      %p35 = scmp.eq.s32.totalorder %s16, 0
      %p36 = por %p34, %p35
      %p37 = scmp.ne.s32.totalorder %s26, %s29
      %p38 = scmp.eq.s32.totalorder %s21, 1
      %p39 = por %p37, %p38
      %p40 = scmp.ne.s32.totalorder %s29, %s30
      %p41 = scmp.eq.s32.totalorder %s21, 0
      %p42 = por %p40, %p41
      %p43 = scmp.ne.s32.totalorder %s29, %s30
      %p44 = scmp.eq.s32.totalorder %s22, 1
      %p45 = por %p43, %p44
      %p47 = scmp.ne.s32.totalorder %s30, %s46
      %p48 = scmp.eq.s32.totalorder %s22, 0
      %p49 = por %p47, %p48
      %s51 = sadd.s32 %s50, 1
      %p54 = scmp.eq.s32.totalorder %s16, 1
      %p55 = scmp.ne.s32.totalorder %s50, %s52
      %p56 = scmp.eq.s32.totalorder %s16, 0
      %p57 = por %p55, %p56
      %p58 = scmp.ne.s32.totalorder %s50, %s52
      %p59 = scmp.eq.s32.totalorder %s21, 1
      %p60 = por %p58, %p59
      %p61 = scmp.ne.s32.totalorder %s52, %s53
      %p62 = scmp.eq.s32.totalorder %s21, 0
      %p63 = por %p61, %p62
      %p64 = scmp.ne.s32.totalorder %s52, %s53
      %p65 = scmp.eq.s32.totalorder %s22, 1
      %p66 = por %p64, %p65
      %p68 = scmp.ne.s32.totalorder %s53, %s67
      %p69 = scmp.eq.s32.totalorder %s22, 0
      %p70 = por %p68, %p69
      %s72 = sadd.s32 %s71, 1
      %p75 = scmp.eq.s32.totalorder %s16, 1
      %p76 = scmp.ne.s32.totalorder %s71, %s73
      %p77 = scmp.eq.s32.totalorder %s16, 0
      %p78 = por %p76, %p77
      %p79 = scmp.ne.s32.totalorder %s71, %s73
      %p80 = scmp.eq.s32.totalorder %s21, 1
      %p81 = por %p79, %p80
      %p82 = scmp.ne.s32.totalorder %s73, %s74
      %p83 = scmp.eq.s32.totalorder %s21, 0
      %p84 = por %p82, %p83
      %p85 = scmp.ne.s32.totalorder %s73, %s74
      %p86 = scmp.eq.s32.totalorder %s22, 1
      %p87 = por %p85, %p86
      %p89 = scmp.ne.s32.totalorder %s74, %s88
      %p90 = scmp.eq.s32.totalorder %s22, 0
      %p91 = por %p89, %p90
      %s93 = sadd.s32 %s92, 1
      %p96 = scmp.eq.s32.totalorder %s16, 1
      %p97 = scmp.ne.s32.totalorder %s92, %s94
      %p98 = scmp.eq.s32.totalorder %s16, 0
      %p99 = por %p97, %p98
      %p100 = scmp.ne.s32.totalorder %s92, %s94
      %p101 = scmp.eq.s32.totalorder %s21, 1
      %p102 = por %p100, %p101
      %p103 = scmp.ne.s32.totalorder %s94, %s95
      %p104 = scmp.eq.s32.totalorder %s21, 0
      %p105 = por %p103, %p104
      %p106 = scmp.ne.s32.totalorder %s94, %s95
      %p107 = scmp.eq.s32.totalorder %s22, 1
      %p108 = por %p106, %p107
      %p110 = scmp.ne.s32.totalorder %s95, %s109
      %p111 = scmp.eq.s32.totalorder %s22, 0
      %p112 = por %p110, %p111
      %s114 = sadd.s32 %s113, 1
      %p117 = scmp.eq.s32.totalorder %s16, 1
      %p118 = scmp.ne.s32.totalorder %s113, %s115
      %p119 = scmp.eq.s32.totalorder %s16, 0
      %p120 = por %p118, %p119
      %p121 = scmp.ne.s32.totalorder %s113, %s115
      %p122 = scmp.eq.s32.totalorder %s21, 1
      %p123 = por %p121, %p122
      %p124 = scmp.ne.s32.totalorder %s115, %s116
      %p125 = scmp.eq.s32.totalorder %s21, 0
      %p126 = por %p124, %p125
      %p127 = scmp.ne.s32.totalorder %s115, %s116
      %p128 = scmp.eq.s32.totalorder %s22, 1
      %p129 = por %p127, %p128
      %p131 = scmp.ne.s32.totalorder %s116, %s130
      %p132 = scmp.eq.s32.totalorder %s22, 0
      %p133 = por %p131, %p132
      %s135 = sadd.s32 %s134, 1
      %p138 = scmp.eq.s32.totalorder %s16, 1
      %p139 = scmp.ne.s32.totalorder %s134, %s136
      %p140 = scmp.eq.s32.totalorder %s16, 0
      %p141 = por %p139, %p140
      %p142 = scmp.ne.s32.totalorder %s134, %s136
      %p143 = scmp.eq.s32.totalorder %s21, 1
      %p144 = por %p142, %p143
      %p145 = scmp.ne.s32.totalorder %s136, %s137
      %p146 = scmp.eq.s32.totalorder %s21, 0
      %p147 = por %p145, %p146
      %p148 = scmp.ne.s32.totalorder %s136, %s137
      %p149 = scmp.eq.s32.totalorder %s22, 1
      %p150 = por %p148, %p149
      %p152 = scmp.ne.s32.totalorder %s137, %s151
      %p153 = scmp.eq.s32.totalorder %s22, 0
      %p154 = por %p152, %p153
      %s156 = sadd.s32 %s155, 1
      %p159 = scmp.eq.s32.totalorder %s16, 1
      %p160 = scmp.ne.s32.totalorder %s155, %s157
      %p161 = scmp.eq.s32.totalorder %s16, 0
      %p162 = por %p160, %p161
      %p163 = scmp.ne.s32.totalorder %s155, %s157
      %p164 = scmp.eq.s32.totalorder %s21, 1
      %p165 = por %p163, %p164
      %p166 = scmp.ne.s32.totalorder %s157, %s158
      %p167 = scmp.eq.s32.totalorder %s21, 0
      %p168 = por %p166, %p167
      %p169 = scmp.ne.s32.totalorder %s157, %s158
      %p170 = scmp.eq.s32.totalorder %s22, 1
      %p171 = por %p169, %p170
      %p173 = scmp.ne.s32.totalorder %s158, %s172
      %p174 = scmp.eq.s32.totalorder %s22, 0
      %p175 = por %p173, %p174
      %s176 = ssub.s32 %s16, %s23
      %p177 = scmp.eq.s32.totalorder %s176, 0
      %s179 = sadd.s32 %s178, 1
      %s180 = scalar_select %p177, %s178, %s179
      %p183 = pneg %p177
      %p184 = scmp.eq.s32.totalorder %s16, 1
      %p185 = por %p183, %p184
      %p186 = scmp.ne.s32.totalorder %s178, %s181
      %p187 = scmp.eq.s32.totalorder %s16, 0
      %p188 = por %p186, %p187
      %p189 = scmp.ne.s32.totalorder %s178, %s181
      %p190 = scmp.eq.s32.totalorder %s21, 1
      %p191 = por %p189, %p190
      %p192 = scmp.ne.s32.totalorder %s181, %s182
      %p193 = scmp.eq.s32.totalorder %s21, 0
      %p194 = por %p192, %p193
      %p195 = scmp.ne.s32.totalorder %s181, %s182
      %p196 = scmp.eq.s32.totalorder %s22, 1
      %p197 = por %p195, %p196
      %p199 = scmp.ne.s32.totalorder %s182, %s198
      %p200 = scmp.eq.s32.totalorder %s22, 0
      %p201 = por %p199, %p200
      %p202 = scmp.le.s32.totalorder 1, %s16
      %p203 = scmp.lt.s32.totalorder %s16, 3
      %p204 = pnand %p202, %p203
      %p205 = pneg %p204
      // Predicated region
      $region9: #{transformer_decoder_layer_forward.9} parent=5 // pred_check
        _
      $region10: #{transformer_decoder_layer_forward.9} parent=5 // pred_check_branch
        %207 = sbr.rel (%p204) target = $region12
      $region11: #{transformer_decoder_layer_forward.9} parent=5 // pred_region
        %s208 = ssub.s32 %s16, 1
        // Predicated region
        $region13: #{transformer_decoder_layer_forward.9} parent=11 // pred_check
          %p209 = pneg %p63
        $region14: #{transformer_decoder_layer_forward.9} parent=11 // pred_check_branch
          %211 = sbr.rel (%p209) target = $region16
        $region15: #{transformer_decoder_layer_forward.9} parent=11 // pred_region
          _
        $region16: #{transformer_decoder_layer_forward.9} parent=11 // pred_fallthru
          _
        // Predicated region
        $region17: #{transformer_decoder_layer_forward.9} parent=11 // pred_check
          %p212 = pneg %p84
        $region18: #{transformer_decoder_layer_forward.9} parent=11 // pred_check_branch
          %214 = sbr.rel (%p212) target = $region20
        $region19: #{transformer_decoder_layer_forward.9} parent=11 // pred_region
          _
        $region20: #{transformer_decoder_layer_forward.9} parent=11 // pred_fallthru
          _
        // Predicated region
        $region21: #{transformer_decoder_layer_forward.9} parent=11 // pred_check
          %p215 = pneg %p105
        $region22: #{transformer_decoder_layer_forward.9} parent=11 // pred_check_branch
          %217 = sbr.rel (%p215) target = $region24
        $region23: #{transformer_decoder_layer_forward.9} parent=11 // pred_region
          _
        $region24: #{transformer_decoder_layer_forward.9} parent=11 // pred_fallthru
          _
        // Predicated region
        $region25: #{transformer_decoder_layer_forward.9} parent=11 // pred_check
          %p218 = pneg %p126
        $region26: #{transformer_decoder_layer_forward.9} parent=11 // pred_check_branch
          %220 = sbr.rel (%p218) target = $region28
        $region27: #{transformer_decoder_layer_forward.9} parent=11 // pred_region
          _
        $region28: #{transformer_decoder_layer_forward.9} parent=11 // pred_fallthru
          _
        // Predicated region
        $region29: #{transformer_decoder_layer_forward.9} parent=11 // pred_check
          %p221 = pneg %p147
        $region30: #{transformer_decoder_layer_forward.9} parent=11 // pred_check_branch
          %223 = sbr.rel (%p221) target = $region32
        $region31: #{transformer_decoder_layer_forward.9} parent=11 // pred_region
          _
        $region32: #{transformer_decoder_layer_forward.9} parent=11 // pred_fallthru
          _
        // Predicated region
        $region33: #{transformer_decoder_layer_forward.9} parent=11 // pred_check
          %p224 = pneg %p168
        $region34: #{transformer_decoder_layer_forward.9} parent=11 // pred_check_branch
          %226 = sbr.rel (%p224) target = $region36
        $region35: #{transformer_decoder_layer_forward.9} parent=11 // pred_region
          _
        $region36: #{transformer_decoder_layer_forward.9} parent=11 // pred_fallthru
          _
      $region12: #{transformer_decoder_layer_forward.9} parent=5 // pred_fallthru
        _
      %p227 = scmp.lt.s32.totalorder %s16, 2
      // Predicated region
      $region37: #{transformer_decoder_layer_forward.9} parent=5 // pred_check
        %p228 = pneg %p227
      $region38: #{transformer_decoder_layer_forward.9} parent=5 // pred_check_branch
        %230 = sbr.rel (%p228) target = $region40
      $region39: #{transformer_decoder_layer_forward.9} parent=5 // pred_region
        // Predicated region
        $region41: #{transformer_decoder_layer_forward.9} parent=39 // pred_check
          %p231 = pneg %p36
        $region42: #{transformer_decoder_layer_forward.9} parent=39 // pred_check_branch
          %233 = sbr.rel (%p231) target = $region44
        $region43: #{transformer_decoder_layer_forward.9} parent=39 // pred_region
          %p234 = scmp.lt.s32.totalorder %s16, 1
          %s235 = scalar_select %p234, %s16, 1
          %s236 = smul.addr %s235, 8
          %s237 = scalar_lea.vmem %s0, %s236
        $region44: #{transformer_decoder_layer_forward.9} parent=39 // pred_fallthru
          _
      $region40: #{transformer_decoder_layer_forward.9} parent=5 // pred_fallthru
        _
      %p238 = scmp.le.s32.totalorder 1, %s16
      %p239 = scmp.lt.s32.totalorder %s16, 3
      %p240 = pnand %p238, %p239
      %p241 = pneg %p240
      // Predicated region
      $region45: #{transformer_decoder_layer_forward.9} parent=5 // pred_check
        _
      $region46: #{transformer_decoder_layer_forward.9} parent=5 // pred_check_branch
        %243 = sbr.rel (%p240) target = $region48
      $region47: #{transformer_decoder_layer_forward.9} parent=5 // pred_region
        %s244 = ssub.s32 %s16, 1
        %p245 = scmp.lt.s32.totalorder %s21, 1
        %s246 = scalar_select %p245, %s21, 1
        %s247 = smul.addr %s246, 8
        %s248 = scalar_lea.vmem %s0, %s247
        %p249 = pneg %p42
        %p250 = pneg %p39
        %p251 = pneg %p63
        %p252 = pneg %p60
        %p253 = pneg %p84
        %p254 = pneg %p81
        %p255 = pneg %p105
        %p256 = pneg %p102
        %p257 = pneg %p126
        %p258 = pneg %p123
        %p259 = pneg %p147
        %p260 = pneg %p144
        %p261 = pneg %p168
        %p262 = pneg %p165
        %p263 = pneg %p194
        %p264 = pneg %p191
        %s265 = sand.u32 %s181, 1
        %s266 = scalar_lea.sflag [#allocation3], %s265
        %s267 = sand.u32 %s181, 1
        %s268 = smul.addr %s267, 8
        %s269 = scalar_lea.vmem [#allocation2], %s268
        %p270 = scmp.lt.s32.totalorder %s21, 1
        %s271 = scalar_select %p270, %s21, 1
        %s272 = smul.addr %s271, 8
        %s273 = scalar_lea.vmem %s0, %s272
        %v275 = vld [vmem:[%s273] sm:$0xff]
        %v276 = vpack.c.bf16 %v275, %v275
        %v277 = vld [vmem:[%s1] sm:$0xf]
        %v278 = vld [vmem:[%s1 + $0x4] sm:$0xf]
        %v279 = vld [vmem:[%s1 + $0x8] sm:$0xf]
        %v280 = vld [vmem:[%s1 + $0xc] sm:$0xf]
        %v281 = vld [vmem:[%s2] sm:$0x1]
        %v283 = vlaneseq
        %v284 = vshrl.u32 %v283, 7
        %v285 = vsub.s32 0, %v284
        %v286 = vrot.slane %v281, %v285
        %v292 = vunpack.c.l.b16 %v277
        %v293 = vunpack.c.l.b16 %v278
        %v294 = vunpack.c.l.b16 %v279
        %v295 = vunpack.c.l.b16 %v280
        %v296 = vpack.c.b16 %v293, %v292
        %v297 = vpack.c.b16 %v295, %v294
        %vm300 = vcmask 261120
        %v302 = vsel %vm300, %v276, 0
        %304 = vmatprep.subr.bf16.mxu0 0
        %305 = vmatpush1.bf16.msra.mxu0 %v296
        %306 = vmatprep.subr.bf16.mxu0 0
        %307 = vmatpush1.bf16.msra.mxu0 %v297
        %308 = vmatprep.subr.bf16.mxu0 0
        %309 = vmatpush1.bf16.msra.mxu0 0
        %310 = vmatprep.subr.bf16.mxu0 0
        %311 = vmatpush1.bf16.msra.mxu0 0
        %312 = vmatprep.subr.bf16.mxu0 0
        %313 = vmatpush1.bf16.msra.mxu0 0
        %314 = vmatprep.subr.bf16.mxu0 0
        %315 = vmatpush1.bf16.msra.mxu0 0
        %316 = vmatprep.subr.bf16.mxu0 0
        %317 = vmatpush1.bf16.msra.mxu0 0
        %318 = vmatprep.subr.bf16.mxu0 0
        %319 = vmatpush1.bf16.msra.mxu0 0
        %320 = vmatprep.subr.bf16.mxu0 0
        %321 = vmatpush1.bf16.msra.mxu0 0
        %322 = vmatprep.subr.bf16.mxu0 0
        %323 = vmatpush1.bf16.msra.mxu0 0
        %324 = vmatprep.subr.bf16.mxu0 0
        %325 = vmatpush1.bf16.msra.mxu0 0
        %326 = vmatprep.subr.bf16.mxu0 0
        %327 = vmatpush1.bf16.msra.mxu0 0
        %328 = vmatprep.subr.bf16.mxu0 0
        %329 = vmatpush1.bf16.msra.mxu0 0
        %330 = vmatprep.subr.bf16.mxu0 0
        %331 = vmatpush1.bf16.msra.mxu0 0
        %332 = vmatprep.subr.bf16.mxu0 0
        %333 = vmatpush1.bf16.msra.mxu0 0
        %334 = vmatprep.subr.bf16.mxu0 0
        %335 = vmatpush1.bf16.msra.mxu0 0
        %336 = vmatprep.mubr.bf16.mxu0 0
        %337 = vmatmul.mubr.bf16.gmra.mrb[0].mxu0 %v302
        %v338 = vpop.f32.mrb[0].mxu0
        %v339 = vadd.f32 %v286, %v338
        %v340 = vpop.f32.mrb[0].mxu0
        %v341 = vpop.f32.mrb[0].mxu0
        %v342 = vpop.f32.mrb[0].mxu0
        %343 = vdwg.mxu0
        %v344 = vmax.f32 %v339, 0.0
        %v345 = vpack.c.bf16 %v344, %v344
        %v346 = vld [vmem:[%s3] sm:$0xf]
        %v347 = vld [vmem:[%s3 + $0x4] sm:$0xf]
        %v348 = vld [vmem:[%s3 + $0x8] sm:$0xf]
        %v349 = vld [vmem:[%s3 + $0xc] sm:$0xf]
        %v350 = vld [vmem:[%s3 + $0x10] sm:$0xf]
        %v351 = vld [vmem:[%s3 + $0x14] sm:$0xf]
        %v352 = vld [vmem:[%s3 + $0x18] sm:$0xf]
        %v353 = vld [vmem:[%s3 + $0x1c] sm:$0xf]
        %v354 = vld [vmem:[%s4] sm:$0x1]
        %v356 = vlaneseq
        %v357 = vshrl.u32 %v356, 7
        %v358 = vsub.s32 0, %v357
        %v359 = vrot.slane %v354, %v358
        %v369 = vunpack.c.l.b16 %v346
        %v370 = vunpack.c.l.b16 %v347
        %v371 = vunpack.c.l.b16 %v348
        %v372 = vunpack.c.l.b16 %v349
        %v373 = vunpack.c.l.b16 %v350
        %v374 = vunpack.c.l.b16 %v351
        %v375 = vunpack.c.l.b16 %v352
        %v376 = vunpack.c.l.b16 %v353
        %v377 = vpack.c.b16 %v370, %v369
        %v378 = vpack.c.b16 %v372, %v371
        %v379 = vpack.c.b16 %v374, %v373
        %v380 = vpack.c.b16 %v376, %v375
        %vm385 = vcmask 523264
        %v387 = vsel %vm385, %v345, 0
        %389 = vmatprep.subr.bf16.mxu0 0
        %390 = vmatpush1.bf16.msra.mxu0 %v377
        %391 = vmatprep.subr.bf16.mxu0 0
        %392 = vmatpush1.bf16.msra.mxu0 %v378
        %393 = vmatprep.subr.bf16.mxu0 0
        %394 = vmatpush1.bf16.msra.mxu0 %v379
        %395 = vmatprep.subr.bf16.mxu0 0
        %396 = vmatpush1.bf16.msra.mxu0 %v380
        %397 = vmatprep.subr.bf16.mxu0 0
        %398 = vmatpush1.bf16.msra.mxu0 0
        %399 = vmatprep.subr.bf16.mxu0 0
        %400 = vmatpush1.bf16.msra.mxu0 0
        %401 = vmatprep.subr.bf16.mxu0 0
        %402 = vmatpush1.bf16.msra.mxu0 0
        %403 = vmatprep.subr.bf16.mxu0 0
        %404 = vmatpush1.bf16.msra.mxu0 0
        %405 = vmatprep.subr.bf16.mxu0 0
        %406 = vmatpush1.bf16.msra.mxu0 0
        %407 = vmatprep.subr.bf16.mxu0 0
        %408 = vmatpush1.bf16.msra.mxu0 0
        %409 = vmatprep.subr.bf16.mxu0 0
        %410 = vmatpush1.bf16.msra.mxu0 0
        %411 = vmatprep.subr.bf16.mxu0 0
        %412 = vmatpush1.bf16.msra.mxu0 0
        %413 = vmatprep.subr.bf16.mxu0 0
        %414 = vmatpush1.bf16.msra.mxu0 0
        %415 = vmatprep.subr.bf16.mxu0 0
        %416 = vmatpush1.bf16.msra.mxu0 0
        %417 = vmatprep.subr.bf16.mxu0 0
        %418 = vmatpush1.bf16.msra.mxu0 0
        %419 = vmatprep.subr.bf16.mxu0 0
        %420 = vmatpush1.bf16.msra.mxu0 0
        %421 = vmatprep.mubr.bf16.mxu0 0
        %422 = vmatmul.mubr.bf16.gmra.mrb[0].mxu0 %v387
        %v423 = vpop.f32.mrb[0].mxu0
        %v424 = vadd.f32 %v359, %v423
        %v425 = vpop.f32.mrb[0].mxu0
        %v426 = vpop.f32.mrb[0].mxu0
        %v427 = vpop.f32.mrb[0].mxu0
        %428 = vdwg.mxu0
        %v429 = vadd.f32 %v275, %v424
        %v430 = vld [vmem:[%s5] sm:$0x1]
        %v431 = vld [vmem:[%s6] sm:$0x1]
        %v432 = vsel %vm300, %v429, 0.0
        %433 = vadd.xlane.f32.xlu0 %v432
        %v434 = vpop.xlane.xlu0 %433
        %v435 = vrcp.pop 32.0
        %v436 = vmul.f32 %v434, %v435
        %v437 = vsub.f32 %v429, %v436
        %v438 = vmul.f32 %v437, %v437
        %v439 = vsel %vm300, %v438, 0.0
        %440 = vadd.xlane.f32.xlu0 %v439
        %v441 = vpop.xlane.xlu0 %440
        %v442 = vmul.f32 %v441, %v435
        %v443 = vadd.f32 %v442, 1e-05
        %v444 = vrsqrt.pop %v443
        %v445 = vmul.f32 %v437, %v444
        %v447 = vlaneseq
        %v448 = vshrl.u32 %v447, 7
        %v449 = vsub.s32 0, %v448
        %v450 = vrot.slane %v430, %v449
        %v452 = vmul.f32 %v445, %v450
        %v454 = vlaneseq
        %v455 = vshrl.u32 %v454, 7
        %v456 = vsub.s32 0, %v455
        %v457 = vrot.slane %v431, %v456
        %v459 = vadd.f32 %v452, %v457
        %460 = vst.msk [vmem:[%s269] sm:$0xff] %vm300, %v459
        %s461 = sand.u32 %s181, 1
        %s462 = scalar_lea.sflag [#allocation3], %s461
        %s463 = sand.u32 %s181, 1
        %s464 = smul.addr %s463, 8
        %s465 = scalar_lea.vmem [#allocation2], %s464
        // Predicated region
        $region49: #{transformer_decoder_layer_forward.9} parent=47 // pred_check
          %p466 = pneg %p191
        $region50: #{transformer_decoder_layer_forward.9} parent=47 // pred_check_branch
          %468 = sbr.rel (%p466) target = $region52
        $region51: #{transformer_decoder_layer_forward.9} parent=47 // pred_region
          %s470 = ssub.s32 128, 128
          %471 = vsyncadd %s462, %s470
          %s472 = smul.addr %s21, 128
          %s473 = scalar_lea.hbm %s7, %s472
          %s475 = sshll.u32 %s465, 4
          %s476 = int_to_ptr.vmem [resolvable:$true] %s475
          %478 = dma.vmem_to_hbm [thread:$0]  %s476, 128, %s473, %s462
        $region52: #{transformer_decoder_layer_forward.9} parent=47 // pred_fallthru
          _
      $region48: #{transformer_decoder_layer_forward.9} parent=5 // pred_fallthru
        _
      %p479 = scmp.le.s32.totalorder 2, %s16
      // Predicated region
      $region53: #{transformer_decoder_layer_forward.9} parent=5 // pred_check
        %p480 = pneg %p479
      $region54: #{transformer_decoder_layer_forward.9} parent=5 // pred_check_branch
        %482 = sbr.rel (%p480) target = $region56
      $region55: #{transformer_decoder_layer_forward.9} parent=5 // pred_region
        %s483 = ssub.s32 %s16, 2
        // Predicated region
        $region57: #{transformer_decoder_layer_forward.9} parent=55 // pred_check
          %p484 = pneg %p197
        $region58: #{transformer_decoder_layer_forward.9} parent=55 // pred_check_branch
          %486 = sbr.rel (%p484) target = $region60
        $region59: #{transformer_decoder_layer_forward.9} parent=55 // pred_region
          %s487 = sand.u32 %s182, 1
          %s488 = scalar_lea.sflag [#allocation3], %s487
          %s489 = sand.u32 %s182, 1
          %s490 = smul.addr %s489, 8
          %s491 = scalar_lea.vmem [#allocation2], %s490
          %492 = dma.done %s488, 128
        $region60: #{transformer_decoder_layer_forward.9} parent=55 // pred_fallthru
          _
      $region56: #{transformer_decoder_layer_forward.9} parent=5 // pred_fallthru
        _
    $region6: #{transformer_decoder_layer_forward.9} parent=1 // loop_footer
      %s20 = sadd.s32 1, %s16
    $region7: #{transformer_decoder_layer_forward.9} parent=1 // loop_footer_branch
      %15 = sbr.rel target = $region3
    $region8: #{transformer_decoder_layer_forward.9} parent=1 // loop_exit
      _
    %493 = vsyncpa [#allocation3], 1
    %s494 = scalar_lea.sflag [#allocation3], 1
    %495 = vsyncpa %s494, 1

</llo_original>
